<compile_context>
chip_gen: v7x
topology: tpu7x:2x2x1
jax: 0.10.0
libtpu: 0.0.40
codegen_flags: <defaults>
</compile_context>

<pallas_src>
import jax
import jax.numpy as jnp
from jax.experimental import pallas as pl
from jax.experimental.pallas import tpu as pltpu

EMBED = 8                      # embedding_dim
WIDTH = 20                     # input width -> 18 -> 14 -> 8 -> pool -> 4
C1, K1 = 64, 3
C2, K2 = 128, 5
C3, K3 = 256, 7
W1OUT = WIDTH - K1 + 1         # 18
W2OUT = W1OUT - K2 + 1         # 14
W3OUT = W2OUT - K3 + 1         # 8
POOL_W = (W3OUT - 2) // 2 + 1  # 4
FLAT = C3 * POOL_W             # 1024 == mlp_weight_1.shape[0]
MLP_H1, MLP_H2 = 256, 128


def _cnn_kernel(x_ref, w1c_ref, w2c_ref, w3c_ref, w1m_ref, w2m_ref, w3m_ref,
                o_ref, h1_ref, h2_ref):
    bf16 = jnp.bfloat16

    # conv1 + ReLU : x (TB, WIDTH*EMBED) -> h1 (TB, W1OUT*C1), one dot per position.
    for i in range(W1OUT):
        lhs = x_ref[:, i * EMBED:i * EMBED + K1 * EMBED].astype(bf16)      # (TB, 24)
        y = jnp.dot(lhs, w1c_ref[...], preferred_element_type=jnp.float32) # (TB, 64)
        h1_ref[:, i * C1:(i + 1) * C1] = jnp.maximum(y, 0.0)

    # conv2 + ReLU : h1 -> h2 (TB, W2OUT*C2), im2col slice gives K=320 per dot.
    for i in range(W2OUT):
        lhs = h1_ref[:, i * C1:i * C1 + K2 * C1].astype(bf16)              # (TB, 320)
        y = jnp.dot(lhs, w2c_ref[...], preferred_element_type=jnp.float32) # (TB, 128)
        h2_ref[:, i * C2:(i + 1) * C2] = jnp.maximum(y, 0.0)

    # conv3 + ReLU + max-pool(k=2,s=2) + first MLP layer, fused:
    #   m1_acc = sum_p max(relu(conv3[2p]), relu(conv3[2p+1])) @ W1_block[p]
    acc = None
    for p in range(POOL_W):
        a0 = (2 * p) * C2
        b0 = (2 * p + 1) * C2
        ya = jnp.dot(h2_ref[:, a0:a0 + K3 * C2].astype(bf16), w3c_ref[...],
                     preferred_element_type=jnp.float32)                   # (TB, 256)
        yb = jnp.dot(h2_ref[:, b0:b0 + K3 * C2].astype(bf16), w3c_ref[...],
                     preferred_element_type=jnp.float32)                   # (TB, 256)
        pooled = jnp.maximum(jnp.maximum(ya, 0.0), jnp.maximum(yb, 0.0))   # f32
        part = jnp.dot(pooled.astype(bf16), w1m_ref[p],
                       preferred_element_type=jnp.float32)                 # (TB, 256)
        acc = part if acc is None else acc + part

    m1 = jnp.maximum(acc, 0.0)                                             # (TB, 256)
    m2 = jnp.maximum(jnp.dot(m1.astype(bf16), w2m_ref[...],
                             preferred_element_type=jnp.float32), 0.0)     # (TB, 128)
    # Final (., 128) x (128, 1) layer on the VPU: broadcast-mul + lane reduction.
    o_ref[...] = jnp.sum(m2 * w3m_ref[...], axis=1, keepdims=True)         # (TB, 1)


def prepare_params(params):
    """One-time weight re-layout + bf16 cast. Call ONCE, outside the hot path."""
    k1, k2, k3, w1, w2, w3 = params
    # conv kernels (out_c, in_c, k) -> im2col matrices (k*in_c, out_c); row = k*in_c + c.
    w1c = jnp.transpose(k1, (2, 1, 0)).reshape(K1 * EMBED, C1).astype(jnp.bfloat16)
    w2c = jnp.transpose(k2, (2, 1, 0)).reshape(K2 * C1, C2).astype(jnp.bfloat16)
    w3c = jnp.transpose(k3, (2, 1, 0)).reshape(K3 * C2, C3).astype(jnp.bfloat16)
    # torch flattens pooled (B, C3, POOL_W) channel-major (row = c*POOL_W + w);
    # split W1 into POOL_W blocks: w1m[w, c, :] = w1[c*POOL_W + w, :].
    w1m = jnp.transpose(w1.reshape(C3, POOL_W, MLP_H1), (1, 0, 2)).astype(jnp.bfloat16)
    w2m = w2.astype(jnp.bfloat16)
    w3m = jnp.transpose(w3, (1, 0)).astype(jnp.float32)       # (1, 128), used on the VPU
    return (w1c, w2c, w3c, w1m, w2m, w3m)


def _round_up(n, m):
    return (n + m - 1) // m * m


def cnn_forward(x_ncw, prepped, *, batch_block=128):
    """x_ncw: (B, EMBED, WIDTH) float32 (PyTorch NCW). prepped: prepare_params(params)."""
    w1c, w2c, w3c, w1m, w2m, w3m = prepped
    B = x_ncw.shape[0]
    # NCW -> (B, W*EMBED) with lane index w*EMBED + c (tiny per-call activation re-layout).
    x = jnp.transpose(x_ncw, (0, 2, 1)).reshape(B, WIDTH * EMBED).astype(jnp.float32)

    tb = min(batch_block, _round_up(B, 8))   # batch tile (block second-minor stays legal)
    bp = _round_up(B, tb)
    if bp != B:
        x = jnp.pad(x, ((0, bp - B), (0, 0)))

    def full(shape):
        return pl.BlockSpec(shape, lambda i, _n=len(shape): (0,) * _n)

    out = pl.pallas_call(
        _cnn_kernel,
        out_shape=jax.ShapeDtypeStruct((bp, 1), jnp.float32),
        grid=(bp // tb,),
        in_specs=[
            pl.BlockSpec((tb, WIDTH * EMBED), lambda i: (i, 0)),
            full(w1c.shape), full(w2c.shape), full(w3c.shape),
            full(w1m.shape), full(w2m.shape), full(w3m.shape),
        ],
        out_specs=pl.BlockSpec((tb, 1), lambda i: (i, 0)),
        scratch_shapes=[
            pltpu.VMEM((tb, W1OUT * C1), jnp.float32),   # conv1 activations
            pltpu.VMEM((tb, W2OUT * C2), jnp.float32),   # conv2 activations
        ],
        compiler_params=pltpu.CompilerParams(dimension_semantics=("parallel",)),
    )(x, w1c, w2c, w3c, w1m, w2m, w3m)
    return out[:B]


def reference_forward(x_ncw, params):
    """Pure-JAX f32 reference mirroring the PyTorch module semantics."""
    k1, k2, k3, w1, w2, w3 = params

    def conv(x, k):
        return jax.lax.conv_general_dilated(
            x, k, window_strides=(1,), padding="VALID",
            dimension_numbers=("NCH", "OIH", "NCH"))

    h = jax.nn.relu(conv(x_ncw, k1))
    h = jax.nn.relu(conv(h, k2))
    h = jax.nn.relu(conv(h, k3))
    B, C, W = h.shape
    ow = (W - 2) // 2 + 1
    h = jnp.max(h[:, :, :2 * ow].reshape(B, C, ow, 2), axis=-1)   # pool1d k=2 s=2
    flat = h.reshape(B, -1)                                       # channel-major flatten
    m = jax.nn.relu(flat @ w1)
    m = jax.nn.relu(m @ w2)
    return m @ w3


if __name__ == "__main__":
    key = jax.random.PRNGKey(0)
    ks = jax.random.split(key, 7)
    # PyTorch-style NCW input (batch, embedding_dim, width); width=20 so the
    # flattened pooled features are 256*4 = 1024 = mlp_weight_1.shape[0].
    x = jax.random.normal(ks[0], (2, EMBED, WIDTH), jnp.float32)
    params = (
        jax.random.normal(ks[1], (C1, EMBED, K1), jnp.float32),   # kernel_1
        jax.random.normal(ks[2], (C2, C1, K2), jnp.float32),      # kernel_2
        jax.random.normal(ks[3], (C3, C2, K3), jnp.float32),      # kernel_3
        jax.random.normal(ks[4], (FLAT, MLP_H1), jnp.float32),    # mlp_weight_1
        jax.random.normal(ks[5], (MLP_H1, MLP_H2), jnp.float32),  # mlp_weight_2
        jax.random.normal(ks[6], (MLP_H2, 1), jnp.float32),       # mlp_weight_3
    )

    prepped = prepare_params(params)          # one-time weight re-layout (not per call)
    fwd = jax.jit(cnn_forward)
    out = jax.block_until_ready(fwd(x, prepped))
    assert out.shape == (2, 1), out.shape

    ref = reference_forward(x, params)
    # Robust norm-relative check (the old `/ (|ref| + 1e3)` check was vacuous).
    err = float(jnp.max(jnp.abs(out - ref)) / (jnp.max(jnp.abs(ref)) + 1e-6))
    assert err < 5e-2, f"mismatch vs reference, norm-rel err={err}"

    print("KERNEL_OK")
</pallas_src>

<mosaic_0001>
module attributes {stable_mosaic.version = 11 : i64} {
  func.func @_cnn_kernel(%arg0: i32, %arg1: memref<8x160xf32, #tpu.memory_space<vmem>>, %arg2: memref<24x64xbf16, #tpu.memory_space<vmem>>, %arg3: memref<320x128xbf16, #tpu.memory_space<vmem>>, %arg4: memref<896x256xbf16, #tpu.memory_space<vmem>>, %arg5: memref<4x256x256xbf16, #tpu.memory_space<vmem>>, %arg6: memref<256x128xbf16, #tpu.memory_space<vmem>>, %arg7: memref<1x128xf32, #tpu.memory_space<vmem>>, %arg8: memref<8x1xf32, #tpu.memory_space<vmem>>, %arg9: memref<8x1152xf32, #tpu.memory_space<vmem>>, %arg10: memref<8x1792xf32, #tpu.memory_space<vmem>>) attributes {dimension_semantics = [#tpu.dimension_semantics<parallel>], iteration_bounds = array<i64: 1>, scalar_prefetch = 0 : i64, scratch_operands = 2 : i64, tpu.core_type = #tpu.core_type<tc>, window_params = [{transform_indices = @transform_0, window_bounds = array<i64: 8, 160>}, {pipeline_mode = #tpu.pipeline_mode<synchronous>, transform_indices = @transform_1, window_bounds = array<i64: 24, 64>}, {pipeline_mode = #tpu.pipeline_mode<synchronous>, transform_indices = @transform_2, window_bounds = array<i64: 320, 128>}, {pipeline_mode = #tpu.pipeline_mode<synchronous>, transform_indices = @transform_3, window_bounds = array<i64: 896, 256>}, {pipeline_mode = #tpu.pipeline_mode<synchronous>, transform_indices = @transform_4, window_bounds = array<i64: 4, 256, 256>}, {pipeline_mode = #tpu.pipeline_mode<synchronous>, transform_indices = @transform_5, window_bounds = array<i64: 256, 128>}, {pipeline_mode = #tpu.pipeline_mode<synchronous>, transform_indices = @transform_6, window_bounds = array<i64: 1, 128>}, {transform_indices = @transform_7, window_bounds = array<i64: 8, 1>}]} {
    %c0 = arith.constant 0 : index
    %c0_0 = arith.constant 0 : index
    %0 = vector.load %arg1[%c0, %c0_0] : memref<8x160xf32, #tpu.memory_space<vmem>>, vector<8x24xf32>
    %1 = arith.truncf %0 : vector<8x24xf32> to vector<8x24xbf16>
    %c0_1 = arith.constant 0 : index
    %c0_2 = arith.constant 0 : index
    %2 = vector.load %arg2[%c0_1, %c0_2] : memref<24x64xbf16, #tpu.memory_space<vmem>>, vector<24x64xbf16>
    %cst = arith.constant dense<0.000000e+00> : vector<8x64xf32>
    %3 = tpu.matmul %1, %2, %cst {dimension_numbers = #tpu.dot_dimension_numbers<[1], [0], [0], [1], [0, 0, 1, 1], [], []>} : vector<8x24xbf16>, vector<24x64xbf16>, vector<8x64xf32> -> vector<8x64xf32>
    %cst_3 = arith.constant 0.000000e+00 : f32
    %4 = vector.broadcast %cst_3 : f32 to vector<8x64xf32>
    %5 = arith.maximumf %3, %4 : vector<8x64xf32>
    %c0_4 = arith.constant 0 : index
    %c0_5 = arith.constant 0 : index
    %6 = vector.load %arg9[%c0_4, %c0_5] : memref<8x1152xf32, #tpu.memory_space<vmem>>, vector<8x64xf32>
    tpu.vector_store %arg9[%c0_4, %c0_5], %5 {strides = array<i32>} : memref<8x1152xf32, #tpu.memory_space<vmem>>, vector<8x64xf32>,
    %c0_6 = arith.constant 0 : index
    %c8 = arith.constant 8 : index
    %7 = vector.load %arg1[%c0_6, %c8] : memref<8x160xf32, #tpu.memory_space<vmem>>, vector<8x24xf32>
    %8 = arith.truncf %7 : vector<8x24xf32> to vector<8x24xbf16>
    %c0_7 = arith.constant 0 : index
    %c0_8 = arith.constant 0 : index
    %9 = vector.load %arg2[%c0_7, %c0_8] : memref<24x64xbf16, #tpu.memory_space<vmem>>, vector<24x64xbf16>
    %cst_9 = arith.constant dense<0.000000e+00> : vector<8x64xf32>
    %10 = tpu.matmul %8, %9, %cst_9 {dimension_numbers = #tpu.dot_dimension_numbers<[1], [0], [0], [1], [0, 0, 1, 1], [], []>} : vector<8x24xbf16>, vector<24x64xbf16>, vector<8x64xf32> -> vector<8x64xf32>
    %cst_10 = arith.constant 0.000000e+00 : f32
    %11 = vector.broadcast %cst_10 : f32 to vector<8x64xf32>
    %12 = arith.maximumf %10, %11 : vector<8x64xf32>
    %c0_11 = arith.constant 0 : index
    %c64 = arith.constant 64 : index
    %13 = vector.load %arg9[%c0_11, %c64] : memref<8x1152xf32, #tpu.memory_space<vmem>>, vector<8x64xf32>
    tpu.vector_store %arg9[%c0_11, %c64], %12 {strides = array<i32>} : memref<8x1152xf32, #tpu.memory_space<vmem>>, vector<8x64xf32>,
    %c0_12 = arith.constant 0 : index
    %c16 = arith.constant 16 : index
    %14 = vector.load %arg1[%c0_12, %c16] : memref<8x160xf32, #tpu.memory_space<vmem>>, vector<8x24xf32>
    %15 = arith.truncf %14 : vector<8x24xf32> to vector<8x24xbf16>
    %c0_13 = arith.constant 0 : index
    %c0_14 = arith.constant 0 : index
    %16 = vector.load %arg2[%c0_13, %c0_14] : memref<24x64xbf16, #tpu.memory_space<vmem>>, vector<24x64xbf16>
    %cst_15 = arith.constant dense<0.000000e+00> : vector<8x64xf32>
    %17 = tpu.matmul %15, %16, %cst_15 {dimension_numbers = #tpu.dot_dimension_numbers<[1], [0], [0], [1], [0, 0, 1, 1], [], []>} : vector<8x24xbf16>, vector<24x64xbf16>, vector<8x64xf32> -> vector<8x64xf32>
    %cst_16 = arith.constant 0.000000e+00 : f32
    %18 = vector.broadcast %cst_16 : f32 to vector<8x64xf32>
    %19 = arith.maximumf %17, %18 : vector<8x64xf32>
    %c0_17 = arith.constant 0 : index
    %c128 = arith.constant 128 : index
    %20 = vector.load %arg9[%c0_17, %c128] : memref<8x1152xf32, #tpu.memory_space<vmem>>, vector<8x64xf32>
    tpu.vector_store %arg9[%c0_17, %c128], %19 {strides = array<i32>} : memref<8x1152xf32, #tpu.memory_space<vmem>>, vector<8x64xf32>,
    %c0_18 = arith.constant 0 : index
    %c24 = arith.constant 24 : index
    %21 = vector.load %arg1[%c0_18, %c24] : memref<8x160xf32, #tpu.memory_space<vmem>>, vector<8x24xf32>
    %22 = arith.truncf %21 : vector<8x24xf32> to vector<8x24xbf16>
    %c0_19 = arith.constant 0 : index
    %c0_20 = arith.constant 0 : index
    %23 = vector.load %arg2[%c0_19, %c0_20] : memref<24x64xbf16, #tpu.memory_space<vmem>>, vector<24x64xbf16>
    %cst_21 = arith.constant dense<0.000000e+00> : vector<8x64xf32>
    %24 = tpu.matmul %22, %23, %cst_21 {dimension_numbers = #tpu.dot_dimension_numbers<[1], [0], [0], [1], [0, 0, 1, 1], [], []>} : vector<8x24xbf16>, vector<24x64xbf16>, vector<8x64xf32> -> vector<8x64xf32>
    %cst_22 = arith.constant 0.000000e+00 : f32
    %25 = vector.broadcast %cst_22 : f32 to vector<8x64xf32>
    %26 = arith.maximumf %24, %25 : vector<8x64xf32>
    %c0_23 = arith.constant 0 : index
    %c192 = arith.constant 192 : index
    %27 = vector.load %arg9[%c0_23, %c192] : memref<8x1152xf32, #tpu.memory_space<vmem>>, vector<8x64xf32>
    tpu.vector_store %arg9[%c0_23, %c192], %26 {strides = array<i32>} : memref<8x1152xf32, #tpu.memory_space<vmem>>, vector<8x64xf32>,
    %c0_24 = arith.constant 0 : index
    %c32 = arith.constant 32 : index
    %28 = vector.load %arg1[%c0_24, %c32] : memref<8x160xf32, #tpu.memory_space<vmem>>, vector<8x24xf32>
    %29 = arith.truncf %28 : vector<8x24xf32> to vector<8x24xbf16>
    %c0_25 = arith.constant 0 : index
    %c0_26 = arith.constant 0 : index
    %30 = vector.load %arg2[%c0_25, %c0_26] : memref<24x64xbf16, #tpu.memory_space<vmem>>, vector<24x64xbf16>
    %cst_27 = arith.constant dense<0.000000e+00> : vector<8x64xf32>
    %31 = tpu.matmul %29, %30, %cst_27 {dimension_numbers = #tpu.dot_dimension_numbers<[1], [0], [0], [1], [0, 0, 1, 1], [], []>} : vector<8x24xbf16>, vector<24x64xbf16>, vector<8x64xf32> -> vector<8x64xf32>
    %cst_28 = arith.constant 0.000000e+00 : f32
    %32 = vector.broadcast %cst_28 : f32 to vector<8x64xf32>
    %33 = arith.maximumf %31, %32 : vector<8x64xf32>
    %c0_29 = arith.constant 0 : index
    %c256 = arith.constant 256 : index
    %34 = vector.load %arg9[%c0_29, %c256] : memref<8x1152xf32, #tpu.memory_space<vmem>>, vector<8x64xf32>
    tpu.vector_store %arg9[%c0_29, %c256], %33 {strides = array<i32>} : memref<8x1152xf32, #tpu.memory_space<vmem>>, vector<8x64xf32>,
    %c0_30 = arith.constant 0 : index
    %c40 = arith.constant 40 : index
    %35 = vector.load %arg1[%c0_30, %c40] : memref<8x160xf32, #tpu.memory_space<vmem>>, vector<8x24xf32>
    %36 = arith.truncf %35 : vector<8x24xf32> to vector<8x24xbf16>
    %c0_31 = arith.constant 0 : index
    %c0_32 = arith.constant 0 : index
    %37 = vector.load %arg2[%c0_31, %c0_32] : memref<24x64xbf16, #tpu.memory_space<vmem>>, vector<24x64xbf16>
    %cst_33 = arith.constant dense<0.000000e+00> : vector<8x64xf32>
    %38 = tpu.matmul %36, %37, %cst_33 {dimension_numbers = #tpu.dot_dimension_numbers<[1], [0], [0], [1], [0, 0, 1, 1], [], []>} : vector<8x24xbf16>, vector<24x64xbf16>, vector<8x64xf32> -> vector<8x64xf32>
    %cst_34 = arith.constant 0.000000e+00 : f32
    %39 = vector.broadcast %cst_34 : f32 to vector<8x64xf32>
    %40 = arith.maximumf %38, %39 : vector<8x64xf32>
    %c0_35 = arith.constant 0 : index
    %c320 = arith.constant 320 : index
    %41 = vector.load %arg9[%c0_35, %c320] : memref<8x1152xf32, #tpu.memory_space<vmem>>, vector<8x64xf32>
    tpu.vector_store %arg9[%c0_35, %c320], %40 {strides = array<i32>} : memref<8x1152xf32, #tpu.memory_space<vmem>>, vector<8x64xf32>,
    %c0_36 = arith.constant 0 : index
    %c48 = arith.constant 48 : index
    %42 = vector.load %arg1[%c0_36, %c48] : memref<8x160xf32, #tpu.memory_space<vmem>>, vector<8x24xf32>
    %43 = arith.truncf %42 : vector<8x24xf32> to vector<8x24xbf16>
    %c0_37 = arith.constant 0 : index
    %c0_38 = arith.constant 0 : index
    %44 = vector.load %arg2[%c0_37, %c0_38] : memref<24x64xbf16, #tpu.memory_space<vmem>>, vector<24x64xbf16>
    %cst_39 = arith.constant dense<0.000000e+00> : vector<8x64xf32>
    %45 = tpu.matmul %43, %44, %cst_39 {dimension_numbers = #tpu.dot_dimension_numbers<[1], [0], [0], [1], [0, 0, 1, 1], [], []>} : vector<8x24xbf16>, vector<24x64xbf16>, vector<8x64xf32> -> vector<8x64xf32>
    %cst_40 = arith.constant 0.000000e+00 : f32
    %46 = vector.broadcast %cst_40 : f32 to vector<8x64xf32>
    %47 = arith.maximumf %45, %46 : vector<8x64xf32>
    %c0_41 = arith.constant 0 : index
    %c384 = arith.constant 384 : index
    %48 = vector.load %arg9[%c0_41, %c384] : memref<8x1152xf32, #tpu.memory_space<vmem>>, vector<8x64xf32>
    tpu.vector_store %arg9[%c0_41, %c384], %47 {strides = array<i32>} : memref<8x1152xf32, #tpu.memory_space<vmem>>, vector<8x64xf32>,
    %c0_42 = arith.constant 0 : index
    %c56 = arith.constant 56 : index
    %49 = vector.load %arg1[%c0_42, %c56] : memref<8x160xf32, #tpu.memory_space<vmem>>, vector<8x24xf32>
    %50 = arith.truncf %49 : vector<8x24xf32> to vector<8x24xbf16>
    %c0_43 = arith.constant 0 : index
    %c0_44 = arith.constant 0 : index
    %51 = vector.load %arg2[%c0_43, %c0_44] : memref<24x64xbf16, #tpu.memory_space<vmem>>, vector<24x64xbf16>
    %cst_45 = arith.constant dense<0.000000e+00> : vector<8x64xf32>
    %52 = tpu.matmul %50, %51, %cst_45 {dimension_numbers = #tpu.dot_dimension_numbers<[1], [0], [0], [1], [0, 0, 1, 1], [], []>} : vector<8x24xbf16>, vector<24x64xbf16>, vector<8x64xf32> -> vector<8x64xf32>
    %cst_46 = arith.constant 0.000000e+00 : f32
    %53 = vector.broadcast %cst_46 : f32 to vector<8x64xf32>
    %54 = arith.maximumf %52, %53 : vector<8x64xf32>
    %c0_47 = arith.constant 0 : index
    %c448 = arith.constant 448 : index
    %55 = vector.load %arg9[%c0_47, %c448] : memref<8x1152xf32, #tpu.memory_space<vmem>>, vector<8x64xf32>
    tpu.vector_store %arg9[%c0_47, %c448], %54 {strides = array<i32>} : memref<8x1152xf32, #tpu.memory_space<vmem>>, vector<8x64xf32>,
    %c0_48 = arith.constant 0 : index
    %c64_49 = arith.constant 64 : index
    %56 = vector.load %arg1[%c0_48, %c64_49] : memref<8x160xf32, #tpu.memory_space<vmem>>, vector<8x24xf32>
    %57 = arith.truncf %56 : vector<8x24xf32> to vector<8x24xbf16>
    %c0_50 = arith.constant 0 : index
    %c0_51 = arith.constant 0 : index
    %58 = vector.load %arg2[%c0_50, %c0_51] : memref<24x64xbf16, #tpu.memory_space<vmem>>, vector<24x64xbf16>
    %cst_52 = arith.constant dense<0.000000e+00> : vector<8x64xf32>
    %59 = tpu.matmul %57, %58, %cst_52 {dimension_numbers = #tpu.dot_dimension_numbers<[1], [0], [0], [1], [0, 0, 1, 1], [], []>} : vector<8x24xbf16>, vector<24x64xbf16>, vector<8x64xf32> -> vector<8x64xf32>
    %cst_53 = arith.constant 0.000000e+00 : f32
    %60 = vector.broadcast %cst_53 : f32 to vector<8x64xf32>
    %61 = arith.maximumf %59, %60 : vector<8x64xf32>
    %c0_54 = arith.constant 0 : index
    %c512 = arith.constant 512 : index
    %62 = vector.load %arg9[%c0_54, %c512] : memref<8x1152xf32, #tpu.memory_space<vmem>>, vector<8x64xf32>
    tpu.vector_store %arg9[%c0_54, %c512], %61 {strides = array<i32>} : memref<8x1152xf32, #tpu.memory_space<vmem>>, vector<8x64xf32>,
    %c0_55 = arith.constant 0 : index
    %c72 = arith.constant 72 : index
    %63 = vector.load %arg1[%c0_55, %c72] : memref<8x160xf32, #tpu.memory_space<vmem>>, vector<8x24xf32>
    %64 = arith.truncf %63 : vector<8x24xf32> to vector<8x24xbf16>
    %c0_56 = arith.constant 0 : index
    %c0_57 = arith.constant 0 : index
    %65 = vector.load %arg2[%c0_56, %c0_57] : memref<24x64xbf16, #tpu.memory_space<vmem>>, vector<24x64xbf16>
    %cst_58 = arith.constant dense<0.000000e+00> : vector<8x64xf32>
    %66 = tpu.matmul %64, %65, %cst_58 {dimension_numbers = #tpu.dot_dimension_numbers<[1], [0], [0], [1], [0, 0, 1, 1], [], []>} : vector<8x24xbf16>, vector<24x64xbf16>, vector<8x64xf32> -> vector<8x64xf32>
    %cst_59 = arith.constant 0.000000e+00 : f32
    %67 = vector.broadcast %cst_59 : f32 to vector<8x64xf32>
    %68 = arith.maximumf %66, %67 : vector<8x64xf32>
    %c0_60 = arith.constant 0 : index
    %c576 = arith.constant 576 : index
    %69 = vector.load %arg9[%c0_60, %c576] : memref<8x1152xf32, #tpu.memory_space<vmem>>, vector<8x64xf32>
    tpu.vector_store %arg9[%c0_60, %c576], %68 {strides = array<i32>} : memref<8x1152xf32, #tpu.memory_space<vmem>>, vector<8x64xf32>,
    %c0_61 = arith.constant 0 : index
    %c80 = arith.constant 80 : index
    %70 = vector.load %arg1[%c0_61, %c80] : memref<8x160xf32, #tpu.memory_space<vmem>>, vector<8x24xf32>
    %71 = arith.truncf %70 : vector<8x24xf32> to vector<8x24xbf16>
    %c0_62 = arith.constant 0 : index
    %c0_63 = arith.constant 0 : index
    %72 = vector.load %arg2[%c0_62, %c0_63] : memref<24x64xbf16, #tpu.memory_space<vmem>>, vector<24x64xbf16>
    %cst_64 = arith.constant dense<0.000000e+00> : vector<8x64xf32>
    %73 = tpu.matmul %71, %72, %cst_64 {dimension_numbers = #tpu.dot_dimension_numbers<[1], [0], [0], [1], [0, 0, 1, 1], [], []>} : vector<8x24xbf16>, vector<24x64xbf16>, vector<8x64xf32> -> vector<8x64xf32>
    %cst_65 = arith.constant 0.000000e+00 : f32
    %74 = vector.broadcast %cst_65 : f32 to vector<8x64xf32>
    %75 = arith.maximumf %73, %74 : vector<8x64xf32>
    %c0_66 = arith.constant 0 : index
    %c640 = arith.constant 640 : index
    %76 = vector.load %arg9[%c0_66, %c640] : memref<8x1152xf32, #tpu.memory_space<vmem>>, vector<8x64xf32>
    tpu.vector_store %arg9[%c0_66, %c640], %75 {strides = array<i32>} : memref<8x1152xf32, #tpu.memory_space<vmem>>, vector<8x64xf32>,
    %c0_67 = arith.constant 0 : index
    %c88 = arith.constant 88 : index
    %77 = vector.load %arg1[%c0_67, %c88] : memref<8x160xf32, #tpu.memory_space<vmem>>, vector<8x24xf32>
    %78 = arith.truncf %77 : vector<8x24xf32> to vector<8x24xbf16>
    %c0_68 = arith.constant 0 : index
    %c0_69 = arith.constant 0 : index
    %79 = vector.load %arg2[%c0_68, %c0_69] : memref<24x64xbf16, #tpu.memory_space<vmem>>, vector<24x64xbf16>
    %cst_70 = arith.constant dense<0.000000e+00> : vector<8x64xf32>
    %80 = tpu.matmul %78, %79, %cst_70 {dimension_numbers = #tpu.dot_dimension_numbers<[1], [0], [0], [1], [0, 0, 1, 1], [], []>} : vector<8x24xbf16>, vector<24x64xbf16>, vector<8x64xf32> -> vector<8x64xf32>
    %cst_71 = arith.constant 0.000000e+00 : f32
    %81 = vector.broadcast %cst_71 : f32 to vector<8x64xf32>
    %82 = arith.maximumf %80, %81 : vector<8x64xf32>
    %c0_72 = arith.constant 0 : index
    %c704 = arith.constant 704 : index
    %83 = vector.load %arg9[%c0_72, %c704] : memref<8x1152xf32, #tpu.memory_space<vmem>>, vector<8x64xf32>
    tpu.vector_store %arg9[%c0_72, %c704], %82 {strides = array<i32>} : memref<8x1152xf32, #tpu.memory_space<vmem>>, vector<8x64xf32>,
    %c0_73 = arith.constant 0 : index
    %c96 = arith.constant 96 : index
    %84 = vector.load %arg1[%c0_73, %c96] : memref<8x160xf32, #tpu.memory_space<vmem>>, vector<8x24xf32>
    %85 = arith.truncf %84 : vector<8x24xf32> to vector<8x24xbf16>
    %c0_74 = arith.constant 0 : index
    %c0_75 = arith.constant 0 : index
    %86 = vector.load %arg2[%c0_74, %c0_75] : memref<24x64xbf16, #tpu.memory_space<vmem>>, vector<24x64xbf16>
    %cst_76 = arith.constant dense<0.000000e+00> : vector<8x64xf32>
    %87 = tpu.matmul %85, %86, %cst_76 {dimension_numbers = #tpu.dot_dimension_numbers<[1], [0], [0], [1], [0, 0, 1, 1], [], []>} : vector<8x24xbf16>, vector<24x64xbf16>, vector<8x64xf32> -> vector<8x64xf32>
    %cst_77 = arith.constant 0.000000e+00 : f32
    %88 = vector.broadcast %cst_77 : f32 to vector<8x64xf32>
    %89 = arith.maximumf %87, %88 : vector<8x64xf32>
    %c0_78 = arith.constant 0 : index
    %c768 = arith.constant 768 : index
    %90 = vector.load %arg9[%c0_78, %c768] : memref<8x1152xf32, #tpu.memory_space<vmem>>, vector<8x64xf32>
    tpu.vector_store %arg9[%c0_78, %c768], %89 {strides = array<i32>} : memref<8x1152xf32, #tpu.memory_space<vmem>>, vector<8x64xf32>,
    %c0_79 = arith.constant 0 : index
    %c104 = arith.constant 104 : index
    %91 = vector.load %arg1[%c0_79, %c104] : memref<8x160xf32, #tpu.memory_space<vmem>>, vector<8x24xf32>
    %92 = arith.truncf %91 : vector<8x24xf32> to vector<8x24xbf16>
    %c0_80 = arith.constant 0 : index
    %c0_81 = arith.constant 0 : index
    %93 = vector.load %arg2[%c0_80, %c0_81] : memref<24x64xbf16, #tpu.memory_space<vmem>>, vector<24x64xbf16>
    %cst_82 = arith.constant dense<0.000000e+00> : vector<8x64xf32>
    %94 = tpu.matmul %92, %93, %cst_82 {dimension_numbers = #tpu.dot_dimension_numbers<[1], [0], [0], [1], [0, 0, 1, 1], [], []>} : vector<8x24xbf16>, vector<24x64xbf16>, vector<8x64xf32> -> vector<8x64xf32>
    %cst_83 = arith.constant 0.000000e+00 : f32
    %95 = vector.broadcast %cst_83 : f32 to vector<8x64xf32>
    %96 = arith.maximumf %94, %95 : vector<8x64xf32>
    %c0_84 = arith.constant 0 : index
    %c832 = arith.constant 832 : index
    %97 = vector.load %arg9[%c0_84, %c832] : memref<8x1152xf32, #tpu.memory_space<vmem>>, vector<8x64xf32>
    tpu.vector_store %arg9[%c0_84, %c832], %96 {strides = array<i32>} : memref<8x1152xf32, #tpu.memory_space<vmem>>, vector<8x64xf32>,
    %c0_85 = arith.constant 0 : index
    %c112 = arith.constant 112 : index
    %98 = vector.load %arg1[%c0_85, %c112] : memref<8x160xf32, #tpu.memory_space<vmem>>, vector<8x24xf32>
    %99 = arith.truncf %98 : vector<8x24xf32> to vector<8x24xbf16>
    %c0_86 = arith.constant 0 : index
    %c0_87 = arith.constant 0 : index
    %100 = vector.load %arg2[%c0_86, %c0_87] : memref<24x64xbf16, #tpu.memory_space<vmem>>, vector<24x64xbf16>
    %cst_88 = arith.constant dense<0.000000e+00> : vector<8x64xf32>
    %101 = tpu.matmul %99, %100, %cst_88 {dimension_numbers = #tpu.dot_dimension_numbers<[1], [0], [0], [1], [0, 0, 1, 1], [], []>} : vector<8x24xbf16>, vector<24x64xbf16>, vector<8x64xf32> -> vector<8x64xf32>
    %cst_89 = arith.constant 0.000000e+00 : f32
    %102 = vector.broadcast %cst_89 : f32 to vector<8x64xf32>
    %103 = arith.maximumf %101, %102 : vector<8x64xf32>
    %c0_90 = arith.constant 0 : index
    %c896 = arith.constant 896 : index
    %104 = vector.load %arg9[%c0_90, %c896] : memref<8x1152xf32, #tpu.memory_space<vmem>>, vector<8x64xf32>
    tpu.vector_store %arg9[%c0_90, %c896], %103 {strides = array<i32>} : memref<8x1152xf32, #tpu.memory_space<vmem>>, vector<8x64xf32>,
    %c0_91 = arith.constant 0 : index
    %c120 = arith.constant 120 : index
    %105 = vector.load %arg1[%c0_91, %c120] : memref<8x160xf32, #tpu.memory_space<vmem>>, vector<8x24xf32>
    %106 = arith.truncf %105 : vector<8x24xf32> to vector<8x24xbf16>
    %c0_92 = arith.constant 0 : index
    %c0_93 = arith.constant 0 : index
    %107 = vector.load %arg2[%c0_92, %c0_93] : memref<24x64xbf16, #tpu.memory_space<vmem>>, vector<24x64xbf16>
    %cst_94 = arith.constant dense<0.000000e+00> : vector<8x64xf32>
    %108 = tpu.matmul %106, %107, %cst_94 {dimension_numbers = #tpu.dot_dimension_numbers<[1], [0], [0], [1], [0, 0, 1, 1], [], []>} : vector<8x24xbf16>, vector<24x64xbf16>, vector<8x64xf32> -> vector<8x64xf32>
    %cst_95 = arith.constant 0.000000e+00 : f32
    %109 = vector.broadcast %cst_95 : f32 to vector<8x64xf32>
    %110 = arith.maximumf %108, %109 : vector<8x64xf32>
    %c0_96 = arith.constant 0 : index
    %c960 = arith.constant 960 : index
    %111 = vector.load %arg9[%c0_96, %c960] : memref<8x1152xf32, #tpu.memory_space<vmem>>, vector<8x64xf32>
    tpu.vector_store %arg9[%c0_96, %c960], %110 {strides = array<i32>} : memref<8x1152xf32, #tpu.memory_space<vmem>>, vector<8x64xf32>,
    %c0_97 = arith.constant 0 : index
    %c128_98 = arith.constant 128 : index
    %112 = vector.load %arg1[%c0_97, %c128_98] : memref<8x160xf32, #tpu.memory_space<vmem>>, vector<8x24xf32>
    %113 = arith.truncf %112 : vector<8x24xf32> to vector<8x24xbf16>
    %c0_99 = arith.constant 0 : index
    %c0_100 = arith.constant 0 : index
    %114 = vector.load %arg2[%c0_99, %c0_100] : memref<24x64xbf16, #tpu.memory_space<vmem>>, vector<24x64xbf16>
    %cst_101 = arith.constant dense<0.000000e+00> : vector<8x64xf32>
    %115 = tpu.matmul %113, %114, %cst_101 {dimension_numbers = #tpu.dot_dimension_numbers<[1], [0], [0], [1], [0, 0, 1, 1], [], []>} : vector<8x24xbf16>, vector<24x64xbf16>, vector<8x64xf32> -> vector<8x64xf32>
    %cst_102 = arith.constant 0.000000e+00 : f32
    %116 = vector.broadcast %cst_102 : f32 to vector<8x64xf32>
    %117 = arith.maximumf %115, %116 : vector<8x64xf32>
    %c0_103 = arith.constant 0 : index
    %c1024 = arith.constant 1024 : index
    %118 = vector.load %arg9[%c0_103, %c1024] : memref<8x1152xf32, #tpu.memory_space<vmem>>, vector<8x64xf32>
    tpu.vector_store %arg9[%c0_103, %c1024], %117 {strides = array<i32>} : memref<8x1152xf32, #tpu.memory_space<vmem>>, vector<8x64xf32>,
    %c0_104 = arith.constant 0 : index
    %c136 = arith.constant 136 : index
    %119 = vector.load %arg1[%c0_104, %c136] : memref<8x160xf32, #tpu.memory_space<vmem>>, vector<8x24xf32>
    %120 = arith.truncf %119 : vector<8x24xf32> to vector<8x24xbf16>
    %c0_105 = arith.constant 0 : index
    %c0_106 = arith.constant 0 : index
    %121 = vector.load %arg2[%c0_105, %c0_106] : memref<24x64xbf16, #tpu.memory_space<vmem>>, vector<24x64xbf16>
    %cst_107 = arith.constant dense<0.000000e+00> : vector<8x64xf32>
    %122 = tpu.matmul %120, %121, %cst_107 {dimension_numbers = #tpu.dot_dimension_numbers<[1], [0], [0], [1], [0, 0, 1, 1], [], []>} : vector<8x24xbf16>, vector<24x64xbf16>, vector<8x64xf32> -> vector<8x64xf32>
    %cst_108 = arith.constant 0.000000e+00 : f32
    %123 = vector.broadcast %cst_108 : f32 to vector<8x64xf32>
    %124 = arith.maximumf %122, %123 : vector<8x64xf32>
    %c0_109 = arith.constant 0 : index
    %c1088 = arith.constant 1088 : index
    %125 = vector.load %arg9[%c0_109, %c1088] : memref<8x1152xf32, #tpu.memory_space<vmem>>, vector<8x64xf32>
    tpu.vector_store %arg9[%c0_109, %c1088], %124 {strides = array<i32>} : memref<8x1152xf32, #tpu.memory_space<vmem>>, vector<8x64xf32>,
    %c0_110 = arith.constant 0 : index
    %c0_111 = arith.constant 0 : index
    %126 = vector.load %arg9[%c0_110, %c0_111] : memref<8x1152xf32, #tpu.memory_space<vmem>>, vector<8x320xf32>
    %127 = arith.truncf %126 : vector<8x320xf32> to vector<8x320xbf16>
    %c0_112 = arith.constant 0 : index
    %c0_113 = arith.constant 0 : index
    %128 = vector.load %arg3[%c0_112, %c0_113] : memref<320x128xbf16, #tpu.memory_space<vmem>>, vector<320x128xbf16>
    %cst_114 = arith.constant dense<0.000000e+00> : vector<8x128xf32>
    %129 = tpu.matmul %127, %128, %cst_114 {dimension_numbers = #tpu.dot_dimension_numbers<[1], [0], [0], [1], [0, 0, 1, 1], [], []>} : vector<8x320xbf16>, vector<320x128xbf16>, vector<8x128xf32> -> vector<8x128xf32>
    %cst_115 = arith.constant 0.000000e+00 : f32
    %130 = vector.broadcast %cst_115 : f32 to vector<8x128xf32>
    %131 = arith.maximumf %129, %130 : vector<8x128xf32>
    %c0_116 = arith.constant 0 : index
    %c0_117 = arith.constant 0 : index
    %132 = vector.load %arg10[%c0_116, %c0_117] : memref<8x1792xf32, #tpu.memory_space<vmem>>, vector<8x128xf32>
    tpu.vector_store %arg10[%c0_116, %c0_117], %131 {strides = array<i32>} : memref<8x1792xf32, #tpu.memory_space<vmem>>, vector<8x128xf32>,
    %c0_118 = arith.constant 0 : index
    %c64_119 = arith.constant 64 : index
    %133 = vector.load %arg9[%c0_118, %c64_119] : memref<8x1152xf32, #tpu.memory_space<vmem>>, vector<8x320xf32>
    %134 = arith.truncf %133 : vector<8x320xf32> to vector<8x320xbf16>
    %c0_120 = arith.constant 0 : index
    %c0_121 = arith.constant 0 : index
    %135 = vector.load %arg3[%c0_120, %c0_121] : memref<320x128xbf16, #tpu.memory_space<vmem>>, vector<320x128xbf16>
    %cst_122 = arith.constant dense<0.000000e+00> : vector<8x128xf32>
    %136 = tpu.matmul %134, %135, %cst_122 {dimension_numbers = #tpu.dot_dimension_numbers<[1], [0], [0], [1], [0, 0, 1, 1], [], []>} : vector<8x320xbf16>, vector<320x128xbf16>, vector<8x128xf32> -> vector<8x128xf32>
    %cst_123 = arith.constant 0.000000e+00 : f32
    %137 = vector.broadcast %cst_123 : f32 to vector<8x128xf32>
    %138 = arith.maximumf %136, %137 : vector<8x128xf32>
    %c0_124 = arith.constant 0 : index
    %c128_125 = arith.constant 128 : index
    %139 = vector.load %arg10[%c0_124, %c128_125] : memref<8x1792xf32, #tpu.memory_space<vmem>>, vector<8x128xf32>
    tpu.vector_store %arg10[%c0_124, %c128_125], %138 {strides = array<i32>} : memref<8x1792xf32, #tpu.memory_space<vmem>>, vector<8x128xf32>,
    %c0_126 = arith.constant 0 : index
    %c128_127 = arith.constant 128 : index
    %140 = vector.load %arg9[%c0_126, %c128_127] : memref<8x1152xf32, #tpu.memory_space<vmem>>, vector<8x320xf32>
    %141 = arith.truncf %140 : vector<8x320xf32> to vector<8x320xbf16>
    %c0_128 = arith.constant 0 : index
    %c0_129 = arith.constant 0 : index
    %142 = vector.load %arg3[%c0_128, %c0_129] : memref<320x128xbf16, #tpu.memory_space<vmem>>, vector<320x128xbf16>
    %cst_130 = arith.constant dense<0.000000e+00> : vector<8x128xf32>
    %143 = tpu.matmul %141, %142, %cst_130 {dimension_numbers = #tpu.dot_dimension_numbers<[1], [0], [0], [1], [0, 0, 1, 1], [], []>} : vector<8x320xbf16>, vector<320x128xbf16>, vector<8x128xf32> -> vector<8x128xf32>
    %cst_131 = arith.constant 0.000000e+00 : f32
    %144 = vector.broadcast %cst_131 : f32 to vector<8x128xf32>
    %145 = arith.maximumf %143, %144 : vector<8x128xf32>
    %c0_132 = arith.constant 0 : index
    %c256_133 = arith.constant 256 : index
    %146 = vector.load %arg10[%c0_132, %c256_133] : memref<8x1792xf32, #tpu.memory_space<vmem>>, vector<8x128xf32>
    tpu.vector_store %arg10[%c0_132, %c256_133], %145 {strides = array<i32>} : memref<8x1792xf32, #tpu.memory_space<vmem>>, vector<8x128xf32>,
    %c0_134 = arith.constant 0 : index
    %c192_135 = arith.constant 192 : index
    %147 = vector.load %arg9[%c0_134, %c192_135] : memref<8x1152xf32, #tpu.memory_space<vmem>>, vector<8x320xf32>
    %148 = arith.truncf %147 : vector<8x320xf32> to vector<8x320xbf16>
    %c0_136 = arith.constant 0 : index
    %c0_137 = arith.constant 0 : index
    %149 = vector.load %arg3[%c0_136, %c0_137] : memref<320x128xbf16, #tpu.memory_space<vmem>>, vector<320x128xbf16>
    %cst_138 = arith.constant dense<0.000000e+00> : vector<8x128xf32>
    %150 = tpu.matmul %148, %149, %cst_138 {dimension_numbers = #tpu.dot_dimension_numbers<[1], [0], [0], [1], [0, 0, 1, 1], [], []>} : vector<8x320xbf16>, vector<320x128xbf16>, vector<8x128xf32> -> vector<8x128xf32>
    %cst_139 = arith.constant 0.000000e+00 : f32
    %151 = vector.broadcast %cst_139 : f32 to vector<8x128xf32>
    %152 = arith.maximumf %150, %151 : vector<8x128xf32>
    %c0_140 = arith.constant 0 : index
    %c384_141 = arith.constant 384 : index
    %153 = vector.load %arg10[%c0_140, %c384_141] : memref<8x1792xf32, #tpu.memory_space<vmem>>, vector<8x128xf32>
    tpu.vector_store %arg10[%c0_140, %c384_141], %152 {strides = array<i32>} : memref<8x1792xf32, #tpu.memory_space<vmem>>, vector<8x128xf32>,
    %c0_142 = arith.constant 0 : index
    %c256_143 = arith.constant 256 : index
    %154 = vector.load %arg9[%c0_142, %c256_143] : memref<8x1152xf32, #tpu.memory_space<vmem>>, vector<8x320xf32>
    %155 = arith.truncf %154 : vector<8x320xf32> to vector<8x320xbf16>
    %c0_144 = arith.constant 0 : index
    %c0_145 = arith.constant 0 : index
    %156 = vector.load %arg3[%c0_144, %c0_145] : memref<320x128xbf16, #tpu.memory_space<vmem>>, vector<320x128xbf16>
    %cst_146 = arith.constant dense<0.000000e+00> : vector<8x128xf32>
    %157 = tpu.matmul %155, %156, %cst_146 {dimension_numbers = #tpu.dot_dimension_numbers<[1], [0], [0], [1], [0, 0, 1, 1], [], []>} : vector<8x320xbf16>, vector<320x128xbf16>, vector<8x128xf32> -> vector<8x128xf32>
    %cst_147 = arith.constant 0.000000e+00 : f32
    %158 = vector.broadcast %cst_147 : f32 to vector<8x128xf32>
    %159 = arith.maximumf %157, %158 : vector<8x128xf32>
    %c0_148 = arith.constant 0 : index
    %c512_149 = arith.constant 512 : index
    %160 = vector.load %arg10[%c0_148, %c512_149] : memref<8x1792xf32, #tpu.memory_space<vmem>>, vector<8x128xf32>
    tpu.vector_store %arg10[%c0_148, %c512_149], %159 {strides = array<i32>} : memref<8x1792xf32, #tpu.memory_space<vmem>>, vector<8x128xf32>,
    %c0_150 = arith.constant 0 : index
    %c320_151 = arith.constant 320 : index
    %161 = vector.load %arg9[%c0_150, %c320_151] : memref<8x1152xf32, #tpu.memory_space<vmem>>, vector<8x320xf32>
    %162 = arith.truncf %161 : vector<8x320xf32> to vector<8x320xbf16>
    %c0_152 = arith.constant 0 : index
    %c0_153 = arith.constant 0 : index
    %163 = vector.load %arg3[%c0_152, %c0_153] : memref<320x128xbf16, #tpu.memory_space<vmem>>, vector<320x128xbf16>
    %cst_154 = arith.constant dense<0.000000e+00> : vector<8x128xf32>
    %164 = tpu.matmul %162, %163, %cst_154 {dimension_numbers = #tpu.dot_dimension_numbers<[1], [0], [0], [1], [0, 0, 1, 1], [], []>} : vector<8x320xbf16>, vector<320x128xbf16>, vector<8x128xf32> -> vector<8x128xf32>
    %cst_155 = arith.constant 0.000000e+00 : f32
    %165 = vector.broadcast %cst_155 : f32 to vector<8x128xf32>
    %166 = arith.maximumf %164, %165 : vector<8x128xf32>
    %c0_156 = arith.constant 0 : index
    %c640_157 = arith.constant 640 : index
    %167 = vector.load %arg10[%c0_156, %c640_157] : memref<8x1792xf32, #tpu.memory_space<vmem>>, vector<8x128xf32>
    tpu.vector_store %arg10[%c0_156, %c640_157], %166 {strides = array<i32>} : memref<8x1792xf32, #tpu.memory_space<vmem>>, vector<8x128xf32>,
    %c0_158 = arith.constant 0 : index
    %c384_159 = arith.constant 384 : index
    %168 = vector.load %arg9[%c0_158, %c384_159] : memref<8x1152xf32, #tpu.memory_space<vmem>>, vector<8x320xf32>
    %169 = arith.truncf %168 : vector<8x320xf32> to vector<8x320xbf16>
    %c0_160 = arith.constant 0 : index
    %c0_161 = arith.constant 0 : index
    %170 = vector.load %arg3[%c0_160, %c0_161] : memref<320x128xbf16, #tpu.memory_space<vmem>>, vector<320x128xbf16>
    %cst_162 = arith.constant dense<0.000000e+00> : vector<8x128xf32>
    %171 = tpu.matmul %169, %170, %cst_162 {dimension_numbers = #tpu.dot_dimension_numbers<[1], [0], [0], [1], [0, 0, 1, 1], [], []>} : vector<8x320xbf16>, vector<320x128xbf16>, vector<8x128xf32> -> vector<8x128xf32>
    %cst_163 = arith.constant 0.000000e+00 : f32
    %172 = vector.broadcast %cst_163 : f32 to vector<8x128xf32>
    %173 = arith.maximumf %171, %172 : vector<8x128xf32>
    %c0_164 = arith.constant 0 : index
    %c768_165 = arith.constant 768 : index
    %174 = vector.load %arg10[%c0_164, %c768_165] : memref<8x1792xf32, #tpu.memory_space<vmem>>, vector<8x128xf32>
    tpu.vector_store %arg10[%c0_164, %c768_165], %173 {strides = array<i32>} : memref<8x1792xf32, #tpu.memory_space<vmem>>, vector<8x128xf32>,
    %c0_166 = arith.constant 0 : index
    %c448_167 = arith.constant 448 : index
    %175 = vector.load %arg9[%c0_166, %c448_167] : memref<8x1152xf32, #tpu.memory_space<vmem>>, vector<8x320xf32>
    %176 = arith.truncf %175 : vector<8x320xf32> to vector<8x320xbf16>
    %c0_168 = arith.constant 0 : index
    %c0_169 = arith.constant 0 : index
    %177 = vector.load %arg3[%c0_168, %c0_169] : memref<320x128xbf16, #tpu.memory_space<vmem>>, vector<320x128xbf16>
    %cst_170 = arith.constant dense<0.000000e+00> : vector<8x128xf32>
    %178 = tpu.matmul %176, %177, %cst_170 {dimension_numbers = #tpu.dot_dimension_numbers<[1], [0], [0], [1], [0, 0, 1, 1], [], []>} : vector<8x320xbf16>, vector<320x128xbf16>, vector<8x128xf32> -> vector<8x128xf32>
    %cst_171 = arith.constant 0.000000e+00 : f32
    %179 = vector.broadcast %cst_171 : f32 to vector<8x128xf32>
    %180 = arith.maximumf %178, %179 : vector<8x128xf32>
    %c0_172 = arith.constant 0 : index
    %c896_173 = arith.constant 896 : index
    %181 = vector.load %arg10[%c0_172, %c896_173] : memref<8x1792xf32, #tpu.memory_space<vmem>>, vector<8x128xf32>
    tpu.vector_store %arg10[%c0_172, %c896_173], %180 {strides = array<i32>} : memref<8x1792xf32, #tpu.memory_space<vmem>>, vector<8x128xf32>,
    %c0_174 = arith.constant 0 : index
    %c512_175 = arith.constant 512 : index
    %182 = vector.load %arg9[%c0_174, %c512_175] : memref<8x1152xf32, #tpu.memory_space<vmem>>, vector<8x320xf32>
    %183 = arith.truncf %182 : vector<8x320xf32> to vector<8x320xbf16>
    %c0_176 = arith.constant 0 : index
    %c0_177 = arith.constant 0 : index
    %184 = vector.load %arg3[%c0_176, %c0_177] : memref<320x128xbf16, #tpu.memory_space<vmem>>, vector<320x128xbf16>
    %cst_178 = arith.constant dense<0.000000e+00> : vector<8x128xf32>
    %185 = tpu.matmul %183, %184, %cst_178 {dimension_numbers = #tpu.dot_dimension_numbers<[1], [0], [0], [1], [0, 0, 1, 1], [], []>} : vector<8x320xbf16>, vector<320x128xbf16>, vector<8x128xf32> -> vector<8x128xf32>
    %cst_179 = arith.constant 0.000000e+00 : f32
    %186 = vector.broadcast %cst_179 : f32 to vector<8x128xf32>
    %187 = arith.maximumf %185, %186 : vector<8x128xf32>
    %c0_180 = arith.constant 0 : index
    %c1024_181 = arith.constant 1024 : index
    %188 = vector.load %arg10[%c0_180, %c1024_181] : memref<8x1792xf32, #tpu.memory_space<vmem>>, vector<8x128xf32>
    tpu.vector_store %arg10[%c0_180, %c1024_181], %187 {strides = array<i32>} : memref<8x1792xf32, #tpu.memory_space<vmem>>, vector<8x128xf32>,
    %c0_182 = arith.constant 0 : index
    %c576_183 = arith.constant 576 : index
    %189 = vector.load %arg9[%c0_182, %c576_183] : memref<8x1152xf32, #tpu.memory_space<vmem>>, vector<8x320xf32>
    %190 = arith.truncf %189 : vector<8x320xf32> to vector<8x320xbf16>
    %c0_184 = arith.constant 0 : index
    %c0_185 = arith.constant 0 : index
    %191 = vector.load %arg3[%c0_184, %c0_185] : memref<320x128xbf16, #tpu.memory_space<vmem>>, vector<320x128xbf16>
    %cst_186 = arith.constant dense<0.000000e+00> : vector<8x128xf32>
    %192 = tpu.matmul %190, %191, %cst_186 {dimension_numbers = #tpu.dot_dimension_numbers<[1], [0], [0], [1], [0, 0, 1, 1], [], []>} : vector<8x320xbf16>, vector<320x128xbf16>, vector<8x128xf32> -> vector<8x128xf32>
    %cst_187 = arith.constant 0.000000e+00 : f32
    %193 = vector.broadcast %cst_187 : f32 to vector<8x128xf32>
    %194 = arith.maximumf %192, %193 : vector<8x128xf32>
    %c0_188 = arith.constant 0 : index
    %c1152 = arith.constant 1152 : index
    %195 = vector.load %arg10[%c0_188, %c1152] : memref<8x1792xf32, #tpu.memory_space<vmem>>, vector<8x128xf32>
    tpu.vector_store %arg10[%c0_188, %c1152], %194 {strides = array<i32>} : memref<8x1792xf32, #tpu.memory_space<vmem>>, vector<8x128xf32>,
    %c0_189 = arith.constant 0 : index
    %c640_190 = arith.constant 640 : index
    %196 = vector.load %arg9[%c0_189, %c640_190] : memref<8x1152xf32, #tpu.memory_space<vmem>>, vector<8x320xf32>
    %197 = arith.truncf %196 : vector<8x320xf32> to vector<8x320xbf16>
    %c0_191 = arith.constant 0 : index
    %c0_192 = arith.constant 0 : index
    %198 = vector.load %arg3[%c0_191, %c0_192] : memref<320x128xbf16, #tpu.memory_space<vmem>>, vector<320x128xbf16>
    %cst_193 = arith.constant dense<0.000000e+00> : vector<8x128xf32>
    %199 = tpu.matmul %197, %198, %cst_193 {dimension_numbers = #tpu.dot_dimension_numbers<[1], [0], [0], [1], [0, 0, 1, 1], [], []>} : vector<8x320xbf16>, vector<320x128xbf16>, vector<8x128xf32> -> vector<8x128xf32>
    %cst_194 = arith.constant 0.000000e+00 : f32
    %200 = vector.broadcast %cst_194 : f32 to vector<8x128xf32>
    %201 = arith.maximumf %199, %200 : vector<8x128xf32>
    %c0_195 = arith.constant 0 : index
    %c1280 = arith.constant 1280 : index
    %202 = vector.load %arg10[%c0_195, %c1280] : memref<8x1792xf32, #tpu.memory_space<vmem>>, vector<8x128xf32>
    tpu.vector_store %arg10[%c0_195, %c1280], %201 {strides = array<i32>} : memref<8x1792xf32, #tpu.memory_space<vmem>>, vector<8x128xf32>,
    %c0_196 = arith.constant 0 : index
    %c704_197 = arith.constant 704 : index
    %203 = vector.load %arg9[%c0_196, %c704_197] : memref<8x1152xf32, #tpu.memory_space<vmem>>, vector<8x320xf32>
    %204 = arith.truncf %203 : vector<8x320xf32> to vector<8x320xbf16>
    %c0_198 = arith.constant 0 : index
    %c0_199 = arith.constant 0 : index
    %205 = vector.load %arg3[%c0_198, %c0_199] : memref<320x128xbf16, #tpu.memory_space<vmem>>, vector<320x128xbf16>
    %cst_200 = arith.constant dense<0.000000e+00> : vector<8x128xf32>
    %206 = tpu.matmul %204, %205, %cst_200 {dimension_numbers = #tpu.dot_dimension_numbers<[1], [0], [0], [1], [0, 0, 1, 1], [], []>} : vector<8x320xbf16>, vector<320x128xbf16>, vector<8x128xf32> -> vector<8x128xf32>
    %cst_201 = arith.constant 0.000000e+00 : f32
    %207 = vector.broadcast %cst_201 : f32 to vector<8x128xf32>
    %208 = arith.maximumf %206, %207 : vector<8x128xf32>
    %c0_202 = arith.constant 0 : index
    %c1408 = arith.constant 1408 : index
    %209 = vector.load %arg10[%c0_202, %c1408] : memref<8x1792xf32, #tpu.memory_space<vmem>>, vector<8x128xf32>
    tpu.vector_store %arg10[%c0_202, %c1408], %208 {strides = array<i32>} : memref<8x1792xf32, #tpu.memory_space<vmem>>, vector<8x128xf32>,
    %c0_203 = arith.constant 0 : index
    %c768_204 = arith.constant 768 : index
    %210 = vector.load %arg9[%c0_203, %c768_204] : memref<8x1152xf32, #tpu.memory_space<vmem>>, vector<8x320xf32>
    %211 = arith.truncf %210 : vector<8x320xf32> to vector<8x320xbf16>
    %c0_205 = arith.constant 0 : index
    %c0_206 = arith.constant 0 : index
    %212 = vector.load %arg3[%c0_205, %c0_206] : memref<320x128xbf16, #tpu.memory_space<vmem>>, vector<320x128xbf16>
    %cst_207 = arith.constant dense<0.000000e+00> : vector<8x128xf32>
    %213 = tpu.matmul %211, %212, %cst_207 {dimension_numbers = #tpu.dot_dimension_numbers<[1], [0], [0], [1], [0, 0, 1, 1], [], []>} : vector<8x320xbf16>, vector<320x128xbf16>, vector<8x128xf32> -> vector<8x128xf32>
    %cst_208 = arith.constant 0.000000e+00 : f32
    %214 = vector.broadcast %cst_208 : f32 to vector<8x128xf32>
    %215 = arith.maximumf %213, %214 : vector<8x128xf32>
    %c0_209 = arith.constant 0 : index
    %c1536 = arith.constant 1536 : index
    %216 = vector.load %arg10[%c0_209, %c1536] : memref<8x1792xf32, #tpu.memory_space<vmem>>, vector<8x128xf32>
    tpu.vector_store %arg10[%c0_209, %c1536], %215 {strides = array<i32>} : memref<8x1792xf32, #tpu.memory_space<vmem>>, vector<8x128xf32>,
    %c0_210 = arith.constant 0 : index
    %c832_211 = arith.constant 832 : index
    %217 = vector.load %arg9[%c0_210, %c832_211] : memref<8x1152xf32, #tpu.memory_space<vmem>>, vector<8x320xf32>
    %218 = arith.truncf %217 : vector<8x320xf32> to vector<8x320xbf16>
    %c0_212 = arith.constant 0 : index
    %c0_213 = arith.constant 0 : index
    %219 = vector.load %arg3[%c0_212, %c0_213] : memref<320x128xbf16, #tpu.memory_space<vmem>>, vector<320x128xbf16>
    %cst_214 = arith.constant dense<0.000000e+00> : vector<8x128xf32>
    %220 = tpu.matmul %218, %219, %cst_214 {dimension_numbers = #tpu.dot_dimension_numbers<[1], [0], [0], [1], [0, 0, 1, 1], [], []>} : vector<8x320xbf16>, vector<320x128xbf16>, vector<8x128xf32> -> vector<8x128xf32>
    %cst_215 = arith.constant 0.000000e+00 : f32
    %221 = vector.broadcast %cst_215 : f32 to vector<8x128xf32>
    %222 = arith.maximumf %220, %221 : vector<8x128xf32>
    %c0_216 = arith.constant 0 : index
    %c1664 = arith.constant 1664 : index
    %223 = vector.load %arg10[%c0_216, %c1664] : memref<8x1792xf32, #tpu.memory_space<vmem>>, vector<8x128xf32>
    tpu.vector_store %arg10[%c0_216, %c1664], %222 {strides = array<i32>} : memref<8x1792xf32, #tpu.memory_space<vmem>>, vector<8x128xf32>,
    %c0_217 = arith.constant 0 : index
    %c0_218 = arith.constant 0 : index
    %224 = vector.load %arg10[%c0_217, %c0_218] : memref<8x1792xf32, #tpu.memory_space<vmem>>, vector<8x896xf32>
    %225 = arith.truncf %224 : vector<8x896xf32> to vector<8x896xbf16>
    %c0_219 = arith.constant 0 : index
    %c0_220 = arith.constant 0 : index
    %226 = vector.load %arg4[%c0_219, %c0_220] : memref<896x256xbf16, #tpu.memory_space<vmem>>, vector<896x256xbf16>
    %cst_221 = arith.constant dense<0.000000e+00> : vector<8x256xf32>
    %227 = tpu.matmul %225, %226, %cst_221 {dimension_numbers = #tpu.dot_dimension_numbers<[1], [0], [0], [1], [0, 0, 1, 1], [], []>} : vector<8x896xbf16>, vector<896x256xbf16>, vector<8x256xf32> -> vector<8x256xf32>
    %c0_222 = arith.constant 0 : index
    %c128_223 = arith.constant 128 : index
    %228 = vector.load %arg10[%c0_222, %c128_223] : memref<8x1792xf32, #tpu.memory_space<vmem>>, vector<8x896xf32>
    %229 = arith.truncf %228 : vector<8x896xf32> to vector<8x896xbf16>
    %c0_224 = arith.constant 0 : index
    %c0_225 = arith.constant 0 : index
    %230 = vector.load %arg4[%c0_224, %c0_225] : memref<896x256xbf16, #tpu.memory_space<vmem>>, vector<896x256xbf16>
    %cst_226 = arith.constant dense<0.000000e+00> : vector<8x256xf32>
    %231 = tpu.matmul %229, %230, %cst_226 {dimension_numbers = #tpu.dot_dimension_numbers<[1], [0], [0], [1], [0, 0, 1, 1], [], []>} : vector<8x896xbf16>, vector<896x256xbf16>, vector<8x256xf32> -> vector<8x256xf32>
    %cst_227 = arith.constant 0.000000e+00 : f32
    %232 = vector.broadcast %cst_227 : f32 to vector<8x256xf32>
    %233 = arith.maximumf %227, %232 : vector<8x256xf32>
    %cst_228 = arith.constant 0.000000e+00 : f32
    %234 = vector.broadcast %cst_228 : f32 to vector<8x256xf32>
    %235 = arith.maximumf %231, %234 : vector<8x256xf32>
    %236 = arith.maximumf %233, %235 : vector<8x256xf32>
    %237 = arith.truncf %236 : vector<8x256xf32> to vector<8x256xbf16>
    %c0_229 = arith.constant 0 : index
    %c0_230 = arith.constant 0 : index
    %c0_231 = arith.constant 0 : index
    %238 = vector.load %arg5[%c0_229, %c0_230, %c0_231] : memref<4x256x256xbf16, #tpu.memory_space<vmem>>, vector<1x256x256xbf16>
    %239 = vector.shape_cast %238 : vector<1x256x256xbf16> to vector<256x256xbf16>
    %cst_232 = arith.constant dense<0.000000e+00> : vector<8x256xf32>
    %240 = tpu.matmul %237, %239, %cst_232 {dimension_numbers = #tpu.dot_dimension_numbers<[1], [0], [0], [1], [0, 0, 1, 1], [], []>} : vector<8x256xbf16>, vector<256x256xbf16>, vector<8x256xf32> -> vector<8x256xf32>
    %c0_233 = arith.constant 0 : index
    %c256_234 = arith.constant 256 : index
    %241 = vector.load %arg10[%c0_233, %c256_234] : memref<8x1792xf32, #tpu.memory_space<vmem>>, vector<8x896xf32>
    %242 = arith.truncf %241 : vector<8x896xf32> to vector<8x896xbf16>
    %c0_235 = arith.constant 0 : index
    %c0_236 = arith.constant 0 : index
    %243 = vector.load %arg4[%c0_235, %c0_236] : memref<896x256xbf16, #tpu.memory_space<vmem>>, vector<896x256xbf16>
    %cst_237 = arith.constant dense<0.000000e+00> : vector<8x256xf32>
    %244 = tpu.matmul %242, %243, %cst_237 {dimension_numbers = #tpu.dot_dimension_numbers<[1], [0], [0], [1], [0, 0, 1, 1], [], []>} : vector<8x896xbf16>, vector<896x256xbf16>, vector<8x256xf32> -> vector<8x256xf32>
    %c0_238 = arith.constant 0 : index
    %c384_239 = arith.constant 384 : index
    %245 = vector.load %arg10[%c0_238, %c384_239] : memref<8x1792xf32, #tpu.memory_space<vmem>>, vector<8x896xf32>
    %246 = arith.truncf %245 : vector<8x896xf32> to vector<8x896xbf16>
    %c0_240 = arith.constant 0 : index
    %c0_241 = arith.constant 0 : index
    %247 = vector.load %arg4[%c0_240, %c0_241] : memref<896x256xbf16, #tpu.memory_space<vmem>>, vector<896x256xbf16>
    %cst_242 = arith.constant dense<0.000000e+00> : vector<8x256xf32>
    %248 = tpu.matmul %246, %247, %cst_242 {dimension_numbers = #tpu.dot_dimension_numbers<[1], [0], [0], [1], [0, 0, 1, 1], [], []>} : vector<8x896xbf16>, vector<896x256xbf16>, vector<8x256xf32> -> vector<8x256xf32>
    %cst_243 = arith.constant 0.000000e+00 : f32
    %249 = vector.broadcast %cst_243 : f32 to vector<8x256xf32>
    %250 = arith.maximumf %244, %249 : vector<8x256xf32>
    %cst_244 = arith.constant 0.000000e+00 : f32
    %251 = vector.broadcast %cst_244 : f32 to vector<8x256xf32>
    %252 = arith.maximumf %248, %251 : vector<8x256xf32>
    %253 = arith.maximumf %250, %252 : vector<8x256xf32>
    %254 = arith.truncf %253 : vector<8x256xf32> to vector<8x256xbf16>
    %c1 = arith.constant 1 : index
    %c0_245 = arith.constant 0 : index
    %c0_246 = arith.constant 0 : index
    %255 = vector.load %arg5[%c1, %c0_245, %c0_246] : memref<4x256x256xbf16, #tpu.memory_space<vmem>>, vector<1x256x256xbf16>
    %256 = vector.shape_cast %255 : vector<1x256x256xbf16> to vector<256x256xbf16>
    %cst_247 = arith.constant dense<0.000000e+00> : vector<8x256xf32>
    %257 = tpu.matmul %254, %256, %cst_247 {dimension_numbers = #tpu.dot_dimension_numbers<[1], [0], [0], [1], [0, 0, 1, 1], [], []>} : vector<8x256xbf16>, vector<256x256xbf16>, vector<8x256xf32> -> vector<8x256xf32>
    %258 = arith.addf %240, %257 : vector<8x256xf32>
    %c0_248 = arith.constant 0 : index
    %c512_249 = arith.constant 512 : index
    %259 = vector.load %arg10[%c0_248, %c512_249] : memref<8x1792xf32, #tpu.memory_space<vmem>>, vector<8x896xf32>
    %260 = arith.truncf %259 : vector<8x896xf32> to vector<8x896xbf16>
    %c0_250 = arith.constant 0 : index
    %c0_251 = arith.constant 0 : index
    %261 = vector.load %arg4[%c0_250, %c0_251] : memref<896x256xbf16, #tpu.memory_space<vmem>>, vector<896x256xbf16>
    %cst_252 = arith.constant dense<0.000000e+00> : vector<8x256xf32>
    %262 = tpu.matmul %260, %261, %cst_252 {dimension_numbers = #tpu.dot_dimension_numbers<[1], [0], [0], [1], [0, 0, 1, 1], [], []>} : vector<8x896xbf16>, vector<896x256xbf16>, vector<8x256xf32> -> vector<8x256xf32>
    %c0_253 = arith.constant 0 : index
    %c640_254 = arith.constant 640 : index
    %263 = vector.load %arg10[%c0_253, %c640_254] : memref<8x1792xf32, #tpu.memory_space<vmem>>, vector<8x896xf32>
    %264 = arith.truncf %263 : vector<8x896xf32> to vector<8x896xbf16>
    %c0_255 = arith.constant 0 : index
    %c0_256 = arith.constant 0 : index
    %265 = vector.load %arg4[%c0_255, %c0_256] : memref<896x256xbf16, #tpu.memory_space<vmem>>, vector<896x256xbf16>
    %cst_257 = arith.constant dense<0.000000e+00> : vector<8x256xf32>
    %266 = tpu.matmul %264, %265, %cst_257 {dimension_numbers = #tpu.dot_dimension_numbers<[1], [0], [0], [1], [0, 0, 1, 1], [], []>} : vector<8x896xbf16>, vector<896x256xbf16>, vector<8x256xf32> -> vector<8x256xf32>
    %cst_258 = arith.constant 0.000000e+00 : f32
    %267 = vector.broadcast %cst_258 : f32 to vector<8x256xf32>
    %268 = arith.maximumf %262, %267 : vector<8x256xf32>
    %cst_259 = arith.constant 0.000000e+00 : f32
    %269 = vector.broadcast %cst_259 : f32 to vector<8x256xf32>
    %270 = arith.maximumf %266, %269 : vector<8x256xf32>
    %271 = arith.maximumf %268, %270 : vector<8x256xf32>
    %272 = arith.truncf %271 : vector<8x256xf32> to vector<8x256xbf16>
    %c2 = arith.constant 2 : index
    %c0_260 = arith.constant 0 : index
    %c0_261 = arith.constant 0 : index
    %273 = vector.load %arg5[%c2, %c0_260, %c0_261] : memref<4x256x256xbf16, #tpu.memory_space<vmem>>, vector<1x256x256xbf16>
    %274 = vector.shape_cast %273 : vector<1x256x256xbf16> to vector<256x256xbf16>
    %cst_262 = arith.constant dense<0.000000e+00> : vector<8x256xf32>
    %275 = tpu.matmul %272, %274, %cst_262 {dimension_numbers = #tpu.dot_dimension_numbers<[1], [0], [0], [1], [0, 0, 1, 1], [], []>} : vector<8x256xbf16>, vector<256x256xbf16>, vector<8x256xf32> -> vector<8x256xf32>
    %276 = arith.addf %258, %275 : vector<8x256xf32>
    %c0_263 = arith.constant 0 : index
    %c768_264 = arith.constant 768 : index
    %277 = vector.load %arg10[%c0_263, %c768_264] : memref<8x1792xf32, #tpu.memory_space<vmem>>, vector<8x896xf32>
    %278 = arith.truncf %277 : vector<8x896xf32> to vector<8x896xbf16>
    %c0_265 = arith.constant 0 : index
    %c0_266 = arith.constant 0 : index
    %279 = vector.load %arg4[%c0_265, %c0_266] : memref<896x256xbf16, #tpu.memory_space<vmem>>, vector<896x256xbf16>
    %cst_267 = arith.constant dense<0.000000e+00> : vector<8x256xf32>
    %280 = tpu.matmul %278, %279, %cst_267 {dimension_numbers = #tpu.dot_dimension_numbers<[1], [0], [0], [1], [0, 0, 1, 1], [], []>} : vector<8x896xbf16>, vector<896x256xbf16>, vector<8x256xf32> -> vector<8x256xf32>
    %c0_268 = arith.constant 0 : index
    %c896_269 = arith.constant 896 : index
    %281 = vector.load %arg10[%c0_268, %c896_269] : memref<8x1792xf32, #tpu.memory_space<vmem>>, vector<8x896xf32>
    %282 = arith.truncf %281 : vector<8x896xf32> to vector<8x896xbf16>
    %c0_270 = arith.constant 0 : index
    %c0_271 = arith.constant 0 : index
    %283 = vector.load %arg4[%c0_270, %c0_271] : memref<896x256xbf16, #tpu.memory_space<vmem>>, vector<896x256xbf16>
    %cst_272 = arith.constant dense<0.000000e+00> : vector<8x256xf32>
    %284 = tpu.matmul %282, %283, %cst_272 {dimension_numbers = #tpu.dot_dimension_numbers<[1], [0], [0], [1], [0, 0, 1, 1], [], []>} : vector<8x896xbf16>, vector<896x256xbf16>, vector<8x256xf32> -> vector<8x256xf32>
    %cst_273 = arith.constant 0.000000e+00 : f32
    %285 = vector.broadcast %cst_273 : f32 to vector<8x256xf32>
    %286 = arith.maximumf %280, %285 : vector<8x256xf32>
    %cst_274 = arith.constant 0.000000e+00 : f32
    %287 = vector.broadcast %cst_274 : f32 to vector<8x256xf32>
    %288 = arith.maximumf %284, %287 : vector<8x256xf32>
    %289 = arith.maximumf %286, %288 : vector<8x256xf32>
    %290 = arith.truncf %289 : vector<8x256xf32> to vector<8x256xbf16>
    %c3 = arith.constant 3 : index
    %c0_275 = arith.constant 0 : index
    %c0_276 = arith.constant 0 : index
    %291 = vector.load %arg5[%c3, %c0_275, %c0_276] : memref<4x256x256xbf16, #tpu.memory_space<vmem>>, vector<1x256x256xbf16>
    %292 = vector.shape_cast %291 : vector<1x256x256xbf16> to vector<256x256xbf16>
    %cst_277 = arith.constant dense<0.000000e+00> : vector<8x256xf32>
    %293 = tpu.matmul %290, %292, %cst_277 {dimension_numbers = #tpu.dot_dimension_numbers<[1], [0], [0], [1], [0, 0, 1, 1], [], []>} : vector<8x256xbf16>, vector<256x256xbf16>, vector<8x256xf32> -> vector<8x256xf32>
    %294 = arith.addf %276, %293 : vector<8x256xf32>
    %cst_278 = arith.constant 0.000000e+00 : f32
    %295 = vector.broadcast %cst_278 : f32 to vector<8x256xf32>
    %296 = arith.maximumf %294, %295 : vector<8x256xf32>
    %297 = arith.truncf %296 : vector<8x256xf32> to vector<8x256xbf16>
    %c0_279 = arith.constant 0 : index
    %c0_280 = arith.constant 0 : index
    %298 = vector.load %arg6[%c0_279, %c0_280] : memref<256x128xbf16, #tpu.memory_space<vmem>>, vector<256x128xbf16>
    %cst_281 = arith.constant dense<0.000000e+00> : vector<8x128xf32>
    %299 = tpu.matmul %297, %298, %cst_281 {dimension_numbers = #tpu.dot_dimension_numbers<[1], [0], [0], [1], [0, 0, 1, 1], [], []>} : vector<8x256xbf16>, vector<256x128xbf16>, vector<8x128xf32> -> vector<8x128xf32>
    %cst_282 = arith.constant 0.000000e+00 : f32
    %300 = vector.broadcast %cst_282 : f32 to vector<8x128xf32>
    %301 = arith.maximumf %299, %300 : vector<8x128xf32>
    %c0_283 = arith.constant 0 : index
    %c0_284 = arith.constant 0 : index
    %302 = vector.load %arg7[%c0_283, %c0_284] : memref<1x128xf32, #tpu.memory_space<vmem>>, vector<1x128xf32>
    %303 = vector.broadcast %302 : vector<1x128xf32> to vector<8x128xf32>
    %304 = arith.mulf %301, %303 : vector<8x128xf32>
    %cst_285 = arith.constant dense<0.000000e+00> : vector<8xf32>
    %305 = vector.multi_reduction <add>, %304, %cst_285 [1] : vector<8x128xf32> to vector<8xf32>
    %306 = vector.shape_cast %305 : vector<8xf32> to vector<8x1xf32>
    %c0_286 = arith.constant 0 : index
    %c0_287 = arith.constant 0 : index
    %307 = vector.load %arg8[%c0_286, %c0_287] : memref<8x1xf32, #tpu.memory_space<vmem>>, vector<8x1xf32>
    tpu.vector_store %arg8[%c0_286, %c0_287], %306 {strides = array<i32>} : memref<8x1xf32, #tpu.memory_space<vmem>>, vector<8x1xf32>,
    return
  }
  func.func @transform_0(%arg0: i32) -> (i32, i32) {
    %c0_i32 = arith.constant 0 : i32
    %c0_i32_0 = arith.constant 0 : i32
    return %arg0, %c0_i32 : i32, i32
  }
  func.func @transform_1(%arg0: i32) -> (i32, i32) {
    %c0_i32 = arith.constant 0 : i32
    %c0_i32_0 = arith.constant 0 : i32
    %c0_i32_1 = arith.constant 0 : i32
    return %c0_i32, %c0_i32_0 : i32, i32
  }
  func.func @transform_2(%arg0: i32) -> (i32, i32) {
    %c0_i32 = arith.constant 0 : i32
    %c0_i32_0 = arith.constant 0 : i32
    %c0_i32_1 = arith.constant 0 : i32
    return %c0_i32, %c0_i32_0 : i32, i32
  }
  func.func @transform_3(%arg0: i32) -> (i32, i32) {
    %c0_i32 = arith.constant 0 : i32
    %c0_i32_0 = arith.constant 0 : i32
    %c0_i32_1 = arith.constant 0 : i32
    return %c0_i32, %c0_i32_0 : i32, i32
  }
  func.func @transform_4(%arg0: i32) -> (i32, i32, i32) {
    %c0_i32 = arith.constant 0 : i32
    %c0_i32_0 = arith.constant 0 : i32
    %c0_i32_1 = arith.constant 0 : i32
    %c0_i32_2 = arith.constant 0 : i32
    return %c0_i32, %c0_i32_0, %c0_i32_1 : i32, i32, i32
  }
  func.func @transform_5(%arg0: i32) -> (i32, i32) {
    %c0_i32 = arith.constant 0 : i32
    %c0_i32_0 = arith.constant 0 : i32
    %c0_i32_1 = arith.constant 0 : i32
    return %c0_i32, %c0_i32_0 : i32, i32
  }
  func.func @transform_6(%arg0: i32) -> (i32, i32) {
    %c0_i32 = arith.constant 0 : i32
    %c0_i32_0 = arith.constant 0 : i32
    %c0_i32_1 = arith.constant 0 : i32
    return %c0_i32, %c0_i32_0 : i32, i32
  }
  func.func @transform_7(%arg0: i32) -> (i32, i32) {
    %c0_i32 = arith.constant 0 : i32
    %c0_i32_0 = arith.constant 0 : i32
    return %arg0, %c0_i32 : i32, i32
  }
}

</mosaic_0001>

<llo_original>
// kernel: cnn_forward.1
$region0: #{cnn_forward.1}
  #allocation0 [shape = 'u32[]', space=smem, size = 0x4, offset = 0x4, fixed_abs, tag = 'smem constant byte address 0x4 - core index']
  #allocation1 [shape = 'u32[144,128]{1,0:T(1,128)}', space=vmem, size = 0x12000, scoped, tag = 'internal scratch']
  #allocation2 [shape = 'f32[8,1152]{1,0:T(8,128)}', space=vmem, size = 0x9000, scoped, tag = 'scratch operand']
  #allocation3 [shape = 'f32[8,1792]{1,0:T(8,128)}', space=vmem, size = 0xe000, scoped, tag = 'scratch operand']
  %s0 = inlined_call_operand.vmem [shape: f32[8,160], index: 0, kind: input, shape index: {}]
  %s1 = inlined_call_operand.vmem [shape: bf16[24,64], index: 1, kind: input, shape index: {}]
  %s2 = inlined_call_operand.hbm [shape: bf16[320,128], index: 2, kind: input, shape index: {}]
  %s3 = inlined_call_operand.hbm [shape: bf16[896,256], index: 3, kind: input, shape index: {}]
  %s4 = inlined_call_operand.hbm [shape: bf16[4,256,256], index: 4, kind: input, shape index: {}]
  %s5 = inlined_call_operand.vmem [shape: bf16[256,128], index: 5, kind: input, shape index: {}]
  %s6 = inlined_call_operand.vmem [shape: f32[1,128], index: 6, kind: input, shape index: {}]
  %s7 = inlined_call_operand.vmem [shape: f32[8,1], index: 7, kind: output, shape index: {}]
  %s8 = sld [smem:[#allocation0]]
  $region50: #{cnn_forward.1} parent=0
    _
  %s10 = ssub.s32 1, %s8
  %s11 = scalar_select 0, %s10, %s8
  $region1: #{cnn_forward.1} parent=0
    #allocation4 [shape = 'u8[81920]{0}', space=vmem, size = 0x14000, scoped, tag = 'input window, operand 2, single buffered']
    #allocation5 [shape = 's32[1]{0}', space=sflag, size = 0x4, scoped, tag = 'scoped memory for cnn_forward.1']
    #allocation6 [shape = 'u8[458752]{0}', space=vmem, size = 0x70000, scoped, tag = 'input window, operand 3, single buffered']
    #allocation7 [shape = 's32[1]{0}', space=sflag, size = 0x4, scoped, tag = 'scoped memory for cnn_forward.1']
    #allocation8 [shape = 'u8[524288]{0}', space=vmem, size = 0x80000, scoped, tag = 'input window, operand 4, single buffered']
    %12 = vsyncpa [#allocation5], 0
    %13 = vsyncpa [#allocation7], 0
    // Predicated region
    $region2: #{cnn_forward.1} parent=1 // pred_check
      _
    $region3: #{cnn_forward.1} parent=1 // pred_check_branch
      %15 = sbr.rel (0) target = $region5
    $region4: #{cnn_forward.1} parent=1 // pred_region
      _
    $region5: #{cnn_forward.1} parent=1 // pred_fallthru
      _
    // Predicated region
    $region6: #{cnn_forward.1} parent=1 // pred_check
      _
    $region7: #{cnn_forward.1} parent=1 // pred_check_branch
      %17 = sbr.rel (0) target = $region9
    $region8: #{cnn_forward.1} parent=1 // pred_region
      _
    $region9: #{cnn_forward.1} parent=1 // pred_fallthru
      _
    // Predicated region
    $region10: #{cnn_forward.1} parent=1 // pred_check
      _
    $region11: #{cnn_forward.1} parent=1 // pred_check_branch
      %19 = sbr.rel (0) target = $region13
    $region12: #{cnn_forward.1} parent=1 // pred_region
      %s21 = ssub.s32 2560, 2560
      %22 = vsyncadd [#allocation5], %s21
      %s23 = sshll.u32 [#allocation4], 4
      %s24 = int_to_ptr.vmem [resolvable:$true] %s23
      %29 = dma.hbm_to_vmem [thread:$0]  %s2, 2560, %s24, [#allocation5], 64, 64, 4
    $region13: #{cnn_forward.1} parent=1 // pred_fallthru
      _
    // Predicated region
    $region14: #{cnn_forward.1} parent=1 // pred_check
      _
    $region15: #{cnn_forward.1} parent=1 // pred_check_branch
      %31 = sbr.rel (0) target = $region17
    $region16: #{cnn_forward.1} parent=1 // pred_region
      %s33 = ssub.s32 14336, 14336
      %34 = vsyncadd [#allocation7], %s33
      %s35 = sshll.u32 [#allocation6], 4
      %s36 = int_to_ptr.vmem [resolvable:$true] %s35
      %41 = dma.hbm_to_vmem [thread:$0]  %s3, 14336, %s36, [#allocation7], 128, 128, 8
    $region17: #{cnn_forward.1} parent=1 // pred_fallthru
      _
    // Predicated region
    $region18: #{cnn_forward.1} parent=1 // pred_check
      _
    $region19: #{cnn_forward.1} parent=1 // pred_check_branch
      %43 = sbr.rel (0) target = $region21
    $region20: #{cnn_forward.1} parent=1 // pred_region
      %s45 = ssub.s32 16384, 16384
      %46 = vsyncadd [#allocation7], %s45
      %s47 = sshll.u32 [#allocation8], 4
      %s48 = int_to_ptr.vmem [resolvable:$true] %s47
      %53 = dma.hbm_to_vmem [thread:$0]  %s4, 16384, %s48, [#allocation7], 128, 128, 8
    $region21: #{cnn_forward.1} parent=1 // pred_fallthru
      _
    // Predicated region
    $region22: #{cnn_forward.1} parent=1 // pred_check
      _
    $region23: #{cnn_forward.1} parent=1 // pred_check_branch
      %55 = sbr.rel (0) target = $region25
    $region24: #{cnn_forward.1} parent=1 // pred_region
      _
    $region25: #{cnn_forward.1} parent=1 // pred_fallthru
      _
    // Predicated region
    $region26: #{cnn_forward.1} parent=1 // pred_check
      _
    $region27: #{cnn_forward.1} parent=1 // pred_check_branch
      %57 = sbr.rel (0) target = $region29
    $region28: #{cnn_forward.1} parent=1 // pred_region
      _
    $region29: #{cnn_forward.1} parent=1 // pred_fallthru
      _
    // Predicated region
    $region30: #{cnn_forward.1} parent=1 // pred_check
      _
    $region31: #{cnn_forward.1} parent=1 // pred_check_branch
      %59 = sbr.rel (0) target = $region33
    $region32: #{cnn_forward.1} parent=1 // pred_region
      %60 = dma.done [#allocation5], 2560
    $region33: #{cnn_forward.1} parent=1 // pred_fallthru
      _
    // Predicated region
    $region34: #{cnn_forward.1} parent=1 // pred_check
      _
    $region35: #{cnn_forward.1} parent=1 // pred_check_branch
      %62 = sbr.rel (0) target = $region37
    $region36: #{cnn_forward.1} parent=1 // pred_region
      %63 = dma.done [#allocation7], 14336
    $region37: #{cnn_forward.1} parent=1 // pred_fallthru
      _
    // Predicated region
    $region38: #{cnn_forward.1} parent=1 // pred_check
      _
    $region39: #{cnn_forward.1} parent=1 // pred_check_branch
      %65 = sbr.rel (0) target = $region41
    $region40: #{cnn_forward.1} parent=1 // pred_region
      %66 = dma.done [#allocation7], 16384
    $region41: #{cnn_forward.1} parent=1 // pred_fallthru
      _
    %v68 = vld [vmem:[%s0] sm:$0xff]
    %v69 = vpack.c.bf16 %v68, %v68
    %v70 = vld [vmem:[%s1] sm:$0xf]
    %v71 = vld [vmem:[%s1 + $0x4] sm:$0xf]
    %v72 = vld [vmem:[%s1 + $0x8] sm:$0xf]
    %v76 = vunpack.c.l.b16 %v70
    %v77 = vunpack.c.l.b16 %v71
    %v78 = vunpack.c.l.b16 %v72
    %v79 = vpack.c.b16 %v77, %v76
    %v80 = vpack.c.b16 %v78, %v78
    %vm82 = vcmask 195584
    %v84 = vsel %vm82, %v69, 0
    %vm86 = vcmask 1043456
    %v88 = vsel %vm86, %v80, 0
    %90 = vmatprep.subr.bf16.mxu0 0
    %91 = vmatpush1.bf16.msra.mxu0 %v79
    %92 = vmatprep.subr.bf16.mxu0 0
    %93 = vmatpush1.bf16.msra.mxu0 %v88
    %94 = vmatprep.subr.bf16.mxu0 0
    %95 = vmatpush1.bf16.msra.mxu0 0
    %96 = vmatprep.subr.bf16.mxu0 0
    %97 = vmatpush1.bf16.msra.mxu0 0
    %98 = vmatprep.subr.bf16.mxu0 0
    %99 = vmatpush1.bf16.msra.mxu0 0
    %100 = vmatprep.subr.bf16.mxu0 0
    %101 = vmatpush1.bf16.msra.mxu0 0
    %102 = vmatprep.subr.bf16.mxu0 0
    %103 = vmatpush1.bf16.msra.mxu0 0
    %104 = vmatprep.subr.bf16.mxu0 0
    %105 = vmatpush1.bf16.msra.mxu0 0
    %106 = vmatprep.subr.bf16.mxu0 0
    %107 = vmatpush1.bf16.msra.mxu0 0
    %108 = vmatprep.subr.bf16.mxu0 0
    %109 = vmatpush1.bf16.msra.mxu0 0
    %110 = vmatprep.subr.bf16.mxu0 0
    %111 = vmatpush1.bf16.msra.mxu0 0
    %112 = vmatprep.subr.bf16.mxu0 0
    %113 = vmatpush1.bf16.msra.mxu0 0
    %114 = vmatprep.subr.bf16.mxu0 0
    %115 = vmatpush1.bf16.msra.mxu0 0
    %116 = vmatprep.subr.bf16.mxu0 0
    %117 = vmatpush1.bf16.msra.mxu0 0
    %118 = vmatprep.subr.bf16.mxu0 0
    %119 = vmatpush1.bf16.msra.mxu0 0
    %120 = vmatprep.subr.bf16.mxu0 0
    %121 = vmatpush1.bf16.msra.mxu0 0
    %122 = vmatprep.mubr.bf16.mxu0 0
    %123 = vmatmul.mubr.bf16.gmra.mrb[0].mxu0 %v84
    %v124 = vpop.f32.mrb[0].mxu0
    %v125 = vadd.f32 0.0, %v124
    %v126 = vpop.f32.mrb[0].mxu0
    %v127 = vpop.f32.mrb[0].mxu0
    %v128 = vpop.f32.mrb[0].mxu0
    %129 = vdwg.mxu0
    %v130 = vmax.f32 %v125, 0.0
    %vm131 = vcmask 523264
    %132 = vst.msk [vmem:[#allocation2] sm:$0xff] %vm131, %v130
    %v133 = vld [vmem:[%s0] sm:$0xff]
    %v134 = vpack.c.bf16 %v133, %v133
    %v135 = vld [vmem:[%s1] sm:$0xf]
    %v136 = vld [vmem:[%s1 + $0x4] sm:$0xf]
    %v137 = vld [vmem:[%s1 + $0x8] sm:$0xf]
    %139 = vrot.lane.b32.xlu0 %v134, 120
    %v140 = vpop.permute.xlu0 %139
    %v144 = vunpack.c.l.b16 %v135
    %v145 = vunpack.c.l.b16 %v136
    %v146 = vunpack.c.l.b16 %v137
    %v147 = vpack.c.b16 %v145, %v144
    %v148 = vpack.c.b16 %v146, %v146
    %v151 = vsel %vm82, %v140, 0
    %v154 = vsel %vm86, %v148, 0
    %156 = vmatprep.subr.bf16.mxu0 0
    %157 = vmatpush1.bf16.msra.mxu0 %v147
    %158 = vmatprep.subr.bf16.mxu0 0
    %159 = vmatpush1.bf16.msra.mxu0 %v154
    %160 = vmatprep.subr.bf16.mxu0 0
    %161 = vmatpush1.bf16.msra.mxu0 0
    %162 = vmatprep.subr.bf16.mxu0 0
    %163 = vmatpush1.bf16.msra.mxu0 0
    %164 = vmatprep.subr.bf16.mxu0 0
    %165 = vmatpush1.bf16.msra.mxu0 0
    %166 = vmatprep.subr.bf16.mxu0 0
    %167 = vmatpush1.bf16.msra.mxu0 0
    %168 = vmatprep.subr.bf16.mxu0 0
    %169 = vmatpush1.bf16.msra.mxu0 0
    %170 = vmatprep.subr.bf16.mxu0 0
    %171 = vmatpush1.bf16.msra.mxu0 0
    %172 = vmatprep.subr.bf16.mxu0 0
    %173 = vmatpush1.bf16.msra.mxu0 0
    %174 = vmatprep.subr.bf16.mxu0 0
    %175 = vmatpush1.bf16.msra.mxu0 0
    %176 = vmatprep.subr.bf16.mxu0 0
    %177 = vmatpush1.bf16.msra.mxu0 0
    %178 = vmatprep.subr.bf16.mxu0 0
    %179 = vmatpush1.bf16.msra.mxu0 0
    %180 = vmatprep.subr.bf16.mxu0 0
    %181 = vmatpush1.bf16.msra.mxu0 0
    %182 = vmatprep.subr.bf16.mxu0 0
    %183 = vmatpush1.bf16.msra.mxu0 0
    %184 = vmatprep.subr.bf16.mxu0 0
    %185 = vmatpush1.bf16.msra.mxu0 0
    %186 = vmatprep.subr.bf16.mxu0 0
    %187 = vmatpush1.bf16.msra.mxu0 0
    %188 = vmatprep.mubr.bf16.mxu0 0
    %189 = vmatmul.mubr.bf16.gmra.mrb[0].mxu0 %v151
    %v190 = vpop.f32.mrb[0].mxu0
    %v191 = vadd.f32 0.0, %v190
    %v192 = vpop.f32.mrb[0].mxu0
    %v193 = vpop.f32.mrb[0].mxu0
    %v194 = vpop.f32.mrb[0].mxu0
    %195 = vdwg.mxu0
    %v196 = vmax.f32 %v191, 0.0
    %198 = vrot.lane.b32.xlu0 %v196, 64
    %v199 = vpop.permute.xlu0 %198
    %vm201 = vcmask 1048064
    %202 = vst.msk [vmem:[#allocation2] sm:$0xff] %vm201, %v199
    %v203 = vld [vmem:[%s0] sm:$0xff]
    %v204 = vpack.c.bf16 %v203, %v203
    %v205 = vld [vmem:[%s1] sm:$0xf]
    %v206 = vld [vmem:[%s1 + $0x4] sm:$0xf]
    %v207 = vld [vmem:[%s1 + $0x8] sm:$0xf]
    %209 = vrot.lane.b32.xlu0 %v204, 112
    %v210 = vpop.permute.xlu0 %209
    %v214 = vunpack.c.l.b16 %v205
    %v215 = vunpack.c.l.b16 %v206
    %v216 = vunpack.c.l.b16 %v207
    %v217 = vpack.c.b16 %v215, %v214
    %v218 = vpack.c.b16 %v216, %v216
    %v221 = vsel %vm82, %v210, 0
    %v224 = vsel %vm86, %v218, 0
    %226 = vmatprep.subr.bf16.mxu0 0
    %227 = vmatpush1.bf16.msra.mxu0 %v217
    %228 = vmatprep.subr.bf16.mxu0 0
    %229 = vmatpush1.bf16.msra.mxu0 %v224
    %230 = vmatprep.subr.bf16.mxu0 0
    %231 = vmatpush1.bf16.msra.mxu0 0
    %232 = vmatprep.subr.bf16.mxu0 0
    %233 = vmatpush1.bf16.msra.mxu0 0
    %234 = vmatprep.subr.bf16.mxu0 0
    %235 = vmatpush1.bf16.msra.mxu0 0
    %236 = vmatprep.subr.bf16.mxu0 0
    %237 = vmatpush1.bf16.msra.mxu0 0
    %238 = vmatprep.subr.bf16.mxu0 0
    %239 = vmatpush1.bf16.msra.mxu0 0
    %240 = vmatprep.subr.bf16.mxu0 0
    %241 = vmatpush1.bf16.msra.mxu0 0
    %242 = vmatprep.subr.bf16.mxu0 0
    %243 = vmatpush1.bf16.msra.mxu0 0
    %244 = vmatprep.subr.bf16.mxu0 0
    %245 = vmatpush1.bf16.msra.mxu0 0
    %246 = vmatprep.subr.bf16.mxu0 0
    %247 = vmatpush1.bf16.msra.mxu0 0
    %248 = vmatprep.subr.bf16.mxu0 0
    %249 = vmatpush1.bf16.msra.mxu0 0
    %250 = vmatprep.subr.bf16.mxu0 0
    %251 = vmatpush1.bf16.msra.mxu0 0
    %252 = vmatprep.subr.bf16.mxu0 0
    %253 = vmatpush1.bf16.msra.mxu0 0
    %254 = vmatprep.subr.bf16.mxu0 0
    %255 = vmatpush1.bf16.msra.mxu0 0
    %256 = vmatprep.subr.bf16.mxu0 0
    %257 = vmatpush1.bf16.msra.mxu0 0
    %258 = vmatprep.mubr.bf16.mxu0 0
    %259 = vmatmul.mubr.bf16.gmra.mrb[0].mxu0 %v221
    %v260 = vpop.f32.mrb[0].mxu0
    %v261 = vadd.f32 0.0, %v260
    %v262 = vpop.f32.mrb[0].mxu0
    %v263 = vpop.f32.mrb[0].mxu0
    %v264 = vpop.f32.mrb[0].mxu0
    %265 = vdwg.mxu0
    %v266 = vmax.f32 %v261, 0.0
    %267 = vst.msk [vmem:[#allocation2 + $0x8] sm:$0xff] %vm131, %v266
    %v268 = vld [vmem:[%s0] sm:$0xff]
    %v269 = vpack.c.bf16 %v268, %v268
    %v270 = vld [vmem:[%s1] sm:$0xf]
    %v271 = vld [vmem:[%s1 + $0x4] sm:$0xf]
    %v272 = vld [vmem:[%s1 + $0x8] sm:$0xf]
    %274 = vrot.lane.b32.xlu0 %v269, 104
    %v275 = vpop.permute.xlu0 %274
    %v279 = vunpack.c.l.b16 %v270
    %v280 = vunpack.c.l.b16 %v271
    %v281 = vunpack.c.l.b16 %v272
    %v282 = vpack.c.b16 %v280, %v279
    %v283 = vpack.c.b16 %v281, %v281
    %v286 = vsel %vm82, %v275, 0
    %v289 = vsel %vm86, %v283, 0
    %291 = vmatprep.subr.bf16.mxu0 0
    %292 = vmatpush1.bf16.msra.mxu0 %v282
    %293 = vmatprep.subr.bf16.mxu0 0
    %294 = vmatpush1.bf16.msra.mxu0 %v289
    %295 = vmatprep.subr.bf16.mxu0 0
    %296 = vmatpush1.bf16.msra.mxu0 0
    %297 = vmatprep.subr.bf16.mxu0 0
    %298 = vmatpush1.bf16.msra.mxu0 0
    %299 = vmatprep.subr.bf16.mxu0 0
    %300 = vmatpush1.bf16.msra.mxu0 0
    %301 = vmatprep.subr.bf16.mxu0 0
    %302 = vmatpush1.bf16.msra.mxu0 0
    %303 = vmatprep.subr.bf16.mxu0 0
    %304 = vmatpush1.bf16.msra.mxu0 0
    %305 = vmatprep.subr.bf16.mxu0 0
    %306 = vmatpush1.bf16.msra.mxu0 0
    %307 = vmatprep.subr.bf16.mxu0 0
    %308 = vmatpush1.bf16.msra.mxu0 0
    %309 = vmatprep.subr.bf16.mxu0 0
    %310 = vmatpush1.bf16.msra.mxu0 0
    %311 = vmatprep.subr.bf16.mxu0 0
    %312 = vmatpush1.bf16.msra.mxu0 0
    %313 = vmatprep.subr.bf16.mxu0 0
    %314 = vmatpush1.bf16.msra.mxu0 0
    %315 = vmatprep.subr.bf16.mxu0 0
    %316 = vmatpush1.bf16.msra.mxu0 0
    %317 = vmatprep.subr.bf16.mxu0 0
    %318 = vmatpush1.bf16.msra.mxu0 0
    %319 = vmatprep.subr.bf16.mxu0 0
    %320 = vmatpush1.bf16.msra.mxu0 0
    %321 = vmatprep.subr.bf16.mxu0 0
    %322 = vmatpush1.bf16.msra.mxu0 0
    %323 = vmatprep.mubr.bf16.mxu0 0
    %324 = vmatmul.mubr.bf16.gmra.mrb[0].mxu0 %v286
    %v325 = vpop.f32.mrb[0].mxu0
    %v326 = vadd.f32 0.0, %v325
    %v327 = vpop.f32.mrb[0].mxu0
    %v328 = vpop.f32.mrb[0].mxu0
    %v329 = vpop.f32.mrb[0].mxu0
    %330 = vdwg.mxu0
    %v331 = vmax.f32 %v326, 0.0
    %333 = vrot.lane.b32.xlu0 %v331, 64
    %v334 = vpop.permute.xlu0 %333
    %336 = vst.msk [vmem:[#allocation2 + $0x8] sm:$0xff] %vm201, %v334
    %v337 = vld [vmem:[%s0] sm:$0xff]
    %v338 = vpack.c.bf16 %v337, %v337
    %v339 = vld [vmem:[%s1] sm:$0xf]
    %v340 = vld [vmem:[%s1 + $0x4] sm:$0xf]
    %v341 = vld [vmem:[%s1 + $0x8] sm:$0xf]
    %343 = vrot.lane.b32.xlu0 %v338, 96
    %v344 = vpop.permute.xlu0 %343
    %v348 = vunpack.c.l.b16 %v339
    %v349 = vunpack.c.l.b16 %v340
    %v350 = vunpack.c.l.b16 %v341
    %v351 = vpack.c.b16 %v349, %v348
    %v352 = vpack.c.b16 %v350, %v350
    %v355 = vsel %vm82, %v344, 0
    %v358 = vsel %vm86, %v352, 0
    %360 = vmatprep.subr.bf16.mxu0 0
    %361 = vmatpush1.bf16.msra.mxu0 %v351
    %362 = vmatprep.subr.bf16.mxu0 0
    %363 = vmatpush1.bf16.msra.mxu0 %v358
    %364 = vmatprep.subr.bf16.mxu0 0
    %365 = vmatpush1.bf16.msra.mxu0 0
    %366 = vmatprep.subr.bf16.mxu0 0
    %367 = vmatpush1.bf16.msra.mxu0 0
    %368 = vmatprep.subr.bf16.mxu0 0
    %369 = vmatpush1.bf16.msra.mxu0 0
    %370 = vmatprep.subr.bf16.mxu0 0
    %371 = vmatpush1.bf16.msra.mxu0 0
    %372 = vmatprep.subr.bf16.mxu0 0
    %373 = vmatpush1.bf16.msra.mxu0 0
    %374 = vmatprep.subr.bf16.mxu0 0
    %375 = vmatpush1.bf16.msra.mxu0 0
    %376 = vmatprep.subr.bf16.mxu0 0
    %377 = vmatpush1.bf16.msra.mxu0 0
    %378 = vmatprep.subr.bf16.mxu0 0
    %379 = vmatpush1.bf16.msra.mxu0 0
    %380 = vmatprep.subr.bf16.mxu0 0
    %381 = vmatpush1.bf16.msra.mxu0 0
    %382 = vmatprep.subr.bf16.mxu0 0
    %383 = vmatpush1.bf16.msra.mxu0 0
    %384 = vmatprep.subr.bf16.mxu0 0
    %385 = vmatpush1.bf16.msra.mxu0 0
    %386 = vmatprep.subr.bf16.mxu0 0
    %387 = vmatpush1.bf16.msra.mxu0 0
    %388 = vmatprep.subr.bf16.mxu0 0
    %389 = vmatpush1.bf16.msra.mxu0 0
    %390 = vmatprep.subr.bf16.mxu0 0
    %391 = vmatpush1.bf16.msra.mxu0 0
    %392 = vmatprep.mubr.bf16.mxu0 0
    %393 = vmatmul.mubr.bf16.gmra.mrb[0].mxu0 %v355
    %v394 = vpop.f32.mrb[0].mxu0
    %v395 = vadd.f32 0.0, %v394
    %v396 = vpop.f32.mrb[0].mxu0
    %v397 = vpop.f32.mrb[0].mxu0
    %v398 = vpop.f32.mrb[0].mxu0
    %399 = vdwg.mxu0
    %v400 = vmax.f32 %v395, 0.0
    %401 = vst.msk [vmem:[#allocation2 + $0x10] sm:$0xff] %vm131, %v400
    %v402 = vld [vmem:[%s0] sm:$0xff]
    %v403 = vpack.c.bf16 %v402, %v402
    %v404 = vld [vmem:[%s1] sm:$0xf]
    %v405 = vld [vmem:[%s1 + $0x4] sm:$0xf]
    %v406 = vld [vmem:[%s1 + $0x8] sm:$0xf]
    %408 = vrot.lane.b32.xlu0 %v403, 88
    %v409 = vpop.permute.xlu0 %408
    %v413 = vunpack.c.l.b16 %v404
    %v414 = vunpack.c.l.b16 %v405
    %v415 = vunpack.c.l.b16 %v406
    %v416 = vpack.c.b16 %v414, %v413
    %v417 = vpack.c.b16 %v415, %v415
    %v420 = vsel %vm82, %v409, 0
    %v423 = vsel %vm86, %v417, 0
    %425 = vmatprep.subr.bf16.mxu0 0
    %426 = vmatpush1.bf16.msra.mxu0 %v416
    %427 = vmatprep.subr.bf16.mxu0 0
    %428 = vmatpush1.bf16.msra.mxu0 %v423
    %429 = vmatprep.subr.bf16.mxu0 0
    %430 = vmatpush1.bf16.msra.mxu0 0
    %431 = vmatprep.subr.bf16.mxu0 0
    %432 = vmatpush1.bf16.msra.mxu0 0
    %433 = vmatprep.subr.bf16.mxu0 0
    %434 = vmatpush1.bf16.msra.mxu0 0
    %435 = vmatprep.subr.bf16.mxu0 0
    %436 = vmatpush1.bf16.msra.mxu0 0
    %437 = vmatprep.subr.bf16.mxu0 0
    %438 = vmatpush1.bf16.msra.mxu0 0
    %439 = vmatprep.subr.bf16.mxu0 0
    %440 = vmatpush1.bf16.msra.mxu0 0
    %441 = vmatprep.subr.bf16.mxu0 0
    %442 = vmatpush1.bf16.msra.mxu0 0
    %443 = vmatprep.subr.bf16.mxu0 0
    %444 = vmatpush1.bf16.msra.mxu0 0
    %445 = vmatprep.subr.bf16.mxu0 0
    %446 = vmatpush1.bf16.msra.mxu0 0
    %447 = vmatprep.subr.bf16.mxu0 0
    %448 = vmatpush1.bf16.msra.mxu0 0
    %449 = vmatprep.subr.bf16.mxu0 0
    %450 = vmatpush1.bf16.msra.mxu0 0
    %451 = vmatprep.subr.bf16.mxu0 0
    %452 = vmatpush1.bf16.msra.mxu0 0
    %453 = vmatprep.subr.bf16.mxu0 0
    %454 = vmatpush1.bf16.msra.mxu0 0
    %455 = vmatprep.subr.bf16.mxu0 0
    %456 = vmatpush1.bf16.msra.mxu0 0
    %457 = vmatprep.mubr.bf16.mxu0 0
    %458 = vmatmul.mubr.bf16.gmra.mrb[0].mxu0 %v420
    %v459 = vpop.f32.mrb[0].mxu0
    %v460 = vadd.f32 0.0, %v459
    %v461 = vpop.f32.mrb[0].mxu0
    %v462 = vpop.f32.mrb[0].mxu0
    %v463 = vpop.f32.mrb[0].mxu0
    %464 = vdwg.mxu0
    %v465 = vmax.f32 %v460, 0.0
    %467 = vrot.lane.b32.xlu0 %v465, 64
    %v468 = vpop.permute.xlu0 %467
    %470 = vst.msk [vmem:[#allocation2 + $0x10] sm:$0xff] %vm201, %v468
    %v471 = vld [vmem:[%s0] sm:$0xff]
    %v472 = vpack.c.bf16 %v471, %v471
    %v473 = vld [vmem:[%s1] sm:$0xf]
    %v474 = vld [vmem:[%s1 + $0x4] sm:$0xf]
    %v475 = vld [vmem:[%s1 + $0x8] sm:$0xf]
    %477 = vrot.lane.b32.xlu0 %v472, 80
    %v478 = vpop.permute.xlu0 %477
    %v482 = vunpack.c.l.b16 %v473
    %v483 = vunpack.c.l.b16 %v474
    %v484 = vunpack.c.l.b16 %v475
    %v485 = vpack.c.b16 %v483, %v482
    %v486 = vpack.c.b16 %v484, %v484
    %v489 = vsel %vm82, %v478, 0
    %v492 = vsel %vm86, %v486, 0
    %494 = vmatprep.subr.bf16.mxu0 0
    %495 = vmatpush1.bf16.msra.mxu0 %v485
    %496 = vmatprep.subr.bf16.mxu0 0
    %497 = vmatpush1.bf16.msra.mxu0 %v492
    %498 = vmatprep.subr.bf16.mxu0 0
    %499 = vmatpush1.bf16.msra.mxu0 0
    %500 = vmatprep.subr.bf16.mxu0 0
    %501 = vmatpush1.bf16.msra.mxu0 0
    %502 = vmatprep.subr.bf16.mxu0 0
    %503 = vmatpush1.bf16.msra.mxu0 0
    %504 = vmatprep.subr.bf16.mxu0 0
    %505 = vmatpush1.bf16.msra.mxu0 0
    %506 = vmatprep.subr.bf16.mxu0 0
    %507 = vmatpush1.bf16.msra.mxu0 0
    %508 = vmatprep.subr.bf16.mxu0 0
    %509 = vmatpush1.bf16.msra.mxu0 0
    %510 = vmatprep.subr.bf16.mxu0 0
    %511 = vmatpush1.bf16.msra.mxu0 0
    %512 = vmatprep.subr.bf16.mxu0 0
    %513 = vmatpush1.bf16.msra.mxu0 0
    %514 = vmatprep.subr.bf16.mxu0 0
    %515 = vmatpush1.bf16.msra.mxu0 0
    %516 = vmatprep.subr.bf16.mxu0 0
    %517 = vmatpush1.bf16.msra.mxu0 0
    %518 = vmatprep.subr.bf16.mxu0 0
    %519 = vmatpush1.bf16.msra.mxu0 0
    %520 = vmatprep.subr.bf16.mxu0 0
    %521 = vmatpush1.bf16.msra.mxu0 0
    %522 = vmatprep.subr.bf16.mxu0 0
    %523 = vmatpush1.bf16.msra.mxu0 0
    %524 = vmatprep.subr.bf16.mxu0 0
    %525 = vmatpush1.bf16.msra.mxu0 0
    %526 = vmatprep.mubr.bf16.mxu0 0
    %527 = vmatmul.mubr.bf16.gmra.mrb[0].mxu0 %v489
    %v528 = vpop.f32.mrb[0].mxu0
    %v529 = vadd.f32 0.0, %v528
    %v530 = vpop.f32.mrb[0].mxu0
    %v531 = vpop.f32.mrb[0].mxu0
    %v532 = vpop.f32.mrb[0].mxu0
    %533 = vdwg.mxu0
    %v534 = vmax.f32 %v529, 0.0
    %535 = vst.msk [vmem:[#allocation2 + $0x18] sm:$0xff] %vm131, %v534
    %v536 = vld [vmem:[%s0] sm:$0xff]
    %v537 = vpack.c.bf16 %v536, %v536
    %v538 = vld [vmem:[%s1] sm:$0xf]
    %v539 = vld [vmem:[%s1 + $0x4] sm:$0xf]
    %v540 = vld [vmem:[%s1 + $0x8] sm:$0xf]
    %542 = vrot.lane.b32.xlu0 %v537, 72
    %v543 = vpop.permute.xlu0 %542
    %v547 = vunpack.c.l.b16 %v538
    %v548 = vunpack.c.l.b16 %v539
    %v549 = vunpack.c.l.b16 %v540
    %v550 = vpack.c.b16 %v548, %v547
    %v551 = vpack.c.b16 %v549, %v549
    %v554 = vsel %vm82, %v543, 0
    %v557 = vsel %vm86, %v551, 0
    %559 = vmatprep.subr.bf16.mxu0 0
    %560 = vmatpush1.bf16.msra.mxu0 %v550
    %561 = vmatprep.subr.bf16.mxu0 0
    %562 = vmatpush1.bf16.msra.mxu0 %v557
    %563 = vmatprep.subr.bf16.mxu0 0
    %564 = vmatpush1.bf16.msra.mxu0 0
    %565 = vmatprep.subr.bf16.mxu0 0
    %566 = vmatpush1.bf16.msra.mxu0 0
    %567 = vmatprep.subr.bf16.mxu0 0
    %568 = vmatpush1.bf16.msra.mxu0 0
    %569 = vmatprep.subr.bf16.mxu0 0
    %570 = vmatpush1.bf16.msra.mxu0 0
    %571 = vmatprep.subr.bf16.mxu0 0
    %572 = vmatpush1.bf16.msra.mxu0 0
    %573 = vmatprep.subr.bf16.mxu0 0
    %574 = vmatpush1.bf16.msra.mxu0 0
    %575 = vmatprep.subr.bf16.mxu0 0
    %576 = vmatpush1.bf16.msra.mxu0 0
    %577 = vmatprep.subr.bf16.mxu0 0
    %578 = vmatpush1.bf16.msra.mxu0 0
    %579 = vmatprep.subr.bf16.mxu0 0
    %580 = vmatpush1.bf16.msra.mxu0 0
    %581 = vmatprep.subr.bf16.mxu0 0
    %582 = vmatpush1.bf16.msra.mxu0 0
    %583 = vmatprep.subr.bf16.mxu0 0
    %584 = vmatpush1.bf16.msra.mxu0 0
    %585 = vmatprep.subr.bf16.mxu0 0
    %586 = vmatpush1.bf16.msra.mxu0 0
    %587 = vmatprep.subr.bf16.mxu0 0
    %588 = vmatpush1.bf16.msra.mxu0 0
    %589 = vmatprep.subr.bf16.mxu0 0
    %590 = vmatpush1.bf16.msra.mxu0 0
    %591 = vmatprep.mubr.bf16.mxu0 0
    %592 = vmatmul.mubr.bf16.gmra.mrb[0].mxu0 %v554
    %v593 = vpop.f32.mrb[0].mxu0
    %v594 = vadd.f32 0.0, %v593
    %v595 = vpop.f32.mrb[0].mxu0
    %v596 = vpop.f32.mrb[0].mxu0
    %v597 = vpop.f32.mrb[0].mxu0
    %598 = vdwg.mxu0
    %v599 = vmax.f32 %v594, 0.0
    %601 = vrot.lane.b32.xlu0 %v599, 64
    %v602 = vpop.permute.xlu0 %601
    %604 = vst.msk [vmem:[#allocation2 + $0x18] sm:$0xff] %vm201, %v602
    %v605 = vld [vmem:[%s0] sm:$0xff]
    %v606 = vpack.c.bf16 %v605, %v605
    %v607 = vld [vmem:[%s1] sm:$0xf]
    %v608 = vld [vmem:[%s1 + $0x4] sm:$0xf]
    %v609 = vld [vmem:[%s1 + $0x8] sm:$0xf]
    %611 = vrot.lane.b32.xlu0 %v606, 64
    %v612 = vpop.permute.xlu0 %611
    %v616 = vunpack.c.l.b16 %v607
    %v617 = vunpack.c.l.b16 %v608
    %v618 = vunpack.c.l.b16 %v609
    %v619 = vpack.c.b16 %v617, %v616
    %v620 = vpack.c.b16 %v618, %v618
    %v623 = vsel %vm82, %v612, 0
    %v626 = vsel %vm86, %v620, 0
    %628 = vmatprep.subr.bf16.mxu0 0
    %629 = vmatpush1.bf16.msra.mxu0 %v619
    %630 = vmatprep.subr.bf16.mxu0 0
    %631 = vmatpush1.bf16.msra.mxu0 %v626
    %632 = vmatprep.subr.bf16.mxu0 0
    %633 = vmatpush1.bf16.msra.mxu0 0
    %634 = vmatprep.subr.bf16.mxu0 0
    %635 = vmatpush1.bf16.msra.mxu0 0
    %636 = vmatprep.subr.bf16.mxu0 0
    %637 = vmatpush1.bf16.msra.mxu0 0
    %638 = vmatprep.subr.bf16.mxu0 0
    %639 = vmatpush1.bf16.msra.mxu0 0
    %640 = vmatprep.subr.bf16.mxu0 0
    %641 = vmatpush1.bf16.msra.mxu0 0
    %642 = vmatprep.subr.bf16.mxu0 0
    %643 = vmatpush1.bf16.msra.mxu0 0
    %644 = vmatprep.subr.bf16.mxu0 0
    %645 = vmatpush1.bf16.msra.mxu0 0
    %646 = vmatprep.subr.bf16.mxu0 0
    %647 = vmatpush1.bf16.msra.mxu0 0
    %648 = vmatprep.subr.bf16.mxu0 0
    %649 = vmatpush1.bf16.msra.mxu0 0
    %650 = vmatprep.subr.bf16.mxu0 0
    %651 = vmatpush1.bf16.msra.mxu0 0
    %652 = vmatprep.subr.bf16.mxu0 0
    %653 = vmatpush1.bf16.msra.mxu0 0
    %654 = vmatprep.subr.bf16.mxu0 0
    %655 = vmatpush1.bf16.msra.mxu0 0
    %656 = vmatprep.subr.bf16.mxu0 0
    %657 = vmatpush1.bf16.msra.mxu0 0
    %658 = vmatprep.subr.bf16.mxu0 0
    %659 = vmatpush1.bf16.msra.mxu0 0
    %660 = vmatprep.mubr.bf16.mxu0 0
    %661 = vmatmul.mubr.bf16.gmra.mrb[0].mxu0 %v623
    %v662 = vpop.f32.mrb[0].mxu0
    %v663 = vadd.f32 0.0, %v662
    %v664 = vpop.f32.mrb[0].mxu0
    %v665 = vpop.f32.mrb[0].mxu0
    %v666 = vpop.f32.mrb[0].mxu0
    %667 = vdwg.mxu0
    %v668 = vmax.f32 %v663, 0.0
    %669 = vst.msk [vmem:[#allocation2 + $0x20] sm:$0xff] %vm131, %v668
    %v670 = vld [vmem:[%s0] sm:$0xff]
    %v671 = vpack.c.bf16 %v670, %v670
    %v672 = vld [vmem:[%s1] sm:$0xf]
    %v673 = vld [vmem:[%s1 + $0x4] sm:$0xf]
    %v674 = vld [vmem:[%s1 + $0x8] sm:$0xf]
    %676 = vrot.lane.b32.xlu0 %v671, 56
    %v677 = vpop.permute.xlu0 %676
    %v681 = vunpack.c.l.b16 %v672
    %v682 = vunpack.c.l.b16 %v673
    %v683 = vunpack.c.l.b16 %v674
    %v684 = vpack.c.b16 %v682, %v681
    %v685 = vpack.c.b16 %v683, %v683
    %v688 = vsel %vm82, %v677, 0
    %v691 = vsel %vm86, %v685, 0
    %693 = vmatprep.subr.bf16.mxu0 0
    %694 = vmatpush1.bf16.msra.mxu0 %v684
    %695 = vmatprep.subr.bf16.mxu0 0
    %696 = vmatpush1.bf16.msra.mxu0 %v691
    %697 = vmatprep.subr.bf16.mxu0 0
    %698 = vmatpush1.bf16.msra.mxu0 0
    %699 = vmatprep.subr.bf16.mxu0 0
    %700 = vmatpush1.bf16.msra.mxu0 0
    %701 = vmatprep.subr.bf16.mxu0 0
    %702 = vmatpush1.bf16.msra.mxu0 0
    %703 = vmatprep.subr.bf16.mxu0 0
    %704 = vmatpush1.bf16.msra.mxu0 0
    %705 = vmatprep.subr.bf16.mxu0 0
    %706 = vmatpush1.bf16.msra.mxu0 0
    %707 = vmatprep.subr.bf16.mxu0 0
    %708 = vmatpush1.bf16.msra.mxu0 0
    %709 = vmatprep.subr.bf16.mxu0 0
    %710 = vmatpush1.bf16.msra.mxu0 0
    %711 = vmatprep.subr.bf16.mxu0 0
    %712 = vmatpush1.bf16.msra.mxu0 0
    %713 = vmatprep.subr.bf16.mxu0 0
    %714 = vmatpush1.bf16.msra.mxu0 0
    %715 = vmatprep.subr.bf16.mxu0 0
    %716 = vmatpush1.bf16.msra.mxu0 0
    %717 = vmatprep.subr.bf16.mxu0 0
    %718 = vmatpush1.bf16.msra.mxu0 0
    %719 = vmatprep.subr.bf16.mxu0 0
    %720 = vmatpush1.bf16.msra.mxu0 0
    %721 = vmatprep.subr.bf16.mxu0 0
    %722 = vmatpush1.bf16.msra.mxu0 0
    %723 = vmatprep.subr.bf16.mxu0 0
    %724 = vmatpush1.bf16.msra.mxu0 0
    %725 = vmatprep.mubr.bf16.mxu0 0
    %726 = vmatmul.mubr.bf16.gmra.mrb[0].mxu0 %v688
    %v727 = vpop.f32.mrb[0].mxu0
    %v728 = vadd.f32 0.0, %v727
    %v729 = vpop.f32.mrb[0].mxu0
    %v730 = vpop.f32.mrb[0].mxu0
    %v731 = vpop.f32.mrb[0].mxu0
    %732 = vdwg.mxu0
    %v733 = vmax.f32 %v728, 0.0
    %735 = vrot.lane.b32.xlu0 %v733, 64
    %v736 = vpop.permute.xlu0 %735
    %738 = vst.msk [vmem:[#allocation2 + $0x20] sm:$0xff] %vm201, %v736
    %v739 = vld [vmem:[%s0] sm:$0xff]
    %v740 = vpack.c.bf16 %v739, %v739
    %v741 = vld [vmem:[%s1] sm:$0xf]
    %v742 = vld [vmem:[%s1 + $0x4] sm:$0xf]
    %v743 = vld [vmem:[%s1 + $0x8] sm:$0xf]
    %745 = vrot.lane.b32.xlu0 %v740, 48
    %v746 = vpop.permute.xlu0 %745
    %v750 = vunpack.c.l.b16 %v741
    %v751 = vunpack.c.l.b16 %v742
    %v752 = vunpack.c.l.b16 %v743
    %v753 = vpack.c.b16 %v751, %v750
    %v754 = vpack.c.b16 %v752, %v752
    %v757 = vsel %vm82, %v746, 0
    %v760 = vsel %vm86, %v754, 0
    %762 = vmatprep.subr.bf16.mxu0 0
    %763 = vmatpush1.bf16.msra.mxu0 %v753
    %764 = vmatprep.subr.bf16.mxu0 0
    %765 = vmatpush1.bf16.msra.mxu0 %v760
    %766 = vmatprep.subr.bf16.mxu0 0
    %767 = vmatpush1.bf16.msra.mxu0 0
    %768 = vmatprep.subr.bf16.mxu0 0
    %769 = vmatpush1.bf16.msra.mxu0 0
    %770 = vmatprep.subr.bf16.mxu0 0
    %771 = vmatpush1.bf16.msra.mxu0 0
    %772 = vmatprep.subr.bf16.mxu0 0
    %773 = vmatpush1.bf16.msra.mxu0 0
    %774 = vmatprep.subr.bf16.mxu0 0
    %775 = vmatpush1.bf16.msra.mxu0 0
    %776 = vmatprep.subr.bf16.mxu0 0
    %777 = vmatpush1.bf16.msra.mxu0 0
    %778 = vmatprep.subr.bf16.mxu0 0
    %779 = vmatpush1.bf16.msra.mxu0 0
    %780 = vmatprep.subr.bf16.mxu0 0
    %781 = vmatpush1.bf16.msra.mxu0 0
    %782 = vmatprep.subr.bf16.mxu0 0
    %783 = vmatpush1.bf16.msra.mxu0 0
    %784 = vmatprep.subr.bf16.mxu0 0
    %785 = vmatpush1.bf16.msra.mxu0 0
    %786 = vmatprep.subr.bf16.mxu0 0
    %787 = vmatpush1.bf16.msra.mxu0 0
    %788 = vmatprep.subr.bf16.mxu0 0
    %789 = vmatpush1.bf16.msra.mxu0 0
    %790 = vmatprep.subr.bf16.mxu0 0
    %791 = vmatpush1.bf16.msra.mxu0 0
    %792 = vmatprep.subr.bf16.mxu0 0
    %793 = vmatpush1.bf16.msra.mxu0 0
    %794 = vmatprep.mubr.bf16.mxu0 0
    %795 = vmatmul.mubr.bf16.gmra.mrb[0].mxu0 %v757
    %v796 = vpop.f32.mrb[0].mxu0
    %v797 = vadd.f32 0.0, %v796
    %v798 = vpop.f32.mrb[0].mxu0
    %v799 = vpop.f32.mrb[0].mxu0
    %v800 = vpop.f32.mrb[0].mxu0
    %801 = vdwg.mxu0
    %v802 = vmax.f32 %v797, 0.0
    %803 = vst.msk [vmem:[#allocation2 + $0x28] sm:$0xff] %vm131, %v802
    %v804 = vld [vmem:[%s0] sm:$0xff]
    %v805 = vpack.c.bf16 %v804, %v804
    %v806 = vld [vmem:[%s1] sm:$0xf]
    %v807 = vld [vmem:[%s1 + $0x4] sm:$0xf]
    %v808 = vld [vmem:[%s1 + $0x8] sm:$0xf]
    %810 = vrot.lane.b32.xlu0 %v805, 40
    %v811 = vpop.permute.xlu0 %810
    %v815 = vunpack.c.l.b16 %v806
    %v816 = vunpack.c.l.b16 %v807
    %v817 = vunpack.c.l.b16 %v808
    %v818 = vpack.c.b16 %v816, %v815
    %v819 = vpack.c.b16 %v817, %v817
    %v822 = vsel %vm82, %v811, 0
    %v825 = vsel %vm86, %v819, 0
    %827 = vmatprep.subr.bf16.mxu0 0
    %828 = vmatpush1.bf16.msra.mxu0 %v818
    %829 = vmatprep.subr.bf16.mxu0 0
    %830 = vmatpush1.bf16.msra.mxu0 %v825
    %831 = vmatprep.subr.bf16.mxu0 0
    %832 = vmatpush1.bf16.msra.mxu0 0
    %833 = vmatprep.subr.bf16.mxu0 0
    %834 = vmatpush1.bf16.msra.mxu0 0
    %835 = vmatprep.subr.bf16.mxu0 0
    %836 = vmatpush1.bf16.msra.mxu0 0
    %837 = vmatprep.subr.bf16.mxu0 0
    %838 = vmatpush1.bf16.msra.mxu0 0
    %839 = vmatprep.subr.bf16.mxu0 0
    %840 = vmatpush1.bf16.msra.mxu0 0
    %841 = vmatprep.subr.bf16.mxu0 0
    %842 = vmatpush1.bf16.msra.mxu0 0
    %843 = vmatprep.subr.bf16.mxu0 0
    %844 = vmatpush1.bf16.msra.mxu0 0
    %845 = vmatprep.subr.bf16.mxu0 0
    %846 = vmatpush1.bf16.msra.mxu0 0
    %847 = vmatprep.subr.bf16.mxu0 0
    %848 = vmatpush1.bf16.msra.mxu0 0
    %849 = vmatprep.subr.bf16.mxu0 0
    %850 = vmatpush1.bf16.msra.mxu0 0
    %851 = vmatprep.subr.bf16.mxu0 0
    %852 = vmatpush1.bf16.msra.mxu0 0
    %853 = vmatprep.subr.bf16.mxu0 0
    %854 = vmatpush1.bf16.msra.mxu0 0
    %855 = vmatprep.subr.bf16.mxu0 0
    %856 = vmatpush1.bf16.msra.mxu0 0
    %857 = vmatprep.subr.bf16.mxu0 0
    %858 = vmatpush1.bf16.msra.mxu0 0
    %859 = vmatprep.mubr.bf16.mxu0 0
    %860 = vmatmul.mubr.bf16.gmra.mrb[0].mxu0 %v822
    %v861 = vpop.f32.mrb[0].mxu0
    %v862 = vadd.f32 0.0, %v861
    %v863 = vpop.f32.mrb[0].mxu0
    %v864 = vpop.f32.mrb[0].mxu0
    %v865 = vpop.f32.mrb[0].mxu0
    %866 = vdwg.mxu0
    %v867 = vmax.f32 %v862, 0.0
    %869 = vrot.lane.b32.xlu0 %v867, 64
    %v870 = vpop.permute.xlu0 %869
    %872 = vst.msk [vmem:[#allocation2 + $0x28] sm:$0xff] %vm201, %v870
    %v873 = vld [vmem:[%s0] sm:$0xff]
    %v874 = vpack.c.bf16 %v873, %v873
    %v875 = vld [vmem:[%s1] sm:$0xf]
    %v876 = vld [vmem:[%s1 + $0x4] sm:$0xf]
    %v877 = vld [vmem:[%s1 + $0x8] sm:$0xf]
    %879 = vrot.lane.b32.xlu0 %v874, 32
    %v880 = vpop.permute.xlu0 %879
    %v884 = vunpack.c.l.b16 %v875
    %v885 = vunpack.c.l.b16 %v876
    %v886 = vunpack.c.l.b16 %v877
    %v887 = vpack.c.b16 %v885, %v884
    %v888 = vpack.c.b16 %v886, %v886
    %v891 = vsel %vm82, %v880, 0
    %v894 = vsel %vm86, %v888, 0
    %896 = vmatprep.subr.bf16.mxu0 0
    %897 = vmatpush1.bf16.msra.mxu0 %v887
    %898 = vmatprep.subr.bf16.mxu0 0
    %899 = vmatpush1.bf16.msra.mxu0 %v894
    %900 = vmatprep.subr.bf16.mxu0 0
    %901 = vmatpush1.bf16.msra.mxu0 0
    %902 = vmatprep.subr.bf16.mxu0 0
    %903 = vmatpush1.bf16.msra.mxu0 0
    %904 = vmatprep.subr.bf16.mxu0 0
    %905 = vmatpush1.bf16.msra.mxu0 0
    %906 = vmatprep.subr.bf16.mxu0 0
    %907 = vmatpush1.bf16.msra.mxu0 0
    %908 = vmatprep.subr.bf16.mxu0 0
    %909 = vmatpush1.bf16.msra.mxu0 0
    %910 = vmatprep.subr.bf16.mxu0 0
    %911 = vmatpush1.bf16.msra.mxu0 0
    %912 = vmatprep.subr.bf16.mxu0 0
    %913 = vmatpush1.bf16.msra.mxu0 0
    %914 = vmatprep.subr.bf16.mxu0 0
    %915 = vmatpush1.bf16.msra.mxu0 0
    %916 = vmatprep.subr.bf16.mxu0 0
    %917 = vmatpush1.bf16.msra.mxu0 0
    %918 = vmatprep.subr.bf16.mxu0 0
    %919 = vmatpush1.bf16.msra.mxu0 0
    %920 = vmatprep.subr.bf16.mxu0 0
    %921 = vmatpush1.bf16.msra.mxu0 0
    %922 = vmatprep.subr.bf16.mxu0 0
    %923 = vmatpush1.bf16.msra.mxu0 0
    %924 = vmatprep.subr.bf16.mxu0 0
    %925 = vmatpush1.bf16.msra.mxu0 0
    %926 = vmatprep.subr.bf16.mxu0 0
    %927 = vmatpush1.bf16.msra.mxu0 0
    %928 = vmatprep.mubr.bf16.mxu0 0
    %929 = vmatmul.mubr.bf16.gmra.mrb[0].mxu0 %v891
    %v930 = vpop.f32.mrb[0].mxu0
    %v931 = vadd.f32 0.0, %v930
    %v932 = vpop.f32.mrb[0].mxu0
    %v933 = vpop.f32.mrb[0].mxu0
    %v934 = vpop.f32.mrb[0].mxu0
    %935 = vdwg.mxu0
    %v936 = vmax.f32 %v931, 0.0
    %937 = vst.msk [vmem:[#allocation2 + $0x30] sm:$0xff] %vm131, %v936
    %v938 = vld [vmem:[%s0] sm:$0xff]
    %v939 = vpack.c.bf16 %v938, %v938
    %v940 = vld [vmem:[%s1] sm:$0xf]
    %v941 = vld [vmem:[%s1 + $0x4] sm:$0xf]
    %v942 = vld [vmem:[%s1 + $0x8] sm:$0xf]
    %944 = vrot.lane.b32.xlu0 %v939, 24
    %v945 = vpop.permute.xlu0 %944
    %v949 = vunpack.c.l.b16 %v940
    %v950 = vunpack.c.l.b16 %v941
    %v951 = vunpack.c.l.b16 %v942
    %v952 = vpack.c.b16 %v950, %v949
    %v953 = vpack.c.b16 %v951, %v951
    %v956 = vsel %vm82, %v945, 0
    %v959 = vsel %vm86, %v953, 0
    %961 = vmatprep.subr.bf16.mxu0 0
    %962 = vmatpush1.bf16.msra.mxu0 %v952
    %963 = vmatprep.subr.bf16.mxu0 0
    %964 = vmatpush1.bf16.msra.mxu0 %v959
    %965 = vmatprep.subr.bf16.mxu0 0
    %966 = vmatpush1.bf16.msra.mxu0 0
    %967 = vmatprep.subr.bf16.mxu0 0
    %968 = vmatpush1.bf16.msra.mxu0 0
    %969 = vmatprep.subr.bf16.mxu0 0
    %970 = vmatpush1.bf16.msra.mxu0 0
    %971 = vmatprep.subr.bf16.mxu0 0
    %972 = vmatpush1.bf16.msra.mxu0 0
    %973 = vmatprep.subr.bf16.mxu0 0
    %974 = vmatpush1.bf16.msra.mxu0 0
    %975 = vmatprep.subr.bf16.mxu0 0
    %976 = vmatpush1.bf16.msra.mxu0 0
    %977 = vmatprep.subr.bf16.mxu0 0
    %978 = vmatpush1.bf16.msra.mxu0 0
    %979 = vmatprep.subr.bf16.mxu0 0
    %980 = vmatpush1.bf16.msra.mxu0 0
    %981 = vmatprep.subr.bf16.mxu0 0
    %982 = vmatpush1.bf16.msra.mxu0 0
    %983 = vmatprep.subr.bf16.mxu0 0
    %984 = vmatpush1.bf16.msra.mxu0 0
    %985 = vmatprep.subr.bf16.mxu0 0
    %986 = vmatpush1.bf16.msra.mxu0 0
    %987 = vmatprep.subr.bf16.mxu0 0
    %988 = vmatpush1.bf16.msra.mxu0 0
    %989 = vmatprep.subr.bf16.mxu0 0
    %990 = vmatpush1.bf16.msra.mxu0 0
    %991 = vmatprep.subr.bf16.mxu0 0
    %992 = vmatpush1.bf16.msra.mxu0 0
    %993 = vmatprep.mubr.bf16.mxu0 0
    %994 = vmatmul.mubr.bf16.gmra.mrb[0].mxu0 %v956
    %v995 = vpop.f32.mrb[0].mxu0
    %v996 = vadd.f32 0.0, %v995
    %v997 = vpop.f32.mrb[0].mxu0
    %v998 = vpop.f32.mrb[0].mxu0
    %v999 = vpop.f32.mrb[0].mxu0
    %1000 = vdwg.mxu0
    %v1001 = vmax.f32 %v996, 0.0
    %1003 = vrot.lane.b32.xlu0 %v1001, 64
    %v1004 = vpop.permute.xlu0 %1003
    %1006 = vst.msk [vmem:[#allocation2 + $0x30] sm:$0xff] %vm201, %v1004
    %v1007 = vld [vmem:[%s0] sm:$0xff]
    %v1008 = vld [vmem:[%s0 + $0x8] sm:$0xff]
    %v1009 = vpack.c.bf16 %v1007, %v1007
    %v1010 = vpack.c.bf16 %v1008, %v1008
    %v1011 = vld [vmem:[%s1] sm:$0xf]
    %v1012 = vld [vmem:[%s1 + $0x4] sm:$0xf]
    %v1013 = vld [vmem:[%s1 + $0x8] sm:$0xf]
    %1016 = vrot.lane.b32.xlu0 %v1009, 16
    %v1017 = vpop.permute.xlu0 %1016
    %1018 = vrot.lane.b32.xlu0 %v1010, 16
    %v1019 = vpop.permute.xlu0 %1018
    %vm1020 = vcmask 130048
    %v1021 = vsel %vm1020, %v1017, %v1019
    %v1025 = vunpack.c.l.b16 %v1011
    %v1026 = vunpack.c.l.b16 %v1012
    %v1027 = vunpack.c.l.b16 %v1013
    %v1028 = vpack.c.b16 %v1026, %v1025
    %v1029 = vpack.c.b16 %v1027, %v1027
    %v1032 = vsel %vm82, %v1021, 0
    %v1035 = vsel %vm86, %v1029, 0
    %1037 = vmatprep.subr.bf16.mxu0 0
    %1038 = vmatpush1.bf16.msra.mxu0 %v1028
    %1039 = vmatprep.subr.bf16.mxu0 0
    %1040 = vmatpush1.bf16.msra.mxu0 %v1035
    %1041 = vmatprep.subr.bf16.mxu0 0
    %1042 = vmatpush1.bf16.msra.mxu0 0
    %1043 = vmatprep.subr.bf16.mxu0 0
    %1044 = vmatpush1.bf16.msra.mxu0 0
    %1045 = vmatprep.subr.bf16.mxu0 0
    %1046 = vmatpush1.bf16.msra.mxu0 0
    %1047 = vmatprep.subr.bf16.mxu0 0
    %1048 = vmatpush1.bf16.msra.mxu0 0
    %1049 = vmatprep.subr.bf16.mxu0 0
    %1050 = vmatpush1.bf16.msra.mxu0 0
    %1051 = vmatprep.subr.bf16.mxu0 0
    %1052 = vmatpush1.bf16.msra.mxu0 0
    %1053 = vmatprep.subr.bf16.mxu0 0
    %1054 = vmatpush1.bf16.msra.mxu0 0
    %1055 = vmatprep.subr.bf16.mxu0 0
    %1056 = vmatpush1.bf16.msra.mxu0 0
    %1057 = vmatprep.subr.bf16.mxu0 0
    %1058 = vmatpush1.bf16.msra.mxu0 0
    %1059 = vmatprep.subr.bf16.mxu0 0
    %1060 = vmatpush1.bf16.msra.mxu0 0
    %1061 = vmatprep.subr.bf16.mxu0 0
    %1062 = vmatpush1.bf16.msra.mxu0 0
    %1063 = vmatprep.subr.bf16.mxu0 0
    %1064 = vmatpush1.bf16.msra.mxu0 0
    %1065 = vmatprep.subr.bf16.mxu0 0
    %1066 = vmatpush1.bf16.msra.mxu0 0
    %1067 = vmatprep.subr.bf16.mxu0 0
    %1068 = vmatpush1.bf16.msra.mxu0 0
    %1069 = vmatprep.mubr.bf16.mxu0 0
    %1070 = vmatmul.mubr.bf16.gmra.mrb[0].mxu0 %v1032
    %v1071 = vpop.f32.mrb[0].mxu0
    %v1072 = vadd.f32 0.0, %v1071
    %v1073 = vpop.f32.mrb[0].mxu0
    %v1074 = vpop.f32.mrb[0].mxu0
    %v1075 = vpop.f32.mrb[0].mxu0
    %1076 = vdwg.mxu0
    %v1077 = vmax.f32 %v1072, 0.0
    %1078 = vst.msk [vmem:[#allocation2 + $0x38] sm:$0xff] %vm131, %v1077
    %v1079 = vld [vmem:[%s0] sm:$0xff]
    %v1080 = vld [vmem:[%s0 + $0x8] sm:$0xff]
    %v1081 = vpack.c.bf16 %v1079, %v1079
    %v1082 = vpack.c.bf16 %v1080, %v1080
    %v1083 = vld [vmem:[%s1] sm:$0xf]
    %v1084 = vld [vmem:[%s1 + $0x4] sm:$0xf]
    %v1085 = vld [vmem:[%s1 + $0x8] sm:$0xf]
    %1088 = vrot.lane.b32.xlu0 %v1081, 8
    %v1089 = vpop.permute.xlu0 %1088
    %1090 = vrot.lane.b32.xlu0 %v1082, 8
    %v1091 = vpop.permute.xlu0 %1090
    %vm1092 = vcmask 64512
    %v1093 = vsel %vm1092, %v1089, %v1091
    %v1097 = vunpack.c.l.b16 %v1083
    %v1098 = vunpack.c.l.b16 %v1084
    %v1099 = vunpack.c.l.b16 %v1085
    %v1100 = vpack.c.b16 %v1098, %v1097
    %v1101 = vpack.c.b16 %v1099, %v1099
    %v1104 = vsel %vm82, %v1093, 0
    %v1107 = vsel %vm86, %v1101, 0
    %1109 = vmatprep.subr.bf16.mxu0 0
    %1110 = vmatpush1.bf16.msra.mxu0 %v1100
    %1111 = vmatprep.subr.bf16.mxu0 0
    %1112 = vmatpush1.bf16.msra.mxu0 %v1107
    %1113 = vmatprep.subr.bf16.mxu0 0
    %1114 = vmatpush1.bf16.msra.mxu0 0
    %1115 = vmatprep.subr.bf16.mxu0 0
    %1116 = vmatpush1.bf16.msra.mxu0 0
    %1117 = vmatprep.subr.bf16.mxu0 0
    %1118 = vmatpush1.bf16.msra.mxu0 0
    %1119 = vmatprep.subr.bf16.mxu0 0
    %1120 = vmatpush1.bf16.msra.mxu0 0
    %1121 = vmatprep.subr.bf16.mxu0 0
    %1122 = vmatpush1.bf16.msra.mxu0 0
    %1123 = vmatprep.subr.bf16.mxu0 0
    %1124 = vmatpush1.bf16.msra.mxu0 0
    %1125 = vmatprep.subr.bf16.mxu0 0
    %1126 = vmatpush1.bf16.msra.mxu0 0
    %1127 = vmatprep.subr.bf16.mxu0 0
    %1128 = vmatpush1.bf16.msra.mxu0 0
    %1129 = vmatprep.subr.bf16.mxu0 0
    %1130 = vmatpush1.bf16.msra.mxu0 0
    %1131 = vmatprep.subr.bf16.mxu0 0
    %1132 = vmatpush1.bf16.msra.mxu0 0
    %1133 = vmatprep.subr.bf16.mxu0 0
    %1134 = vmatpush1.bf16.msra.mxu0 0
    %1135 = vmatprep.subr.bf16.mxu0 0
    %1136 = vmatpush1.bf16.msra.mxu0 0
    %1137 = vmatprep.subr.bf16.mxu0 0
    %1138 = vmatpush1.bf16.msra.mxu0 0
    %1139 = vmatprep.subr.bf16.mxu0 0
    %1140 = vmatpush1.bf16.msra.mxu0 0
    %1141 = vmatprep.mubr.bf16.mxu0 0
    %1142 = vmatmul.mubr.bf16.gmra.mrb[0].mxu0 %v1104
    %v1143 = vpop.f32.mrb[0].mxu0
    %v1144 = vadd.f32 0.0, %v1143
    %v1145 = vpop.f32.mrb[0].mxu0
    %v1146 = vpop.f32.mrb[0].mxu0
    %v1147 = vpop.f32.mrb[0].mxu0
    %1148 = vdwg.mxu0
    %v1149 = vmax.f32 %v1144, 0.0
    %1151 = vrot.lane.b32.xlu0 %v1149, 64
    %v1152 = vpop.permute.xlu0 %1151
    %1154 = vst.msk [vmem:[#allocation2 + $0x38] sm:$0xff] %vm201, %v1152
    %v1155 = vld [vmem:[%s0 + $0x8] sm:$0xff]
    %v1156 = vpack.c.bf16 %v1155, %v1155
    %v1157 = vld [vmem:[%s1] sm:$0xf]
    %v1158 = vld [vmem:[%s1 + $0x4] sm:$0xf]
    %v1159 = vld [vmem:[%s1 + $0x8] sm:$0xf]
    %v1163 = vunpack.c.l.b16 %v1157
    %v1164 = vunpack.c.l.b16 %v1158
    %v1165 = vunpack.c.l.b16 %v1159
    %v1166 = vpack.c.b16 %v1164, %v1163
    %v1167 = vpack.c.b16 %v1165, %v1165
    %v1170 = vsel %vm82, %v1156, 0
    %v1173 = vsel %vm86, %v1167, 0
    %1175 = vmatprep.subr.bf16.mxu0 0
    %1176 = vmatpush1.bf16.msra.mxu0 %v1166
    %1177 = vmatprep.subr.bf16.mxu0 0
    %1178 = vmatpush1.bf16.msra.mxu0 %v1173
    %1179 = vmatprep.subr.bf16.mxu0 0
    %1180 = vmatpush1.bf16.msra.mxu0 0
    %1181 = vmatprep.subr.bf16.mxu0 0
    %1182 = vmatpush1.bf16.msra.mxu0 0
    %1183 = vmatprep.subr.bf16.mxu0 0
    %1184 = vmatpush1.bf16.msra.mxu0 0
    %1185 = vmatprep.subr.bf16.mxu0 0
    %1186 = vmatpush1.bf16.msra.mxu0 0
    %1187 = vmatprep.subr.bf16.mxu0 0
    %1188 = vmatpush1.bf16.msra.mxu0 0
    %1189 = vmatprep.subr.bf16.mxu0 0
    %1190 = vmatpush1.bf16.msra.mxu0 0
    %1191 = vmatprep.subr.bf16.mxu0 0
    %1192 = vmatpush1.bf16.msra.mxu0 0
    %1193 = vmatprep.subr.bf16.mxu0 0
    %1194 = vmatpush1.bf16.msra.mxu0 0
    %1195 = vmatprep.subr.bf16.mxu0 0
    %1196 = vmatpush1.bf16.msra.mxu0 0
    %1197 = vmatprep.subr.bf16.mxu0 0
    %1198 = vmatpush1.bf16.msra.mxu0 0
    %1199 = vmatprep.subr.bf16.mxu0 0
    %1200 = vmatpush1.bf16.msra.mxu0 0
    %1201 = vmatprep.subr.bf16.mxu0 0
    %1202 = vmatpush1.bf16.msra.mxu0 0
    %1203 = vmatprep.subr.bf16.mxu0 0
    %1204 = vmatpush1.bf16.msra.mxu0 0
    %1205 = vmatprep.subr.bf16.mxu0 0
    %1206 = vmatpush1.bf16.msra.mxu0 0
    %1207 = vmatprep.mubr.bf16.mxu0 0
    %1208 = vmatmul.mubr.bf16.gmra.mrb[0].mxu0 %v1170
    %v1209 = vpop.f32.mrb[0].mxu0
    %v1210 = vadd.f32 0.0, %v1209
    %v1211 = vpop.f32.mrb[0].mxu0
    %v1212 = vpop.f32.mrb[0].mxu0
    %v1213 = vpop.f32.mrb[0].mxu0
    %1214 = vdwg.mxu0
    %v1215 = vmax.f32 %v1210, 0.0
    %1216 = vst.msk [vmem:[#allocation2 + $0x40] sm:$0xff] %vm131, %v1215
    %v1217 = vld [vmem:[%s0 + $0x8] sm:$0xff]
    %v1218 = vpack.c.bf16 %v1217, %v1217
    %v1219 = vld [vmem:[%s1] sm:$0xf]
    %v1220 = vld [vmem:[%s1 + $0x4] sm:$0xf]
    %v1221 = vld [vmem:[%s1 + $0x8] sm:$0xf]
    %1223 = vrot.lane.b32.xlu0 %v1218, 120
    %v1224 = vpop.permute.xlu0 %1223
    %v1228 = vunpack.c.l.b16 %v1219
    %v1229 = vunpack.c.l.b16 %v1220
    %v1230 = vunpack.c.l.b16 %v1221
    %v1231 = vpack.c.b16 %v1229, %v1228
    %v1232 = vpack.c.b16 %v1230, %v1230
    %v1235 = vsel %vm82, %v1224, 0
    %v1238 = vsel %vm86, %v1232, 0
    %1240 = vmatprep.subr.bf16.mxu0 0
    %1241 = vmatpush1.bf16.msra.mxu0 %v1231
    %1242 = vmatprep.subr.bf16.mxu0 0
    %1243 = vmatpush1.bf16.msra.mxu0 %v1238
    %1244 = vmatprep.subr.bf16.mxu0 0
    %1245 = vmatpush1.bf16.msra.mxu0 0
    %1246 = vmatprep.subr.bf16.mxu0 0
    %1247 = vmatpush1.bf16.msra.mxu0 0
    %1248 = vmatprep.subr.bf16.mxu0 0
    %1249 = vmatpush1.bf16.msra.mxu0 0
    %1250 = vmatprep.subr.bf16.mxu0 0
    %1251 = vmatpush1.bf16.msra.mxu0 0
    %1252 = vmatprep.subr.bf16.mxu0 0
    %1253 = vmatpush1.bf16.msra.mxu0 0
    %1254 = vmatprep.subr.bf16.mxu0 0
    %1255 = vmatpush1.bf16.msra.mxu0 0
    %1256 = vmatprep.subr.bf16.mxu0 0
    %1257 = vmatpush1.bf16.msra.mxu0 0
    %1258 = vmatprep.subr.bf16.mxu0 0
    %1259 = vmatpush1.bf16.msra.mxu0 0
    %1260 = vmatprep.subr.bf16.mxu0 0
    %1261 = vmatpush1.bf16.msra.mxu0 0
    %1262 = vmatprep.subr.bf16.mxu0 0
    %1263 = vmatpush1.bf16.msra.mxu0 0
    %1264 = vmatprep.subr.bf16.mxu0 0
    %1265 = vmatpush1.bf16.msra.mxu0 0
    %1266 = vmatprep.subr.bf16.mxu0 0
    %1267 = vmatpush1.bf16.msra.mxu0 0
    %1268 = vmatprep.subr.bf16.mxu0 0
    %1269 = vmatpush1.bf16.msra.mxu0 0
    %1270 = vmatprep.subr.bf16.mxu0 0
    %1271 = vmatpush1.bf16.msra.mxu0 0
    %1272 = vmatprep.mubr.bf16.mxu0 0
    %1273 = vmatmul.mubr.bf16.gmra.mrb[0].mxu0 %v1235
    %v1274 = vpop.f32.mrb[0].mxu0
    %v1275 = vadd.f32 0.0, %v1274
    %v1276 = vpop.f32.mrb[0].mxu0
    %v1277 = vpop.f32.mrb[0].mxu0
    %v1278 = vpop.f32.mrb[0].mxu0
    %1279 = vdwg.mxu0
    %v1280 = vmax.f32 %v1275, 0.0
    %1282 = vrot.lane.b32.xlu0 %v1280, 64
    %v1283 = vpop.permute.xlu0 %1282
    %1285 = vst.msk [vmem:[#allocation2 + $0x40] sm:$0xff] %vm201, %v1283
    %v1286 = vld [vmem:[#allocation2] sm:$0xff]
    %v1287 = vld [vmem:[#allocation2 + $0x8] sm:$0xff]
    %v1288 = vld [vmem:[#allocation2 + $0x10] sm:$0xff]
    %v1289 = vpack.c.bf16 %v1286, %v1286
    %v1290 = vpack.c.bf16 %v1287, %v1287
    %v1291 = vpack.c.bf16 %v1288, %v1288
    %v1292 = vld [vmem:[#allocation4] sm:$0xf]
    %v1293 = vld [vmem:[#allocation4 + $0x4] sm:$0xf]
    %v1294 = vld [vmem:[#allocation4 + $0x8] sm:$0xf]
    %v1295 = vld [vmem:[#allocation4 + $0xc] sm:$0xf]
    %v1296 = vld [vmem:[#allocation4 + $0x10] sm:$0xf]
    %v1297 = vld [vmem:[#allocation4 + $0x14] sm:$0xf]
    %v1298 = vld [vmem:[#allocation4 + $0x18] sm:$0xf]
    %v1299 = vld [vmem:[#allocation4 + $0x1c] sm:$0xf]
    %v1300 = vld [vmem:[#allocation4 + $0x20] sm:$0xf]
    %v1301 = vld [vmem:[#allocation4 + $0x24] sm:$0xf]
    %v1302 = vld [vmem:[#allocation4 + $0x28] sm:$0xf]
    %v1303 = vld [vmem:[#allocation4 + $0x2c] sm:$0xf]
    %v1304 = vld [vmem:[#allocation4 + $0x30] sm:$0xf]
    %v1305 = vld [vmem:[#allocation4 + $0x34] sm:$0xf]
    %v1306 = vld [vmem:[#allocation4 + $0x38] sm:$0xf]
    %v1307 = vld [vmem:[#allocation4 + $0x3c] sm:$0xf]
    %v1308 = vld [vmem:[#allocation4 + $0x40] sm:$0xf]
    %v1309 = vld [vmem:[#allocation4 + $0x44] sm:$0xf]
    %v1310 = vld [vmem:[#allocation4 + $0x48] sm:$0xf]
    %v1311 = vld [vmem:[#allocation4 + $0x4c] sm:$0xf]
    %v1312 = vld [vmem:[#allocation4 + $0x50] sm:$0xf]
    %v1313 = vld [vmem:[#allocation4 + $0x54] sm:$0xf]
    %v1314 = vld [vmem:[#allocation4 + $0x58] sm:$0xf]
    %v1315 = vld [vmem:[#allocation4 + $0x5c] sm:$0xf]
    %v1316 = vld [vmem:[#allocation4 + $0x60] sm:$0xf]
    %v1317 = vld [vmem:[#allocation4 + $0x64] sm:$0xf]
    %v1318 = vld [vmem:[#allocation4 + $0x68] sm:$0xf]
    %v1319 = vld [vmem:[#allocation4 + $0x6c] sm:$0xf]
    %v1320 = vld [vmem:[#allocation4 + $0x70] sm:$0xf]
    %v1321 = vld [vmem:[#allocation4 + $0x74] sm:$0xf]
    %v1322 = vld [vmem:[#allocation4 + $0x78] sm:$0xf]
    %v1323 = vld [vmem:[#allocation4 + $0x7c] sm:$0xf]
    %v1324 = vld [vmem:[#allocation4 + $0x80] sm:$0xf]
    %v1325 = vld [vmem:[#allocation4 + $0x84] sm:$0xf]
    %v1326 = vld [vmem:[#allocation4 + $0x88] sm:$0xf]
    %v1327 = vld [vmem:[#allocation4 + $0x8c] sm:$0xf]
    %v1328 = vld [vmem:[#allocation4 + $0x90] sm:$0xf]
    %v1329 = vld [vmem:[#allocation4 + $0x94] sm:$0xf]
    %v1330 = vld [vmem:[#allocation4 + $0x98] sm:$0xf]
    %v1331 = vld [vmem:[#allocation4 + $0x9c] sm:$0xf]
    %v1372 = vunpack.c.l.b16 %v1292
    %v1373 = vunpack.c.l.b16 %v1293
    %v1374 = vunpack.c.l.b16 %v1294
    %v1375 = vunpack.c.l.b16 %v1295
    %v1376 = vunpack.c.l.b16 %v1296
    %v1377 = vunpack.c.l.b16 %v1297
    %v1378 = vunpack.c.l.b16 %v1298
    %v1379 = vunpack.c.l.b16 %v1299
    %v1380 = vunpack.c.l.b16 %v1300
    %v1381 = vunpack.c.l.b16 %v1301
    %v1382 = vunpack.c.l.b16 %v1302
    %v1383 = vunpack.c.l.b16 %v1303
    %v1384 = vunpack.c.l.b16 %v1304
    %v1385 = vunpack.c.l.b16 %v1305
    %v1386 = vunpack.c.l.b16 %v1306
    %v1387 = vunpack.c.l.b16 %v1307
    %v1388 = vunpack.c.l.b16 %v1308
    %v1389 = vunpack.c.l.b16 %v1309
    %v1390 = vunpack.c.l.b16 %v1310
    %v1391 = vunpack.c.l.b16 %v1311
    %v1392 = vunpack.c.l.b16 %v1312
    %v1393 = vunpack.c.l.b16 %v1313
    %v1394 = vunpack.c.l.b16 %v1314
    %v1395 = vunpack.c.l.b16 %v1315
    %v1396 = vunpack.c.l.b16 %v1316
    %v1397 = vunpack.c.l.b16 %v1317
    %v1398 = vunpack.c.l.b16 %v1318
    %v1399 = vunpack.c.l.b16 %v1319
    %v1400 = vunpack.c.l.b16 %v1320
    %v1401 = vunpack.c.l.b16 %v1321
    %v1402 = vunpack.c.l.b16 %v1322
    %v1403 = vunpack.c.l.b16 %v1323
    %v1404 = vunpack.c.l.b16 %v1324
    %v1405 = vunpack.c.l.b16 %v1325
    %v1406 = vunpack.c.l.b16 %v1326
    %v1407 = vunpack.c.l.b16 %v1327
    %v1408 = vunpack.c.l.b16 %v1328
    %v1409 = vunpack.c.l.b16 %v1329
    %v1410 = vunpack.c.l.b16 %v1330
    %v1411 = vunpack.c.l.b16 %v1331
    %v1412 = vpack.c.b16 %v1373, %v1372
    %v1413 = vpack.c.b16 %v1375, %v1374
    %v1414 = vpack.c.b16 %v1377, %v1376
    %v1415 = vpack.c.b16 %v1379, %v1378
    %v1416 = vpack.c.b16 %v1381, %v1380
    %v1417 = vpack.c.b16 %v1383, %v1382
    %v1418 = vpack.c.b16 %v1385, %v1384
    %v1419 = vpack.c.b16 %v1387, %v1386
    %v1420 = vpack.c.b16 %v1389, %v1388
    %v1421 = vpack.c.b16 %v1391, %v1390
    %v1422 = vpack.c.b16 %v1393, %v1392
    %v1423 = vpack.c.b16 %v1395, %v1394
    %v1424 = vpack.c.b16 %v1397, %v1396
    %v1425 = vpack.c.b16 %v1399, %v1398
    %v1426 = vpack.c.b16 %v1401, %v1400
    %v1427 = vpack.c.b16 %v1403, %v1402
    %v1428 = vpack.c.b16 %v1405, %v1404
    %v1429 = vpack.c.b16 %v1407, %v1406
    %v1430 = vpack.c.b16 %v1409, %v1408
    %v1431 = vpack.c.b16 %v1411, %v1410
    %v1453 = vsel %vm131, %v1291, 0
    %1455 = vmatprep.subr.bf16.mxu0 0
    %1456 = vmatpush1.bf16.msra.mxu0 %v1412
    %1457 = vmatprep.subr.bf16.mxu0 0
    %1458 = vmatpush1.bf16.msra.mxu0 %v1413
    %1459 = vmatprep.subr.bf16.mxu0 0
    %1460 = vmatpush1.bf16.msra.mxu0 %v1414
    %1461 = vmatprep.subr.bf16.mxu0 0
    %1462 = vmatpush1.bf16.msra.mxu0 %v1415
    %1463 = vmatprep.subr.bf16.mxu0 0
    %1464 = vmatpush1.bf16.msra.mxu0 %v1416
    %1465 = vmatprep.subr.bf16.mxu0 0
    %1466 = vmatpush1.bf16.msra.mxu0 %v1417
    %1467 = vmatprep.subr.bf16.mxu0 0
    %1468 = vmatpush1.bf16.msra.mxu0 %v1418
    %1469 = vmatprep.subr.bf16.mxu0 0
    %1470 = vmatpush1.bf16.msra.mxu0 %v1419
    %1471 = vmatprep.subr.bf16.mxu0 0
    %1472 = vmatpush1.bf16.msra.mxu0 %v1420
    %1473 = vmatprep.subr.bf16.mxu0 0
    %1474 = vmatpush1.bf16.msra.mxu0 %v1421
    %1475 = vmatprep.subr.bf16.mxu0 0
    %1476 = vmatpush1.bf16.msra.mxu0 %v1422
    %1477 = vmatprep.subr.bf16.mxu0 0
    %1478 = vmatpush1.bf16.msra.mxu0 %v1423
    %1479 = vmatprep.subr.bf16.mxu0 0
    %1480 = vmatpush1.bf16.msra.mxu0 %v1424
    %1481 = vmatprep.subr.bf16.mxu0 0
    %1482 = vmatpush1.bf16.msra.mxu0 %v1425
    %1483 = vmatprep.subr.bf16.mxu0 0
    %1484 = vmatpush1.bf16.msra.mxu0 %v1426
    %1485 = vmatprep.subr.bf16.mxu0 0
    %1486 = vmatpush1.bf16.msra.mxu0 %v1427
    %1487 = vmatprep.mubr.bf16.mxu0 %v1290
    %1488 = vmatmul.mubr.bf16.gmra.mrb[0].mxu0 %v1289
    %v1489 = vpop.f32.mrb[0].mxu0
    %v1490 = vadd.f32 0.0, %v1489
    %v1491 = vpop.f32.mrb[0].mxu0
    %v1492 = vpop.f32.mrb[0].mxu0
    %v1493 = vpop.f32.mrb[0].mxu0
    %1494 = vdwg.mxu0
    %1495 = vmatprep.subr.bf16.mxu0 0
    %1496 = vmatpush1.bf16.msra.mxu0 %v1428
    %1497 = vmatprep.subr.bf16.mxu0 0
    %1498 = vmatpush1.bf16.msra.mxu0 %v1429
    %1499 = vmatprep.subr.bf16.mxu0 0
    %1500 = vmatpush1.bf16.msra.mxu0 %v1430
    %1501 = vmatprep.subr.bf16.mxu0 0
    %1502 = vmatpush1.bf16.msra.mxu0 %v1431
    %1503 = vmatprep.subr.bf16.mxu0 0
    %1504 = vmatpush1.bf16.msra.mxu0 0
    %1505 = vmatprep.subr.bf16.mxu0 0
    %1506 = vmatpush1.bf16.msra.mxu0 0
    %1507 = vmatprep.subr.bf16.mxu0 0
    %1508 = vmatpush1.bf16.msra.mxu0 0
    %1509 = vmatprep.subr.bf16.mxu0 0
    %1510 = vmatpush1.bf16.msra.mxu0 0
    %1511 = vmatprep.subr.bf16.mxu0 0
    %1512 = vmatpush1.bf16.msra.mxu0 0
    %1513 = vmatprep.subr.bf16.mxu0 0
    %1514 = vmatpush1.bf16.msra.mxu0 0
    %1515 = vmatprep.subr.bf16.mxu0 0
    %1516 = vmatpush1.bf16.msra.mxu0 0
    %1517 = vmatprep.subr.bf16.mxu0 0
    %1518 = vmatpush1.bf16.msra.mxu0 0
    %1519 = vmatprep.subr.bf16.mxu0 0
    %1520 = vmatpush1.bf16.msra.mxu0 0
    %1521 = vmatprep.subr.bf16.mxu0 0
    %1522 = vmatpush1.bf16.msra.mxu0 0
    %1523 = vmatprep.subr.bf16.mxu0 0
    %1524 = vmatpush1.bf16.msra.mxu0 0
    %1525 = vmatprep.subr.bf16.mxu0 0
    %1526 = vmatpush1.bf16.msra.mxu0 0
    %1527 = vmatprep.mubr.bf16.mxu0 0
    %1528 = vmatmul.mubr.bf16.gmra.mrb[0].mxu0 %v1453
    %v1529 = vpop.f32.mrb[0].mxu0
    %v1530 = vadd.f32 %v1490, %v1529
    %v1531 = vpop.f32.mrb[0].mxu0
    %v1532 = vpop.f32.mrb[0].mxu0
    %v1533 = vpop.f32.mrb[0].mxu0
    %1534 = vdwg.mxu0
    %v1535 = vmax.f32 %v1530, 0.0
    %1536 = vst [vmem:[#allocation3] sm:$0xff] %v1535
    %v1537 = vld [vmem:[#allocation2] sm:$0xff]
    %v1538 = vld [vmem:[#allocation2 + $0x8] sm:$0xff]
    %v1539 = vld [vmem:[#allocation2 + $0x10] sm:$0xff]
    %v1540 = vpack.c.bf16 %v1537, %v1537
    %v1541 = vpack.c.bf16 %v1538, %v1538
    %v1542 = vpack.c.bf16 %v1539, %v1539
    %v1543 = vld [vmem:[#allocation4] sm:$0xf]
    %v1544 = vld [vmem:[#allocation4 + $0x4] sm:$0xf]
    %v1545 = vld [vmem:[#allocation4 + $0x8] sm:$0xf]
    %v1546 = vld [vmem:[#allocation4 + $0xc] sm:$0xf]
    %v1547 = vld [vmem:[#allocation4 + $0x10] sm:$0xf]
    %v1548 = vld [vmem:[#allocation4 + $0x14] sm:$0xf]
    %v1549 = vld [vmem:[#allocation4 + $0x18] sm:$0xf]
    %v1550 = vld [vmem:[#allocation4 + $0x1c] sm:$0xf]
    %v1551 = vld [vmem:[#allocation4 + $0x20] sm:$0xf]
    %v1552 = vld [vmem:[#allocation4 + $0x24] sm:$0xf]
    %v1553 = vld [vmem:[#allocation4 + $0x28] sm:$0xf]
    %v1554 = vld [vmem:[#allocation4 + $0x2c] sm:$0xf]
    %v1555 = vld [vmem:[#allocation4 + $0x30] sm:$0xf]
    %v1556 = vld [vmem:[#allocation4 + $0x34] sm:$0xf]
    %v1557 = vld [vmem:[#allocation4 + $0x38] sm:$0xf]
    %v1558 = vld [vmem:[#allocation4 + $0x3c] sm:$0xf]
    %v1559 = vld [vmem:[#allocation4 + $0x40] sm:$0xf]
    %v1560 = vld [vmem:[#allocation4 + $0x44] sm:$0xf]
    %v1561 = vld [vmem:[#allocation4 + $0x48] sm:$0xf]
    %v1562 = vld [vmem:[#allocation4 + $0x4c] sm:$0xf]
    %v1563 = vld [vmem:[#allocation4 + $0x50] sm:$0xf]
    %v1564 = vld [vmem:[#allocation4 + $0x54] sm:$0xf]
    %v1565 = vld [vmem:[#allocation4 + $0x58] sm:$0xf]
    %v1566 = vld [vmem:[#allocation4 + $0x5c] sm:$0xf]
    %v1567 = vld [vmem:[#allocation4 + $0x60] sm:$0xf]
    %v1568 = vld [vmem:[#allocation4 + $0x64] sm:$0xf]
    %v1569 = vld [vmem:[#allocation4 + $0x68] sm:$0xf]
    %v1570 = vld [vmem:[#allocation4 + $0x6c] sm:$0xf]
    %v1571 = vld [vmem:[#allocation4 + $0x70] sm:$0xf]
    %v1572 = vld [vmem:[#allocation4 + $0x74] sm:$0xf]
    %v1573 = vld [vmem:[#allocation4 + $0x78] sm:$0xf]
    %v1574 = vld [vmem:[#allocation4 + $0x7c] sm:$0xf]
    %v1575 = vld [vmem:[#allocation4 + $0x80] sm:$0xf]
    %v1576 = vld [vmem:[#allocation4 + $0x84] sm:$0xf]
    %v1577 = vld [vmem:[#allocation4 + $0x88] sm:$0xf]
    %v1578 = vld [vmem:[#allocation4 + $0x8c] sm:$0xf]
    %v1579 = vld [vmem:[#allocation4 + $0x90] sm:$0xf]
    %v1580 = vld [vmem:[#allocation4 + $0x94] sm:$0xf]
    %v1581 = vld [vmem:[#allocation4 + $0x98] sm:$0xf]
    %v1582 = vld [vmem:[#allocation4 + $0x9c] sm:$0xf]
    %1586 = vrot.lane.b32.xlu0 %v1540, 64
    %v1587 = vpop.permute.xlu0 %1586
    %1588 = vrot.lane.b32.xlu0 %v1541, 64
    %v1589 = vpop.permute.xlu0 %1588
    %1590 = vrot.lane.b32.xlu0 %v1542, 64
    %v1591 = vpop.permute.xlu0 %1590
    %vm1592 = vcmask 523264
    %v1593 = vsel %vm1592, %v1587, %v1589
    %v1594 = vsel %vm1592, %v1589, %v1591
    %v1637 = vunpack.c.l.b16 %v1543
    %v1638 = vunpack.c.l.b16 %v1544
    %v1639 = vunpack.c.l.b16 %v1545
    %v1640 = vunpack.c.l.b16 %v1546
    %v1641 = vunpack.c.l.b16 %v1547
    %v1642 = vunpack.c.l.b16 %v1548
    %v1643 = vunpack.c.l.b16 %v1549
    %v1644 = vunpack.c.l.b16 %v1550
    %v1645 = vunpack.c.l.b16 %v1551
    %v1646 = vunpack.c.l.b16 %v1552
    %v1647 = vunpack.c.l.b16 %v1553
    %v1648 = vunpack.c.l.b16 %v1554
    %v1649 = vunpack.c.l.b16 %v1555
    %v1650 = vunpack.c.l.b16 %v1556
    %v1651 = vunpack.c.l.b16 %v1557
    %v1652 = vunpack.c.l.b16 %v1558
    %v1653 = vunpack.c.l.b16 %v1559
    %v1654 = vunpack.c.l.b16 %v1560
    %v1655 = vunpack.c.l.b16 %v1561
    %v1656 = vunpack.c.l.b16 %v1562
    %v1657 = vunpack.c.l.b16 %v1563
    %v1658 = vunpack.c.l.b16 %v1564
    %v1659 = vunpack.c.l.b16 %v1565
    %v1660 = vunpack.c.l.b16 %v1566
    %v1661 = vunpack.c.l.b16 %v1567
    %v1662 = vunpack.c.l.b16 %v1568
    %v1663 = vunpack.c.l.b16 %v1569
    %v1664 = vunpack.c.l.b16 %v1570
    %v1665 = vunpack.c.l.b16 %v1571
    %v1666 = vunpack.c.l.b16 %v1572
    %v1667 = vunpack.c.l.b16 %v1573
    %v1668 = vunpack.c.l.b16 %v1574
    %v1669 = vunpack.c.l.b16 %v1575
    %v1670 = vunpack.c.l.b16 %v1576
    %v1671 = vunpack.c.l.b16 %v1577
    %v1672 = vunpack.c.l.b16 %v1578
    %v1673 = vunpack.c.l.b16 %v1579
    %v1674 = vunpack.c.l.b16 %v1580
    %v1675 = vunpack.c.l.b16 %v1581
    %v1676 = vunpack.c.l.b16 %v1582
    %v1677 = vpack.c.b16 %v1638, %v1637
    %v1678 = vpack.c.b16 %v1640, %v1639
    %v1679 = vpack.c.b16 %v1642, %v1641
    %v1680 = vpack.c.b16 %v1644, %v1643
    %v1681 = vpack.c.b16 %v1646, %v1645
    %v1682 = vpack.c.b16 %v1648, %v1647
    %v1683 = vpack.c.b16 %v1650, %v1649
    %v1684 = vpack.c.b16 %v1652, %v1651
    %v1685 = vpack.c.b16 %v1654, %v1653
    %v1686 = vpack.c.b16 %v1656, %v1655
    %v1687 = vpack.c.b16 %v1658, %v1657
    %v1688 = vpack.c.b16 %v1660, %v1659
    %v1689 = vpack.c.b16 %v1662, %v1661
    %v1690 = vpack.c.b16 %v1664, %v1663
    %v1691 = vpack.c.b16 %v1666, %v1665
    %v1692 = vpack.c.b16 %v1668, %v1667
    %v1693 = vpack.c.b16 %v1670, %v1669
    %v1694 = vpack.c.b16 %v1672, %v1671
    %v1695 = vpack.c.b16 %v1674, %v1673
    %v1696 = vpack.c.b16 %v1676, %v1675
    %v1718 = vsel %vm131, %v1591, 0
    %1720 = vmatprep.subr.bf16.mxu0 0
    %1721 = vmatpush1.bf16.msra.mxu0 %v1677
    %1722 = vmatprep.subr.bf16.mxu0 0
    %1723 = vmatpush1.bf16.msra.mxu0 %v1678
    %1724 = vmatprep.subr.bf16.mxu0 0
    %1725 = vmatpush1.bf16.msra.mxu0 %v1679
    %1726 = vmatprep.subr.bf16.mxu0 0
    %1727 = vmatpush1.bf16.msra.mxu0 %v1680
    %1728 = vmatprep.subr.bf16.mxu0 0
    %1729 = vmatpush1.bf16.msra.mxu0 %v1681
    %1730 = vmatprep.subr.bf16.mxu0 0
    %1731 = vmatpush1.bf16.msra.mxu0 %v1682
    %1732 = vmatprep.subr.bf16.mxu0 0
    %1733 = vmatpush1.bf16.msra.mxu0 %v1683
    %1734 = vmatprep.subr.bf16.mxu0 0
    %1735 = vmatpush1.bf16.msra.mxu0 %v1684
    %1736 = vmatprep.subr.bf16.mxu0 0
    %1737 = vmatpush1.bf16.msra.mxu0 %v1685
    %1738 = vmatprep.subr.bf16.mxu0 0
    %1739 = vmatpush1.bf16.msra.mxu0 %v1686
    %1740 = vmatprep.subr.bf16.mxu0 0
    %1741 = vmatpush1.bf16.msra.mxu0 %v1687
    %1742 = vmatprep.subr.bf16.mxu0 0
    %1743 = vmatpush1.bf16.msra.mxu0 %v1688
    %1744 = vmatprep.subr.bf16.mxu0 0
    %1745 = vmatpush1.bf16.msra.mxu0 %v1689
    %1746 = vmatprep.subr.bf16.mxu0 0
    %1747 = vmatpush1.bf16.msra.mxu0 %v1690
    %1748 = vmatprep.subr.bf16.mxu0 0
    %1749 = vmatpush1.bf16.msra.mxu0 %v1691
    %1750 = vmatprep.subr.bf16.mxu0 0
    %1751 = vmatpush1.bf16.msra.mxu0 %v1692
    %1752 = vmatprep.mubr.bf16.mxu0 %v1594
    %1753 = vmatmul.mubr.bf16.gmra.mrb[0].mxu0 %v1593
    %v1754 = vpop.f32.mrb[0].mxu0
    %v1755 = vadd.f32 0.0, %v1754
    %v1756 = vpop.f32.mrb[0].mxu0
    %v1757 = vpop.f32.mrb[0].mxu0
    %v1758 = vpop.f32.mrb[0].mxu0
    %1759 = vdwg.mxu0
    %1760 = vmatprep.subr.bf16.mxu0 0
    %1761 = vmatpush1.bf16.msra.mxu0 %v1693
    %1762 = vmatprep.subr.bf16.mxu0 0
    %1763 = vmatpush1.bf16.msra.mxu0 %v1694
    %1764 = vmatprep.subr.bf16.mxu0 0
    %1765 = vmatpush1.bf16.msra.mxu0 %v1695
    %1766 = vmatprep.subr.bf16.mxu0 0
    %1767 = vmatpush1.bf16.msra.mxu0 %v1696
    %1768 = vmatprep.subr.bf16.mxu0 0
    %1769 = vmatpush1.bf16.msra.mxu0 0
    %1770 = vmatprep.subr.bf16.mxu0 0
    %1771 = vmatpush1.bf16.msra.mxu0 0
    %1772 = vmatprep.subr.bf16.mxu0 0
    %1773 = vmatpush1.bf16.msra.mxu0 0
    %1774 = vmatprep.subr.bf16.mxu0 0
    %1775 = vmatpush1.bf16.msra.mxu0 0
    %1776 = vmatprep.subr.bf16.mxu0 0
    %1777 = vmatpush1.bf16.msra.mxu0 0
    %1778 = vmatprep.subr.bf16.mxu0 0
    %1779 = vmatpush1.bf16.msra.mxu0 0
    %1780 = vmatprep.subr.bf16.mxu0 0
    %1781 = vmatpush1.bf16.msra.mxu0 0
    %1782 = vmatprep.subr.bf16.mxu0 0
    %1783 = vmatpush1.bf16.msra.mxu0 0
    %1784 = vmatprep.subr.bf16.mxu0 0
    %1785 = vmatpush1.bf16.msra.mxu0 0
    %1786 = vmatprep.subr.bf16.mxu0 0
    %1787 = vmatpush1.bf16.msra.mxu0 0
    %1788 = vmatprep.subr.bf16.mxu0 0
    %1789 = vmatpush1.bf16.msra.mxu0 0
    %1790 = vmatprep.subr.bf16.mxu0 0
    %1791 = vmatpush1.bf16.msra.mxu0 0
    %1792 = vmatprep.mubr.bf16.mxu0 0
    %1793 = vmatmul.mubr.bf16.gmra.mrb[0].mxu0 %v1718
    %v1794 = vpop.f32.mrb[0].mxu0
    %v1795 = vadd.f32 %v1755, %v1794
    %v1796 = vpop.f32.mrb[0].mxu0
    %v1797 = vpop.f32.mrb[0].mxu0
    %v1798 = vpop.f32.mrb[0].mxu0
    %1799 = vdwg.mxu0
    %v1800 = vmax.f32 %v1795, 0.0
    %1801 = vst [vmem:[#allocation3 + $0x8] sm:$0xff] %v1800
    %v1802 = vld [vmem:[#allocation2 + $0x8] sm:$0xff]
    %v1803 = vld [vmem:[#allocation2 + $0x10] sm:$0xff]
    %v1804 = vld [vmem:[#allocation2 + $0x18] sm:$0xff]
    %v1805 = vpack.c.bf16 %v1802, %v1802
    %v1806 = vpack.c.bf16 %v1803, %v1803
    %v1807 = vpack.c.bf16 %v1804, %v1804
    %v1808 = vld [vmem:[#allocation4] sm:$0xf]
    %v1809 = vld [vmem:[#allocation4 + $0x4] sm:$0xf]
    %v1810 = vld [vmem:[#allocation4 + $0x8] sm:$0xf]
    %v1811 = vld [vmem:[#allocation4 + $0xc] sm:$0xf]
    %v1812 = vld [vmem:[#allocation4 + $0x10] sm:$0xf]
    %v1813 = vld [vmem:[#allocation4 + $0x14] sm:$0xf]
    %v1814 = vld [vmem:[#allocation4 + $0x18] sm:$0xf]
    %v1815 = vld [vmem:[#allocation4 + $0x1c] sm:$0xf]
    %v1816 = vld [vmem:[#allocation4 + $0x20] sm:$0xf]
    %v1817 = vld [vmem:[#allocation4 + $0x24] sm:$0xf]
    %v1818 = vld [vmem:[#allocation4 + $0x28] sm:$0xf]
    %v1819 = vld [vmem:[#allocation4 + $0x2c] sm:$0xf]
    %v1820 = vld [vmem:[#allocation4 + $0x30] sm:$0xf]
    %v1821 = vld [vmem:[#allocation4 + $0x34] sm:$0xf]
    %v1822 = vld [vmem:[#allocation4 + $0x38] sm:$0xf]
    %v1823 = vld [vmem:[#allocation4 + $0x3c] sm:$0xf]
    %v1824 = vld [vmem:[#allocation4 + $0x40] sm:$0xf]
    %v1825 = vld [vmem:[#allocation4 + $0x44] sm:$0xf]
    %v1826 = vld [vmem:[#allocation4 + $0x48] sm:$0xf]
    %v1827 = vld [vmem:[#allocation4 + $0x4c] sm:$0xf]
    %v1828 = vld [vmem:[#allocation4 + $0x50] sm:$0xf]
    %v1829 = vld [vmem:[#allocation4 + $0x54] sm:$0xf]
    %v1830 = vld [vmem:[#allocation4 + $0x58] sm:$0xf]
    %v1831 = vld [vmem:[#allocation4 + $0x5c] sm:$0xf]
    %v1832 = vld [vmem:[#allocation4 + $0x60] sm:$0xf]
    %v1833 = vld [vmem:[#allocation4 + $0x64] sm:$0xf]
    %v1834 = vld [vmem:[#allocation4 + $0x68] sm:$0xf]
    %v1835 = vld [vmem:[#allocation4 + $0x6c] sm:$0xf]
    %v1836 = vld [vmem:[#allocation4 + $0x70] sm:$0xf]
    %v1837 = vld [vmem:[#allocation4 + $0x74] sm:$0xf]
    %v1838 = vld [vmem:[#allocation4 + $0x78] sm:$0xf]
    %v1839 = vld [vmem:[#allocation4 + $0x7c] sm:$0xf]
    %v1840 = vld [vmem:[#allocation4 + $0x80] sm:$0xf]
    %v1841 = vld [vmem:[#allocation4 + $0x84] sm:$0xf]
    %v1842 = vld [vmem:[#allocation4 + $0x88] sm:$0xf]
    %v1843 = vld [vmem:[#allocation4 + $0x8c] sm:$0xf]
    %v1844 = vld [vmem:[#allocation4 + $0x90] sm:$0xf]
    %v1845 = vld [vmem:[#allocation4 + $0x94] sm:$0xf]
    %v1846 = vld [vmem:[#allocation4 + $0x98] sm:$0xf]
    %v1847 = vld [vmem:[#allocation4 + $0x9c] sm:$0xf]
    %v1888 = vunpack.c.l.b16 %v1808
    %v1889 = vunpack.c.l.b16 %v1809
    %v1890 = vunpack.c.l.b16 %v1810
    %v1891 = vunpack.c.l.b16 %v1811
    %v1892 = vunpack.c.l.b16 %v1812
    %v1893 = vunpack.c.l.b16 %v1813
    %v1894 = vunpack.c.l.b16 %v1814
    %v1895 = vunpack.c.l.b16 %v1815
    %v1896 = vunpack.c.l.b16 %v1816
    %v1897 = vunpack.c.l.b16 %v1817
    %v1898 = vunpack.c.l.b16 %v1818
    %v1899 = vunpack.c.l.b16 %v1819
    %v1900 = vunpack.c.l.b16 %v1820
    %v1901 = vunpack.c.l.b16 %v1821
    %v1902 = vunpack.c.l.b16 %v1822
    %v1903 = vunpack.c.l.b16 %v1823
    %v1904 = vunpack.c.l.b16 %v1824
    %v1905 = vunpack.c.l.b16 %v1825
    %v1906 = vunpack.c.l.b16 %v1826
    %v1907 = vunpack.c.l.b16 %v1827
    %v1908 = vunpack.c.l.b16 %v1828
    %v1909 = vunpack.c.l.b16 %v1829
    %v1910 = vunpack.c.l.b16 %v1830
    %v1911 = vunpack.c.l.b16 %v1831
    %v1912 = vunpack.c.l.b16 %v1832
    %v1913 = vunpack.c.l.b16 %v1833
    %v1914 = vunpack.c.l.b16 %v1834
    %v1915 = vunpack.c.l.b16 %v1835
    %v1916 = vunpack.c.l.b16 %v1836
    %v1917 = vunpack.c.l.b16 %v1837
    %v1918 = vunpack.c.l.b16 %v1838
    %v1919 = vunpack.c.l.b16 %v1839
    %v1920 = vunpack.c.l.b16 %v1840
    %v1921 = vunpack.c.l.b16 %v1841
    %v1922 = vunpack.c.l.b16 %v1842
    %v1923 = vunpack.c.l.b16 %v1843
    %v1924 = vunpack.c.l.b16 %v1844
    %v1925 = vunpack.c.l.b16 %v1845
    %v1926 = vunpack.c.l.b16 %v1846
    %v1927 = vunpack.c.l.b16 %v1847
    %v1928 = vpack.c.b16 %v1889, %v1888
    %v1929 = vpack.c.b16 %v1891, %v1890
    %v1930 = vpack.c.b16 %v1893, %v1892
    %v1931 = vpack.c.b16 %v1895, %v1894
    %v1932 = vpack.c.b16 %v1897, %v1896
    %v1933 = vpack.c.b16 %v1899, %v1898
    %v1934 = vpack.c.b16 %v1901, %v1900
    %v1935 = vpack.c.b16 %v1903, %v1902
    %v1936 = vpack.c.b16 %v1905, %v1904
    %v1937 = vpack.c.b16 %v1907, %v1906
    %v1938 = vpack.c.b16 %v1909, %v1908
    %v1939 = vpack.c.b16 %v1911, %v1910
    %v1940 = vpack.c.b16 %v1913, %v1912
    %v1941 = vpack.c.b16 %v1915, %v1914
    %v1942 = vpack.c.b16 %v1917, %v1916
    %v1943 = vpack.c.b16 %v1919, %v1918
    %v1944 = vpack.c.b16 %v1921, %v1920
    %v1945 = vpack.c.b16 %v1923, %v1922
    %v1946 = vpack.c.b16 %v1925, %v1924
    %v1947 = vpack.c.b16 %v1927, %v1926
    %v1969 = vsel %vm131, %v1807, 0
    %1971 = vmatprep.subr.bf16.mxu0 0
    %1972 = vmatpush1.bf16.msra.mxu0 %v1928
    %1973 = vmatprep.subr.bf16.mxu0 0
    %1974 = vmatpush1.bf16.msra.mxu0 %v1929
    %1975 = vmatprep.subr.bf16.mxu0 0
    %1976 = vmatpush1.bf16.msra.mxu0 %v1930
    %1977 = vmatprep.subr.bf16.mxu0 0
    %1978 = vmatpush1.bf16.msra.mxu0 %v1931
    %1979 = vmatprep.subr.bf16.mxu0 0
    %1980 = vmatpush1.bf16.msra.mxu0 %v1932
    %1981 = vmatprep.subr.bf16.mxu0 0
    %1982 = vmatpush1.bf16.msra.mxu0 %v1933
    %1983 = vmatprep.subr.bf16.mxu0 0
    %1984 = vmatpush1.bf16.msra.mxu0 %v1934
    %1985 = vmatprep.subr.bf16.mxu0 0
    %1986 = vmatpush1.bf16.msra.mxu0 %v1935
    %1987 = vmatprep.subr.bf16.mxu0 0
    %1988 = vmatpush1.bf16.msra.mxu0 %v1936
    %1989 = vmatprep.subr.bf16.mxu0 0
    %1990 = vmatpush1.bf16.msra.mxu0 %v1937
    %1991 = vmatprep.subr.bf16.mxu0 0
    %1992 = vmatpush1.bf16.msra.mxu0 %v1938
    %1993 = vmatprep.subr.bf16.mxu0 0
    %1994 = vmatpush1.bf16.msra.mxu0 %v1939
    %1995 = vmatprep.subr.bf16.mxu0 0
    %1996 = vmatpush1.bf16.msra.mxu0 %v1940
    %1997 = vmatprep.subr.bf16.mxu0 0
    %1998 = vmatpush1.bf16.msra.mxu0 %v1941
    %1999 = vmatprep.subr.bf16.mxu0 0
    %2000 = vmatpush1.bf16.msra.mxu0 %v1942
    %2001 = vmatprep.subr.bf16.mxu0 0
    %2002 = vmatpush1.bf16.msra.mxu0 %v1943
    %2003 = vmatprep.mubr.bf16.mxu0 %v1806
    %2004 = vmatmul.mubr.bf16.gmra.mrb[0].mxu0 %v1805
    %v2005 = vpop.f32.mrb[0].mxu0
    %v2006 = vadd.f32 0.0, %v2005
    %v2007 = vpop.f32.mrb[0].mxu0
    %v2008 = vpop.f32.mrb[0].mxu0
    %v2009 = vpop.f32.mrb[0].mxu0
    %2010 = vdwg.mxu0
    %2011 = vmatprep.subr.bf16.mxu0 0
    %2012 = vmatpush1.bf16.msra.mxu0 %v1944
    %2013 = vmatprep.subr.bf16.mxu0 0
    %2014 = vmatpush1.bf16.msra.mxu0 %v1945
    %2015 = vmatprep.subr.bf16.mxu0 0
    %2016 = vmatpush1.bf16.msra.mxu0 %v1946
    %2017 = vmatprep.subr.bf16.mxu0 0
    %2018 = vmatpush1.bf16.msra.mxu0 %v1947
    %2019 = vmatprep.subr.bf16.mxu0 0
    %2020 = vmatpush1.bf16.msra.mxu0 0
    %2021 = vmatprep.subr.bf16.mxu0 0
    %2022 = vmatpush1.bf16.msra.mxu0 0
    %2023 = vmatprep.subr.bf16.mxu0 0
    %2024 = vmatpush1.bf16.msra.mxu0 0
    %2025 = vmatprep.subr.bf16.mxu0 0
    %2026 = vmatpush1.bf16.msra.mxu0 0
    %2027 = vmatprep.subr.bf16.mxu0 0
    %2028 = vmatpush1.bf16.msra.mxu0 0
    %2029 = vmatprep.subr.bf16.mxu0 0
    %2030 = vmatpush1.bf16.msra.mxu0 0
    %2031 = vmatprep.subr.bf16.mxu0 0
    %2032 = vmatpush1.bf16.msra.mxu0 0
    %2033 = vmatprep.subr.bf16.mxu0 0
    %2034 = vmatpush1.bf16.msra.mxu0 0
    %2035 = vmatprep.subr.bf16.mxu0 0
    %2036 = vmatpush1.bf16.msra.mxu0 0
    %2037 = vmatprep.subr.bf16.mxu0 0
    %2038 = vmatpush1.bf16.msra.mxu0 0
    %2039 = vmatprep.subr.bf16.mxu0 0
    %2040 = vmatpush1.bf16.msra.mxu0 0
    %2041 = vmatprep.subr.bf16.mxu0 0
    %2042 = vmatpush1.bf16.msra.mxu0 0
    %2043 = vmatprep.mubr.bf16.mxu0 0
    %2044 = vmatmul.mubr.bf16.gmra.mrb[0].mxu0 %v1969
    %v2045 = vpop.f32.mrb[0].mxu0
    %v2046 = vadd.f32 %v2006, %v2045
    %v2047 = vpop.f32.mrb[0].mxu0
    %v2048 = vpop.f32.mrb[0].mxu0
    %v2049 = vpop.f32.mrb[0].mxu0
    %2050 = vdwg.mxu0
    %v2051 = vmax.f32 %v2046, 0.0
    %2052 = vst [vmem:[#allocation3 + $0x10] sm:$0xff] %v2051
    %v2053 = vld [vmem:[#allocation2 + $0x8] sm:$0xff]
    %v2054 = vld [vmem:[#allocation2 + $0x10] sm:$0xff]
    %v2055 = vld [vmem:[#allocation2 + $0x18] sm:$0xff]
    %v2056 = vpack.c.bf16 %v2053, %v2053
    %v2057 = vpack.c.bf16 %v2054, %v2054
    %v2058 = vpack.c.bf16 %v2055, %v2055
    %v2059 = vld [vmem:[#allocation4] sm:$0xf]
    %v2060 = vld [vmem:[#allocation4 + $0x4] sm:$0xf]
    %v2061 = vld [vmem:[#allocation4 + $0x8] sm:$0xf]
    %v2062 = vld [vmem:[#allocation4 + $0xc] sm:$0xf]
    %v2063 = vld [vmem:[#allocation4 + $0x10] sm:$0xf]
    %v2064 = vld [vmem:[#allocation4 + $0x14] sm:$0xf]
    %v2065 = vld [vmem:[#allocation4 + $0x18] sm:$0xf]
    %v2066 = vld [vmem:[#allocation4 + $0x1c] sm:$0xf]
    %v2067 = vld [vmem:[#allocation4 + $0x20] sm:$0xf]
    %v2068 = vld [vmem:[#allocation4 + $0x24] sm:$0xf]
    %v2069 = vld [vmem:[#allocation4 + $0x28] sm:$0xf]
    %v2070 = vld [vmem:[#allocation4 + $0x2c] sm:$0xf]
    %v2071 = vld [vmem:[#allocation4 + $0x30] sm:$0xf]
    %v2072 = vld [vmem:[#allocation4 + $0x34] sm:$0xf]
    %v2073 = vld [vmem:[#allocation4 + $0x38] sm:$0xf]
    %v2074 = vld [vmem:[#allocation4 + $0x3c] sm:$0xf]
    %v2075 = vld [vmem:[#allocation4 + $0x40] sm:$0xf]
    %v2076 = vld [vmem:[#allocation4 + $0x44] sm:$0xf]
    %v2077 = vld [vmem:[#allocation4 + $0x48] sm:$0xf]
    %v2078 = vld [vmem:[#allocation4 + $0x4c] sm:$0xf]
    %v2079 = vld [vmem:[#allocation4 + $0x50] sm:$0xf]
    %v2080 = vld [vmem:[#allocation4 + $0x54] sm:$0xf]
    %v2081 = vld [vmem:[#allocation4 + $0x58] sm:$0xf]
    %v2082 = vld [vmem:[#allocation4 + $0x5c] sm:$0xf]
    %v2083 = vld [vmem:[#allocation4 + $0x60] sm:$0xf]
    %v2084 = vld [vmem:[#allocation4 + $0x64] sm:$0xf]
    %v2085 = vld [vmem:[#allocation4 + $0x68] sm:$0xf]
    %v2086 = vld [vmem:[#allocation4 + $0x6c] sm:$0xf]
    %v2087 = vld [vmem:[#allocation4 + $0x70] sm:$0xf]
    %v2088 = vld [vmem:[#allocation4 + $0x74] sm:$0xf]
    %v2089 = vld [vmem:[#allocation4 + $0x78] sm:$0xf]
    %v2090 = vld [vmem:[#allocation4 + $0x7c] sm:$0xf]
    %v2091 = vld [vmem:[#allocation4 + $0x80] sm:$0xf]
    %v2092 = vld [vmem:[#allocation4 + $0x84] sm:$0xf]
    %v2093 = vld [vmem:[#allocation4 + $0x88] sm:$0xf]
    %v2094 = vld [vmem:[#allocation4 + $0x8c] sm:$0xf]
    %v2095 = vld [vmem:[#allocation4 + $0x90] sm:$0xf]
    %v2096 = vld [vmem:[#allocation4 + $0x94] sm:$0xf]
    %v2097 = vld [vmem:[#allocation4 + $0x98] sm:$0xf]
    %v2098 = vld [vmem:[#allocation4 + $0x9c] sm:$0xf]
    %2102 = vrot.lane.b32.xlu0 %v2056, 64
    %v2103 = vpop.permute.xlu0 %2102
    %2104 = vrot.lane.b32.xlu0 %v2057, 64
    %v2105 = vpop.permute.xlu0 %2104
    %2106 = vrot.lane.b32.xlu0 %v2058, 64
    %v2107 = vpop.permute.xlu0 %2106
    %v2108 = vsel %vm1592, %v2103, %v2105
    %v2109 = vsel %vm1592, %v2105, %v2107
    %v2152 = vunpack.c.l.b16 %v2059
    %v2153 = vunpack.c.l.b16 %v2060
    %v2154 = vunpack.c.l.b16 %v2061
    %v2155 = vunpack.c.l.b16 %v2062
    %v2156 = vunpack.c.l.b16 %v2063
    %v2157 = vunpack.c.l.b16 %v2064
    %v2158 = vunpack.c.l.b16 %v2065
    %v2159 = vunpack.c.l.b16 %v2066
    %v2160 = vunpack.c.l.b16 %v2067
    %v2161 = vunpack.c.l.b16 %v2068
    %v2162 = vunpack.c.l.b16 %v2069
    %v2163 = vunpack.c.l.b16 %v2070
    %v2164 = vunpack.c.l.b16 %v2071
    %v2165 = vunpack.c.l.b16 %v2072
    %v2166 = vunpack.c.l.b16 %v2073
    %v2167 = vunpack.c.l.b16 %v2074
    %v2168 = vunpack.c.l.b16 %v2075
    %v2169 = vunpack.c.l.b16 %v2076
    %v2170 = vunpack.c.l.b16 %v2077
    %v2171 = vunpack.c.l.b16 %v2078
    %v2172 = vunpack.c.l.b16 %v2079
    %v2173 = vunpack.c.l.b16 %v2080
    %v2174 = vunpack.c.l.b16 %v2081
    %v2175 = vunpack.c.l.b16 %v2082
    %v2176 = vunpack.c.l.b16 %v2083
    %v2177 = vunpack.c.l.b16 %v2084
    %v2178 = vunpack.c.l.b16 %v2085
    %v2179 = vunpack.c.l.b16 %v2086
    %v2180 = vunpack.c.l.b16 %v2087
    %v2181 = vunpack.c.l.b16 %v2088
    %v2182 = vunpack.c.l.b16 %v2089
    %v2183 = vunpack.c.l.b16 %v2090
    %v2184 = vunpack.c.l.b16 %v2091
    %v2185 = vunpack.c.l.b16 %v2092
    %v2186 = vunpack.c.l.b16 %v2093
    %v2187 = vunpack.c.l.b16 %v2094
    %v2188 = vunpack.c.l.b16 %v2095
    %v2189 = vunpack.c.l.b16 %v2096
    %v2190 = vunpack.c.l.b16 %v2097
    %v2191 = vunpack.c.l.b16 %v2098
    %v2192 = vpack.c.b16 %v2153, %v2152
    %v2193 = vpack.c.b16 %v2155, %v2154
    %v2194 = vpack.c.b16 %v2157, %v2156
    %v2195 = vpack.c.b16 %v2159, %v2158
    %v2196 = vpack.c.b16 %v2161, %v2160
    %v2197 = vpack.c.b16 %v2163, %v2162
    %v2198 = vpack.c.b16 %v2165, %v2164
    %v2199 = vpack.c.b16 %v2167, %v2166
    %v2200 = vpack.c.b16 %v2169, %v2168
    %v2201 = vpack.c.b16 %v2171, %v2170
    %v2202 = vpack.c.b16 %v2173, %v2172
    %v2203 = vpack.c.b16 %v2175, %v2174
    %v2204 = vpack.c.b16 %v2177, %v2176
    %v2205 = vpack.c.b16 %v2179, %v2178
    %v2206 = vpack.c.b16 %v2181, %v2180
    %v2207 = vpack.c.b16 %v2183, %v2182
    %v2208 = vpack.c.b16 %v2185, %v2184
    %v2209 = vpack.c.b16 %v2187, %v2186
    %v2210 = vpack.c.b16 %v2189, %v2188
    %v2211 = vpack.c.b16 %v2191, %v2190
    %v2233 = vsel %vm131, %v2107, 0
    %2235 = vmatprep.subr.bf16.mxu0 0
    %2236 = vmatpush1.bf16.msra.mxu0 %v2192
    %2237 = vmatprep.subr.bf16.mxu0 0
    %2238 = vmatpush1.bf16.msra.mxu0 %v2193
    %2239 = vmatprep.subr.bf16.mxu0 0
    %2240 = vmatpush1.bf16.msra.mxu0 %v2194
    %2241 = vmatprep.subr.bf16.mxu0 0
    %2242 = vmatpush1.bf16.msra.mxu0 %v2195
    %2243 = vmatprep.subr.bf16.mxu0 0
    %2244 = vmatpush1.bf16.msra.mxu0 %v2196
    %2245 = vmatprep.subr.bf16.mxu0 0
    %2246 = vmatpush1.bf16.msra.mxu0 %v2197
    %2247 = vmatprep.subr.bf16.mxu0 0
    %2248 = vmatpush1.bf16.msra.mxu0 %v2198
    %2249 = vmatprep.subr.bf16.mxu0 0
    %2250 = vmatpush1.bf16.msra.mxu0 %v2199
    %2251 = vmatprep.subr.bf16.mxu0 0
    %2252 = vmatpush1.bf16.msra.mxu0 %v2200
    %2253 = vmatprep.subr.bf16.mxu0 0
    %2254 = vmatpush1.bf16.msra.mxu0 %v2201
    %2255 = vmatprep.subr.bf16.mxu0 0
    %2256 = vmatpush1.bf16.msra.mxu0 %v2202
    %2257 = vmatprep.subr.bf16.mxu0 0
    %2258 = vmatpush1.bf16.msra.mxu0 %v2203
    %2259 = vmatprep.subr.bf16.mxu0 0
    %2260 = vmatpush1.bf16.msra.mxu0 %v2204
    %2261 = vmatprep.subr.bf16.mxu0 0
    %2262 = vmatpush1.bf16.msra.mxu0 %v2205
    %2263 = vmatprep.subr.bf16.mxu0 0
    %2264 = vmatpush1.bf16.msra.mxu0 %v2206
    %2265 = vmatprep.subr.bf16.mxu0 0
    %2266 = vmatpush1.bf16.msra.mxu0 %v2207
    %2267 = vmatprep.mubr.bf16.mxu0 %v2109
    %2268 = vmatmul.mubr.bf16.gmra.mrb[0].mxu0 %v2108
    %v2269 = vpop.f32.mrb[0].mxu0
    %v2270 = vadd.f32 0.0, %v2269
    %v2271 = vpop.f32.mrb[0].mxu0
    %v2272 = vpop.f32.mrb[0].mxu0
    %v2273 = vpop.f32.mrb[0].mxu0
    %2274 = vdwg.mxu0
    %2275 = vmatprep.subr.bf16.mxu0 0
    %2276 = vmatpush1.bf16.msra.mxu0 %v2208
    %2277 = vmatprep.subr.bf16.mxu0 0
    %2278 = vmatpush1.bf16.msra.mxu0 %v2209
    %2279 = vmatprep.subr.bf16.mxu0 0
    %2280 = vmatpush1.bf16.msra.mxu0 %v2210
    %2281 = vmatprep.subr.bf16.mxu0 0
    %2282 = vmatpush1.bf16.msra.mxu0 %v2211
    %2283 = vmatprep.subr.bf16.mxu0 0
    %2284 = vmatpush1.bf16.msra.mxu0 0
    %2285 = vmatprep.subr.bf16.mxu0 0
    %2286 = vmatpush1.bf16.msra.mxu0 0
    %2287 = vmatprep.subr.bf16.mxu0 0
    %2288 = vmatpush1.bf16.msra.mxu0 0
    %2289 = vmatprep.subr.bf16.mxu0 0
    %2290 = vmatpush1.bf16.msra.mxu0 0
    %2291 = vmatprep.subr.bf16.mxu0 0
    %2292 = vmatpush1.bf16.msra.mxu0 0
    %2293 = vmatprep.subr.bf16.mxu0 0
    %2294 = vmatpush1.bf16.msra.mxu0 0
    %2295 = vmatprep.subr.bf16.mxu0 0
    %2296 = vmatpush1.bf16.msra.mxu0 0
    %2297 = vmatprep.subr.bf16.mxu0 0
    %2298 = vmatpush1.bf16.msra.mxu0 0
    %2299 = vmatprep.subr.bf16.mxu0 0
    %2300 = vmatpush1.bf16.msra.mxu0 0
    %2301 = vmatprep.subr.bf16.mxu0 0
    %2302 = vmatpush1.bf16.msra.mxu0 0
    %2303 = vmatprep.subr.bf16.mxu0 0
    %2304 = vmatpush1.bf16.msra.mxu0 0
    %2305 = vmatprep.subr.bf16.mxu0 0
    %2306 = vmatpush1.bf16.msra.mxu0 0
    %2307 = vmatprep.mubr.bf16.mxu0 0
    %2308 = vmatmul.mubr.bf16.gmra.mrb[0].mxu0 %v2233
    %v2309 = vpop.f32.mrb[0].mxu0
    %v2310 = vadd.f32 %v2270, %v2309
    %v2311 = vpop.f32.mrb[0].mxu0
    %v2312 = vpop.f32.mrb[0].mxu0
    %v2313 = vpop.f32.mrb[0].mxu0
    %2314 = vdwg.mxu0
    %v2315 = vmax.f32 %v2310, 0.0
    %2316 = vst [vmem:[#allocation3 + $0x18] sm:$0xff] %v2315
    %v2317 = vld [vmem:[#allocation2 + $0x10] sm:$0xff]
    %v2318 = vld [vmem:[#allocation2 + $0x18] sm:$0xff]
    %v2319 = vld [vmem:[#allocation2 + $0x20] sm:$0xff]
    %v2320 = vpack.c.bf16 %v2317, %v2317
    %v2321 = vpack.c.bf16 %v2318, %v2318
    %v2322 = vpack.c.bf16 %v2319, %v2319
    %v2323 = vld [vmem:[#allocation4] sm:$0xf]
    %v2324 = vld [vmem:[#allocation4 + $0x4] sm:$0xf]
    %v2325 = vld [vmem:[#allocation4 + $0x8] sm:$0xf]
    %v2326 = vld [vmem:[#allocation4 + $0xc] sm:$0xf]
    %v2327 = vld [vmem:[#allocation4 + $0x10] sm:$0xf]
    %v2328 = vld [vmem:[#allocation4 + $0x14] sm:$0xf]
    %v2329 = vld [vmem:[#allocation4 + $0x18] sm:$0xf]
    %v2330 = vld [vmem:[#allocation4 + $0x1c] sm:$0xf]
    %v2331 = vld [vmem:[#allocation4 + $0x20] sm:$0xf]
    %v2332 = vld [vmem:[#allocation4 + $0x24] sm:$0xf]
    %v2333 = vld [vmem:[#allocation4 + $0x28] sm:$0xf]
    %v2334 = vld [vmem:[#allocation4 + $0x2c] sm:$0xf]
    %v2335 = vld [vmem:[#allocation4 + $0x30] sm:$0xf]
    %v2336 = vld [vmem:[#allocation4 + $0x34] sm:$0xf]
    %v2337 = vld [vmem:[#allocation4 + $0x38] sm:$0xf]
    %v2338 = vld [vmem:[#allocation4 + $0x3c] sm:$0xf]
    %v2339 = vld [vmem:[#allocation4 + $0x40] sm:$0xf]
    %v2340 = vld [vmem:[#allocation4 + $0x44] sm:$0xf]
    %v2341 = vld [vmem:[#allocation4 + $0x48] sm:$0xf]
    %v2342 = vld [vmem:[#allocation4 + $0x4c] sm:$0xf]
    %v2343 = vld [vmem:[#allocation4 + $0x50] sm:$0xf]
    %v2344 = vld [vmem:[#allocation4 + $0x54] sm:$0xf]
    %v2345 = vld [vmem:[#allocation4 + $0x58] sm:$0xf]
    %v2346 = vld [vmem:[#allocation4 + $0x5c] sm:$0xf]
    %v2347 = vld [vmem:[#allocation4 + $0x60] sm:$0xf]
    %v2348 = vld [vmem:[#allocation4 + $0x64] sm:$0xf]
    %v2349 = vld [vmem:[#allocation4 + $0x68] sm:$0xf]
    %v2350 = vld [vmem:[#allocation4 + $0x6c] sm:$0xf]
    %v2351 = vld [vmem:[#allocation4 + $0x70] sm:$0xf]
    %v2352 = vld [vmem:[#allocation4 + $0x74] sm:$0xf]
    %v2353 = vld [vmem:[#allocation4 + $0x78] sm:$0xf]
    %v2354 = vld [vmem:[#allocation4 + $0x7c] sm:$0xf]
    %v2355 = vld [vmem:[#allocation4 + $0x80] sm:$0xf]
    %v2356 = vld [vmem:[#allocation4 + $0x84] sm:$0xf]
    %v2357 = vld [vmem:[#allocation4 + $0x88] sm:$0xf]
    %v2358 = vld [vmem:[#allocation4 + $0x8c] sm:$0xf]
    %v2359 = vld [vmem:[#allocation4 + $0x90] sm:$0xf]
    %v2360 = vld [vmem:[#allocation4 + $0x94] sm:$0xf]
    %v2361 = vld [vmem:[#allocation4 + $0x98] sm:$0xf]
    %v2362 = vld [vmem:[#allocation4 + $0x9c] sm:$0xf]
    %v2403 = vunpack.c.l.b16 %v2323
    %v2404 = vunpack.c.l.b16 %v2324
    %v2405 = vunpack.c.l.b16 %v2325
    %v2406 = vunpack.c.l.b16 %v2326
    %v2407 = vunpack.c.l.b16 %v2327
    %v2408 = vunpack.c.l.b16 %v2328
    %v2409 = vunpack.c.l.b16 %v2329
    %v2410 = vunpack.c.l.b16 %v2330
    %v2411 = vunpack.c.l.b16 %v2331
    %v2412 = vunpack.c.l.b16 %v2332
    %v2413 = vunpack.c.l.b16 %v2333
    %v2414 = vunpack.c.l.b16 %v2334
    %v2415 = vunpack.c.l.b16 %v2335
    %v2416 = vunpack.c.l.b16 %v2336
    %v2417 = vunpack.c.l.b16 %v2337
    %v2418 = vunpack.c.l.b16 %v2338
    %v2419 = vunpack.c.l.b16 %v2339
    %v2420 = vunpack.c.l.b16 %v2340
    %v2421 = vunpack.c.l.b16 %v2341
    %v2422 = vunpack.c.l.b16 %v2342
    %v2423 = vunpack.c.l.b16 %v2343
    %v2424 = vunpack.c.l.b16 %v2344
    %v2425 = vunpack.c.l.b16 %v2345
    %v2426 = vunpack.c.l.b16 %v2346
    %v2427 = vunpack.c.l.b16 %v2347
    %v2428 = vunpack.c.l.b16 %v2348
    %v2429 = vunpack.c.l.b16 %v2349
    %v2430 = vunpack.c.l.b16 %v2350
    %v2431 = vunpack.c.l.b16 %v2351
    %v2432 = vunpack.c.l.b16 %v2352
    %v2433 = vunpack.c.l.b16 %v2353
    %v2434 = vunpack.c.l.b16 %v2354
    %v2435 = vunpack.c.l.b16 %v2355
    %v2436 = vunpack.c.l.b16 %v2356
    %v2437 = vunpack.c.l.b16 %v2357
    %v2438 = vunpack.c.l.b16 %v2358
    %v2439 = vunpack.c.l.b16 %v2359
    %v2440 = vunpack.c.l.b16 %v2360
    %v2441 = vunpack.c.l.b16 %v2361
    %v2442 = vunpack.c.l.b16 %v2362
    %v2443 = vpack.c.b16 %v2404, %v2403
    %v2444 = vpack.c.b16 %v2406, %v2405
    %v2445 = vpack.c.b16 %v2408, %v2407
    %v2446 = vpack.c.b16 %v2410, %v2409
    %v2447 = vpack.c.b16 %v2412, %v2411
    %v2448 = vpack.c.b16 %v2414, %v2413
    %v2449 = vpack.c.b16 %v2416, %v2415
    %v2450 = vpack.c.b16 %v2418, %v2417
    %v2451 = vpack.c.b16 %v2420, %v2419
    %v2452 = vpack.c.b16 %v2422, %v2421
    %v2453 = vpack.c.b16 %v2424, %v2423
    %v2454 = vpack.c.b16 %v2426, %v2425
    %v2455 = vpack.c.b16 %v2428, %v2427
    %v2456 = vpack.c.b16 %v2430, %v2429
    %v2457 = vpack.c.b16 %v2432, %v2431
    %v2458 = vpack.c.b16 %v2434, %v2433
    %v2459 = vpack.c.b16 %v2436, %v2435
    %v2460 = vpack.c.b16 %v2438, %v2437
    %v2461 = vpack.c.b16 %v2440, %v2439
    %v2462 = vpack.c.b16 %v2442, %v2441
    %v2484 = vsel %vm131, %v2322, 0
    %2486 = vmatprep.subr.bf16.mxu0 0
    %2487 = vmatpush1.bf16.msra.mxu0 %v2443
    %2488 = vmatprep.subr.bf16.mxu0 0
    %2489 = vmatpush1.bf16.msra.mxu0 %v2444
    %2490 = vmatprep.subr.bf16.mxu0 0
    %2491 = vmatpush1.bf16.msra.mxu0 %v2445
    %2492 = vmatprep.subr.bf16.mxu0 0
    %2493 = vmatpush1.bf16.msra.mxu0 %v2446
    %2494 = vmatprep.subr.bf16.mxu0 0
    %2495 = vmatpush1.bf16.msra.mxu0 %v2447
    %2496 = vmatprep.subr.bf16.mxu0 0
    %2497 = vmatpush1.bf16.msra.mxu0 %v2448
    %2498 = vmatprep.subr.bf16.mxu0 0
    %2499 = vmatpush1.bf16.msra.mxu0 %v2449
    %2500 = vmatprep.subr.bf16.mxu0 0
    %2501 = vmatpush1.bf16.msra.mxu0 %v2450
    %2502 = vmatprep.subr.bf16.mxu0 0
    %2503 = vmatpush1.bf16.msra.mxu0 %v2451
    %2504 = vmatprep.subr.bf16.mxu0 0
    %2505 = vmatpush1.bf16.msra.mxu0 %v2452
    %2506 = vmatprep.subr.bf16.mxu0 0
    %2507 = vmatpush1.bf16.msra.mxu0 %v2453
    %2508 = vmatprep.subr.bf16.mxu0 0
    %2509 = vmatpush1.bf16.msra.mxu0 %v2454
    %2510 = vmatprep.subr.bf16.mxu0 0
    %2511 = vmatpush1.bf16.msra.mxu0 %v2455
    %2512 = vmatprep.subr.bf16.mxu0 0
    %2513 = vmatpush1.bf16.msra.mxu0 %v2456
    %2514 = vmatprep.subr.bf16.mxu0 0
    %2515 = vmatpush1.bf16.msra.mxu0 %v2457
    %2516 = vmatprep.subr.bf16.mxu0 0
    %2517 = vmatpush1.bf16.msra.mxu0 %v2458
    %2518 = vmatprep.mubr.bf16.mxu0 %v2321
    %2519 = vmatmul.mubr.bf16.gmra.mrb[0].mxu0 %v2320
    %v2520 = vpop.f32.mrb[0].mxu0
    %v2521 = vadd.f32 0.0, %v2520
    %v2522 = vpop.f32.mrb[0].mxu0
    %v2523 = vpop.f32.mrb[0].mxu0
    %v2524 = vpop.f32.mrb[0].mxu0
    %2525 = vdwg.mxu0
    %2526 = vmatprep.subr.bf16.mxu0 0
    %2527 = vmatpush1.bf16.msra.mxu0 %v2459
    %2528 = vmatprep.subr.bf16.mxu0 0
    %2529 = vmatpush1.bf16.msra.mxu0 %v2460
    %2530 = vmatprep.subr.bf16.mxu0 0
    %2531 = vmatpush1.bf16.msra.mxu0 %v2461
    %2532 = vmatprep.subr.bf16.mxu0 0
    %2533 = vmatpush1.bf16.msra.mxu0 %v2462
    %2534 = vmatprep.subr.bf16.mxu0 0
    %2535 = vmatpush1.bf16.msra.mxu0 0
    %2536 = vmatprep.subr.bf16.mxu0 0
    %2537 = vmatpush1.bf16.msra.mxu0 0
    %2538 = vmatprep.subr.bf16.mxu0 0
    %2539 = vmatpush1.bf16.msra.mxu0 0
    %2540 = vmatprep.subr.bf16.mxu0 0
    %2541 = vmatpush1.bf16.msra.mxu0 0
    %2542 = vmatprep.subr.bf16.mxu0 0
    %2543 = vmatpush1.bf16.msra.mxu0 0
    %2544 = vmatprep.subr.bf16.mxu0 0
    %2545 = vmatpush1.bf16.msra.mxu0 0
    %2546 = vmatprep.subr.bf16.mxu0 0
    %2547 = vmatpush1.bf16.msra.mxu0 0
    %2548 = vmatprep.subr.bf16.mxu0 0
    %2549 = vmatpush1.bf16.msra.mxu0 0
    %2550 = vmatprep.subr.bf16.mxu0 0
    %2551 = vmatpush1.bf16.msra.mxu0 0
    %2552 = vmatprep.subr.bf16.mxu0 0
    %2553 = vmatpush1.bf16.msra.mxu0 0
    %2554 = vmatprep.subr.bf16.mxu0 0
    %2555 = vmatpush1.bf16.msra.mxu0 0
    %2556 = vmatprep.subr.bf16.mxu0 0
    %2557 = vmatpush1.bf16.msra.mxu0 0
    %2558 = vmatprep.mubr.bf16.mxu0 0
    %2559 = vmatmul.mubr.bf16.gmra.mrb[0].mxu0 %v2484
    %v2560 = vpop.f32.mrb[0].mxu0
    %v2561 = vadd.f32 %v2521, %v2560
    %v2562 = vpop.f32.mrb[0].mxu0
    %v2563 = vpop.f32.mrb[0].mxu0
    %v2564 = vpop.f32.mrb[0].mxu0
    %2565 = vdwg.mxu0
    %v2566 = vmax.f32 %v2561, 0.0
    %2567 = vst [vmem:[#allocation3 + $0x20] sm:$0xff] %v2566
    %v2568 = vld [vmem:[#allocation2 + $0x10] sm:$0xff]
    %v2569 = vld [vmem:[#allocation2 + $0x18] sm:$0xff]
    %v2570 = vld [vmem:[#allocation2 + $0x20] sm:$0xff]
    %v2571 = vpack.c.bf16 %v2568, %v2568
    %v2572 = vpack.c.bf16 %v2569, %v2569
    %v2573 = vpack.c.bf16 %v2570, %v2570
    %v2574 = vld [vmem:[#allocation4] sm:$0xf]
    %v2575 = vld [vmem:[#allocation4 + $0x4] sm:$0xf]
    %v2576 = vld [vmem:[#allocation4 + $0x8] sm:$0xf]
    %v2577 = vld [vmem:[#allocation4 + $0xc] sm:$0xf]
    %v2578 = vld [vmem:[#allocation4 + $0x10] sm:$0xf]
    %v2579 = vld [vmem:[#allocation4 + $0x14] sm:$0xf]
    %v2580 = vld [vmem:[#allocation4 + $0x18] sm:$0xf]
    %v2581 = vld [vmem:[#allocation4 + $0x1c] sm:$0xf]
    %v2582 = vld [vmem:[#allocation4 + $0x20] sm:$0xf]
    %v2583 = vld [vmem:[#allocation4 + $0x24] sm:$0xf]
    %v2584 = vld [vmem:[#allocation4 + $0x28] sm:$0xf]
    %v2585 = vld [vmem:[#allocation4 + $0x2c] sm:$0xf]
    %v2586 = vld [vmem:[#allocation4 + $0x30] sm:$0xf]
    %v2587 = vld [vmem:[#allocation4 + $0x34] sm:$0xf]
    %v2588 = vld [vmem:[#allocation4 + $0x38] sm:$0xf]
    %v2589 = vld [vmem:[#allocation4 + $0x3c] sm:$0xf]
    %v2590 = vld [vmem:[#allocation4 + $0x40] sm:$0xf]
    %v2591 = vld [vmem:[#allocation4 + $0x44] sm:$0xf]
    %v2592 = vld [vmem:[#allocation4 + $0x48] sm:$0xf]
    %v2593 = vld [vmem:[#allocation4 + $0x4c] sm:$0xf]
    %v2594 = vld [vmem:[#allocation4 + $0x50] sm:$0xf]
    %v2595 = vld [vmem:[#allocation4 + $0x54] sm:$0xf]
    %v2596 = vld [vmem:[#allocation4 + $0x58] sm:$0xf]
    %v2597 = vld [vmem:[#allocation4 + $0x5c] sm:$0xf]
    %v2598 = vld [vmem:[#allocation4 + $0x60] sm:$0xf]
    %v2599 = vld [vmem:[#allocation4 + $0x64] sm:$0xf]
    %v2600 = vld [vmem:[#allocation4 + $0x68] sm:$0xf]
    %v2601 = vld [vmem:[#allocation4 + $0x6c] sm:$0xf]
    %v2602 = vld [vmem:[#allocation4 + $0x70] sm:$0xf]
    %v2603 = vld [vmem:[#allocation4 + $0x74] sm:$0xf]
    %v2604 = vld [vmem:[#allocation4 + $0x78] sm:$0xf]
    %v2605 = vld [vmem:[#allocation4 + $0x7c] sm:$0xf]
    %v2606 = vld [vmem:[#allocation4 + $0x80] sm:$0xf]
    %v2607 = vld [vmem:[#allocation4 + $0x84] sm:$0xf]
    %v2608 = vld [vmem:[#allocation4 + $0x88] sm:$0xf]
    %v2609 = vld [vmem:[#allocation4 + $0x8c] sm:$0xf]
    %v2610 = vld [vmem:[#allocation4 + $0x90] sm:$0xf]
    %v2611 = vld [vmem:[#allocation4 + $0x94] sm:$0xf]
    %v2612 = vld [vmem:[#allocation4 + $0x98] sm:$0xf]
    %v2613 = vld [vmem:[#allocation4 + $0x9c] sm:$0xf]
    %2617 = vrot.lane.b32.xlu0 %v2571, 64
    %v2618 = vpop.permute.xlu0 %2617
    %2619 = vrot.lane.b32.xlu0 %v2572, 64
    %v2620 = vpop.permute.xlu0 %2619
    %2621 = vrot.lane.b32.xlu0 %v2573, 64
    %v2622 = vpop.permute.xlu0 %2621
    %v2623 = vsel %vm1592, %v2618, %v2620
    %v2624 = vsel %vm1592, %v2620, %v2622
    %v2667 = vunpack.c.l.b16 %v2574
    %v2668 = vunpack.c.l.b16 %v2575
    %v2669 = vunpack.c.l.b16 %v2576
    %v2670 = vunpack.c.l.b16 %v2577
    %v2671 = vunpack.c.l.b16 %v2578
    %v2672 = vunpack.c.l.b16 %v2579
    %v2673 = vunpack.c.l.b16 %v2580
    %v2674 = vunpack.c.l.b16 %v2581
    %v2675 = vunpack.c.l.b16 %v2582
    %v2676 = vunpack.c.l.b16 %v2583
    %v2677 = vunpack.c.l.b16 %v2584
    %v2678 = vunpack.c.l.b16 %v2585
    %v2679 = vunpack.c.l.b16 %v2586
    %v2680 = vunpack.c.l.b16 %v2587
    %v2681 = vunpack.c.l.b16 %v2588
    %v2682 = vunpack.c.l.b16 %v2589
    %v2683 = vunpack.c.l.b16 %v2590
    %v2684 = vunpack.c.l.b16 %v2591
    %v2685 = vunpack.c.l.b16 %v2592
    %v2686 = vunpack.c.l.b16 %v2593
    %v2687 = vunpack.c.l.b16 %v2594
    %v2688 = vunpack.c.l.b16 %v2595
    %v2689 = vunpack.c.l.b16 %v2596
    %v2690 = vunpack.c.l.b16 %v2597
    %v2691 = vunpack.c.l.b16 %v2598
    %v2692 = vunpack.c.l.b16 %v2599
    %v2693 = vunpack.c.l.b16 %v2600
    %v2694 = vunpack.c.l.b16 %v2601
    %v2695 = vunpack.c.l.b16 %v2602
    %v2696 = vunpack.c.l.b16 %v2603
    %v2697 = vunpack.c.l.b16 %v2604
    %v2698 = vunpack.c.l.b16 %v2605
    %v2699 = vunpack.c.l.b16 %v2606
    %v2700 = vunpack.c.l.b16 %v2607
    %v2701 = vunpack.c.l.b16 %v2608
    %v2702 = vunpack.c.l.b16 %v2609
    %v2703 = vunpack.c.l.b16 %v2610
    %v2704 = vunpack.c.l.b16 %v2611
    %v2705 = vunpack.c.l.b16 %v2612
    %v2706 = vunpack.c.l.b16 %v2613
    %v2707 = vpack.c.b16 %v2668, %v2667
    %v2708 = vpack.c.b16 %v2670, %v2669
    %v2709 = vpack.c.b16 %v2672, %v2671
    %v2710 = vpack.c.b16 %v2674, %v2673
    %v2711 = vpack.c.b16 %v2676, %v2675
    %v2712 = vpack.c.b16 %v2678, %v2677
    %v2713 = vpack.c.b16 %v2680, %v2679
    %v2714 = vpack.c.b16 %v2682, %v2681
    %v2715 = vpack.c.b16 %v2684, %v2683
    %v2716 = vpack.c.b16 %v2686, %v2685
    %v2717 = vpack.c.b16 %v2688, %v2687
    %v2718 = vpack.c.b16 %v2690, %v2689
    %v2719 = vpack.c.b16 %v2692, %v2691
    %v2720 = vpack.c.b16 %v2694, %v2693
    %v2721 = vpack.c.b16 %v2696, %v2695
    %v2722 = vpack.c.b16 %v2698, %v2697
    %v2723 = vpack.c.b16 %v2700, %v2699
    %v2724 = vpack.c.b16 %v2702, %v2701
    %v2725 = vpack.c.b16 %v2704, %v2703
    %v2726 = vpack.c.b16 %v2706, %v2705
    %v2748 = vsel %vm131, %v2622, 0
    %2750 = vmatprep.subr.bf16.mxu0 0
    %2751 = vmatpush1.bf16.msra.mxu0 %v2707
    %2752 = vmatprep.subr.bf16.mxu0 0
    %2753 = vmatpush1.bf16.msra.mxu0 %v2708
    %2754 = vmatprep.subr.bf16.mxu0 0
    %2755 = vmatpush1.bf16.msra.mxu0 %v2709
    %2756 = vmatprep.subr.bf16.mxu0 0
    %2757 = vmatpush1.bf16.msra.mxu0 %v2710
    %2758 = vmatprep.subr.bf16.mxu0 0
    %2759 = vmatpush1.bf16.msra.mxu0 %v2711
    %2760 = vmatprep.subr.bf16.mxu0 0
    %2761 = vmatpush1.bf16.msra.mxu0 %v2712
    %2762 = vmatprep.subr.bf16.mxu0 0
    %2763 = vmatpush1.bf16.msra.mxu0 %v2713
    %2764 = vmatprep.subr.bf16.mxu0 0
    %2765 = vmatpush1.bf16.msra.mxu0 %v2714
    %2766 = vmatprep.subr.bf16.mxu0 0
    %2767 = vmatpush1.bf16.msra.mxu0 %v2715
    %2768 = vmatprep.subr.bf16.mxu0 0
    %2769 = vmatpush1.bf16.msra.mxu0 %v2716
    %2770 = vmatprep.subr.bf16.mxu0 0
    %2771 = vmatpush1.bf16.msra.mxu0 %v2717
    %2772 = vmatprep.subr.bf16.mxu0 0
    %2773 = vmatpush1.bf16.msra.mxu0 %v2718
    %2774 = vmatprep.subr.bf16.mxu0 0
    %2775 = vmatpush1.bf16.msra.mxu0 %v2719
    %2776 = vmatprep.subr.bf16.mxu0 0
    %2777 = vmatpush1.bf16.msra.mxu0 %v2720
    %2778 = vmatprep.subr.bf16.mxu0 0
    %2779 = vmatpush1.bf16.msra.mxu0 %v2721
    %2780 = vmatprep.subr.bf16.mxu0 0
    %2781 = vmatpush1.bf16.msra.mxu0 %v2722
    %2782 = vmatprep.mubr.bf16.mxu0 %v2624
    %2783 = vmatmul.mubr.bf16.gmra.mrb[0].mxu0 %v2623
    %v2784 = vpop.f32.mrb[0].mxu0
    %v2785 = vadd.f32 0.0, %v2784
    %v2786 = vpop.f32.mrb[0].mxu0
    %v2787 = vpop.f32.mrb[0].mxu0
    %v2788 = vpop.f32.mrb[0].mxu0
    %2789 = vdwg.mxu0
    %2790 = vmatprep.subr.bf16.mxu0 0
    %2791 = vmatpush1.bf16.msra.mxu0 %v2723
    %2792 = vmatprep.subr.bf16.mxu0 0
    %2793 = vmatpush1.bf16.msra.mxu0 %v2724
    %2794 = vmatprep.subr.bf16.mxu0 0
    %2795 = vmatpush1.bf16.msra.mxu0 %v2725
    %2796 = vmatprep.subr.bf16.mxu0 0
    %2797 = vmatpush1.bf16.msra.mxu0 %v2726
    %2798 = vmatprep.subr.bf16.mxu0 0
    %2799 = vmatpush1.bf16.msra.mxu0 0
    %2800 = vmatprep.subr.bf16.mxu0 0
    %2801 = vmatpush1.bf16.msra.mxu0 0
    %2802 = vmatprep.subr.bf16.mxu0 0
    %2803 = vmatpush1.bf16.msra.mxu0 0
    %2804 = vmatprep.subr.bf16.mxu0 0
    %2805 = vmatpush1.bf16.msra.mxu0 0
    %2806 = vmatprep.subr.bf16.mxu0 0
    %2807 = vmatpush1.bf16.msra.mxu0 0
    %2808 = vmatprep.subr.bf16.mxu0 0
    %2809 = vmatpush1.bf16.msra.mxu0 0
    %2810 = vmatprep.subr.bf16.mxu0 0
    %2811 = vmatpush1.bf16.msra.mxu0 0
    %2812 = vmatprep.subr.bf16.mxu0 0
    %2813 = vmatpush1.bf16.msra.mxu0 0
    %2814 = vmatprep.subr.bf16.mxu0 0
    %2815 = vmatpush1.bf16.msra.mxu0 0
    %2816 = vmatprep.subr.bf16.mxu0 0
    %2817 = vmatpush1.bf16.msra.mxu0 0
    %2818 = vmatprep.subr.bf16.mxu0 0
    %2819 = vmatpush1.bf16.msra.mxu0 0
    %2820 = vmatprep.subr.bf16.mxu0 0
    %2821 = vmatpush1.bf16.msra.mxu0 0
    %2822 = vmatprep.mubr.bf16.mxu0 0
    %2823 = vmatmul.mubr.bf16.gmra.mrb[0].mxu0 %v2748
    %v2824 = vpop.f32.mrb[0].mxu0
    %v2825 = vadd.f32 %v2785, %v2824
    %v2826 = vpop.f32.mrb[0].mxu0
    %v2827 = vpop.f32.mrb[0].mxu0
    %v2828 = vpop.f32.mrb[0].mxu0
    %2829 = vdwg.mxu0
    %v2830 = vmax.f32 %v2825, 0.0
    %2831 = vst [vmem:[#allocation3 + $0x28] sm:$0xff] %v2830
    %v2832 = vld [vmem:[#allocation2 + $0x18] sm:$0xff]
    %v2833 = vld [vmem:[#allocation2 + $0x20] sm:$0xff]
    %v2834 = vld [vmem:[#allocation2 + $0x28] sm:$0xff]
    %v2835 = vpack.c.bf16 %v2832, %v2832
    %v2836 = vpack.c.bf16 %v2833, %v2833
    %v2837 = vpack.c.bf16 %v2834, %v2834
    %v2838 = vld [vmem:[#allocation4] sm:$0xf]
    %v2839 = vld [vmem:[#allocation4 + $0x4] sm:$0xf]
    %v2840 = vld [vmem:[#allocation4 + $0x8] sm:$0xf]
    %v2841 = vld [vmem:[#allocation4 + $0xc] sm:$0xf]
    %v2842 = vld [vmem:[#allocation4 + $0x10] sm:$0xf]
    %v2843 = vld [vmem:[#allocation4 + $0x14] sm:$0xf]
    %v2844 = vld [vmem:[#allocation4 + $0x18] sm:$0xf]
    %v2845 = vld [vmem:[#allocation4 + $0x1c] sm:$0xf]
    %v2846 = vld [vmem:[#allocation4 + $0x20] sm:$0xf]
    %v2847 = vld [vmem:[#allocation4 + $0x24] sm:$0xf]
    %v2848 = vld [vmem:[#allocation4 + $0x28] sm:$0xf]
    %v2849 = vld [vmem:[#allocation4 + $0x2c] sm:$0xf]
    %v2850 = vld [vmem:[#allocation4 + $0x30] sm:$0xf]
    %v2851 = vld [vmem:[#allocation4 + $0x34] sm:$0xf]
    %v2852 = vld [vmem:[#allocation4 + $0x38] sm:$0xf]
    %v2853 = vld [vmem:[#allocation4 + $0x3c] sm:$0xf]
    %v2854 = vld [vmem:[#allocation4 + $0x40] sm:$0xf]
    %v2855 = vld [vmem:[#allocation4 + $0x44] sm:$0xf]
    %v2856 = vld [vmem:[#allocation4 + $0x48] sm:$0xf]
    %v2857 = vld [vmem:[#allocation4 + $0x4c] sm:$0xf]
    %v2858 = vld [vmem:[#allocation4 + $0x50] sm:$0xf]
    %v2859 = vld [vmem:[#allocation4 + $0x54] sm:$0xf]
    %v2860 = vld [vmem:[#allocation4 + $0x58] sm:$0xf]
    %v2861 = vld [vmem:[#allocation4 + $0x5c] sm:$0xf]
    %v2862 = vld [vmem:[#allocation4 + $0x60] sm:$0xf]
    %v2863 = vld [vmem:[#allocation4 + $0x64] sm:$0xf]
    %v2864 = vld [vmem:[#allocation4 + $0x68] sm:$0xf]
    %v2865 = vld [vmem:[#allocation4 + $0x6c] sm:$0xf]
    %v2866 = vld [vmem:[#allocation4 + $0x70] sm:$0xf]
    %v2867 = vld [vmem:[#allocation4 + $0x74] sm:$0xf]
    %v2868 = vld [vmem:[#allocation4 + $0x78] sm:$0xf]
    %v2869 = vld [vmem:[#allocation4 + $0x7c] sm:$0xf]
    %v2870 = vld [vmem:[#allocation4 + $0x80] sm:$0xf]
    %v2871 = vld [vmem:[#allocation4 + $0x84] sm:$0xf]
    %v2872 = vld [vmem:[#allocation4 + $0x88] sm:$0xf]
    %v2873 = vld [vmem:[#allocation4 + $0x8c] sm:$0xf]
    %v2874 = vld [vmem:[#allocation4 + $0x90] sm:$0xf]
    %v2875 = vld [vmem:[#allocation4 + $0x94] sm:$0xf]
    %v2876 = vld [vmem:[#allocation4 + $0x98] sm:$0xf]
    %v2877 = vld [vmem:[#allocation4 + $0x9c] sm:$0xf]
    %v2918 = vunpack.c.l.b16 %v2838
    %v2919 = vunpack.c.l.b16 %v2839
    %v2920 = vunpack.c.l.b16 %v2840
    %v2921 = vunpack.c.l.b16 %v2841
    %v2922 = vunpack.c.l.b16 %v2842
    %v2923 = vunpack.c.l.b16 %v2843
    %v2924 = vunpack.c.l.b16 %v2844
    %v2925 = vunpack.c.l.b16 %v2845
    %v2926 = vunpack.c.l.b16 %v2846
    %v2927 = vunpack.c.l.b16 %v2847
    %v2928 = vunpack.c.l.b16 %v2848
    %v2929 = vunpack.c.l.b16 %v2849
    %v2930 = vunpack.c.l.b16 %v2850
    %v2931 = vunpack.c.l.b16 %v2851
    %v2932 = vunpack.c.l.b16 %v2852
    %v2933 = vunpack.c.l.b16 %v2853
    %v2934 = vunpack.c.l.b16 %v2854
    %v2935 = vunpack.c.l.b16 %v2855
    %v2936 = vunpack.c.l.b16 %v2856
    %v2937 = vunpack.c.l.b16 %v2857
    %v2938 = vunpack.c.l.b16 %v2858
    %v2939 = vunpack.c.l.b16 %v2859
    %v2940 = vunpack.c.l.b16 %v2860
    %v2941 = vunpack.c.l.b16 %v2861
    %v2942 = vunpack.c.l.b16 %v2862
    %v2943 = vunpack.c.l.b16 %v2863
    %v2944 = vunpack.c.l.b16 %v2864
    %v2945 = vunpack.c.l.b16 %v2865
    %v2946 = vunpack.c.l.b16 %v2866
    %v2947 = vunpack.c.l.b16 %v2867
    %v2948 = vunpack.c.l.b16 %v2868
    %v2949 = vunpack.c.l.b16 %v2869
    %v2950 = vunpack.c.l.b16 %v2870
    %v2951 = vunpack.c.l.b16 %v2871
    %v2952 = vunpack.c.l.b16 %v2872
    %v2953 = vunpack.c.l.b16 %v2873
    %v2954 = vunpack.c.l.b16 %v2874
    %v2955 = vunpack.c.l.b16 %v2875
    %v2956 = vunpack.c.l.b16 %v2876
    %v2957 = vunpack.c.l.b16 %v2877
    %v2958 = vpack.c.b16 %v2919, %v2918
    %v2959 = vpack.c.b16 %v2921, %v2920
    %v2960 = vpack.c.b16 %v2923, %v2922
    %v2961 = vpack.c.b16 %v2925, %v2924
    %v2962 = vpack.c.b16 %v2927, %v2926
    %v2963 = vpack.c.b16 %v2929, %v2928
    %v2964 = vpack.c.b16 %v2931, %v2930
    %v2965 = vpack.c.b16 %v2933, %v2932
    %v2966 = vpack.c.b16 %v2935, %v2934
    %v2967 = vpack.c.b16 %v2937, %v2936
    %v2968 = vpack.c.b16 %v2939, %v2938
    %v2969 = vpack.c.b16 %v2941, %v2940
    %v2970 = vpack.c.b16 %v2943, %v2942
    %v2971 = vpack.c.b16 %v2945, %v2944
    %v2972 = vpack.c.b16 %v2947, %v2946
    %v2973 = vpack.c.b16 %v2949, %v2948
    %v2974 = vpack.c.b16 %v2951, %v2950
    %v2975 = vpack.c.b16 %v2953, %v2952
    %v2976 = vpack.c.b16 %v2955, %v2954
    %v2977 = vpack.c.b16 %v2957, %v2956
    %v2999 = vsel %vm131, %v2837, 0
    %3001 = vmatprep.subr.bf16.mxu0 0
    %3002 = vmatpush1.bf16.msra.mxu0 %v2958
    %3003 = vmatprep.subr.bf16.mxu0 0
    %3004 = vmatpush1.bf16.msra.mxu0 %v2959
    %3005 = vmatprep.subr.bf16.mxu0 0
    %3006 = vmatpush1.bf16.msra.mxu0 %v2960
    %3007 = vmatprep.subr.bf16.mxu0 0
    %3008 = vmatpush1.bf16.msra.mxu0 %v2961
    %3009 = vmatprep.subr.bf16.mxu0 0
    %3010 = vmatpush1.bf16.msra.mxu0 %v2962
    %3011 = vmatprep.subr.bf16.mxu0 0
    %3012 = vmatpush1.bf16.msra.mxu0 %v2963
    %3013 = vmatprep.subr.bf16.mxu0 0
    %3014 = vmatpush1.bf16.msra.mxu0 %v2964
    %3015 = vmatprep.subr.bf16.mxu0 0
    %3016 = vmatpush1.bf16.msra.mxu0 %v2965
    %3017 = vmatprep.subr.bf16.mxu0 0
    %3018 = vmatpush1.bf16.msra.mxu0 %v2966
    %3019 = vmatprep.subr.bf16.mxu0 0
    %3020 = vmatpush1.bf16.msra.mxu0 %v2967
    %3021 = vmatprep.subr.bf16.mxu0 0
    %3022 = vmatpush1.bf16.msra.mxu0 %v2968
    %3023 = vmatprep.subr.bf16.mxu0 0
    %3024 = vmatpush1.bf16.msra.mxu0 %v2969
    %3025 = vmatprep.subr.bf16.mxu0 0
    %3026 = vmatpush1.bf16.msra.mxu0 %v2970
    %3027 = vmatprep.subr.bf16.mxu0 0
    %3028 = vmatpush1.bf16.msra.mxu0 %v2971
    %3029 = vmatprep.subr.bf16.mxu0 0
    %3030 = vmatpush1.bf16.msra.mxu0 %v2972
    %3031 = vmatprep.subr.bf16.mxu0 0
    %3032 = vmatpush1.bf16.msra.mxu0 %v2973
    %3033 = vmatprep.mubr.bf16.mxu0 %v2836
    %3034 = vmatmul.mubr.bf16.gmra.mrb[0].mxu0 %v2835
    %v3035 = vpop.f32.mrb[0].mxu0
    %v3036 = vadd.f32 0.0, %v3035
    %v3037 = vpop.f32.mrb[0].mxu0
    %v3038 = vpop.f32.mrb[0].mxu0
    %v3039 = vpop.f32.mrb[0].mxu0
    %3040 = vdwg.mxu0
    %3041 = vmatprep.subr.bf16.mxu0 0
    %3042 = vmatpush1.bf16.msra.mxu0 %v2974
    %3043 = vmatprep.subr.bf16.mxu0 0
    %3044 = vmatpush1.bf16.msra.mxu0 %v2975
    %3045 = vmatprep.subr.bf16.mxu0 0
    %3046 = vmatpush1.bf16.msra.mxu0 %v2976
    %3047 = vmatprep.subr.bf16.mxu0 0
    %3048 = vmatpush1.bf16.msra.mxu0 %v2977
    %3049 = vmatprep.subr.bf16.mxu0 0
    %3050 = vmatpush1.bf16.msra.mxu0 0
    %3051 = vmatprep.subr.bf16.mxu0 0
    %3052 = vmatpush1.bf16.msra.mxu0 0
    %3053 = vmatprep.subr.bf16.mxu0 0
    %3054 = vmatpush1.bf16.msra.mxu0 0
    %3055 = vmatprep.subr.bf16.mxu0 0
    %3056 = vmatpush1.bf16.msra.mxu0 0
    %3057 = vmatprep.subr.bf16.mxu0 0
    %3058 = vmatpush1.bf16.msra.mxu0 0
    %3059 = vmatprep.subr.bf16.mxu0 0
    %3060 = vmatpush1.bf16.msra.mxu0 0
    %3061 = vmatprep.subr.bf16.mxu0 0
    %3062 = vmatpush1.bf16.msra.mxu0 0
    %3063 = vmatprep.subr.bf16.mxu0 0
    %3064 = vmatpush1.bf16.msra.mxu0 0
    %3065 = vmatprep.subr.bf16.mxu0 0
    %3066 = vmatpush1.bf16.msra.mxu0 0
    %3067 = vmatprep.subr.bf16.mxu0 0
    %3068 = vmatpush1.bf16.msra.mxu0 0
    %3069 = vmatprep.subr.bf16.mxu0 0
    %3070 = vmatpush1.bf16.msra.mxu0 0
    %3071 = vmatprep.subr.bf16.mxu0 0
    %3072 = vmatpush1.bf16.msra.mxu0 0
    %3073 = vmatprep.mubr.bf16.mxu0 0
    %3074 = vmatmul.mubr.bf16.gmra.mrb[0].mxu0 %v2999
    %v3075 = vpop.f32.mrb[0].mxu0
    %v3076 = vadd.f32 %v3036, %v3075
    %v3077 = vpop.f32.mrb[0].mxu0
    %v3078 = vpop.f32.mrb[0].mxu0
    %v3079 = vpop.f32.mrb[0].mxu0
    %3080 = vdwg.mxu0
    %v3081 = vmax.f32 %v3076, 0.0
    %3082 = vst [vmem:[#allocation3 + $0x30] sm:$0xff] %v3081
    %v3083 = vld [vmem:[#allocation2 + $0x18] sm:$0xff]
    %v3084 = vld [vmem:[#allocation2 + $0x20] sm:$0xff]
    %v3085 = vld [vmem:[#allocation2 + $0x28] sm:$0xff]
    %v3086 = vpack.c.bf16 %v3083, %v3083
    %v3087 = vpack.c.bf16 %v3084, %v3084
    %v3088 = vpack.c.bf16 %v3085, %v3085
    %v3089 = vld [vmem:[#allocation4] sm:$0xf]
    %v3090 = vld [vmem:[#allocation4 + $0x4] sm:$0xf]
    %v3091 = vld [vmem:[#allocation4 + $0x8] sm:$0xf]
    %v3092 = vld [vmem:[#allocation4 + $0xc] sm:$0xf]
    %v3093 = vld [vmem:[#allocation4 + $0x10] sm:$0xf]
    %v3094 = vld [vmem:[#allocation4 + $0x14] sm:$0xf]
    %v3095 = vld [vmem:[#allocation4 + $0x18] sm:$0xf]
    %v3096 = vld [vmem:[#allocation4 + $0x1c] sm:$0xf]
    %v3097 = vld [vmem:[#allocation4 + $0x20] sm:$0xf]
    %v3098 = vld [vmem:[#allocation4 + $0x24] sm:$0xf]
    %v3099 = vld [vmem:[#allocation4 + $0x28] sm:$0xf]
    %v3100 = vld [vmem:[#allocation4 + $0x2c] sm:$0xf]
    %v3101 = vld [vmem:[#allocation4 + $0x30] sm:$0xf]
    %v3102 = vld [vmem:[#allocation4 + $0x34] sm:$0xf]
    %v3103 = vld [vmem:[#allocation4 + $0x38] sm:$0xf]
    %v3104 = vld [vmem:[#allocation4 + $0x3c] sm:$0xf]
    %v3105 = vld [vmem:[#allocation4 + $0x40] sm:$0xf]
    %v3106 = vld [vmem:[#allocation4 + $0x44] sm:$0xf]
    %v3107 = vld [vmem:[#allocation4 + $0x48] sm:$0xf]
    %v3108 = vld [vmem:[#allocation4 + $0x4c] sm:$0xf]
    %v3109 = vld [vmem:[#allocation4 + $0x50] sm:$0xf]
    %v3110 = vld [vmem:[#allocation4 + $0x54] sm:$0xf]
    %v3111 = vld [vmem:[#allocation4 + $0x58] sm:$0xf]
    %v3112 = vld [vmem:[#allocation4 + $0x5c] sm:$0xf]
    %v3113 = vld [vmem:[#allocation4 + $0x60] sm:$0xf]
    %v3114 = vld [vmem:[#allocation4 + $0x64] sm:$0xf]
    %v3115 = vld [vmem:[#allocation4 + $0x68] sm:$0xf]
    %v3116 = vld [vmem:[#allocation4 + $0x6c] sm:$0xf]
    %v3117 = vld [vmem:[#allocation4 + $0x70] sm:$0xf]
    %v3118 = vld [vmem:[#allocation4 + $0x74] sm:$0xf]
    %v3119 = vld [vmem:[#allocation4 + $0x78] sm:$0xf]
    %v3120 = vld [vmem:[#allocation4 + $0x7c] sm:$0xf]
    %v3121 = vld [vmem:[#allocation4 + $0x80] sm:$0xf]
    %v3122 = vld [vmem:[#allocation4 + $0x84] sm:$0xf]
    %v3123 = vld [vmem:[#allocation4 + $0x88] sm:$0xf]
    %v3124 = vld [vmem:[#allocation4 + $0x8c] sm:$0xf]
    %v3125 = vld [vmem:[#allocation4 + $0x90] sm:$0xf]
    %v3126 = vld [vmem:[#allocation4 + $0x94] sm:$0xf]
    %v3127 = vld [vmem:[#allocation4 + $0x98] sm:$0xf]
    %v3128 = vld [vmem:[#allocation4 + $0x9c] sm:$0xf]
    %3132 = vrot.lane.b32.xlu0 %v3086, 64
    %v3133 = vpop.permute.xlu0 %3132
    %3134 = vrot.lane.b32.xlu0 %v3087, 64
    %v3135 = vpop.permute.xlu0 %3134
    %3136 = vrot.lane.b32.xlu0 %v3088, 64
    %v3137 = vpop.permute.xlu0 %3136
    %v3138 = vsel %vm1592, %v3133, %v3135
    %v3139 = vsel %vm1592, %v3135, %v3137
    %v3182 = vunpack.c.l.b16 %v3089
    %v3183 = vunpack.c.l.b16 %v3090
    %v3184 = vunpack.c.l.b16 %v3091
    %v3185 = vunpack.c.l.b16 %v3092
    %v3186 = vunpack.c.l.b16 %v3093
    %v3187 = vunpack.c.l.b16 %v3094
    %v3188 = vunpack.c.l.b16 %v3095
    %v3189 = vunpack.c.l.b16 %v3096
    %v3190 = vunpack.c.l.b16 %v3097
    %v3191 = vunpack.c.l.b16 %v3098
    %v3192 = vunpack.c.l.b16 %v3099
    %v3193 = vunpack.c.l.b16 %v3100
    %v3194 = vunpack.c.l.b16 %v3101
    %v3195 = vunpack.c.l.b16 %v3102
    %v3196 = vunpack.c.l.b16 %v3103
    %v3197 = vunpack.c.l.b16 %v3104
    %v3198 = vunpack.c.l.b16 %v3105
    %v3199 = vunpack.c.l.b16 %v3106
    %v3200 = vunpack.c.l.b16 %v3107
    %v3201 = vunpack.c.l.b16 %v3108
    %v3202 = vunpack.c.l.b16 %v3109
    %v3203 = vunpack.c.l.b16 %v3110
    %v3204 = vunpack.c.l.b16 %v3111
    %v3205 = vunpack.c.l.b16 %v3112
    %v3206 = vunpack.c.l.b16 %v3113
    %v3207 = vunpack.c.l.b16 %v3114
    %v3208 = vunpack.c.l.b16 %v3115
    %v3209 = vunpack.c.l.b16 %v3116
    %v3210 = vunpack.c.l.b16 %v3117
    %v3211 = vunpack.c.l.b16 %v3118
    %v3212 = vunpack.c.l.b16 %v3119
    %v3213 = vunpack.c.l.b16 %v3120
    %v3214 = vunpack.c.l.b16 %v3121
    %v3215 = vunpack.c.l.b16 %v3122
    %v3216 = vunpack.c.l.b16 %v3123
    %v3217 = vunpack.c.l.b16 %v3124
    %v3218 = vunpack.c.l.b16 %v3125
    %v3219 = vunpack.c.l.b16 %v3126
    %v3220 = vunpack.c.l.b16 %v3127
    %v3221 = vunpack.c.l.b16 %v3128
    %v3222 = vpack.c.b16 %v3183, %v3182
    %v3223 = vpack.c.b16 %v3185, %v3184
    %v3224 = vpack.c.b16 %v3187, %v3186
    %v3225 = vpack.c.b16 %v3189, %v3188
    %v3226 = vpack.c.b16 %v3191, %v3190
    %v3227 = vpack.c.b16 %v3193, %v3192
    %v3228 = vpack.c.b16 %v3195, %v3194
    %v3229 = vpack.c.b16 %v3197, %v3196
    %v3230 = vpack.c.b16 %v3199, %v3198
    %v3231 = vpack.c.b16 %v3201, %v3200
    %v3232 = vpack.c.b16 %v3203, %v3202
    %v3233 = vpack.c.b16 %v3205, %v3204
    %v3234 = vpack.c.b16 %v3207, %v3206
    %v3235 = vpack.c.b16 %v3209, %v3208
    %v3236 = vpack.c.b16 %v3211, %v3210
    %v3237 = vpack.c.b16 %v3213, %v3212
    %v3238 = vpack.c.b16 %v3215, %v3214
    %v3239 = vpack.c.b16 %v3217, %v3216
    %v3240 = vpack.c.b16 %v3219, %v3218
    %v3241 = vpack.c.b16 %v3221, %v3220
    %v3263 = vsel %vm131, %v3137, 0
    %3265 = vmatprep.subr.bf16.mxu0 0
    %3266 = vmatpush1.bf16.msra.mxu0 %v3222
    %3267 = vmatprep.subr.bf16.mxu0 0
    %3268 = vmatpush1.bf16.msra.mxu0 %v3223
    %3269 = vmatprep.subr.bf16.mxu0 0
    %3270 = vmatpush1.bf16.msra.mxu0 %v3224
    %3271 = vmatprep.subr.bf16.mxu0 0
    %3272 = vmatpush1.bf16.msra.mxu0 %v3225
    %3273 = vmatprep.subr.bf16.mxu0 0
    %3274 = vmatpush1.bf16.msra.mxu0 %v3226
    %3275 = vmatprep.subr.bf16.mxu0 0
    %3276 = vmatpush1.bf16.msra.mxu0 %v3227
    %3277 = vmatprep.subr.bf16.mxu0 0
    %3278 = vmatpush1.bf16.msra.mxu0 %v3228
    %3279 = vmatprep.subr.bf16.mxu0 0
    %3280 = vmatpush1.bf16.msra.mxu0 %v3229
    %3281 = vmatprep.subr.bf16.mxu0 0
    %3282 = vmatpush1.bf16.msra.mxu0 %v3230
    %3283 = vmatprep.subr.bf16.mxu0 0
    %3284 = vmatpush1.bf16.msra.mxu0 %v3231
    %3285 = vmatprep.subr.bf16.mxu0 0
    %3286 = vmatpush1.bf16.msra.mxu0 %v3232
    %3287 = vmatprep.subr.bf16.mxu0 0
    %3288 = vmatpush1.bf16.msra.mxu0 %v3233
    %3289 = vmatprep.subr.bf16.mxu0 0
    %3290 = vmatpush1.bf16.msra.mxu0 %v3234
    %3291 = vmatprep.subr.bf16.mxu0 0
    %3292 = vmatpush1.bf16.msra.mxu0 %v3235
    %3293 = vmatprep.subr.bf16.mxu0 0
    %3294 = vmatpush1.bf16.msra.mxu0 %v3236
    %3295 = vmatprep.subr.bf16.mxu0 0
    %3296 = vmatpush1.bf16.msra.mxu0 %v3237
    %3297 = vmatprep.mubr.bf16.mxu0 %v3139
    %3298 = vmatmul.mubr.bf16.gmra.mrb[0].mxu0 %v3138
    %v3299 = vpop.f32.mrb[0].mxu0
    %v3300 = vadd.f32 0.0, %v3299
    %v3301 = vpop.f32.mrb[0].mxu0
    %v3302 = vpop.f32.mrb[0].mxu0
    %v3303 = vpop.f32.mrb[0].mxu0
    %3304 = vdwg.mxu0
    %3305 = vmatprep.subr.bf16.mxu0 0
    %3306 = vmatpush1.bf16.msra.mxu0 %v3238
    %3307 = vmatprep.subr.bf16.mxu0 0
    %3308 = vmatpush1.bf16.msra.mxu0 %v3239
    %3309 = vmatprep.subr.bf16.mxu0 0
    %3310 = vmatpush1.bf16.msra.mxu0 %v3240
    %3311 = vmatprep.subr.bf16.mxu0 0
    %3312 = vmatpush1.bf16.msra.mxu0 %v3241
    %3313 = vmatprep.subr.bf16.mxu0 0
    %3314 = vmatpush1.bf16.msra.mxu0 0
    %3315 = vmatprep.subr.bf16.mxu0 0
    %3316 = vmatpush1.bf16.msra.mxu0 0
    %3317 = vmatprep.subr.bf16.mxu0 0
    %3318 = vmatpush1.bf16.msra.mxu0 0
    %3319 = vmatprep.subr.bf16.mxu0 0
    %3320 = vmatpush1.bf16.msra.mxu0 0
    %3321 = vmatprep.subr.bf16.mxu0 0
    %3322 = vmatpush1.bf16.msra.mxu0 0
    %3323 = vmatprep.subr.bf16.mxu0 0
    %3324 = vmatpush1.bf16.msra.mxu0 0
    %3325 = vmatprep.subr.bf16.mxu0 0
    %3326 = vmatpush1.bf16.msra.mxu0 0
    %3327 = vmatprep.subr.bf16.mxu0 0
    %3328 = vmatpush1.bf16.msra.mxu0 0
    %3329 = vmatprep.subr.bf16.mxu0 0
    %3330 = vmatpush1.bf16.msra.mxu0 0
    %3331 = vmatprep.subr.bf16.mxu0 0
    %3332 = vmatpush1.bf16.msra.mxu0 0
    %3333 = vmatprep.subr.bf16.mxu0 0
    %3334 = vmatpush1.bf16.msra.mxu0 0
    %3335 = vmatprep.subr.bf16.mxu0 0
    %3336 = vmatpush1.bf16.msra.mxu0 0
    %3337 = vmatprep.mubr.bf16.mxu0 0
    %3338 = vmatmul.mubr.bf16.gmra.mrb[0].mxu0 %v3263
    %v3339 = vpop.f32.mrb[0].mxu0
    %v3340 = vadd.f32 %v3300, %v3339
    %v3341 = vpop.f32.mrb[0].mxu0
    %v3342 = vpop.f32.mrb[0].mxu0
    %v3343 = vpop.f32.mrb[0].mxu0
    %3344 = vdwg.mxu0
    %v3345 = vmax.f32 %v3340, 0.0
    %3346 = vst [vmem:[#allocation3 + $0x38] sm:$0xff] %v3345
    %v3347 = vld [vmem:[#allocation2 + $0x20] sm:$0xff]
    %v3348 = vld [vmem:[#allocation2 + $0x28] sm:$0xff]
    %v3349 = vld [vmem:[#allocation2 + $0x30] sm:$0xff]
    %v3350 = vpack.c.bf16 %v3347, %v3347
    %v3351 = vpack.c.bf16 %v3348, %v3348
    %v3352 = vpack.c.bf16 %v3349, %v3349
    %v3353 = vld [vmem:[#allocation4] sm:$0xf]
    %v3354 = vld [vmem:[#allocation4 + $0x4] sm:$0xf]
    %v3355 = vld [vmem:[#allocation4 + $0x8] sm:$0xf]
    %v3356 = vld [vmem:[#allocation4 + $0xc] sm:$0xf]
    %v3357 = vld [vmem:[#allocation4 + $0x10] sm:$0xf]
    %v3358 = vld [vmem:[#allocation4 + $0x14] sm:$0xf]
    %v3359 = vld [vmem:[#allocation4 + $0x18] sm:$0xf]
    %v3360 = vld [vmem:[#allocation4 + $0x1c] sm:$0xf]
    %v3361 = vld [vmem:[#allocation4 + $0x20] sm:$0xf]
    %v3362 = vld [vmem:[#allocation4 + $0x24] sm:$0xf]
    %v3363 = vld [vmem:[#allocation4 + $0x28] sm:$0xf]
    %v3364 = vld [vmem:[#allocation4 + $0x2c] sm:$0xf]
    %v3365 = vld [vmem:[#allocation4 + $0x30] sm:$0xf]
    %v3366 = vld [vmem:[#allocation4 + $0x34] sm:$0xf]
    %v3367 = vld [vmem:[#allocation4 + $0x38] sm:$0xf]
    %v3368 = vld [vmem:[#allocation4 + $0x3c] sm:$0xf]
    %v3369 = vld [vmem:[#allocation4 + $0x40] sm:$0xf]
    %v3370 = vld [vmem:[#allocation4 + $0x44] sm:$0xf]
    %v3371 = vld [vmem:[#allocation4 + $0x48] sm:$0xf]
    %v3372 = vld [vmem:[#allocation4 + $0x4c] sm:$0xf]
    %v3373 = vld [vmem:[#allocation4 + $0x50] sm:$0xf]
    %v3374 = vld [vmem:[#allocation4 + $0x54] sm:$0xf]
    %v3375 = vld [vmem:[#allocation4 + $0x58] sm:$0xf]
    %v3376 = vld [vmem:[#allocation4 + $0x5c] sm:$0xf]
    %v3377 = vld [vmem:[#allocation4 + $0x60] sm:$0xf]
    %v3378 = vld [vmem:[#allocation4 + $0x64] sm:$0xf]
    %v3379 = vld [vmem:[#allocation4 + $0x68] sm:$0xf]
    %v3380 = vld [vmem:[#allocation4 + $0x6c] sm:$0xf]
    %v3381 = vld [vmem:[#allocation4 + $0x70] sm:$0xf]
    %v3382 = vld [vmem:[#allocation4 + $0x74] sm:$0xf]
    %v3383 = vld [vmem:[#allocation4 + $0x78] sm:$0xf]
    %v3384 = vld [vmem:[#allocation4 + $0x7c] sm:$0xf]
    %v3385 = vld [vmem:[#allocation4 + $0x80] sm:$0xf]
    %v3386 = vld [vmem:[#allocation4 + $0x84] sm:$0xf]
    %v3387 = vld [vmem:[#allocation4 + $0x88] sm:$0xf]
    %v3388 = vld [vmem:[#allocation4 + $0x8c] sm:$0xf]
    %v3389 = vld [vmem:[#allocation4 + $0x90] sm:$0xf]
    %v3390 = vld [vmem:[#allocation4 + $0x94] sm:$0xf]
    %v3391 = vld [vmem:[#allocation4 + $0x98] sm:$0xf]
    %v3392 = vld [vmem:[#allocation4 + $0x9c] sm:$0xf]
    %v3433 = vunpack.c.l.b16 %v3353
    %v3434 = vunpack.c.l.b16 %v3354
    %v3435 = vunpack.c.l.b16 %v3355
    %v3436 = vunpack.c.l.b16 %v3356
    %v3437 = vunpack.c.l.b16 %v3357
    %v3438 = vunpack.c.l.b16 %v3358
    %v3439 = vunpack.c.l.b16 %v3359
    %v3440 = vunpack.c.l.b16 %v3360
    %v3441 = vunpack.c.l.b16 %v3361
    %v3442 = vunpack.c.l.b16 %v3362
    %v3443 = vunpack.c.l.b16 %v3363
    %v3444 = vunpack.c.l.b16 %v3364
    %v3445 = vunpack.c.l.b16 %v3365
    %v3446 = vunpack.c.l.b16 %v3366
    %v3447 = vunpack.c.l.b16 %v3367
    %v3448 = vunpack.c.l.b16 %v3368
    %v3449 = vunpack.c.l.b16 %v3369
    %v3450 = vunpack.c.l.b16 %v3370
    %v3451 = vunpack.c.l.b16 %v3371
    %v3452 = vunpack.c.l.b16 %v3372
    %v3453 = vunpack.c.l.b16 %v3373
    %v3454 = vunpack.c.l.b16 %v3374
    %v3455 = vunpack.c.l.b16 %v3375
    %v3456 = vunpack.c.l.b16 %v3376
    %v3457 = vunpack.c.l.b16 %v3377
    %v3458 = vunpack.c.l.b16 %v3378
    %v3459 = vunpack.c.l.b16 %v3379
    %v3460 = vunpack.c.l.b16 %v3380
    %v3461 = vunpack.c.l.b16 %v3381
    %v3462 = vunpack.c.l.b16 %v3382
    %v3463 = vunpack.c.l.b16 %v3383
    %v3464 = vunpack.c.l.b16 %v3384
    %v3465 = vunpack.c.l.b16 %v3385
    %v3466 = vunpack.c.l.b16 %v3386
    %v3467 = vunpack.c.l.b16 %v3387
    %v3468 = vunpack.c.l.b16 %v3388
    %v3469 = vunpack.c.l.b16 %v3389
    %v3470 = vunpack.c.l.b16 %v3390
    %v3471 = vunpack.c.l.b16 %v3391
    %v3472 = vunpack.c.l.b16 %v3392
    %v3473 = vpack.c.b16 %v3434, %v3433
    %v3474 = vpack.c.b16 %v3436, %v3435
    %v3475 = vpack.c.b16 %v3438, %v3437
    %v3476 = vpack.c.b16 %v3440, %v3439
    %v3477 = vpack.c.b16 %v3442, %v3441
    %v3478 = vpack.c.b16 %v3444, %v3443
    %v3479 = vpack.c.b16 %v3446, %v3445
    %v3480 = vpack.c.b16 %v3448, %v3447
    %v3481 = vpack.c.b16 %v3450, %v3449
    %v3482 = vpack.c.b16 %v3452, %v3451
    %v3483 = vpack.c.b16 %v3454, %v3453
    %v3484 = vpack.c.b16 %v3456, %v3455
    %v3485 = vpack.c.b16 %v3458, %v3457
    %v3486 = vpack.c.b16 %v3460, %v3459
    %v3487 = vpack.c.b16 %v3462, %v3461
    %v3488 = vpack.c.b16 %v3464, %v3463
    %v3489 = vpack.c.b16 %v3466, %v3465
    %v3490 = vpack.c.b16 %v3468, %v3467
    %v3491 = vpack.c.b16 %v3470, %v3469
    %v3492 = vpack.c.b16 %v3472, %v3471
    %v3514 = vsel %vm131, %v3352, 0
    %3516 = vmatprep.subr.bf16.mxu0 0
    %3517 = vmatpush1.bf16.msra.mxu0 %v3473
    %3518 = vmatprep.subr.bf16.mxu0 0
    %3519 = vmatpush1.bf16.msra.mxu0 %v3474
    %3520 = vmatprep.subr.bf16.mxu0 0
    %3521 = vmatpush1.bf16.msra.mxu0 %v3475
    %3522 = vmatprep.subr.bf16.mxu0 0
    %3523 = vmatpush1.bf16.msra.mxu0 %v3476
    %3524 = vmatprep.subr.bf16.mxu0 0
    %3525 = vmatpush1.bf16.msra.mxu0 %v3477
    %3526 = vmatprep.subr.bf16.mxu0 0
    %3527 = vmatpush1.bf16.msra.mxu0 %v3478
    %3528 = vmatprep.subr.bf16.mxu0 0
    %3529 = vmatpush1.bf16.msra.mxu0 %v3479
    %3530 = vmatprep.subr.bf16.mxu0 0
    %3531 = vmatpush1.bf16.msra.mxu0 %v3480
    %3532 = vmatprep.subr.bf16.mxu0 0
    %3533 = vmatpush1.bf16.msra.mxu0 %v3481
    %3534 = vmatprep.subr.bf16.mxu0 0
    %3535 = vmatpush1.bf16.msra.mxu0 %v3482
    %3536 = vmatprep.subr.bf16.mxu0 0
    %3537 = vmatpush1.bf16.msra.mxu0 %v3483
    %3538 = vmatprep.subr.bf16.mxu0 0
    %3539 = vmatpush1.bf16.msra.mxu0 %v3484
    %3540 = vmatprep.subr.bf16.mxu0 0
    %3541 = vmatpush1.bf16.msra.mxu0 %v3485
    %3542 = vmatprep.subr.bf16.mxu0 0
    %3543 = vmatpush1.bf16.msra.mxu0 %v3486
    %3544 = vmatprep.subr.bf16.mxu0 0
    %3545 = vmatpush1.bf16.msra.mxu0 %v3487
    %3546 = vmatprep.subr.bf16.mxu0 0
    %3547 = vmatpush1.bf16.msra.mxu0 %v3488
    %3548 = vmatprep.mubr.bf16.mxu0 %v3351
    %3549 = vmatmul.mubr.bf16.gmra.mrb[0].mxu0 %v3350
    %v3550 = vpop.f32.mrb[0].mxu0
    %v3551 = vadd.f32 0.0, %v3550
    %v3552 = vpop.f32.mrb[0].mxu0
    %v3553 = vpop.f32.mrb[0].mxu0
    %v3554 = vpop.f32.mrb[0].mxu0
    %3555 = vdwg.mxu0
    %3556 = vmatprep.subr.bf16.mxu0 0
    %3557 = vmatpush1.bf16.msra.mxu0 %v3489
    %3558 = vmatprep.subr.bf16.mxu0 0
    %3559 = vmatpush1.bf16.msra.mxu0 %v3490
    %3560 = vmatprep.subr.bf16.mxu0 0
    %3561 = vmatpush1.bf16.msra.mxu0 %v3491
    %3562 = vmatprep.subr.bf16.mxu0 0
    %3563 = vmatpush1.bf16.msra.mxu0 %v3492
    %3564 = vmatprep.subr.bf16.mxu0 0
    %3565 = vmatpush1.bf16.msra.mxu0 0
    %3566 = vmatprep.subr.bf16.mxu0 0
    %3567 = vmatpush1.bf16.msra.mxu0 0
    %3568 = vmatprep.subr.bf16.mxu0 0
    %3569 = vmatpush1.bf16.msra.mxu0 0
    %3570 = vmatprep.subr.bf16.mxu0 0
    %3571 = vmatpush1.bf16.msra.mxu0 0
    %3572 = vmatprep.subr.bf16.mxu0 0
    %3573 = vmatpush1.bf16.msra.mxu0 0
    %3574 = vmatprep.subr.bf16.mxu0 0
    %3575 = vmatpush1.bf16.msra.mxu0 0
    %3576 = vmatprep.subr.bf16.mxu0 0
    %3577 = vmatpush1.bf16.msra.mxu0 0
    %3578 = vmatprep.subr.bf16.mxu0 0
    %3579 = vmatpush1.bf16.msra.mxu0 0
    %3580 = vmatprep.subr.bf16.mxu0 0
    %3581 = vmatpush1.bf16.msra.mxu0 0
    %3582 = vmatprep.subr.bf16.mxu0 0
    %3583 = vmatpush1.bf16.msra.mxu0 0
    %3584 = vmatprep.subr.bf16.mxu0 0
    %3585 = vmatpush1.bf16.msra.mxu0 0
    %3586 = vmatprep.subr.bf16.mxu0 0
    %3587 = vmatpush1.bf16.msra.mxu0 0
    %3588 = vmatprep.mubr.bf16.mxu0 0
    %3589 = vmatmul.mubr.bf16.gmra.mrb[0].mxu0 %v3514
    %v3590 = vpop.f32.mrb[0].mxu0
    %v3591 = vadd.f32 %v3551, %v3590
    %v3592 = vpop.f32.mrb[0].mxu0
    %v3593 = vpop.f32.mrb[0].mxu0
    %v3594 = vpop.f32.mrb[0].mxu0
    %3595 = vdwg.mxu0
    %v3596 = vmax.f32 %v3591, 0.0
    %3597 = vst [vmem:[#allocation3 + $0x40] sm:$0xff] %v3596
    %v3598 = vld [vmem:[#allocation2 + $0x20] sm:$0xff]
    %v3599 = vld [vmem:[#allocation2 + $0x28] sm:$0xff]
    %v3600 = vld [vmem:[#allocation2 + $0x30] sm:$0xff]
    %v3601 = vpack.c.bf16 %v3598, %v3598
    %v3602 = vpack.c.bf16 %v3599, %v3599
    %v3603 = vpack.c.bf16 %v3600, %v3600
    %v3604 = vld [vmem:[#allocation4] sm:$0xf]
    %v3605 = vld [vmem:[#allocation4 + $0x4] sm:$0xf]
    %v3606 = vld [vmem:[#allocation4 + $0x8] sm:$0xf]
    %v3607 = vld [vmem:[#allocation4 + $0xc] sm:$0xf]
    %v3608 = vld [vmem:[#allocation4 + $0x10] sm:$0xf]
    %v3609 = vld [vmem:[#allocation4 + $0x14] sm:$0xf]
    %v3610 = vld [vmem:[#allocation4 + $0x18] sm:$0xf]
    %v3611 = vld [vmem:[#allocation4 + $0x1c] sm:$0xf]
    %v3612 = vld [vmem:[#allocation4 + $0x20] sm:$0xf]
    %v3613 = vld [vmem:[#allocation4 + $0x24] sm:$0xf]
    %v3614 = vld [vmem:[#allocation4 + $0x28] sm:$0xf]
    %v3615 = vld [vmem:[#allocation4 + $0x2c] sm:$0xf]
    %v3616 = vld [vmem:[#allocation4 + $0x30] sm:$0xf]
    %v3617 = vld [vmem:[#allocation4 + $0x34] sm:$0xf]
    %v3618 = vld [vmem:[#allocation4 + $0x38] sm:$0xf]
    %v3619 = vld [vmem:[#allocation4 + $0x3c] sm:$0xf]
    %v3620 = vld [vmem:[#allocation4 + $0x40] sm:$0xf]
    %v3621 = vld [vmem:[#allocation4 + $0x44] sm:$0xf]
    %v3622 = vld [vmem:[#allocation4 + $0x48] sm:$0xf]
    %v3623 = vld [vmem:[#allocation4 + $0x4c] sm:$0xf]
    %v3624 = vld [vmem:[#allocation4 + $0x50] sm:$0xf]
    %v3625 = vld [vmem:[#allocation4 + $0x54] sm:$0xf]
    %v3626 = vld [vmem:[#allocation4 + $0x58] sm:$0xf]
    %v3627 = vld [vmem:[#allocation4 + $0x5c] sm:$0xf]
    %v3628 = vld [vmem:[#allocation4 + $0x60] sm:$0xf]
    %v3629 = vld [vmem:[#allocation4 + $0x64] sm:$0xf]
    %v3630 = vld [vmem:[#allocation4 + $0x68] sm:$0xf]
    %v3631 = vld [vmem:[#allocation4 + $0x6c] sm:$0xf]
    %v3632 = vld [vmem:[#allocation4 + $0x70] sm:$0xf]
    %v3633 = vld [vmem:[#allocation4 + $0x74] sm:$0xf]
    %v3634 = vld [vmem:[#allocation4 + $0x78] sm:$0xf]
    %v3635 = vld [vmem:[#allocation4 + $0x7c] sm:$0xf]
    %v3636 = vld [vmem:[#allocation4 + $0x80] sm:$0xf]
    %v3637 = vld [vmem:[#allocation4 + $0x84] sm:$0xf]
    %v3638 = vld [vmem:[#allocation4 + $0x88] sm:$0xf]
    %v3639 = vld [vmem:[#allocation4 + $0x8c] sm:$0xf]
    %v3640 = vld [vmem:[#allocation4 + $0x90] sm:$0xf]
    %v3641 = vld [vmem:[#allocation4 + $0x94] sm:$0xf]
    %v3642 = vld [vmem:[#allocation4 + $0x98] sm:$0xf]
    %v3643 = vld [vmem:[#allocation4 + $0x9c] sm:$0xf]
    %3647 = vrot.lane.b32.xlu0 %v3601, 64
    %v3648 = vpop.permute.xlu0 %3647
    %3649 = vrot.lane.b32.xlu0 %v3602, 64
    %v3650 = vpop.permute.xlu0 %3649
    %3651 = vrot.lane.b32.xlu0 %v3603, 64
    %v3652 = vpop.permute.xlu0 %3651
    %v3653 = vsel %vm1592, %v3648, %v3650
    %v3654 = vsel %vm1592, %v3650, %v3652
    %v3697 = vunpack.c.l.b16 %v3604
    %v3698 = vunpack.c.l.b16 %v3605
    %v3699 = vunpack.c.l.b16 %v3606
    %v3700 = vunpack.c.l.b16 %v3607
    %v3701 = vunpack.c.l.b16 %v3608
    %v3702 = vunpack.c.l.b16 %v3609
    %v3703 = vunpack.c.l.b16 %v3610
    %v3704 = vunpack.c.l.b16 %v3611
    %v3705 = vunpack.c.l.b16 %v3612
    %v3706 = vunpack.c.l.b16 %v3613
    %v3707 = vunpack.c.l.b16 %v3614
    %v3708 = vunpack.c.l.b16 %v3615
    %v3709 = vunpack.c.l.b16 %v3616
    %v3710 = vunpack.c.l.b16 %v3617
    %v3711 = vunpack.c.l.b16 %v3618
    %v3712 = vunpack.c.l.b16 %v3619
    %v3713 = vunpack.c.l.b16 %v3620
    %v3714 = vunpack.c.l.b16 %v3621
    %v3715 = vunpack.c.l.b16 %v3622
    %v3716 = vunpack.c.l.b16 %v3623
    %v3717 = vunpack.c.l.b16 %v3624
    %v3718 = vunpack.c.l.b16 %v3625
    %v3719 = vunpack.c.l.b16 %v3626
    %v3720 = vunpack.c.l.b16 %v3627
    %v3721 = vunpack.c.l.b16 %v3628
    %v3722 = vunpack.c.l.b16 %v3629
    %v3723 = vunpack.c.l.b16 %v3630
    %v3724 = vunpack.c.l.b16 %v3631
    %v3725 = vunpack.c.l.b16 %v3632
    %v3726 = vunpack.c.l.b16 %v3633
    %v3727 = vunpack.c.l.b16 %v3634
    %v3728 = vunpack.c.l.b16 %v3635
    %v3729 = vunpack.c.l.b16 %v3636
    %v3730 = vunpack.c.l.b16 %v3637
    %v3731 = vunpack.c.l.b16 %v3638
    %v3732 = vunpack.c.l.b16 %v3639
    %v3733 = vunpack.c.l.b16 %v3640
    %v3734 = vunpack.c.l.b16 %v3641
    %v3735 = vunpack.c.l.b16 %v3642
    %v3736 = vunpack.c.l.b16 %v3643
    %v3737 = vpack.c.b16 %v3698, %v3697
    %v3738 = vpack.c.b16 %v3700, %v3699
    %v3739 = vpack.c.b16 %v3702, %v3701
    %v3740 = vpack.c.b16 %v3704, %v3703
    %v3741 = vpack.c.b16 %v3706, %v3705
    %v3742 = vpack.c.b16 %v3708, %v3707
    %v3743 = vpack.c.b16 %v3710, %v3709
    %v3744 = vpack.c.b16 %v3712, %v3711
    %v3745 = vpack.c.b16 %v3714, %v3713
    %v3746 = vpack.c.b16 %v3716, %v3715
    %v3747 = vpack.c.b16 %v3718, %v3717
    %v3748 = vpack.c.b16 %v3720, %v3719
    %v3749 = vpack.c.b16 %v3722, %v3721
    %v3750 = vpack.c.b16 %v3724, %v3723
    %v3751 = vpack.c.b16 %v3726, %v3725
    %v3752 = vpack.c.b16 %v3728, %v3727
    %v3753 = vpack.c.b16 %v3730, %v3729
    %v3754 = vpack.c.b16 %v3732, %v3731
    %v3755 = vpack.c.b16 %v3734, %v3733
    %v3756 = vpack.c.b16 %v3736, %v3735
    %v3778 = vsel %vm131, %v3652, 0
    %3780 = vmatprep.subr.bf16.mxu0 0
    %3781 = vmatpush1.bf16.msra.mxu0 %v3737
    %3782 = vmatprep.subr.bf16.mxu0 0
    %3783 = vmatpush1.bf16.msra.mxu0 %v3738
    %3784 = vmatprep.subr.bf16.mxu0 0
    %3785 = vmatpush1.bf16.msra.mxu0 %v3739
    %3786 = vmatprep.subr.bf16.mxu0 0
    %3787 = vmatpush1.bf16.msra.mxu0 %v3740
    %3788 = vmatprep.subr.bf16.mxu0 0
    %3789 = vmatpush1.bf16.msra.mxu0 %v3741
    %3790 = vmatprep.subr.bf16.mxu0 0
    %3791 = vmatpush1.bf16.msra.mxu0 %v3742
    %3792 = vmatprep.subr.bf16.mxu0 0
    %3793 = vmatpush1.bf16.msra.mxu0 %v3743
    %3794 = vmatprep.subr.bf16.mxu0 0
    %3795 = vmatpush1.bf16.msra.mxu0 %v3744
    %3796 = vmatprep.subr.bf16.mxu0 0
    %3797 = vmatpush1.bf16.msra.mxu0 %v3745
    %3798 = vmatprep.subr.bf16.mxu0 0
    %3799 = vmatpush1.bf16.msra.mxu0 %v3746
    %3800 = vmatprep.subr.bf16.mxu0 0
    %3801 = vmatpush1.bf16.msra.mxu0 %v3747
    %3802 = vmatprep.subr.bf16.mxu0 0
    %3803 = vmatpush1.bf16.msra.mxu0 %v3748
    %3804 = vmatprep.subr.bf16.mxu0 0
    %3805 = vmatpush1.bf16.msra.mxu0 %v3749
    %3806 = vmatprep.subr.bf16.mxu0 0
    %3807 = vmatpush1.bf16.msra.mxu0 %v3750
    %3808 = vmatprep.subr.bf16.mxu0 0
    %3809 = vmatpush1.bf16.msra.mxu0 %v3751
    %3810 = vmatprep.subr.bf16.mxu0 0
    %3811 = vmatpush1.bf16.msra.mxu0 %v3752
    %3812 = vmatprep.mubr.bf16.mxu0 %v3654
    %3813 = vmatmul.mubr.bf16.gmra.mrb[0].mxu0 %v3653
    %v3814 = vpop.f32.mrb[0].mxu0
    %v3815 = vadd.f32 0.0, %v3814
    %v3816 = vpop.f32.mrb[0].mxu0
    %v3817 = vpop.f32.mrb[0].mxu0
    %v3818 = vpop.f32.mrb[0].mxu0
    %3819 = vdwg.mxu0
    %3820 = vmatprep.subr.bf16.mxu0 0
    %3821 = vmatpush1.bf16.msra.mxu0 %v3753
    %3822 = vmatprep.subr.bf16.mxu0 0
    %3823 = vmatpush1.bf16.msra.mxu0 %v3754
    %3824 = vmatprep.subr.bf16.mxu0 0
    %3825 = vmatpush1.bf16.msra.mxu0 %v3755
    %3826 = vmatprep.subr.bf16.mxu0 0
    %3827 = vmatpush1.bf16.msra.mxu0 %v3756
    %3828 = vmatprep.subr.bf16.mxu0 0
    %3829 = vmatpush1.bf16.msra.mxu0 0
    %3830 = vmatprep.subr.bf16.mxu0 0
    %3831 = vmatpush1.bf16.msra.mxu0 0
    %3832 = vmatprep.subr.bf16.mxu0 0
    %3833 = vmatpush1.bf16.msra.mxu0 0
    %3834 = vmatprep.subr.bf16.mxu0 0
    %3835 = vmatpush1.bf16.msra.mxu0 0
    %3836 = vmatprep.subr.bf16.mxu0 0
    %3837 = vmatpush1.bf16.msra.mxu0 0
    %3838 = vmatprep.subr.bf16.mxu0 0
    %3839 = vmatpush1.bf16.msra.mxu0 0
    %3840 = vmatprep.subr.bf16.mxu0 0
    %3841 = vmatpush1.bf16.msra.mxu0 0
    %3842 = vmatprep.subr.bf16.mxu0 0
    %3843 = vmatpush1.bf16.msra.mxu0 0
    %3844 = vmatprep.subr.bf16.mxu0 0
    %3845 = vmatpush1.bf16.msra.mxu0 0
    %3846 = vmatprep.subr.bf16.mxu0 0
    %3847 = vmatpush1.bf16.msra.mxu0 0
    %3848 = vmatprep.subr.bf16.mxu0 0
    %3849 = vmatpush1.bf16.msra.mxu0 0
    %3850 = vmatprep.subr.bf16.mxu0 0
    %3851 = vmatpush1.bf16.msra.mxu0 0
    %3852 = vmatprep.mubr.bf16.mxu0 0
    %3853 = vmatmul.mubr.bf16.gmra.mrb[0].mxu0 %v3778
    %v3854 = vpop.f32.mrb[0].mxu0
    %v3855 = vadd.f32 %v3815, %v3854
    %v3856 = vpop.f32.mrb[0].mxu0
    %v3857 = vpop.f32.mrb[0].mxu0
    %v3858 = vpop.f32.mrb[0].mxu0
    %3859 = vdwg.mxu0
    %v3860 = vmax.f32 %v3855, 0.0
    %3861 = vst [vmem:[#allocation3 + $0x48] sm:$0xff] %v3860
    %v3862 = vld [vmem:[#allocation2 + $0x28] sm:$0xff]
    %v3863 = vld [vmem:[#allocation2 + $0x30] sm:$0xff]
    %v3864 = vld [vmem:[#allocation2 + $0x38] sm:$0xff]
    %v3865 = vpack.c.bf16 %v3862, %v3862
    %v3866 = vpack.c.bf16 %v3863, %v3863
    %v3867 = vpack.c.bf16 %v3864, %v3864
    %v3868 = vld [vmem:[#allocation4] sm:$0xf]
    %v3869 = vld [vmem:[#allocation4 + $0x4] sm:$0xf]
    %v3870 = vld [vmem:[#allocation4 + $0x8] sm:$0xf]
    %v3871 = vld [vmem:[#allocation4 + $0xc] sm:$0xf]
    %v3872 = vld [vmem:[#allocation4 + $0x10] sm:$0xf]
    %v3873 = vld [vmem:[#allocation4 + $0x14] sm:$0xf]
    %v3874 = vld [vmem:[#allocation4 + $0x18] sm:$0xf]
    %v3875 = vld [vmem:[#allocation4 + $0x1c] sm:$0xf]
    %v3876 = vld [vmem:[#allocation4 + $0x20] sm:$0xf]
    %v3877 = vld [vmem:[#allocation4 + $0x24] sm:$0xf]
    %v3878 = vld [vmem:[#allocation4 + $0x28] sm:$0xf]
    %v3879 = vld [vmem:[#allocation4 + $0x2c] sm:$0xf]
    %v3880 = vld [vmem:[#allocation4 + $0x30] sm:$0xf]
    %v3881 = vld [vmem:[#allocation4 + $0x34] sm:$0xf]
    %v3882 = vld [vmem:[#allocation4 + $0x38] sm:$0xf]
    %v3883 = vld [vmem:[#allocation4 + $0x3c] sm:$0xf]
    %v3884 = vld [vmem:[#allocation4 + $0x40] sm:$0xf]
    %v3885 = vld [vmem:[#allocation4 + $0x44] sm:$0xf]
    %v3886 = vld [vmem:[#allocation4 + $0x48] sm:$0xf]
    %v3887 = vld [vmem:[#allocation4 + $0x4c] sm:$0xf]
    %v3888 = vld [vmem:[#allocation4 + $0x50] sm:$0xf]
    %v3889 = vld [vmem:[#allocation4 + $0x54] sm:$0xf]
    %v3890 = vld [vmem:[#allocation4 + $0x58] sm:$0xf]
    %v3891 = vld [vmem:[#allocation4 + $0x5c] sm:$0xf]
    %v3892 = vld [vmem:[#allocation4 + $0x60] sm:$0xf]
    %v3893 = vld [vmem:[#allocation4 + $0x64] sm:$0xf]
    %v3894 = vld [vmem:[#allocation4 + $0x68] sm:$0xf]
    %v3895 = vld [vmem:[#allocation4 + $0x6c] sm:$0xf]
    %v3896 = vld [vmem:[#allocation4 + $0x70] sm:$0xf]
    %v3897 = vld [vmem:[#allocation4 + $0x74] sm:$0xf]
    %v3898 = vld [vmem:[#allocation4 + $0x78] sm:$0xf]
    %v3899 = vld [vmem:[#allocation4 + $0x7c] sm:$0xf]
    %v3900 = vld [vmem:[#allocation4 + $0x80] sm:$0xf]
    %v3901 = vld [vmem:[#allocation4 + $0x84] sm:$0xf]
    %v3902 = vld [vmem:[#allocation4 + $0x88] sm:$0xf]
    %v3903 = vld [vmem:[#allocation4 + $0x8c] sm:$0xf]
    %v3904 = vld [vmem:[#allocation4 + $0x90] sm:$0xf]
    %v3905 = vld [vmem:[#allocation4 + $0x94] sm:$0xf]
    %v3906 = vld [vmem:[#allocation4 + $0x98] sm:$0xf]
    %v3907 = vld [vmem:[#allocation4 + $0x9c] sm:$0xf]
    %v3948 = vunpack.c.l.b16 %v3868
    %v3949 = vunpack.c.l.b16 %v3869
    %v3950 = vunpack.c.l.b16 %v3870
    %v3951 = vunpack.c.l.b16 %v3871
    %v3952 = vunpack.c.l.b16 %v3872
    %v3953 = vunpack.c.l.b16 %v3873
    %v3954 = vunpack.c.l.b16 %v3874
    %v3955 = vunpack.c.l.b16 %v3875
    %v3956 = vunpack.c.l.b16 %v3876
    %v3957 = vunpack.c.l.b16 %v3877
    %v3958 = vunpack.c.l.b16 %v3878
    %v3959 = vunpack.c.l.b16 %v3879
    %v3960 = vunpack.c.l.b16 %v3880
    %v3961 = vunpack.c.l.b16 %v3881
    %v3962 = vunpack.c.l.b16 %v3882
    %v3963 = vunpack.c.l.b16 %v3883
    %v3964 = vunpack.c.l.b16 %v3884
    %v3965 = vunpack.c.l.b16 %v3885
    %v3966 = vunpack.c.l.b16 %v3886
    %v3967 = vunpack.c.l.b16 %v3887
    %v3968 = vunpack.c.l.b16 %v3888
    %v3969 = vunpack.c.l.b16 %v3889
    %v3970 = vunpack.c.l.b16 %v3890
    %v3971 = vunpack.c.l.b16 %v3891
    %v3972 = vunpack.c.l.b16 %v3892
    %v3973 = vunpack.c.l.b16 %v3893
    %v3974 = vunpack.c.l.b16 %v3894
    %v3975 = vunpack.c.l.b16 %v3895
    %v3976 = vunpack.c.l.b16 %v3896
    %v3977 = vunpack.c.l.b16 %v3897
    %v3978 = vunpack.c.l.b16 %v3898
    %v3979 = vunpack.c.l.b16 %v3899
    %v3980 = vunpack.c.l.b16 %v3900
    %v3981 = vunpack.c.l.b16 %v3901
    %v3982 = vunpack.c.l.b16 %v3902
    %v3983 = vunpack.c.l.b16 %v3903
    %v3984 = vunpack.c.l.b16 %v3904
    %v3985 = vunpack.c.l.b16 %v3905
    %v3986 = vunpack.c.l.b16 %v3906
    %v3987 = vunpack.c.l.b16 %v3907
    %v3988 = vpack.c.b16 %v3949, %v3948
    %v3989 = vpack.c.b16 %v3951, %v3950
    %v3990 = vpack.c.b16 %v3953, %v3952
    %v3991 = vpack.c.b16 %v3955, %v3954
    %v3992 = vpack.c.b16 %v3957, %v3956
    %v3993 = vpack.c.b16 %v3959, %v3958
    %v3994 = vpack.c.b16 %v3961, %v3960
    %v3995 = vpack.c.b16 %v3963, %v3962
    %v3996 = vpack.c.b16 %v3965, %v3964
    %v3997 = vpack.c.b16 %v3967, %v3966
    %v3998 = vpack.c.b16 %v3969, %v3968
    %v3999 = vpack.c.b16 %v3971, %v3970
    %v4000 = vpack.c.b16 %v3973, %v3972
    %v4001 = vpack.c.b16 %v3975, %v3974
    %v4002 = vpack.c.b16 %v3977, %v3976
    %v4003 = vpack.c.b16 %v3979, %v3978
    %v4004 = vpack.c.b16 %v3981, %v3980
    %v4005 = vpack.c.b16 %v3983, %v3982
    %v4006 = vpack.c.b16 %v3985, %v3984
    %v4007 = vpack.c.b16 %v3987, %v3986
    %v4029 = vsel %vm131, %v3867, 0
    %4031 = vmatprep.subr.bf16.mxu0 0
    %4032 = vmatpush1.bf16.msra.mxu0 %v3988
    %4033 = vmatprep.subr.bf16.mxu0 0
    %4034 = vmatpush1.bf16.msra.mxu0 %v3989
    %4035 = vmatprep.subr.bf16.mxu0 0
    %4036 = vmatpush1.bf16.msra.mxu0 %v3990
    %4037 = vmatprep.subr.bf16.mxu0 0
    %4038 = vmatpush1.bf16.msra.mxu0 %v3991
    %4039 = vmatprep.subr.bf16.mxu0 0
    %4040 = vmatpush1.bf16.msra.mxu0 %v3992
    %4041 = vmatprep.subr.bf16.mxu0 0
    %4042 = vmatpush1.bf16.msra.mxu0 %v3993
    %4043 = vmatprep.subr.bf16.mxu0 0
    %4044 = vmatpush1.bf16.msra.mxu0 %v3994
    %4045 = vmatprep.subr.bf16.mxu0 0
    %4046 = vmatpush1.bf16.msra.mxu0 %v3995
    %4047 = vmatprep.subr.bf16.mxu0 0
    %4048 = vmatpush1.bf16.msra.mxu0 %v3996
    %4049 = vmatprep.subr.bf16.mxu0 0
    %4050 = vmatpush1.bf16.msra.mxu0 %v3997
    %4051 = vmatprep.subr.bf16.mxu0 0
    %4052 = vmatpush1.bf16.msra.mxu0 %v3998
    %4053 = vmatprep.subr.bf16.mxu0 0
    %4054 = vmatpush1.bf16.msra.mxu0 %v3999
    %4055 = vmatprep.subr.bf16.mxu0 0
    %4056 = vmatpush1.bf16.msra.mxu0 %v4000
    %4057 = vmatprep.subr.bf16.mxu0 0
    %4058 = vmatpush1.bf16.msra.mxu0 %v4001
    %4059 = vmatprep.subr.bf16.mxu0 0
    %4060 = vmatpush1.bf16.msra.mxu0 %v4002
    %4061 = vmatprep.subr.bf16.mxu0 0
    %4062 = vmatpush1.bf16.msra.mxu0 %v4003
    %4063 = vmatprep.mubr.bf16.mxu0 %v3866
    %4064 = vmatmul.mubr.bf16.gmra.mrb[0].mxu0 %v3865
    %v4065 = vpop.f32.mrb[0].mxu0
    %v4066 = vadd.f32 0.0, %v4065
    %v4067 = vpop.f32.mrb[0].mxu0
    %v4068 = vpop.f32.mrb[0].mxu0
    %v4069 = vpop.f32.mrb[0].mxu0
    %4070 = vdwg.mxu0
    %4071 = vmatprep.subr.bf16.mxu0 0
    %4072 = vmatpush1.bf16.msra.mxu0 %v4004
    %4073 = vmatprep.subr.bf16.mxu0 0
    %4074 = vmatpush1.bf16.msra.mxu0 %v4005
    %4075 = vmatprep.subr.bf16.mxu0 0
    %4076 = vmatpush1.bf16.msra.mxu0 %v4006
    %4077 = vmatprep.subr.bf16.mxu0 0
    %4078 = vmatpush1.bf16.msra.mxu0 %v4007
    %4079 = vmatprep.subr.bf16.mxu0 0
    %4080 = vmatpush1.bf16.msra.mxu0 0
    %4081 = vmatprep.subr.bf16.mxu0 0
    %4082 = vmatpush1.bf16.msra.mxu0 0
    %4083 = vmatprep.subr.bf16.mxu0 0
    %4084 = vmatpush1.bf16.msra.mxu0 0
    %4085 = vmatprep.subr.bf16.mxu0 0
    %4086 = vmatpush1.bf16.msra.mxu0 0
    %4087 = vmatprep.subr.bf16.mxu0 0
    %4088 = vmatpush1.bf16.msra.mxu0 0
    %4089 = vmatprep.subr.bf16.mxu0 0
    %4090 = vmatpush1.bf16.msra.mxu0 0
    %4091 = vmatprep.subr.bf16.mxu0 0
    %4092 = vmatpush1.bf16.msra.mxu0 0
    %4093 = vmatprep.subr.bf16.mxu0 0
    %4094 = vmatpush1.bf16.msra.mxu0 0
    %4095 = vmatprep.subr.bf16.mxu0 0
    %4096 = vmatpush1.bf16.msra.mxu0 0
    %4097 = vmatprep.subr.bf16.mxu0 0
    %4098 = vmatpush1.bf16.msra.mxu0 0
    %4099 = vmatprep.subr.bf16.mxu0 0
    %4100 = vmatpush1.bf16.msra.mxu0 0
    %4101 = vmatprep.subr.bf16.mxu0 0
    %4102 = vmatpush1.bf16.msra.mxu0 0
    %4103 = vmatprep.mubr.bf16.mxu0 0
    %4104 = vmatmul.mubr.bf16.gmra.mrb[0].mxu0 %v4029
    %v4105 = vpop.f32.mrb[0].mxu0
    %v4106 = vadd.f32 %v4066, %v4105
    %v4107 = vpop.f32.mrb[0].mxu0
    %v4108 = vpop.f32.mrb[0].mxu0
    %v4109 = vpop.f32.mrb[0].mxu0
    %4110 = vdwg.mxu0
    %v4111 = vmax.f32 %v4106, 0.0
    %4112 = vst [vmem:[#allocation3 + $0x50] sm:$0xff] %v4111
    %v4113 = vld [vmem:[#allocation2 + $0x28] sm:$0xff]
    %v4114 = vld [vmem:[#allocation2 + $0x30] sm:$0xff]
    %v4115 = vld [vmem:[#allocation2 + $0x38] sm:$0xff]
    %v4116 = vpack.c.bf16 %v4113, %v4113
    %v4117 = vpack.c.bf16 %v4114, %v4114
    %v4118 = vpack.c.bf16 %v4115, %v4115
    %v4119 = vld [vmem:[#allocation4] sm:$0xf]
    %v4120 = vld [vmem:[#allocation4 + $0x4] sm:$0xf]
    %v4121 = vld [vmem:[#allocation4 + $0x8] sm:$0xf]
    %v4122 = vld [vmem:[#allocation4 + $0xc] sm:$0xf]
    %v4123 = vld [vmem:[#allocation4 + $0x10] sm:$0xf]
    %v4124 = vld [vmem:[#allocation4 + $0x14] sm:$0xf]
    %v4125 = vld [vmem:[#allocation4 + $0x18] sm:$0xf]
    %v4126 = vld [vmem:[#allocation4 + $0x1c] sm:$0xf]
    %v4127 = vld [vmem:[#allocation4 + $0x20] sm:$0xf]
    %v4128 = vld [vmem:[#allocation4 + $0x24] sm:$0xf]
    %v4129 = vld [vmem:[#allocation4 + $0x28] sm:$0xf]
    %v4130 = vld [vmem:[#allocation4 + $0x2c] sm:$0xf]
    %v4131 = vld [vmem:[#allocation4 + $0x30] sm:$0xf]
    %v4132 = vld [vmem:[#allocation4 + $0x34] sm:$0xf]
    %v4133 = vld [vmem:[#allocation4 + $0x38] sm:$0xf]
    %v4134 = vld [vmem:[#allocation4 + $0x3c] sm:$0xf]
    %v4135 = vld [vmem:[#allocation4 + $0x40] sm:$0xf]
    %v4136 = vld [vmem:[#allocation4 + $0x44] sm:$0xf]
    %v4137 = vld [vmem:[#allocation4 + $0x48] sm:$0xf]
    %v4138 = vld [vmem:[#allocation4 + $0x4c] sm:$0xf]
    %v4139 = vld [vmem:[#allocation4 + $0x50] sm:$0xf]
    %v4140 = vld [vmem:[#allocation4 + $0x54] sm:$0xf]
    %v4141 = vld [vmem:[#allocation4 + $0x58] sm:$0xf]
    %v4142 = vld [vmem:[#allocation4 + $0x5c] sm:$0xf]
    %v4143 = vld [vmem:[#allocation4 + $0x60] sm:$0xf]
    %v4144 = vld [vmem:[#allocation4 + $0x64] sm:$0xf]
    %v4145 = vld [vmem:[#allocation4 + $0x68] sm:$0xf]
    %v4146 = vld [vmem:[#allocation4 + $0x6c] sm:$0xf]
    %v4147 = vld [vmem:[#allocation4 + $0x70] sm:$0xf]
    %v4148 = vld [vmem:[#allocation4 + $0x74] sm:$0xf]
    %v4149 = vld [vmem:[#allocation4 + $0x78] sm:$0xf]
    %v4150 = vld [vmem:[#allocation4 + $0x7c] sm:$0xf]
    %v4151 = vld [vmem:[#allocation4 + $0x80] sm:$0xf]
    %v4152 = vld [vmem:[#allocation4 + $0x84] sm:$0xf]
    %v4153 = vld [vmem:[#allocation4 + $0x88] sm:$0xf]
    %v4154 = vld [vmem:[#allocation4 + $0x8c] sm:$0xf]
    %v4155 = vld [vmem:[#allocation4 + $0x90] sm:$0xf]
    %v4156 = vld [vmem:[#allocation4 + $0x94] sm:$0xf]
    %v4157 = vld [vmem:[#allocation4 + $0x98] sm:$0xf]
    %v4158 = vld [vmem:[#allocation4 + $0x9c] sm:$0xf]
    %4162 = vrot.lane.b32.xlu0 %v4116, 64
    %v4163 = vpop.permute.xlu0 %4162
    %4164 = vrot.lane.b32.xlu0 %v4117, 64
    %v4165 = vpop.permute.xlu0 %4164
    %4166 = vrot.lane.b32.xlu0 %v4118, 64
    %v4167 = vpop.permute.xlu0 %4166
    %v4168 = vsel %vm1592, %v4163, %v4165
    %v4169 = vsel %vm1592, %v4165, %v4167
    %v4212 = vunpack.c.l.b16 %v4119
    %v4213 = vunpack.c.l.b16 %v4120
    %v4214 = vunpack.c.l.b16 %v4121
    %v4215 = vunpack.c.l.b16 %v4122
    %v4216 = vunpack.c.l.b16 %v4123
    %v4217 = vunpack.c.l.b16 %v4124
    %v4218 = vunpack.c.l.b16 %v4125
    %v4219 = vunpack.c.l.b16 %v4126
    %v4220 = vunpack.c.l.b16 %v4127
    %v4221 = vunpack.c.l.b16 %v4128
    %v4222 = vunpack.c.l.b16 %v4129
    %v4223 = vunpack.c.l.b16 %v4130
    %v4224 = vunpack.c.l.b16 %v4131
    %v4225 = vunpack.c.l.b16 %v4132
    %v4226 = vunpack.c.l.b16 %v4133
    %v4227 = vunpack.c.l.b16 %v4134
    %v4228 = vunpack.c.l.b16 %v4135
    %v4229 = vunpack.c.l.b16 %v4136
    %v4230 = vunpack.c.l.b16 %v4137
    %v4231 = vunpack.c.l.b16 %v4138
    %v4232 = vunpack.c.l.b16 %v4139
    %v4233 = vunpack.c.l.b16 %v4140
    %v4234 = vunpack.c.l.b16 %v4141
    %v4235 = vunpack.c.l.b16 %v4142
    %v4236 = vunpack.c.l.b16 %v4143
    %v4237 = vunpack.c.l.b16 %v4144
    %v4238 = vunpack.c.l.b16 %v4145
    %v4239 = vunpack.c.l.b16 %v4146
    %v4240 = vunpack.c.l.b16 %v4147
    %v4241 = vunpack.c.l.b16 %v4148
    %v4242 = vunpack.c.l.b16 %v4149
    %v4243 = vunpack.c.l.b16 %v4150
    %v4244 = vunpack.c.l.b16 %v4151
    %v4245 = vunpack.c.l.b16 %v4152
    %v4246 = vunpack.c.l.b16 %v4153
    %v4247 = vunpack.c.l.b16 %v4154
    %v4248 = vunpack.c.l.b16 %v4155
    %v4249 = vunpack.c.l.b16 %v4156
    %v4250 = vunpack.c.l.b16 %v4157
    %v4251 = vunpack.c.l.b16 %v4158
    %v4252 = vpack.c.b16 %v4213, %v4212
    %v4253 = vpack.c.b16 %v4215, %v4214
    %v4254 = vpack.c.b16 %v4217, %v4216
    %v4255 = vpack.c.b16 %v4219, %v4218
    %v4256 = vpack.c.b16 %v4221, %v4220
    %v4257 = vpack.c.b16 %v4223, %v4222
    %v4258 = vpack.c.b16 %v4225, %v4224
    %v4259 = vpack.c.b16 %v4227, %v4226
    %v4260 = vpack.c.b16 %v4229, %v4228
    %v4261 = vpack.c.b16 %v4231, %v4230
    %v4262 = vpack.c.b16 %v4233, %v4232
    %v4263 = vpack.c.b16 %v4235, %v4234
    %v4264 = vpack.c.b16 %v4237, %v4236
    %v4265 = vpack.c.b16 %v4239, %v4238
    %v4266 = vpack.c.b16 %v4241, %v4240
    %v4267 = vpack.c.b16 %v4243, %v4242
    %v4268 = vpack.c.b16 %v4245, %v4244
    %v4269 = vpack.c.b16 %v4247, %v4246
    %v4270 = vpack.c.b16 %v4249, %v4248
    %v4271 = vpack.c.b16 %v4251, %v4250
    %v4293 = vsel %vm131, %v4167, 0
    %4295 = vmatprep.subr.bf16.mxu0 0
    %4296 = vmatpush1.bf16.msra.mxu0 %v4252
    %4297 = vmatprep.subr.bf16.mxu0 0
    %4298 = vmatpush1.bf16.msra.mxu0 %v4253
    %4299 = vmatprep.subr.bf16.mxu0 0
    %4300 = vmatpush1.bf16.msra.mxu0 %v4254
    %4301 = vmatprep.subr.bf16.mxu0 0
    %4302 = vmatpush1.bf16.msra.mxu0 %v4255
    %4303 = vmatprep.subr.bf16.mxu0 0
    %4304 = vmatpush1.bf16.msra.mxu0 %v4256
    %4305 = vmatprep.subr.bf16.mxu0 0
    %4306 = vmatpush1.bf16.msra.mxu0 %v4257
    %4307 = vmatprep.subr.bf16.mxu0 0
    %4308 = vmatpush1.bf16.msra.mxu0 %v4258
    %4309 = vmatprep.subr.bf16.mxu0 0
    %4310 = vmatpush1.bf16.msra.mxu0 %v4259
    %4311 = vmatprep.subr.bf16.mxu0 0
    %4312 = vmatpush1.bf16.msra.mxu0 %v4260
    %4313 = vmatprep.subr.bf16.mxu0 0
    %4314 = vmatpush1.bf16.msra.mxu0 %v4261
    %4315 = vmatprep.subr.bf16.mxu0 0
    %4316 = vmatpush1.bf16.msra.mxu0 %v4262
    %4317 = vmatprep.subr.bf16.mxu0 0
    %4318 = vmatpush1.bf16.msra.mxu0 %v4263
    %4319 = vmatprep.subr.bf16.mxu0 0
    %4320 = vmatpush1.bf16.msra.mxu0 %v4264
    %4321 = vmatprep.subr.bf16.mxu0 0
    %4322 = vmatpush1.bf16.msra.mxu0 %v4265
    %4323 = vmatprep.subr.bf16.mxu0 0
    %4324 = vmatpush1.bf16.msra.mxu0 %v4266
    %4325 = vmatprep.subr.bf16.mxu0 0
    %4326 = vmatpush1.bf16.msra.mxu0 %v4267
    %4327 = vmatprep.mubr.bf16.mxu0 %v4169
    %4328 = vmatmul.mubr.bf16.gmra.mrb[0].mxu0 %v4168
    %v4329 = vpop.f32.mrb[0].mxu0
    %v4330 = vadd.f32 0.0, %v4329
    %v4331 = vpop.f32.mrb[0].mxu0
    %v4332 = vpop.f32.mrb[0].mxu0
    %v4333 = vpop.f32.mrb[0].mxu0
    %4334 = vdwg.mxu0
    %4335 = vmatprep.subr.bf16.mxu0 0
    %4336 = vmatpush1.bf16.msra.mxu0 %v4268
    %4337 = vmatprep.subr.bf16.mxu0 0
    %4338 = vmatpush1.bf16.msra.mxu0 %v4269
    %4339 = vmatprep.subr.bf16.mxu0 0
    %4340 = vmatpush1.bf16.msra.mxu0 %v4270
    %4341 = vmatprep.subr.bf16.mxu0 0
    %4342 = vmatpush1.bf16.msra.mxu0 %v4271
    %4343 = vmatprep.subr.bf16.mxu0 0
    %4344 = vmatpush1.bf16.msra.mxu0 0
    %4345 = vmatprep.subr.bf16.mxu0 0
    %4346 = vmatpush1.bf16.msra.mxu0 0
    %4347 = vmatprep.subr.bf16.mxu0 0
    %4348 = vmatpush1.bf16.msra.mxu0 0
    %4349 = vmatprep.subr.bf16.mxu0 0
    %4350 = vmatpush1.bf16.msra.mxu0 0
    %4351 = vmatprep.subr.bf16.mxu0 0
    %4352 = vmatpush1.bf16.msra.mxu0 0
    %4353 = vmatprep.subr.bf16.mxu0 0
    %4354 = vmatpush1.bf16.msra.mxu0 0
    %4355 = vmatprep.subr.bf16.mxu0 0
    %4356 = vmatpush1.bf16.msra.mxu0 0
    %4357 = vmatprep.subr.bf16.mxu0 0
    %4358 = vmatpush1.bf16.msra.mxu0 0
    %4359 = vmatprep.subr.bf16.mxu0 0
    %4360 = vmatpush1.bf16.msra.mxu0 0
    %4361 = vmatprep.subr.bf16.mxu0 0
    %4362 = vmatpush1.bf16.msra.mxu0 0
    %4363 = vmatprep.subr.bf16.mxu0 0
    %4364 = vmatpush1.bf16.msra.mxu0 0
    %4365 = vmatprep.subr.bf16.mxu0 0
    %4366 = vmatpush1.bf16.msra.mxu0 0
    %4367 = vmatprep.mubr.bf16.mxu0 0
    %4368 = vmatmul.mubr.bf16.gmra.mrb[0].mxu0 %v4293
    %v4369 = vpop.f32.mrb[0].mxu0
    %v4370 = vadd.f32 %v4330, %v4369
    %v4371 = vpop.f32.mrb[0].mxu0
    %v4372 = vpop.f32.mrb[0].mxu0
    %v4373 = vpop.f32.mrb[0].mxu0
    %4374 = vdwg.mxu0
    %v4375 = vmax.f32 %v4370, 0.0
    %4376 = vst [vmem:[#allocation3 + $0x58] sm:$0xff] %v4375
    %v4377 = vld [vmem:[#allocation2 + $0x30] sm:$0xff]
    %v4378 = vld [vmem:[#allocation2 + $0x38] sm:$0xff]
    %v4379 = vld [vmem:[#allocation2 + $0x40] sm:$0xff]
    %v4380 = vpack.c.bf16 %v4377, %v4377
    %v4381 = vpack.c.bf16 %v4378, %v4378
    %v4382 = vpack.c.bf16 %v4379, %v4379
    %v4383 = vld [vmem:[#allocation4] sm:$0xf]
    %v4384 = vld [vmem:[#allocation4 + $0x4] sm:$0xf]
    %v4385 = vld [vmem:[#allocation4 + $0x8] sm:$0xf]
    %v4386 = vld [vmem:[#allocation4 + $0xc] sm:$0xf]
    %v4387 = vld [vmem:[#allocation4 + $0x10] sm:$0xf]
    %v4388 = vld [vmem:[#allocation4 + $0x14] sm:$0xf]
    %v4389 = vld [vmem:[#allocation4 + $0x18] sm:$0xf]
    %v4390 = vld [vmem:[#allocation4 + $0x1c] sm:$0xf]
    %v4391 = vld [vmem:[#allocation4 + $0x20] sm:$0xf]
    %v4392 = vld [vmem:[#allocation4 + $0x24] sm:$0xf]
    %v4393 = vld [vmem:[#allocation4 + $0x28] sm:$0xf]
    %v4394 = vld [vmem:[#allocation4 + $0x2c] sm:$0xf]
    %v4395 = vld [vmem:[#allocation4 + $0x30] sm:$0xf]
    %v4396 = vld [vmem:[#allocation4 + $0x34] sm:$0xf]
    %v4397 = vld [vmem:[#allocation4 + $0x38] sm:$0xf]
    %v4398 = vld [vmem:[#allocation4 + $0x3c] sm:$0xf]
    %v4399 = vld [vmem:[#allocation4 + $0x40] sm:$0xf]
    %v4400 = vld [vmem:[#allocation4 + $0x44] sm:$0xf]
    %v4401 = vld [vmem:[#allocation4 + $0x48] sm:$0xf]
    %v4402 = vld [vmem:[#allocation4 + $0x4c] sm:$0xf]
    %v4403 = vld [vmem:[#allocation4 + $0x50] sm:$0xf]
    %v4404 = vld [vmem:[#allocation4 + $0x54] sm:$0xf]
    %v4405 = vld [vmem:[#allocation4 + $0x58] sm:$0xf]
    %v4406 = vld [vmem:[#allocation4 + $0x5c] sm:$0xf]
    %v4407 = vld [vmem:[#allocation4 + $0x60] sm:$0xf]
    %v4408 = vld [vmem:[#allocation4 + $0x64] sm:$0xf]
    %v4409 = vld [vmem:[#allocation4 + $0x68] sm:$0xf]
    %v4410 = vld [vmem:[#allocation4 + $0x6c] sm:$0xf]
    %v4411 = vld [vmem:[#allocation4 + $0x70] sm:$0xf]
    %v4412 = vld [vmem:[#allocation4 + $0x74] sm:$0xf]
    %v4413 = vld [vmem:[#allocation4 + $0x78] sm:$0xf]
    %v4414 = vld [vmem:[#allocation4 + $0x7c] sm:$0xf]
    %v4415 = vld [vmem:[#allocation4 + $0x80] sm:$0xf]
    %v4416 = vld [vmem:[#allocation4 + $0x84] sm:$0xf]
    %v4417 = vld [vmem:[#allocation4 + $0x88] sm:$0xf]
    %v4418 = vld [vmem:[#allocation4 + $0x8c] sm:$0xf]
    %v4419 = vld [vmem:[#allocation4 + $0x90] sm:$0xf]
    %v4420 = vld [vmem:[#allocation4 + $0x94] sm:$0xf]
    %v4421 = vld [vmem:[#allocation4 + $0x98] sm:$0xf]
    %v4422 = vld [vmem:[#allocation4 + $0x9c] sm:$0xf]
    %v4463 = vunpack.c.l.b16 %v4383
    %v4464 = vunpack.c.l.b16 %v4384
    %v4465 = vunpack.c.l.b16 %v4385
    %v4466 = vunpack.c.l.b16 %v4386
    %v4467 = vunpack.c.l.b16 %v4387
    %v4468 = vunpack.c.l.b16 %v4388
    %v4469 = vunpack.c.l.b16 %v4389
    %v4470 = vunpack.c.l.b16 %v4390
    %v4471 = vunpack.c.l.b16 %v4391
    %v4472 = vunpack.c.l.b16 %v4392
    %v4473 = vunpack.c.l.b16 %v4393
    %v4474 = vunpack.c.l.b16 %v4394
    %v4475 = vunpack.c.l.b16 %v4395
    %v4476 = vunpack.c.l.b16 %v4396
    %v4477 = vunpack.c.l.b16 %v4397
    %v4478 = vunpack.c.l.b16 %v4398
    %v4479 = vunpack.c.l.b16 %v4399
    %v4480 = vunpack.c.l.b16 %v4400
    %v4481 = vunpack.c.l.b16 %v4401
    %v4482 = vunpack.c.l.b16 %v4402
    %v4483 = vunpack.c.l.b16 %v4403
    %v4484 = vunpack.c.l.b16 %v4404
    %v4485 = vunpack.c.l.b16 %v4405
    %v4486 = vunpack.c.l.b16 %v4406
    %v4487 = vunpack.c.l.b16 %v4407
    %v4488 = vunpack.c.l.b16 %v4408
    %v4489 = vunpack.c.l.b16 %v4409
    %v4490 = vunpack.c.l.b16 %v4410
    %v4491 = vunpack.c.l.b16 %v4411
    %v4492 = vunpack.c.l.b16 %v4412
    %v4493 = vunpack.c.l.b16 %v4413
    %v4494 = vunpack.c.l.b16 %v4414
    %v4495 = vunpack.c.l.b16 %v4415
    %v4496 = vunpack.c.l.b16 %v4416
    %v4497 = vunpack.c.l.b16 %v4417
    %v4498 = vunpack.c.l.b16 %v4418
    %v4499 = vunpack.c.l.b16 %v4419
    %v4500 = vunpack.c.l.b16 %v4420
    %v4501 = vunpack.c.l.b16 %v4421
    %v4502 = vunpack.c.l.b16 %v4422
    %v4503 = vpack.c.b16 %v4464, %v4463
    %v4504 = vpack.c.b16 %v4466, %v4465
    %v4505 = vpack.c.b16 %v4468, %v4467
    %v4506 = vpack.c.b16 %v4470, %v4469
    %v4507 = vpack.c.b16 %v4472, %v4471
    %v4508 = vpack.c.b16 %v4474, %v4473
    %v4509 = vpack.c.b16 %v4476, %v4475
    %v4510 = vpack.c.b16 %v4478, %v4477
    %v4511 = vpack.c.b16 %v4480, %v4479
    %v4512 = vpack.c.b16 %v4482, %v4481
    %v4513 = vpack.c.b16 %v4484, %v4483
    %v4514 = vpack.c.b16 %v4486, %v4485
    %v4515 = vpack.c.b16 %v4488, %v4487
    %v4516 = vpack.c.b16 %v4490, %v4489
    %v4517 = vpack.c.b16 %v4492, %v4491
    %v4518 = vpack.c.b16 %v4494, %v4493
    %v4519 = vpack.c.b16 %v4496, %v4495
    %v4520 = vpack.c.b16 %v4498, %v4497
    %v4521 = vpack.c.b16 %v4500, %v4499
    %v4522 = vpack.c.b16 %v4502, %v4501
    %v4544 = vsel %vm131, %v4382, 0
    %4546 = vmatprep.subr.bf16.mxu0 0
    %4547 = vmatpush1.bf16.msra.mxu0 %v4503
    %4548 = vmatprep.subr.bf16.mxu0 0
    %4549 = vmatpush1.bf16.msra.mxu0 %v4504
    %4550 = vmatprep.subr.bf16.mxu0 0
    %4551 = vmatpush1.bf16.msra.mxu0 %v4505
    %4552 = vmatprep.subr.bf16.mxu0 0
    %4553 = vmatpush1.bf16.msra.mxu0 %v4506
    %4554 = vmatprep.subr.bf16.mxu0 0
    %4555 = vmatpush1.bf16.msra.mxu0 %v4507
    %4556 = vmatprep.subr.bf16.mxu0 0
    %4557 = vmatpush1.bf16.msra.mxu0 %v4508
    %4558 = vmatprep.subr.bf16.mxu0 0
    %4559 = vmatpush1.bf16.msra.mxu0 %v4509
    %4560 = vmatprep.subr.bf16.mxu0 0
    %4561 = vmatpush1.bf16.msra.mxu0 %v4510
    %4562 = vmatprep.subr.bf16.mxu0 0
    %4563 = vmatpush1.bf16.msra.mxu0 %v4511
    %4564 = vmatprep.subr.bf16.mxu0 0
    %4565 = vmatpush1.bf16.msra.mxu0 %v4512
    %4566 = vmatprep.subr.bf16.mxu0 0
    %4567 = vmatpush1.bf16.msra.mxu0 %v4513
    %4568 = vmatprep.subr.bf16.mxu0 0
    %4569 = vmatpush1.bf16.msra.mxu0 %v4514
    %4570 = vmatprep.subr.bf16.mxu0 0
    %4571 = vmatpush1.bf16.msra.mxu0 %v4515
    %4572 = vmatprep.subr.bf16.mxu0 0
    %4573 = vmatpush1.bf16.msra.mxu0 %v4516
    %4574 = vmatprep.subr.bf16.mxu0 0
    %4575 = vmatpush1.bf16.msra.mxu0 %v4517
    %4576 = vmatprep.subr.bf16.mxu0 0
    %4577 = vmatpush1.bf16.msra.mxu0 %v4518
    %4578 = vmatprep.mubr.bf16.mxu0 %v4381
    %4579 = vmatmul.mubr.bf16.gmra.mrb[0].mxu0 %v4380
    %v4580 = vpop.f32.mrb[0].mxu0
    %v4581 = vadd.f32 0.0, %v4580
    %v4582 = vpop.f32.mrb[0].mxu0
    %v4583 = vpop.f32.mrb[0].mxu0
    %v4584 = vpop.f32.mrb[0].mxu0
    %4585 = vdwg.mxu0
    %4586 = vmatprep.subr.bf16.mxu0 0
    %4587 = vmatpush1.bf16.msra.mxu0 %v4519
    %4588 = vmatprep.subr.bf16.mxu0 0
    %4589 = vmatpush1.bf16.msra.mxu0 %v4520
    %4590 = vmatprep.subr.bf16.mxu0 0
    %4591 = vmatpush1.bf16.msra.mxu0 %v4521
    %4592 = vmatprep.subr.bf16.mxu0 0
    %4593 = vmatpush1.bf16.msra.mxu0 %v4522
    %4594 = vmatprep.subr.bf16.mxu0 0
    %4595 = vmatpush1.bf16.msra.mxu0 0
    %4596 = vmatprep.subr.bf16.mxu0 0
    %4597 = vmatpush1.bf16.msra.mxu0 0
    %4598 = vmatprep.subr.bf16.mxu0 0
    %4599 = vmatpush1.bf16.msra.mxu0 0
    %4600 = vmatprep.subr.bf16.mxu0 0
    %4601 = vmatpush1.bf16.msra.mxu0 0
    %4602 = vmatprep.subr.bf16.mxu0 0
    %4603 = vmatpush1.bf16.msra.mxu0 0
    %4604 = vmatprep.subr.bf16.mxu0 0
    %4605 = vmatpush1.bf16.msra.mxu0 0
    %4606 = vmatprep.subr.bf16.mxu0 0
    %4607 = vmatpush1.bf16.msra.mxu0 0
    %4608 = vmatprep.subr.bf16.mxu0 0
    %4609 = vmatpush1.bf16.msra.mxu0 0
    %4610 = vmatprep.subr.bf16.mxu0 0
    %4611 = vmatpush1.bf16.msra.mxu0 0
    %4612 = vmatprep.subr.bf16.mxu0 0
    %4613 = vmatpush1.bf16.msra.mxu0 0
    %4614 = vmatprep.subr.bf16.mxu0 0
    %4615 = vmatpush1.bf16.msra.mxu0 0
    %4616 = vmatprep.subr.bf16.mxu0 0
    %4617 = vmatpush1.bf16.msra.mxu0 0
    %4618 = vmatprep.mubr.bf16.mxu0 0
    %4619 = vmatmul.mubr.bf16.gmra.mrb[0].mxu0 %v4544
    %v4620 = vpop.f32.mrb[0].mxu0
    %v4621 = vadd.f32 %v4581, %v4620
    %v4622 = vpop.f32.mrb[0].mxu0
    %v4623 = vpop.f32.mrb[0].mxu0
    %v4624 = vpop.f32.mrb[0].mxu0
    %4625 = vdwg.mxu0
    %v4626 = vmax.f32 %v4621, 0.0
    %4627 = vst [vmem:[#allocation3 + $0x60] sm:$0xff] %v4626
    %v4628 = vld [vmem:[#allocation2 + $0x30] sm:$0xff]
    %v4629 = vld [vmem:[#allocation2 + $0x38] sm:$0xff]
    %v4630 = vld [vmem:[#allocation2 + $0x40] sm:$0xff]
    %v4631 = vpack.c.bf16 %v4628, %v4628
    %v4632 = vpack.c.bf16 %v4629, %v4629
    %v4633 = vpack.c.bf16 %v4630, %v4630
    %v4634 = vld [vmem:[#allocation4] sm:$0xf]
    %v4635 = vld [vmem:[#allocation4 + $0x4] sm:$0xf]
    %v4636 = vld [vmem:[#allocation4 + $0x8] sm:$0xf]
    %v4637 = vld [vmem:[#allocation4 + $0xc] sm:$0xf]
    %v4638 = vld [vmem:[#allocation4 + $0x10] sm:$0xf]
    %v4639 = vld [vmem:[#allocation4 + $0x14] sm:$0xf]
    %v4640 = vld [vmem:[#allocation4 + $0x18] sm:$0xf]
    %v4641 = vld [vmem:[#allocation4 + $0x1c] sm:$0xf]
    %v4642 = vld [vmem:[#allocation4 + $0x20] sm:$0xf]
    %v4643 = vld [vmem:[#allocation4 + $0x24] sm:$0xf]
    %v4644 = vld [vmem:[#allocation4 + $0x28] sm:$0xf]
    %v4645 = vld [vmem:[#allocation4 + $0x2c] sm:$0xf]
    %v4646 = vld [vmem:[#allocation4 + $0x30] sm:$0xf]
    %v4647 = vld [vmem:[#allocation4 + $0x34] sm:$0xf]
    %v4648 = vld [vmem:[#allocation4 + $0x38] sm:$0xf]
    %v4649 = vld [vmem:[#allocation4 + $0x3c] sm:$0xf]
    %v4650 = vld [vmem:[#allocation4 + $0x40] sm:$0xf]
    %v4651 = vld [vmem:[#allocation4 + $0x44] sm:$0xf]
    %v4652 = vld [vmem:[#allocation4 + $0x48] sm:$0xf]
    %v4653 = vld [vmem:[#allocation4 + $0x4c] sm:$0xf]
    %v4654 = vld [vmem:[#allocation4 + $0x50] sm:$0xf]
    %v4655 = vld [vmem:[#allocation4 + $0x54] sm:$0xf]
    %v4656 = vld [vmem:[#allocation4 + $0x58] sm:$0xf]
    %v4657 = vld [vmem:[#allocation4 + $0x5c] sm:$0xf]
    %v4658 = vld [vmem:[#allocation4 + $0x60] sm:$0xf]
    %v4659 = vld [vmem:[#allocation4 + $0x64] sm:$0xf]
    %v4660 = vld [vmem:[#allocation4 + $0x68] sm:$0xf]
    %v4661 = vld [vmem:[#allocation4 + $0x6c] sm:$0xf]
    %v4662 = vld [vmem:[#allocation4 + $0x70] sm:$0xf]
    %v4663 = vld [vmem:[#allocation4 + $0x74] sm:$0xf]
    %v4664 = vld [vmem:[#allocation4 + $0x78] sm:$0xf]
    %v4665 = vld [vmem:[#allocation4 + $0x7c] sm:$0xf]
    %v4666 = vld [vmem:[#allocation4 + $0x80] sm:$0xf]
    %v4667 = vld [vmem:[#allocation4 + $0x84] sm:$0xf]
    %v4668 = vld [vmem:[#allocation4 + $0x88] sm:$0xf]
    %v4669 = vld [vmem:[#allocation4 + $0x8c] sm:$0xf]
    %v4670 = vld [vmem:[#allocation4 + $0x90] sm:$0xf]
    %v4671 = vld [vmem:[#allocation4 + $0x94] sm:$0xf]
    %v4672 = vld [vmem:[#allocation4 + $0x98] sm:$0xf]
    %v4673 = vld [vmem:[#allocation4 + $0x9c] sm:$0xf]
    %4677 = vrot.lane.b32.xlu0 %v4631, 64
    %v4678 = vpop.permute.xlu0 %4677
    %4679 = vrot.lane.b32.xlu0 %v4632, 64
    %v4680 = vpop.permute.xlu0 %4679
    %4681 = vrot.lane.b32.xlu0 %v4633, 64
    %v4682 = vpop.permute.xlu0 %4681
    %v4683 = vsel %vm1592, %v4678, %v4680
    %v4684 = vsel %vm1592, %v4680, %v4682
    %v4727 = vunpack.c.l.b16 %v4634
    %v4728 = vunpack.c.l.b16 %v4635
    %v4729 = vunpack.c.l.b16 %v4636
    %v4730 = vunpack.c.l.b16 %v4637
    %v4731 = vunpack.c.l.b16 %v4638
    %v4732 = vunpack.c.l.b16 %v4639
    %v4733 = vunpack.c.l.b16 %v4640
    %v4734 = vunpack.c.l.b16 %v4641
    %v4735 = vunpack.c.l.b16 %v4642
    %v4736 = vunpack.c.l.b16 %v4643
    %v4737 = vunpack.c.l.b16 %v4644
    %v4738 = vunpack.c.l.b16 %v4645
    %v4739 = vunpack.c.l.b16 %v4646
    %v4740 = vunpack.c.l.b16 %v4647
    %v4741 = vunpack.c.l.b16 %v4648
    %v4742 = vunpack.c.l.b16 %v4649
    %v4743 = vunpack.c.l.b16 %v4650
    %v4744 = vunpack.c.l.b16 %v4651
    %v4745 = vunpack.c.l.b16 %v4652
    %v4746 = vunpack.c.l.b16 %v4653
    %v4747 = vunpack.c.l.b16 %v4654
    %v4748 = vunpack.c.l.b16 %v4655
    %v4749 = vunpack.c.l.b16 %v4656
    %v4750 = vunpack.c.l.b16 %v4657
    %v4751 = vunpack.c.l.b16 %v4658
    %v4752 = vunpack.c.l.b16 %v4659
    %v4753 = vunpack.c.l.b16 %v4660
    %v4754 = vunpack.c.l.b16 %v4661
    %v4755 = vunpack.c.l.b16 %v4662
    %v4756 = vunpack.c.l.b16 %v4663
    %v4757 = vunpack.c.l.b16 %v4664
    %v4758 = vunpack.c.l.b16 %v4665
    %v4759 = vunpack.c.l.b16 %v4666
    %v4760 = vunpack.c.l.b16 %v4667
    %v4761 = vunpack.c.l.b16 %v4668
    %v4762 = vunpack.c.l.b16 %v4669
    %v4763 = vunpack.c.l.b16 %v4670
    %v4764 = vunpack.c.l.b16 %v4671
    %v4765 = vunpack.c.l.b16 %v4672
    %v4766 = vunpack.c.l.b16 %v4673
    %v4767 = vpack.c.b16 %v4728, %v4727
    %v4768 = vpack.c.b16 %v4730, %v4729
    %v4769 = vpack.c.b16 %v4732, %v4731
    %v4770 = vpack.c.b16 %v4734, %v4733
    %v4771 = vpack.c.b16 %v4736, %v4735
    %v4772 = vpack.c.b16 %v4738, %v4737
    %v4773 = vpack.c.b16 %v4740, %v4739
    %v4774 = vpack.c.b16 %v4742, %v4741
    %v4775 = vpack.c.b16 %v4744, %v4743
    %v4776 = vpack.c.b16 %v4746, %v4745
    %v4777 = vpack.c.b16 %v4748, %v4747
    %v4778 = vpack.c.b16 %v4750, %v4749
    %v4779 = vpack.c.b16 %v4752, %v4751
    %v4780 = vpack.c.b16 %v4754, %v4753
    %v4781 = vpack.c.b16 %v4756, %v4755
    %v4782 = vpack.c.b16 %v4758, %v4757
    %v4783 = vpack.c.b16 %v4760, %v4759
    %v4784 = vpack.c.b16 %v4762, %v4761
    %v4785 = vpack.c.b16 %v4764, %v4763
    %v4786 = vpack.c.b16 %v4766, %v4765
    %v4808 = vsel %vm131, %v4682, 0
    %4810 = vmatprep.subr.bf16.mxu0 0
    %4811 = vmatpush1.bf16.msra.mxu0 %v4767
    %4812 = vmatprep.subr.bf16.mxu0 0
    %4813 = vmatpush1.bf16.msra.mxu0 %v4768
    %4814 = vmatprep.subr.bf16.mxu0 0
    %4815 = vmatpush1.bf16.msra.mxu0 %v4769
    %4816 = vmatprep.subr.bf16.mxu0 0
    %4817 = vmatpush1.bf16.msra.mxu0 %v4770
    %4818 = vmatprep.subr.bf16.mxu0 0
    %4819 = vmatpush1.bf16.msra.mxu0 %v4771
    %4820 = vmatprep.subr.bf16.mxu0 0
    %4821 = vmatpush1.bf16.msra.mxu0 %v4772
    %4822 = vmatprep.subr.bf16.mxu0 0
    %4823 = vmatpush1.bf16.msra.mxu0 %v4773
    %4824 = vmatprep.subr.bf16.mxu0 0
    %4825 = vmatpush1.bf16.msra.mxu0 %v4774
    %4826 = vmatprep.subr.bf16.mxu0 0
    %4827 = vmatpush1.bf16.msra.mxu0 %v4775
    %4828 = vmatprep.subr.bf16.mxu0 0
    %4829 = vmatpush1.bf16.msra.mxu0 %v4776
    %4830 = vmatprep.subr.bf16.mxu0 0
    %4831 = vmatpush1.bf16.msra.mxu0 %v4777
    %4832 = vmatprep.subr.bf16.mxu0 0
    %4833 = vmatpush1.bf16.msra.mxu0 %v4778
    %4834 = vmatprep.subr.bf16.mxu0 0
    %4835 = vmatpush1.bf16.msra.mxu0 %v4779
    %4836 = vmatprep.subr.bf16.mxu0 0
    %4837 = vmatpush1.bf16.msra.mxu0 %v4780
    %4838 = vmatprep.subr.bf16.mxu0 0
    %4839 = vmatpush1.bf16.msra.mxu0 %v4781
    %4840 = vmatprep.subr.bf16.mxu0 0
    %4841 = vmatpush1.bf16.msra.mxu0 %v4782
    %4842 = vmatprep.mubr.bf16.mxu0 %v4684
    %4843 = vmatmul.mubr.bf16.gmra.mrb[0].mxu0 %v4683
    %v4844 = vpop.f32.mrb[0].mxu0
    %v4845 = vadd.f32 0.0, %v4844
    %v4846 = vpop.f32.mrb[0].mxu0
    %v4847 = vpop.f32.mrb[0].mxu0
    %v4848 = vpop.f32.mrb[0].mxu0
    %4849 = vdwg.mxu0
    %4850 = vmatprep.subr.bf16.mxu0 0
    %4851 = vmatpush1.bf16.msra.mxu0 %v4783
    %4852 = vmatprep.subr.bf16.mxu0 0
    %4853 = vmatpush1.bf16.msra.mxu0 %v4784
    %4854 = vmatprep.subr.bf16.mxu0 0
    %4855 = vmatpush1.bf16.msra.mxu0 %v4785
    %4856 = vmatprep.subr.bf16.mxu0 0
    %4857 = vmatpush1.bf16.msra.mxu0 %v4786
    %4858 = vmatprep.subr.bf16.mxu0 0
    %4859 = vmatpush1.bf16.msra.mxu0 0
    %4860 = vmatprep.subr.bf16.mxu0 0
    %4861 = vmatpush1.bf16.msra.mxu0 0
    %4862 = vmatprep.subr.bf16.mxu0 0
    %4863 = vmatpush1.bf16.msra.mxu0 0
    %4864 = vmatprep.subr.bf16.mxu0 0
    %4865 = vmatpush1.bf16.msra.mxu0 0
    %4866 = vmatprep.subr.bf16.mxu0 0
    %4867 = vmatpush1.bf16.msra.mxu0 0
    %4868 = vmatprep.subr.bf16.mxu0 0
    %4869 = vmatpush1.bf16.msra.mxu0 0
    %4870 = vmatprep.subr.bf16.mxu0 0
    %4871 = vmatpush1.bf16.msra.mxu0 0
    %4872 = vmatprep.subr.bf16.mxu0 0
    %4873 = vmatpush1.bf16.msra.mxu0 0
    %4874 = vmatprep.subr.bf16.mxu0 0
    %4875 = vmatpush1.bf16.msra.mxu0 0
    %4876 = vmatprep.subr.bf16.mxu0 0
    %4877 = vmatpush1.bf16.msra.mxu0 0
    %4878 = vmatprep.subr.bf16.mxu0 0
    %4879 = vmatpush1.bf16.msra.mxu0 0
    %4880 = vmatprep.subr.bf16.mxu0 0
    %4881 = vmatpush1.bf16.msra.mxu0 0
    %4882 = vmatprep.mubr.bf16.mxu0 0
    %4883 = vmatmul.mubr.bf16.gmra.mrb[0].mxu0 %v4808
    %v4884 = vpop.f32.mrb[0].mxu0
    %v4885 = vadd.f32 %v4845, %v4884
    %v4886 = vpop.f32.mrb[0].mxu0
    %v4887 = vpop.f32.mrb[0].mxu0
    %v4888 = vpop.f32.mrb[0].mxu0
    %4889 = vdwg.mxu0
    %v4890 = vmax.f32 %v4885, 0.0
    %4891 = vst [vmem:[#allocation3 + $0x68] sm:$0xff] %v4890
    %v4892 = vld [vmem:[#allocation3] sm:$0xff]
    %v4893 = vld [vmem:[#allocation3 + $0x8] sm:$0xff]
    %v4894 = vld [vmem:[#allocation3 + $0x10] sm:$0xff]
    %v4895 = vld [vmem:[#allocation3 + $0x18] sm:$0xff]
    %v4896 = vld [vmem:[#allocation3 + $0x20] sm:$0xff]
    %v4897 = vld [vmem:[#allocation3 + $0x28] sm:$0xff]
    %v4898 = vld [vmem:[#allocation3 + $0x30] sm:$0xff]
    %v4899 = vpack.c.bf16 %v4892, %v4892
    %v4900 = vpack.c.bf16 %v4893, %v4893
    %v4901 = vpack.c.bf16 %v4894, %v4894
    %v4902 = vpack.c.bf16 %v4895, %v4895
    %v4903 = vpack.c.bf16 %v4896, %v4896
    %v4904 = vpack.c.bf16 %v4897, %v4897
    %v4905 = vpack.c.bf16 %v4898, %v4898
    %v4906 = vld [vmem:[#allocation6] sm:$0xff]
    %v4907 = vld [vmem:[#allocation6 + $0x8] sm:$0xff]
    %v4908 = vld [vmem:[#allocation6 + $0x10] sm:$0xff]
    %v4909 = vld [vmem:[#allocation6 + $0x18] sm:$0xff]
    %v4910 = vld [vmem:[#allocation6 + $0x20] sm:$0xff]
    %v4911 = vld [vmem:[#allocation6 + $0x28] sm:$0xff]
    %v4912 = vld [vmem:[#allocation6 + $0x30] sm:$0xff]
    %v4913 = vld [vmem:[#allocation6 + $0x38] sm:$0xff]
    %v4914 = vld [vmem:[#allocation6 + $0x40] sm:$0xff]
    %v4915 = vld [vmem:[#allocation6 + $0x48] sm:$0xff]
    %v4916 = vld [vmem:[#allocation6 + $0x50] sm:$0xff]
    %v4917 = vld [vmem:[#allocation6 + $0x58] sm:$0xff]
    %v4918 = vld [vmem:[#allocation6 + $0x60] sm:$0xff]
    %v4919 = vld [vmem:[#allocation6 + $0x68] sm:$0xff]
    %v4920 = vld [vmem:[#allocation6 + $0x70] sm:$0xff]
    %v4921 = vld [vmem:[#allocation6 + $0x78] sm:$0xff]
    %v4922 = vld [vmem:[#allocation6 + $0x80] sm:$0xff]
    %v4923 = vld [vmem:[#allocation6 + $0x88] sm:$0xff]
    %v4924 = vld [vmem:[#allocation6 + $0x90] sm:$0xff]
    %v4925 = vld [vmem:[#allocation6 + $0x98] sm:$0xff]
    %v4926 = vld [vmem:[#allocation6 + $0xa0] sm:$0xff]
    %v4927 = vld [vmem:[#allocation6 + $0xa8] sm:$0xff]
    %v4928 = vld [vmem:[#allocation6 + $0xb0] sm:$0xff]
    %v4929 = vld [vmem:[#allocation6 + $0xb8] sm:$0xff]
    %v4930 = vld [vmem:[#allocation6 + $0xc0] sm:$0xff]
    %v4931 = vld [vmem:[#allocation6 + $0xc8] sm:$0xff]
    %v4932 = vld [vmem:[#allocation6 + $0xd0] sm:$0xff]
    %v4933 = vld [vmem:[#allocation6 + $0xd8] sm:$0xff]
    %v4934 = vld [vmem:[#allocation6 + $0xe0] sm:$0xff]
    %v4935 = vld [vmem:[#allocation6 + $0xe8] sm:$0xff]
    %v4936 = vld [vmem:[#allocation6 + $0xf0] sm:$0xff]
    %v4937 = vld [vmem:[#allocation6 + $0xf8] sm:$0xff]
    %v4938 = vld [vmem:[#allocation6 + $0x100] sm:$0xff]
    %v4939 = vld [vmem:[#allocation6 + $0x108] sm:$0xff]
    %v4940 = vld [vmem:[#allocation6 + $0x110] sm:$0xff]
    %v4941 = vld [vmem:[#allocation6 + $0x118] sm:$0xff]
    %v4942 = vld [vmem:[#allocation6 + $0x120] sm:$0xff]
    %v4943 = vld [vmem:[#allocation6 + $0x128] sm:$0xff]
    %v4944 = vld [vmem:[#allocation6 + $0x130] sm:$0xff]
    %v4945 = vld [vmem:[#allocation6 + $0x138] sm:$0xff]
    %v4946 = vld [vmem:[#allocation6 + $0x140] sm:$0xff]
    %v4947 = vld [vmem:[#allocation6 + $0x148] sm:$0xff]
    %v4948 = vld [vmem:[#allocation6 + $0x150] sm:$0xff]
    %v4949 = vld [vmem:[#allocation6 + $0x158] sm:$0xff]
    %v4950 = vld [vmem:[#allocation6 + $0x160] sm:$0xff]
    %v4951 = vld [vmem:[#allocation6 + $0x168] sm:$0xff]
    %v4952 = vld [vmem:[#allocation6 + $0x170] sm:$0xff]
    %v4953 = vld [vmem:[#allocation6 + $0x178] sm:$0xff]
    %v4954 = vld [vmem:[#allocation6 + $0x180] sm:$0xff]
    %v4955 = vld [vmem:[#allocation6 + $0x188] sm:$0xff]
    %v4956 = vld [vmem:[#allocation6 + $0x190] sm:$0xff]
    %v4957 = vld [vmem:[#allocation6 + $0x198] sm:$0xff]
    %v4958 = vld [vmem:[#allocation6 + $0x1a0] sm:$0xff]
    %v4959 = vld [vmem:[#allocation6 + $0x1a8] sm:$0xff]
    %v4960 = vld [vmem:[#allocation6 + $0x1b0] sm:$0xff]
    %v4961 = vld [vmem:[#allocation6 + $0x1b8] sm:$0xff]
    %v4962 = vld [vmem:[#allocation6 + $0x1c0] sm:$0xff]
    %v4963 = vld [vmem:[#allocation6 + $0x1c8] sm:$0xff]
    %v4964 = vld [vmem:[#allocation6 + $0x1d0] sm:$0xff]
    %v4965 = vld [vmem:[#allocation6 + $0x1d8] sm:$0xff]
    %v4966 = vld [vmem:[#allocation6 + $0x1e0] sm:$0xff]
    %v4967 = vld [vmem:[#allocation6 + $0x1e8] sm:$0xff]
    %v4968 = vld [vmem:[#allocation6 + $0x1f0] sm:$0xff]
    %v4969 = vld [vmem:[#allocation6 + $0x1f8] sm:$0xff]
    %v4970 = vld [vmem:[#allocation6 + $0x200] sm:$0xff]
    %v4971 = vld [vmem:[#allocation6 + $0x208] sm:$0xff]
    %v4972 = vld [vmem:[#allocation6 + $0x210] sm:$0xff]
    %v4973 = vld [vmem:[#allocation6 + $0x218] sm:$0xff]
    %v4974 = vld [vmem:[#allocation6 + $0x220] sm:$0xff]
    %v4975 = vld [vmem:[#allocation6 + $0x228] sm:$0xff]
    %v4976 = vld [vmem:[#allocation6 + $0x230] sm:$0xff]
    %v4977 = vld [vmem:[#allocation6 + $0x238] sm:$0xff]
    %v4978 = vld [vmem:[#allocation6 + $0x240] sm:$0xff]
    %v4979 = vld [vmem:[#allocation6 + $0x248] sm:$0xff]
    %v4980 = vld [vmem:[#allocation6 + $0x250] sm:$0xff]
    %v4981 = vld [vmem:[#allocation6 + $0x258] sm:$0xff]
    %v4982 = vld [vmem:[#allocation6 + $0x260] sm:$0xff]
    %v4983 = vld [vmem:[#allocation6 + $0x268] sm:$0xff]
    %v4984 = vld [vmem:[#allocation6 + $0x270] sm:$0xff]
    %v4985 = vld [vmem:[#allocation6 + $0x278] sm:$0xff]
    %v4986 = vld [vmem:[#allocation6 + $0x280] sm:$0xff]
    %v4987 = vld [vmem:[#allocation6 + $0x288] sm:$0xff]
    %v4988 = vld [vmem:[#allocation6 + $0x290] sm:$0xff]
    %v4989 = vld [vmem:[#allocation6 + $0x298] sm:$0xff]
    %v4990 = vld [vmem:[#allocation6 + $0x2a0] sm:$0xff]
    %v4991 = vld [vmem:[#allocation6 + $0x2a8] sm:$0xff]
    %v4992 = vld [vmem:[#allocation6 + $0x2b0] sm:$0xff]
    %v4993 = vld [vmem:[#allocation6 + $0x2b8] sm:$0xff]
    %v4994 = vld [vmem:[#allocation6 + $0x2c0] sm:$0xff]
    %v4995 = vld [vmem:[#allocation6 + $0x2c8] sm:$0xff]
    %v4996 = vld [vmem:[#allocation6 + $0x2d0] sm:$0xff]
    %v4997 = vld [vmem:[#allocation6 + $0x2d8] sm:$0xff]
    %v4998 = vld [vmem:[#allocation6 + $0x2e0] sm:$0xff]
    %v4999 = vld [vmem:[#allocation6 + $0x2e8] sm:$0xff]
    %v5000 = vld [vmem:[#allocation6 + $0x2f0] sm:$0xff]
    %v5001 = vld [vmem:[#allocation6 + $0x2f8] sm:$0xff]
    %v5002 = vld [vmem:[#allocation6 + $0x300] sm:$0xff]
    %v5003 = vld [vmem:[#allocation6 + $0x308] sm:$0xff]
    %v5004 = vld [vmem:[#allocation6 + $0x310] sm:$0xff]
    %v5005 = vld [vmem:[#allocation6 + $0x318] sm:$0xff]
    %v5006 = vld [vmem:[#allocation6 + $0x320] sm:$0xff]
    %v5007 = vld [vmem:[#allocation6 + $0x328] sm:$0xff]
    %v5008 = vld [vmem:[#allocation6 + $0x330] sm:$0xff]
    %v5009 = vld [vmem:[#allocation6 + $0x338] sm:$0xff]
    %v5010 = vld [vmem:[#allocation6 + $0x340] sm:$0xff]
    %v5011 = vld [vmem:[#allocation6 + $0x348] sm:$0xff]
    %v5012 = vld [vmem:[#allocation6 + $0x350] sm:$0xff]
    %v5013 = vld [vmem:[#allocation6 + $0x358] sm:$0xff]
    %v5014 = vld [vmem:[#allocation6 + $0x360] sm:$0xff]
    %v5015 = vld [vmem:[#allocation6 + $0x368] sm:$0xff]
    %v5016 = vld [vmem:[#allocation6 + $0x370] sm:$0xff]
    %v5017 = vld [vmem:[#allocation6 + $0x378] sm:$0xff]
    %v5130 = vunpack.c.l.b16 %v4906
    %v5131 = vunpack.c.h.b16 %v4906
    %v5132 = vunpack.c.l.b16 %v4907
    %v5133 = vunpack.c.h.b16 %v4907
    %v5134 = vunpack.c.l.b16 %v4908
    %v5135 = vunpack.c.h.b16 %v4908
    %v5136 = vunpack.c.l.b16 %v4909
    %v5137 = vunpack.c.h.b16 %v4909
    %v5138 = vunpack.c.l.b16 %v4910
    %v5139 = vunpack.c.h.b16 %v4910
    %v5140 = vunpack.c.l.b16 %v4911
    %v5141 = vunpack.c.h.b16 %v4911
    %v5142 = vunpack.c.l.b16 %v4912
    %v5143 = vunpack.c.h.b16 %v4912
    %v5144 = vunpack.c.l.b16 %v4913
    %v5145 = vunpack.c.h.b16 %v4913
    %v5146 = vunpack.c.l.b16 %v4914
    %v5147 = vunpack.c.h.b16 %v4914
    %v5148 = vunpack.c.l.b16 %v4915
    %v5149 = vunpack.c.h.b16 %v4915
    %v5150 = vunpack.c.l.b16 %v4916
    %v5151 = vunpack.c.h.b16 %v4916
    %v5152 = vunpack.c.l.b16 %v4917
    %v5153 = vunpack.c.h.b16 %v4917
    %v5154 = vunpack.c.l.b16 %v4918
    %v5155 = vunpack.c.h.b16 %v4918
    %v5156 = vunpack.c.l.b16 %v4919
    %v5157 = vunpack.c.h.b16 %v4919
    %v5158 = vunpack.c.l.b16 %v4920
    %v5159 = vunpack.c.h.b16 %v4920
    %v5160 = vunpack.c.l.b16 %v4921
    %v5161 = vunpack.c.h.b16 %v4921
    %v5162 = vunpack.c.l.b16 %v4922
    %v5163 = vunpack.c.h.b16 %v4922
    %v5164 = vunpack.c.l.b16 %v4923
    %v5165 = vunpack.c.h.b16 %v4923
    %v5166 = vunpack.c.l.b16 %v4924
    %v5167 = vunpack.c.h.b16 %v4924
    %v5168 = vunpack.c.l.b16 %v4925
    %v5169 = vunpack.c.h.b16 %v4925
    %v5170 = vunpack.c.l.b16 %v4926
    %v5171 = vunpack.c.h.b16 %v4926
    %v5172 = vunpack.c.l.b16 %v4927
    %v5173 = vunpack.c.h.b16 %v4927
    %v5174 = vunpack.c.l.b16 %v4928
    %v5175 = vunpack.c.h.b16 %v4928
    %v5176 = vunpack.c.l.b16 %v4929
    %v5177 = vunpack.c.h.b16 %v4929
    %v5178 = vunpack.c.l.b16 %v4930
    %v5179 = vunpack.c.h.b16 %v4930
    %v5180 = vunpack.c.l.b16 %v4931
    %v5181 = vunpack.c.h.b16 %v4931
    %v5182 = vunpack.c.l.b16 %v4932
    %v5183 = vunpack.c.h.b16 %v4932
    %v5184 = vunpack.c.l.b16 %v4933
    %v5185 = vunpack.c.h.b16 %v4933
    %v5186 = vunpack.c.l.b16 %v4934
    %v5187 = vunpack.c.h.b16 %v4934
    %v5188 = vunpack.c.l.b16 %v4935
    %v5189 = vunpack.c.h.b16 %v4935
    %v5190 = vunpack.c.l.b16 %v4936
    %v5191 = vunpack.c.h.b16 %v4936
    %v5192 = vunpack.c.l.b16 %v4937
    %v5193 = vunpack.c.h.b16 %v4937
    %v5194 = vunpack.c.l.b16 %v4938
    %v5195 = vunpack.c.h.b16 %v4938
    %v5196 = vunpack.c.l.b16 %v4939
    %v5197 = vunpack.c.h.b16 %v4939
    %v5198 = vunpack.c.l.b16 %v4940
    %v5199 = vunpack.c.h.b16 %v4940
    %v5200 = vunpack.c.l.b16 %v4941
    %v5201 = vunpack.c.h.b16 %v4941
    %v5202 = vunpack.c.l.b16 %v4942
    %v5203 = vunpack.c.h.b16 %v4942
    %v5204 = vunpack.c.l.b16 %v4943
    %v5205 = vunpack.c.h.b16 %v4943
    %v5206 = vunpack.c.l.b16 %v4944
    %v5207 = vunpack.c.h.b16 %v4944
    %v5208 = vunpack.c.l.b16 %v4945
    %v5209 = vunpack.c.h.b16 %v4945
    %v5210 = vunpack.c.l.b16 %v4946
    %v5211 = vunpack.c.h.b16 %v4946
    %v5212 = vunpack.c.l.b16 %v4947
    %v5213 = vunpack.c.h.b16 %v4947
    %v5214 = vunpack.c.l.b16 %v4948
    %v5215 = vunpack.c.h.b16 %v4948
    %v5216 = vunpack.c.l.b16 %v4949
    %v5217 = vunpack.c.h.b16 %v4949
    %v5218 = vunpack.c.l.b16 %v4950
    %v5219 = vunpack.c.h.b16 %v4950
    %v5220 = vunpack.c.l.b16 %v4951
    %v5221 = vunpack.c.h.b16 %v4951
    %v5222 = vunpack.c.l.b16 %v4952
    %v5223 = vunpack.c.h.b16 %v4952
    %v5224 = vunpack.c.l.b16 %v4953
    %v5225 = vunpack.c.h.b16 %v4953
    %v5226 = vunpack.c.l.b16 %v4954
    %v5227 = vunpack.c.h.b16 %v4954
    %v5228 = vunpack.c.l.b16 %v4955
    %v5229 = vunpack.c.h.b16 %v4955
    %v5230 = vunpack.c.l.b16 %v4956
    %v5231 = vunpack.c.h.b16 %v4956
    %v5232 = vunpack.c.l.b16 %v4957
    %v5233 = vunpack.c.h.b16 %v4957
    %v5234 = vunpack.c.l.b16 %v4958
    %v5235 = vunpack.c.h.b16 %v4958
    %v5236 = vunpack.c.l.b16 %v4959
    %v5237 = vunpack.c.h.b16 %v4959
    %v5238 = vunpack.c.l.b16 %v4960
    %v5239 = vunpack.c.h.b16 %v4960
    %v5240 = vunpack.c.l.b16 %v4961
    %v5241 = vunpack.c.h.b16 %v4961
    %v5242 = vunpack.c.l.b16 %v4962
    %v5243 = vunpack.c.h.b16 %v4962
    %v5244 = vunpack.c.l.b16 %v4963
    %v5245 = vunpack.c.h.b16 %v4963
    %v5246 = vunpack.c.l.b16 %v4964
    %v5247 = vunpack.c.h.b16 %v4964
    %v5248 = vunpack.c.l.b16 %v4965
    %v5249 = vunpack.c.h.b16 %v4965
    %v5250 = vunpack.c.l.b16 %v4966
    %v5251 = vunpack.c.h.b16 %v4966
    %v5252 = vunpack.c.l.b16 %v4967
    %v5253 = vunpack.c.h.b16 %v4967
    %v5254 = vunpack.c.l.b16 %v4968
    %v5255 = vunpack.c.h.b16 %v4968
    %v5256 = vunpack.c.l.b16 %v4969
    %v5257 = vunpack.c.h.b16 %v4969
    %v5258 = vunpack.c.l.b16 %v4970
    %v5259 = vunpack.c.h.b16 %v4970
    %v5260 = vunpack.c.l.b16 %v4971
    %v5261 = vunpack.c.h.b16 %v4971
    %v5262 = vunpack.c.l.b16 %v4972
    %v5263 = vunpack.c.h.b16 %v4972
    %v5264 = vunpack.c.l.b16 %v4973
    %v5265 = vunpack.c.h.b16 %v4973
    %v5266 = vunpack.c.l.b16 %v4974
    %v5267 = vunpack.c.h.b16 %v4974
    %v5268 = vunpack.c.l.b16 %v4975
    %v5269 = vunpack.c.h.b16 %v4975
    %v5270 = vunpack.c.l.b16 %v4976
    %v5271 = vunpack.c.h.b16 %v4976
    %v5272 = vunpack.c.l.b16 %v4977
    %v5273 = vunpack.c.h.b16 %v4977
    %v5274 = vunpack.c.l.b16 %v4978
    %v5275 = vunpack.c.h.b16 %v4978
    %v5276 = vunpack.c.l.b16 %v4979
    %v5277 = vunpack.c.h.b16 %v4979
    %v5278 = vunpack.c.l.b16 %v4980
    %v5279 = vunpack.c.h.b16 %v4980
    %v5280 = vunpack.c.l.b16 %v4981
    %v5281 = vunpack.c.h.b16 %v4981
    %v5282 = vunpack.c.l.b16 %v4982
    %v5283 = vunpack.c.h.b16 %v4982
    %v5284 = vunpack.c.l.b16 %v4983
    %v5285 = vunpack.c.h.b16 %v4983
    %v5286 = vunpack.c.l.b16 %v4984
    %v5287 = vunpack.c.h.b16 %v4984
    %v5288 = vunpack.c.l.b16 %v4985
    %v5289 = vunpack.c.h.b16 %v4985
    %v5290 = vunpack.c.l.b16 %v4986
    %v5291 = vunpack.c.h.b16 %v4986
    %v5292 = vunpack.c.l.b16 %v4987
    %v5293 = vunpack.c.h.b16 %v4987
    %v5294 = vunpack.c.l.b16 %v4988
    %v5295 = vunpack.c.h.b16 %v4988
    %v5296 = vunpack.c.l.b16 %v4989
    %v5297 = vunpack.c.h.b16 %v4989
    %v5298 = vunpack.c.l.b16 %v4990
    %v5299 = vunpack.c.h.b16 %v4990
    %v5300 = vunpack.c.l.b16 %v4991
    %v5301 = vunpack.c.h.b16 %v4991
    %v5302 = vunpack.c.l.b16 %v4992
    %v5303 = vunpack.c.h.b16 %v4992
    %v5304 = vunpack.c.l.b16 %v4993
    %v5305 = vunpack.c.h.b16 %v4993
    %v5306 = vunpack.c.l.b16 %v4994
    %v5307 = vunpack.c.h.b16 %v4994
    %v5308 = vunpack.c.l.b16 %v4995
    %v5309 = vunpack.c.h.b16 %v4995
    %v5310 = vunpack.c.l.b16 %v4996
    %v5311 = vunpack.c.h.b16 %v4996
    %v5312 = vunpack.c.l.b16 %v4997
    %v5313 = vunpack.c.h.b16 %v4997
    %v5314 = vunpack.c.l.b16 %v4998
    %v5315 = vunpack.c.h.b16 %v4998
    %v5316 = vunpack.c.l.b16 %v4999
    %v5317 = vunpack.c.h.b16 %v4999
    %v5318 = vunpack.c.l.b16 %v5000
    %v5319 = vunpack.c.h.b16 %v5000
    %v5320 = vunpack.c.l.b16 %v5001
    %v5321 = vunpack.c.h.b16 %v5001
    %v5322 = vunpack.c.l.b16 %v5002
    %v5323 = vunpack.c.h.b16 %v5002
    %v5324 = vunpack.c.l.b16 %v5003
    %v5325 = vunpack.c.h.b16 %v5003
    %v5326 = vunpack.c.l.b16 %v5004
    %v5327 = vunpack.c.h.b16 %v5004
    %v5328 = vunpack.c.l.b16 %v5005
    %v5329 = vunpack.c.h.b16 %v5005
    %v5330 = vunpack.c.l.b16 %v5006
    %v5331 = vunpack.c.h.b16 %v5006
    %v5332 = vunpack.c.l.b16 %v5007
    %v5333 = vunpack.c.h.b16 %v5007
    %v5334 = vunpack.c.l.b16 %v5008
    %v5335 = vunpack.c.h.b16 %v5008
    %v5336 = vunpack.c.l.b16 %v5009
    %v5337 = vunpack.c.h.b16 %v5009
    %v5338 = vunpack.c.l.b16 %v5010
    %v5339 = vunpack.c.h.b16 %v5010
    %v5340 = vunpack.c.l.b16 %v5011
    %v5341 = vunpack.c.h.b16 %v5011
    %v5342 = vunpack.c.l.b16 %v5012
    %v5343 = vunpack.c.h.b16 %v5012
    %v5344 = vunpack.c.l.b16 %v5013
    %v5345 = vunpack.c.h.b16 %v5013
    %v5346 = vunpack.c.l.b16 %v5014
    %v5347 = vunpack.c.h.b16 %v5014
    %v5348 = vunpack.c.l.b16 %v5015
    %v5349 = vunpack.c.h.b16 %v5015
    %v5350 = vunpack.c.l.b16 %v5016
    %v5351 = vunpack.c.h.b16 %v5016
    %v5352 = vunpack.c.l.b16 %v5017
    %v5353 = vunpack.c.h.b16 %v5017
    %v5354 = vpack.c.b16 %v5132, %v5130
    %v5355 = vpack.c.b16 %v5133, %v5131
    %v5356 = vpack.c.b16 %v5136, %v5134
    %v5357 = vpack.c.b16 %v5137, %v5135
    %v5358 = vpack.c.b16 %v5140, %v5138
    %v5359 = vpack.c.b16 %v5141, %v5139
    %v5360 = vpack.c.b16 %v5144, %v5142
    %v5361 = vpack.c.b16 %v5145, %v5143
    %v5362 = vpack.c.b16 %v5148, %v5146
    %v5363 = vpack.c.b16 %v5149, %v5147
    %v5364 = vpack.c.b16 %v5152, %v5150
    %v5365 = vpack.c.b16 %v5153, %v5151
    %v5366 = vpack.c.b16 %v5156, %v5154
    %v5367 = vpack.c.b16 %v5157, %v5155
    %v5368 = vpack.c.b16 %v5160, %v5158
    %v5369 = vpack.c.b16 %v5161, %v5159
    %v5370 = vpack.c.b16 %v5164, %v5162
    %v5371 = vpack.c.b16 %v5165, %v5163
    %v5372 = vpack.c.b16 %v5168, %v5166
    %v5373 = vpack.c.b16 %v5169, %v5167
    %v5374 = vpack.c.b16 %v5172, %v5170
    %v5375 = vpack.c.b16 %v5173, %v5171
    %v5376 = vpack.c.b16 %v5176, %v5174
    %v5377 = vpack.c.b16 %v5177, %v5175
    %v5378 = vpack.c.b16 %v5180, %v5178
    %v5379 = vpack.c.b16 %v5181, %v5179
    %v5380 = vpack.c.b16 %v5184, %v5182
    %v5381 = vpack.c.b16 %v5185, %v5183
    %v5382 = vpack.c.b16 %v5188, %v5186
    %v5383 = vpack.c.b16 %v5189, %v5187
    %v5384 = vpack.c.b16 %v5192, %v5190
    %v5385 = vpack.c.b16 %v5193, %v5191
    %v5386 = vpack.c.b16 %v5196, %v5194
    %v5387 = vpack.c.b16 %v5197, %v5195
    %v5388 = vpack.c.b16 %v5200, %v5198
    %v5389 = vpack.c.b16 %v5201, %v5199
    %v5390 = vpack.c.b16 %v5204, %v5202
    %v5391 = vpack.c.b16 %v5205, %v5203
    %v5392 = vpack.c.b16 %v5208, %v5206
    %v5393 = vpack.c.b16 %v5209, %v5207
    %v5394 = vpack.c.b16 %v5212, %v5210
    %v5395 = vpack.c.b16 %v5213, %v5211
    %v5396 = vpack.c.b16 %v5216, %v5214
    %v5397 = vpack.c.b16 %v5217, %v5215
    %v5398 = vpack.c.b16 %v5220, %v5218
    %v5399 = vpack.c.b16 %v5221, %v5219
    %v5400 = vpack.c.b16 %v5224, %v5222
    %v5401 = vpack.c.b16 %v5225, %v5223
    %v5402 = vpack.c.b16 %v5228, %v5226
    %v5403 = vpack.c.b16 %v5229, %v5227
    %v5404 = vpack.c.b16 %v5232, %v5230
    %v5405 = vpack.c.b16 %v5233, %v5231
    %v5406 = vpack.c.b16 %v5236, %v5234
    %v5407 = vpack.c.b16 %v5237, %v5235
    %v5408 = vpack.c.b16 %v5240, %v5238
    %v5409 = vpack.c.b16 %v5241, %v5239
    %v5410 = vpack.c.b16 %v5244, %v5242
    %v5411 = vpack.c.b16 %v5245, %v5243
    %v5412 = vpack.c.b16 %v5248, %v5246
    %v5413 = vpack.c.b16 %v5249, %v5247
    %v5414 = vpack.c.b16 %v5252, %v5250
    %v5415 = vpack.c.b16 %v5253, %v5251
    %v5416 = vpack.c.b16 %v5256, %v5254
    %v5417 = vpack.c.b16 %v5257, %v5255
    %v5418 = vpack.c.b16 %v5260, %v5258
    %v5419 = vpack.c.b16 %v5261, %v5259
    %v5420 = vpack.c.b16 %v5264, %v5262
    %v5421 = vpack.c.b16 %v5265, %v5263
    %v5422 = vpack.c.b16 %v5268, %v5266
    %v5423 = vpack.c.b16 %v5269, %v5267
    %v5424 = vpack.c.b16 %v5272, %v5270
    %v5425 = vpack.c.b16 %v5273, %v5271
    %v5426 = vpack.c.b16 %v5276, %v5274
    %v5427 = vpack.c.b16 %v5277, %v5275
    %v5428 = vpack.c.b16 %v5280, %v5278
    %v5429 = vpack.c.b16 %v5281, %v5279
    %v5430 = vpack.c.b16 %v5284, %v5282
    %v5431 = vpack.c.b16 %v5285, %v5283
    %v5432 = vpack.c.b16 %v5288, %v5286
    %v5433 = vpack.c.b16 %v5289, %v5287
    %v5434 = vpack.c.b16 %v5292, %v5290
    %v5435 = vpack.c.b16 %v5293, %v5291
    %v5436 = vpack.c.b16 %v5296, %v5294
    %v5437 = vpack.c.b16 %v5297, %v5295
    %v5438 = vpack.c.b16 %v5300, %v5298
    %v5439 = vpack.c.b16 %v5301, %v5299
    %v5440 = vpack.c.b16 %v5304, %v5302
    %v5441 = vpack.c.b16 %v5305, %v5303
    %v5442 = vpack.c.b16 %v5308, %v5306
    %v5443 = vpack.c.b16 %v5309, %v5307
    %v5444 = vpack.c.b16 %v5312, %v5310
    %v5445 = vpack.c.b16 %v5313, %v5311
    %v5446 = vpack.c.b16 %v5316, %v5314
    %v5447 = vpack.c.b16 %v5317, %v5315
    %v5448 = vpack.c.b16 %v5320, %v5318
    %v5449 = vpack.c.b16 %v5321, %v5319
    %v5450 = vpack.c.b16 %v5324, %v5322
    %v5451 = vpack.c.b16 %v5325, %v5323
    %v5452 = vpack.c.b16 %v5328, %v5326
    %v5453 = vpack.c.b16 %v5329, %v5327
    %v5454 = vpack.c.b16 %v5332, %v5330
    %v5455 = vpack.c.b16 %v5333, %v5331
    %v5456 = vpack.c.b16 %v5336, %v5334
    %v5457 = vpack.c.b16 %v5337, %v5335
    %v5458 = vpack.c.b16 %v5340, %v5338
    %v5459 = vpack.c.b16 %v5341, %v5339
    %v5460 = vpack.c.b16 %v5344, %v5342
    %v5461 = vpack.c.b16 %v5345, %v5343
    %v5462 = vpack.c.b16 %v5348, %v5346
    %v5463 = vpack.c.b16 %v5349, %v5347
    %v5464 = vpack.c.b16 %v5352, %v5350
    %v5465 = vpack.c.b16 %v5353, %v5351
    %5578 = vmatprep.subr.bf16.mxu0 %v5355
    %5579 = vmatpush1.bf16.msra.mxu0 %v5354
    %5580 = vmatprep.subr.bf16.mxu0 %v5357
    %5581 = vmatpush1.bf16.msra.mxu0 %v5356
    %5582 = vmatprep.subr.bf16.mxu0 %v5359
    %5583 = vmatpush1.bf16.msra.mxu0 %v5358
    %5584 = vmatprep.subr.bf16.mxu0 %v5361
    %5585 = vmatpush1.bf16.msra.mxu0 %v5360
    %5586 = vmatprep.subr.bf16.mxu0 %v5363
    %5587 = vmatpush1.bf16.msra.mxu0 %v5362
    %5588 = vmatprep.subr.bf16.mxu0 %v5365
    %5589 = vmatpush1.bf16.msra.mxu0 %v5364
    %5590 = vmatprep.subr.bf16.mxu0 %v5367
    %5591 = vmatpush1.bf16.msra.mxu0 %v5366
    %5592 = vmatprep.subr.bf16.mxu0 %v5369
    %5593 = vmatpush1.bf16.msra.mxu0 %v5368
    %5594 = vmatprep.subr.bf16.mxu0 %v5371
    %5595 = vmatpush1.bf16.msra.mxu0 %v5370
    %5596 = vmatprep.subr.bf16.mxu0 %v5373
    %5597 = vmatpush1.bf16.msra.mxu0 %v5372
    %5598 = vmatprep.subr.bf16.mxu0 %v5375
    %5599 = vmatpush1.bf16.msra.mxu0 %v5374
    %5600 = vmatprep.subr.bf16.mxu0 %v5377
    %5601 = vmatpush1.bf16.msra.mxu0 %v5376
    %5602 = vmatprep.subr.bf16.mxu0 %v5379
    %5603 = vmatpush1.bf16.msra.mxu0 %v5378
    %5604 = vmatprep.subr.bf16.mxu0 %v5381
    %5605 = vmatpush1.bf16.msra.mxu0 %v5380
    %5606 = vmatprep.subr.bf16.mxu0 %v5383
    %5607 = vmatpush1.bf16.msra.mxu0 %v5382
    %5608 = vmatprep.subr.bf16.mxu0 %v5385
    %5609 = vmatpush1.bf16.msra.mxu0 %v5384
    %5610 = vmatprep.mubr.bf16.mxu0 %v4900
    %5611 = vmatmul.mubr.bf16.gmra.mrb[0].mxu0 %v4899
    %v5612 = vpop.f32.mrb[0].mxu0
    %v5613 = vadd.f32 0.0, %v5612
    %v5614 = vpop.f32.mrb[0].mxu0
    %v5615 = vadd.f32 0.0, %v5614
    %v5616 = vpop.f32.mrb[0].mxu0
    %v5617 = vpop.f32.mrb[0].mxu0
    %5618 = vdwg.mxu0
    %5619 = vmatprep.subr.bf16.mxu0 %v5387
    %5620 = vmatpush1.bf16.msra.mxu0 %v5386
    %5621 = vmatprep.subr.bf16.mxu0 %v5389
    %5622 = vmatpush1.bf16.msra.mxu0 %v5388
    %5623 = vmatprep.subr.bf16.mxu0 %v5391
    %5624 = vmatpush1.bf16.msra.mxu0 %v5390
    %5625 = vmatprep.subr.bf16.mxu0 %v5393
    %5626 = vmatpush1.bf16.msra.mxu0 %v5392
    %5627 = vmatprep.subr.bf16.mxu0 %v5395
    %5628 = vmatpush1.bf16.msra.mxu0 %v5394
    %5629 = vmatprep.subr.bf16.mxu0 %v5397
    %5630 = vmatpush1.bf16.msra.mxu0 %v5396
    %5631 = vmatprep.subr.bf16.mxu0 %v5399
    %5632 = vmatpush1.bf16.msra.mxu0 %v5398
    %5633 = vmatprep.subr.bf16.mxu0 %v5401
    %5634 = vmatpush1.bf16.msra.mxu0 %v5400
    %5635 = vmatprep.subr.bf16.mxu0 %v5403
    %5636 = vmatpush1.bf16.msra.mxu0 %v5402
    %5637 = vmatprep.subr.bf16.mxu0 %v5405
    %5638 = vmatpush1.bf16.msra.mxu0 %v5404
    %5639 = vmatprep.subr.bf16.mxu0 %v5407
    %5640 = vmatpush1.bf16.msra.mxu0 %v5406
    %5641 = vmatprep.subr.bf16.mxu0 %v5409
    %5642 = vmatpush1.bf16.msra.mxu0 %v5408
    %5643 = vmatprep.subr.bf16.mxu0 %v5411
    %5644 = vmatpush1.bf16.msra.mxu0 %v5410
    %5645 = vmatprep.subr.bf16.mxu0 %v5413
    %5646 = vmatpush1.bf16.msra.mxu0 %v5412
    %5647 = vmatprep.subr.bf16.mxu0 %v5415
    %5648 = vmatpush1.bf16.msra.mxu0 %v5414
    %5649 = vmatprep.subr.bf16.mxu0 %v5417
    %5650 = vmatpush1.bf16.msra.mxu0 %v5416
    %5651 = vmatprep.mubr.bf16.mxu0 %v4902
    %5652 = vmatmul.mubr.bf16.gmra.mrb[0].mxu0 %v4901
    %v5653 = vpop.f32.mrb[0].mxu0
    %v5654 = vadd.f32 %v5613, %v5653
    %v5655 = vpop.f32.mrb[0].mxu0
    %v5656 = vadd.f32 %v5615, %v5655
    %v5657 = vpop.f32.mrb[0].mxu0
    %v5658 = vpop.f32.mrb[0].mxu0
    %5659 = vdwg.mxu0
    %5660 = vmatprep.subr.bf16.mxu0 %v5419
    %5661 = vmatpush1.bf16.msra.mxu0 %v5418
    %5662 = vmatprep.subr.bf16.mxu0 %v5421
    %5663 = vmatpush1.bf16.msra.mxu0 %v5420
    %5664 = vmatprep.subr.bf16.mxu0 %v5423
    %5665 = vmatpush1.bf16.msra.mxu0 %v5422
    %5666 = vmatprep.subr.bf16.mxu0 %v5425
    %5667 = vmatpush1.bf16.msra.mxu0 %v5424
    %5668 = vmatprep.subr.bf16.mxu0 %v5427
    %5669 = vmatpush1.bf16.msra.mxu0 %v5426
    %5670 = vmatprep.subr.bf16.mxu0 %v5429
    %5671 = vmatpush1.bf16.msra.mxu0 %v5428
    %5672 = vmatprep.subr.bf16.mxu0 %v5431
    %5673 = vmatpush1.bf16.msra.mxu0 %v5430
    %5674 = vmatprep.subr.bf16.mxu0 %v5433
    %5675 = vmatpush1.bf16.msra.mxu0 %v5432
    %5676 = vmatprep.subr.bf16.mxu0 %v5435
    %5677 = vmatpush1.bf16.msra.mxu0 %v5434
    %5678 = vmatprep.subr.bf16.mxu0 %v5437
    %5679 = vmatpush1.bf16.msra.mxu0 %v5436
    %5680 = vmatprep.subr.bf16.mxu0 %v5439
    %5681 = vmatpush1.bf16.msra.mxu0 %v5438
    %5682 = vmatprep.subr.bf16.mxu0 %v5441
    %5683 = vmatpush1.bf16.msra.mxu0 %v5440
    %5684 = vmatprep.subr.bf16.mxu0 %v5443
    %5685 = vmatpush1.bf16.msra.mxu0 %v5442
    %5686 = vmatprep.subr.bf16.mxu0 %v5445
    %5687 = vmatpush1.bf16.msra.mxu0 %v5444
    %5688 = vmatprep.subr.bf16.mxu0 %v5447
    %5689 = vmatpush1.bf16.msra.mxu0 %v5446
    %5690 = vmatprep.subr.bf16.mxu0 %v5449
    %5691 = vmatpush1.bf16.msra.mxu0 %v5448
    %5692 = vmatprep.mubr.bf16.mxu0 %v4904
    %5693 = vmatmul.mubr.bf16.gmra.mrb[0].mxu0 %v4903
    %v5694 = vpop.f32.mrb[0].mxu0
    %v5695 = vadd.f32 %v5654, %v5694
    %v5696 = vpop.f32.mrb[0].mxu0
    %v5697 = vadd.f32 %v5656, %v5696
    %v5698 = vpop.f32.mrb[0].mxu0
    %v5699 = vpop.f32.mrb[0].mxu0
    %5700 = vdwg.mxu0
    %5701 = vmatprep.subr.bf16.mxu0 %v5451
    %5702 = vmatpush1.bf16.msra.mxu0 %v5450
    %5703 = vmatprep.subr.bf16.mxu0 %v5453
    %5704 = vmatpush1.bf16.msra.mxu0 %v5452
    %5705 = vmatprep.subr.bf16.mxu0 %v5455
    %5706 = vmatpush1.bf16.msra.mxu0 %v5454
    %5707 = vmatprep.subr.bf16.mxu0 %v5457
    %5708 = vmatpush1.bf16.msra.mxu0 %v5456
    %5709 = vmatprep.subr.bf16.mxu0 %v5459
    %5710 = vmatpush1.bf16.msra.mxu0 %v5458
    %5711 = vmatprep.subr.bf16.mxu0 %v5461
    %5712 = vmatpush1.bf16.msra.mxu0 %v5460
    %5713 = vmatprep.subr.bf16.mxu0 %v5463
    %5714 = vmatpush1.bf16.msra.mxu0 %v5462
    %5715 = vmatprep.subr.bf16.mxu0 %v5465
    %5716 = vmatpush1.bf16.msra.mxu0 %v5464
    %5717 = vmatprep.subr.bf16.mxu0 0
    %5718 = vmatpush1.bf16.msra.mxu0 0
    %5719 = vmatprep.subr.bf16.mxu0 0
    %5720 = vmatpush1.bf16.msra.mxu0 0
    %5721 = vmatprep.subr.bf16.mxu0 0
    %5722 = vmatpush1.bf16.msra.mxu0 0
    %5723 = vmatprep.subr.bf16.mxu0 0
    %5724 = vmatpush1.bf16.msra.mxu0 0
    %5725 = vmatprep.subr.bf16.mxu0 0
    %5726 = vmatpush1.bf16.msra.mxu0 0
    %5727 = vmatprep.subr.bf16.mxu0 0
    %5728 = vmatpush1.bf16.msra.mxu0 0
    %5729 = vmatprep.subr.bf16.mxu0 0
    %5730 = vmatpush1.bf16.msra.mxu0 0
    %5731 = vmatprep.subr.bf16.mxu0 0
    %5732 = vmatpush1.bf16.msra.mxu0 0
    %5733 = vmatprep.mubr.bf16.mxu0 0
    %5734 = vmatmul.mubr.bf16.gmra.mrb[0].mxu0 %v4905
    %v5735 = vpop.f32.mrb[0].mxu0
    %v5736 = vadd.f32 %v5695, %v5735
    %v5737 = vpop.f32.mrb[0].mxu0
    %v5738 = vadd.f32 %v5697, %v5737
    %v5739 = vpop.f32.mrb[0].mxu0
    %v5740 = vpop.f32.mrb[0].mxu0
    %5741 = vdwg.mxu0
    %v5742 = vld [vmem:[#allocation3 + $0x8] sm:$0xff]
    %v5743 = vld [vmem:[#allocation3 + $0x10] sm:$0xff]
    %v5744 = vld [vmem:[#allocation3 + $0x18] sm:$0xff]
    %v5745 = vld [vmem:[#allocation3 + $0x20] sm:$0xff]
    %v5746 = vld [vmem:[#allocation3 + $0x28] sm:$0xff]
    %v5747 = vld [vmem:[#allocation3 + $0x30] sm:$0xff]
    %v5748 = vld [vmem:[#allocation3 + $0x38] sm:$0xff]
    %v5749 = vpack.c.bf16 %v5742, %v5742
    %v5750 = vpack.c.bf16 %v5743, %v5743
    %v5751 = vpack.c.bf16 %v5744, %v5744
    %v5752 = vpack.c.bf16 %v5745, %v5745
    %v5753 = vpack.c.bf16 %v5746, %v5746
    %v5754 = vpack.c.bf16 %v5747, %v5747
    %v5755 = vpack.c.bf16 %v5748, %v5748
    %5756 = vmatprep.subr.bf16.mxu0 %v5355
    %5757 = vmatpush1.bf16.msra.mxu0 %v5354
    %5758 = vmatprep.subr.bf16.mxu0 %v5357
    %5759 = vmatpush1.bf16.msra.mxu0 %v5356
    %5760 = vmatprep.subr.bf16.mxu0 %v5359
    %5761 = vmatpush1.bf16.msra.mxu0 %v5358
    %5762 = vmatprep.subr.bf16.mxu0 %v5361
    %5763 = vmatpush1.bf16.msra.mxu0 %v5360
    %5764 = vmatprep.subr.bf16.mxu0 %v5363
    %5765 = vmatpush1.bf16.msra.mxu0 %v5362
    %5766 = vmatprep.subr.bf16.mxu0 %v5365
    %5767 = vmatpush1.bf16.msra.mxu0 %v5364
    %5768 = vmatprep.subr.bf16.mxu0 %v5367
    %5769 = vmatpush1.bf16.msra.mxu0 %v5366
    %5770 = vmatprep.subr.bf16.mxu0 %v5369
    %5771 = vmatpush1.bf16.msra.mxu0 %v5368
    %5772 = vmatprep.subr.bf16.mxu0 %v5371
    %5773 = vmatpush1.bf16.msra.mxu0 %v5370
    %5774 = vmatprep.subr.bf16.mxu0 %v5373
    %5775 = vmatpush1.bf16.msra.mxu0 %v5372
    %5776 = vmatprep.subr.bf16.mxu0 %v5375
    %5777 = vmatpush1.bf16.msra.mxu0 %v5374
    %5778 = vmatprep.subr.bf16.mxu0 %v5377
    %5779 = vmatpush1.bf16.msra.mxu0 %v5376
    %5780 = vmatprep.subr.bf16.mxu0 %v5379
    %5781 = vmatpush1.bf16.msra.mxu0 %v5378
    %5782 = vmatprep.subr.bf16.mxu0 %v5381
    %5783 = vmatpush1.bf16.msra.mxu0 %v5380
    %5784 = vmatprep.subr.bf16.mxu0 %v5383
    %5785 = vmatpush1.bf16.msra.mxu0 %v5382
    %5786 = vmatprep.subr.bf16.mxu0 %v5385
    %5787 = vmatpush1.bf16.msra.mxu0 %v5384
    %5788 = vmatprep.mubr.bf16.mxu0 %v5750
    %5789 = vmatmul.mubr.bf16.gmra.mrb[0].mxu0 %v5749
    %v5790 = vpop.f32.mrb[0].mxu0
    %v5791 = vadd.f32 0.0, %v5790
    %v5792 = vpop.f32.mrb[0].mxu0
    %v5793 = vadd.f32 0.0, %v5792
    %v5794 = vpop.f32.mrb[0].mxu0
    %v5795 = vpop.f32.mrb[0].mxu0
    %5796 = vdwg.mxu0
    %5797 = vmatprep.subr.bf16.mxu0 %v5387
    %5798 = vmatpush1.bf16.msra.mxu0 %v5386
    %5799 = vmatprep.subr.bf16.mxu0 %v5389
    %5800 = vmatpush1.bf16.msra.mxu0 %v5388
    %5801 = vmatprep.subr.bf16.mxu0 %v5391
    %5802 = vmatpush1.bf16.msra.mxu0 %v5390
    %5803 = vmatprep.subr.bf16.mxu0 %v5393
    %5804 = vmatpush1.bf16.msra.mxu0 %v5392
    %5805 = vmatprep.subr.bf16.mxu0 %v5395
    %5806 = vmatpush1.bf16.msra.mxu0 %v5394
    %5807 = vmatprep.subr.bf16.mxu0 %v5397
    %5808 = vmatpush1.bf16.msra.mxu0 %v5396
    %5809 = vmatprep.subr.bf16.mxu0 %v5399
    %5810 = vmatpush1.bf16.msra.mxu0 %v5398
    %5811 = vmatprep.subr.bf16.mxu0 %v5401
    %5812 = vmatpush1.bf16.msra.mxu0 %v5400
    %5813 = vmatprep.subr.bf16.mxu0 %v5403
    %5814 = vmatpush1.bf16.msra.mxu0 %v5402
    %5815 = vmatprep.subr.bf16.mxu0 %v5405
    %5816 = vmatpush1.bf16.msra.mxu0 %v5404
    %5817 = vmatprep.subr.bf16.mxu0 %v5407
    %5818 = vmatpush1.bf16.msra.mxu0 %v5406
    %5819 = vmatprep.subr.bf16.mxu0 %v5409
    %5820 = vmatpush1.bf16.msra.mxu0 %v5408
    %5821 = vmatprep.subr.bf16.mxu0 %v5411
    %5822 = vmatpush1.bf16.msra.mxu0 %v5410
    %5823 = vmatprep.subr.bf16.mxu0 %v5413
    %5824 = vmatpush1.bf16.msra.mxu0 %v5412
    %5825 = vmatprep.subr.bf16.mxu0 %v5415
    %5826 = vmatpush1.bf16.msra.mxu0 %v5414
    %5827 = vmatprep.subr.bf16.mxu0 %v5417
    %5828 = vmatpush1.bf16.msra.mxu0 %v5416
    %5829 = vmatprep.mubr.bf16.mxu0 %v5752
    %5830 = vmatmul.mubr.bf16.gmra.mrb[0].mxu0 %v5751
    %v5831 = vpop.f32.mrb[0].mxu0
    %v5832 = vadd.f32 %v5791, %v5831
    %v5833 = vpop.f32.mrb[0].mxu0
    %v5834 = vadd.f32 %v5793, %v5833
    %v5835 = vpop.f32.mrb[0].mxu0
    %v5836 = vpop.f32.mrb[0].mxu0
    %5837 = vdwg.mxu0
    %5838 = vmatprep.subr.bf16.mxu0 %v5419
    %5839 = vmatpush1.bf16.msra.mxu0 %v5418
    %5840 = vmatprep.subr.bf16.mxu0 %v5421
    %5841 = vmatpush1.bf16.msra.mxu0 %v5420
    %5842 = vmatprep.subr.bf16.mxu0 %v5423
    %5843 = vmatpush1.bf16.msra.mxu0 %v5422
    %5844 = vmatprep.subr.bf16.mxu0 %v5425
    %5845 = vmatpush1.bf16.msra.mxu0 %v5424
    %5846 = vmatprep.subr.bf16.mxu0 %v5427
    %5847 = vmatpush1.bf16.msra.mxu0 %v5426
    %5848 = vmatprep.subr.bf16.mxu0 %v5429
    %5849 = vmatpush1.bf16.msra.mxu0 %v5428
    %5850 = vmatprep.subr.bf16.mxu0 %v5431
    %5851 = vmatpush1.bf16.msra.mxu0 %v5430
    %5852 = vmatprep.subr.bf16.mxu0 %v5433
    %5853 = vmatpush1.bf16.msra.mxu0 %v5432
    %5854 = vmatprep.subr.bf16.mxu0 %v5435
    %5855 = vmatpush1.bf16.msra.mxu0 %v5434
    %5856 = vmatprep.subr.bf16.mxu0 %v5437
    %5857 = vmatpush1.bf16.msra.mxu0 %v5436
    %5858 = vmatprep.subr.bf16.mxu0 %v5439
    %5859 = vmatpush1.bf16.msra.mxu0 %v5438
    %5860 = vmatprep.subr.bf16.mxu0 %v5441
    %5861 = vmatpush1.bf16.msra.mxu0 %v5440
    %5862 = vmatprep.subr.bf16.mxu0 %v5443
    %5863 = vmatpush1.bf16.msra.mxu0 %v5442
    %5864 = vmatprep.subr.bf16.mxu0 %v5445
    %5865 = vmatpush1.bf16.msra.mxu0 %v5444
    %5866 = vmatprep.subr.bf16.mxu0 %v5447
    %5867 = vmatpush1.bf16.msra.mxu0 %v5446
    %5868 = vmatprep.subr.bf16.mxu0 %v5449
    %5869 = vmatpush1.bf16.msra.mxu0 %v5448
    %5870 = vmatprep.mubr.bf16.mxu0 %v5754
    %5871 = vmatmul.mubr.bf16.gmra.mrb[0].mxu0 %v5753
    %v5872 = vpop.f32.mrb[0].mxu0
    %v5873 = vadd.f32 %v5832, %v5872
    %v5874 = vpop.f32.mrb[0].mxu0
    %v5875 = vadd.f32 %v5834, %v5874
    %v5876 = vpop.f32.mrb[0].mxu0
    %v5877 = vpop.f32.mrb[0].mxu0
    %5878 = vdwg.mxu0
    %5879 = vmatprep.subr.bf16.mxu0 %v5451
    %5880 = vmatpush1.bf16.msra.mxu0 %v5450
    %5881 = vmatprep.subr.bf16.mxu0 %v5453
    %5882 = vmatpush1.bf16.msra.mxu0 %v5452
    %5883 = vmatprep.subr.bf16.mxu0 %v5455
    %5884 = vmatpush1.bf16.msra.mxu0 %v5454
    %5885 = vmatprep.subr.bf16.mxu0 %v5457
    %5886 = vmatpush1.bf16.msra.mxu0 %v5456
    %5887 = vmatprep.subr.bf16.mxu0 %v5459
    %5888 = vmatpush1.bf16.msra.mxu0 %v5458
    %5889 = vmatprep.subr.bf16.mxu0 %v5461
    %5890 = vmatpush1.bf16.msra.mxu0 %v5460
    %5891 = vmatprep.subr.bf16.mxu0 %v5463
    %5892 = vmatpush1.bf16.msra.mxu0 %v5462
    %5893 = vmatprep.subr.bf16.mxu0 %v5465
    %5894 = vmatpush1.bf16.msra.mxu0 %v5464
    %5895 = vmatprep.subr.bf16.mxu0 0
    %5896 = vmatpush1.bf16.msra.mxu0 0
    %5897 = vmatprep.subr.bf16.mxu0 0
    %5898 = vmatpush1.bf16.msra.mxu0 0
    %5899 = vmatprep.subr.bf16.mxu0 0
    %5900 = vmatpush1.bf16.msra.mxu0 0
    %5901 = vmatprep.subr.bf16.mxu0 0
    %5902 = vmatpush1.bf16.msra.mxu0 0
    %5903 = vmatprep.subr.bf16.mxu0 0
    %5904 = vmatpush1.bf16.msra.mxu0 0
    %5905 = vmatprep.subr.bf16.mxu0 0
    %5906 = vmatpush1.bf16.msra.mxu0 0
    %5907 = vmatprep.subr.bf16.mxu0 0
    %5908 = vmatpush1.bf16.msra.mxu0 0
    %5909 = vmatprep.subr.bf16.mxu0 0
    %5910 = vmatpush1.bf16.msra.mxu0 0
    %5911 = vmatprep.mubr.bf16.mxu0 0
    %5912 = vmatmul.mubr.bf16.gmra.mrb[0].mxu0 %v5755
    %v5913 = vpop.f32.mrb[0].mxu0
    %v5914 = vadd.f32 %v5873, %v5913
    %v5915 = vpop.f32.mrb[0].mxu0
    %v5916 = vadd.f32 %v5875, %v5915
    %v5917 = vpop.f32.mrb[0].mxu0
    %v5918 = vpop.f32.mrb[0].mxu0
    %5919 = vdwg.mxu0
    %v5920 = vmax.f32 %v5736, 0.0
    %v5921 = vmax.f32 %v5738, 0.0
    %v5922 = vmax.f32 %v5914, 0.0
    %v5923 = vmax.f32 %v5916, 0.0
    %v5924 = vmax.f32 %v5920, %v5922
    %v5925 = vmax.f32 %v5921, %v5923
    %v5926 = vpack.c.bf16 %v5924, %v5924
    %v5927 = vpack.c.bf16 %v5925, %v5925
    %v5928 = vld [vmem:[#allocation8] sm:$0xff]
    %v5929 = vld [vmem:[#allocation8 + $0x8] sm:$0xff]
    %v5930 = vld [vmem:[#allocation8 + $0x10] sm:$0xff]
    %v5931 = vld [vmem:[#allocation8 + $0x18] sm:$0xff]
    %v5932 = vld [vmem:[#allocation8 + $0x20] sm:$0xff]
    %v5933 = vld [vmem:[#allocation8 + $0x28] sm:$0xff]
    %v5934 = vld [vmem:[#allocation8 + $0x30] sm:$0xff]
    %v5935 = vld [vmem:[#allocation8 + $0x38] sm:$0xff]
    %v5936 = vld [vmem:[#allocation8 + $0x40] sm:$0xff]
    %v5937 = vld [vmem:[#allocation8 + $0x48] sm:$0xff]
    %v5938 = vld [vmem:[#allocation8 + $0x50] sm:$0xff]
    %v5939 = vld [vmem:[#allocation8 + $0x58] sm:$0xff]
    %v5940 = vld [vmem:[#allocation8 + $0x60] sm:$0xff]
    %v5941 = vld [vmem:[#allocation8 + $0x68] sm:$0xff]
    %v5942 = vld [vmem:[#allocation8 + $0x70] sm:$0xff]
    %v5943 = vld [vmem:[#allocation8 + $0x78] sm:$0xff]
    %v5944 = vld [vmem:[#allocation8 + $0x80] sm:$0xff]
    %v5945 = vld [vmem:[#allocation8 + $0x88] sm:$0xff]
    %v5946 = vld [vmem:[#allocation8 + $0x90] sm:$0xff]
    %v5947 = vld [vmem:[#allocation8 + $0x98] sm:$0xff]
    %v5948 = vld [vmem:[#allocation8 + $0xa0] sm:$0xff]
    %v5949 = vld [vmem:[#allocation8 + $0xa8] sm:$0xff]
    %v5950 = vld [vmem:[#allocation8 + $0xb0] sm:$0xff]
    %v5951 = vld [vmem:[#allocation8 + $0xb8] sm:$0xff]
    %v5952 = vld [vmem:[#allocation8 + $0xc0] sm:$0xff]
    %v5953 = vld [vmem:[#allocation8 + $0xc8] sm:$0xff]
    %v5954 = vld [vmem:[#allocation8 + $0xd0] sm:$0xff]
    %v5955 = vld [vmem:[#allocation8 + $0xd8] sm:$0xff]
    %v5956 = vld [vmem:[#allocation8 + $0xe0] sm:$0xff]
    %v5957 = vld [vmem:[#allocation8 + $0xe8] sm:$0xff]
    %v5958 = vld [vmem:[#allocation8 + $0xf0] sm:$0xff]
    %v5959 = vld [vmem:[#allocation8 + $0xf8] sm:$0xff]
    %v5960 = vld [vmem:[#allocation3 + $0x10] sm:$0xff]
    %v5961 = vld [vmem:[#allocation3 + $0x18] sm:$0xff]
    %v5962 = vld [vmem:[#allocation3 + $0x20] sm:$0xff]
    %v5963 = vld [vmem:[#allocation3 + $0x28] sm:$0xff]
    %v5964 = vld [vmem:[#allocation3 + $0x30] sm:$0xff]
    %v5965 = vld [vmem:[#allocation3 + $0x38] sm:$0xff]
    %v5966 = vld [vmem:[#allocation3 + $0x40] sm:$0xff]
    %v5967 = vpack.c.bf16 %v5960, %v5960
    %v5968 = vpack.c.bf16 %v5961, %v5961
    %v5969 = vpack.c.bf16 %v5962, %v5962
    %v5970 = vpack.c.bf16 %v5963, %v5963
    %v5971 = vpack.c.bf16 %v5964, %v5964
    %v5972 = vpack.c.bf16 %v5965, %v5965
    %v5973 = vpack.c.bf16 %v5966, %v5966
    %5974 = vmatprep.subr.bf16.mxu0 %v5355
    %5975 = vmatpush1.bf16.msra.mxu0 %v5354
    %5976 = vmatprep.subr.bf16.mxu0 %v5357
    %5977 = vmatpush1.bf16.msra.mxu0 %v5356
    %5978 = vmatprep.subr.bf16.mxu0 %v5359
    %5979 = vmatpush1.bf16.msra.mxu0 %v5358
    %5980 = vmatprep.subr.bf16.mxu0 %v5361
    %5981 = vmatpush1.bf16.msra.mxu0 %v5360
    %5982 = vmatprep.subr.bf16.mxu0 %v5363
    %5983 = vmatpush1.bf16.msra.mxu0 %v5362
    %5984 = vmatprep.subr.bf16.mxu0 %v5365
    %5985 = vmatpush1.bf16.msra.mxu0 %v5364
    %5986 = vmatprep.subr.bf16.mxu0 %v5367
    %5987 = vmatpush1.bf16.msra.mxu0 %v5366
    %5988 = vmatprep.subr.bf16.mxu0 %v5369
    %5989 = vmatpush1.bf16.msra.mxu0 %v5368
    %5990 = vmatprep.subr.bf16.mxu0 %v5371
    %5991 = vmatpush1.bf16.msra.mxu0 %v5370
    %5992 = vmatprep.subr.bf16.mxu0 %v5373
    %5993 = vmatpush1.bf16.msra.mxu0 %v5372
    %5994 = vmatprep.subr.bf16.mxu0 %v5375
    %5995 = vmatpush1.bf16.msra.mxu0 %v5374
    %5996 = vmatprep.subr.bf16.mxu0 %v5377
    %5997 = vmatpush1.bf16.msra.mxu0 %v5376
    %5998 = vmatprep.subr.bf16.mxu0 %v5379
    %5999 = vmatpush1.bf16.msra.mxu0 %v5378
    %6000 = vmatprep.subr.bf16.mxu0 %v5381
    %6001 = vmatpush1.bf16.msra.mxu0 %v5380
    %6002 = vmatprep.subr.bf16.mxu0 %v5383
    %6003 = vmatpush1.bf16.msra.mxu0 %v5382
    %6004 = vmatprep.subr.bf16.mxu0 %v5385
    %6005 = vmatpush1.bf16.msra.mxu0 %v5384
    %6006 = vmatprep.mubr.bf16.mxu0 %v5968
    %6007 = vmatmul.mubr.bf16.gmra.mrb[0].mxu0 %v5967
    %v6008 = vpop.f32.mrb[0].mxu0
    %v6009 = vadd.f32 0.0, %v6008
    %v6010 = vpop.f32.mrb[0].mxu0
    %v6011 = vadd.f32 0.0, %v6010
    %v6012 = vpop.f32.mrb[0].mxu0
    %v6013 = vpop.f32.mrb[0].mxu0
    %6014 = vdwg.mxu0
    %6015 = vmatprep.subr.bf16.mxu0 %v5387
    %6016 = vmatpush1.bf16.msra.mxu0 %v5386
    %6017 = vmatprep.subr.bf16.mxu0 %v5389
    %6018 = vmatpush1.bf16.msra.mxu0 %v5388
    %6019 = vmatprep.subr.bf16.mxu0 %v5391
    %6020 = vmatpush1.bf16.msra.mxu0 %v5390
    %6021 = vmatprep.subr.bf16.mxu0 %v5393
    %6022 = vmatpush1.bf16.msra.mxu0 %v5392
    %6023 = vmatprep.subr.bf16.mxu0 %v5395
    %6024 = vmatpush1.bf16.msra.mxu0 %v5394
    %6025 = vmatprep.subr.bf16.mxu0 %v5397
    %6026 = vmatpush1.bf16.msra.mxu0 %v5396
    %6027 = vmatprep.subr.bf16.mxu0 %v5399
    %6028 = vmatpush1.bf16.msra.mxu0 %v5398
    %6029 = vmatprep.subr.bf16.mxu0 %v5401
    %6030 = vmatpush1.bf16.msra.mxu0 %v5400
    %6031 = vmatprep.subr.bf16.mxu0 %v5403
    %6032 = vmatpush1.bf16.msra.mxu0 %v5402
    %6033 = vmatprep.subr.bf16.mxu0 %v5405
    %6034 = vmatpush1.bf16.msra.mxu0 %v5404
    %6035 = vmatprep.subr.bf16.mxu0 %v5407
    %6036 = vmatpush1.bf16.msra.mxu0 %v5406
    %6037 = vmatprep.subr.bf16.mxu0 %v5409
    %6038 = vmatpush1.bf16.msra.mxu0 %v5408
    %6039 = vmatprep.subr.bf16.mxu0 %v5411
    %6040 = vmatpush1.bf16.msra.mxu0 %v5410
    %6041 = vmatprep.subr.bf16.mxu0 %v5413
    %6042 = vmatpush1.bf16.msra.mxu0 %v5412
    %6043 = vmatprep.subr.bf16.mxu0 %v5415
    %6044 = vmatpush1.bf16.msra.mxu0 %v5414
    %6045 = vmatprep.subr.bf16.mxu0 %v5417
    %6046 = vmatpush1.bf16.msra.mxu0 %v5416
    %6047 = vmatprep.mubr.bf16.mxu0 %v5970
    %6048 = vmatmul.mubr.bf16.gmra.mrb[0].mxu0 %v5969
    %v6049 = vpop.f32.mrb[0].mxu0
    %v6050 = vadd.f32 %v6009, %v6049
    %v6051 = vpop.f32.mrb[0].mxu0
    %v6052 = vadd.f32 %v6011, %v6051
    %v6053 = vpop.f32.mrb[0].mxu0
    %v6054 = vpop.f32.mrb[0].mxu0
    %6055 = vdwg.mxu0
    %6056 = vmatprep.subr.bf16.mxu0 %v5419
    %6057 = vmatpush1.bf16.msra.mxu0 %v5418
    %6058 = vmatprep.subr.bf16.mxu0 %v5421
    %6059 = vmatpush1.bf16.msra.mxu0 %v5420
    %6060 = vmatprep.subr.bf16.mxu0 %v5423
    %6061 = vmatpush1.bf16.msra.mxu0 %v5422
    %6062 = vmatprep.subr.bf16.mxu0 %v5425
    %6063 = vmatpush1.bf16.msra.mxu0 %v5424
    %6064 = vmatprep.subr.bf16.mxu0 %v5427
    %6065 = vmatpush1.bf16.msra.mxu0 %v5426
    %6066 = vmatprep.subr.bf16.mxu0 %v5429
    %6067 = vmatpush1.bf16.msra.mxu0 %v5428
    %6068 = vmatprep.subr.bf16.mxu0 %v5431
    %6069 = vmatpush1.bf16.msra.mxu0 %v5430
    %6070 = vmatprep.subr.bf16.mxu0 %v5433
    %6071 = vmatpush1.bf16.msra.mxu0 %v5432
    %6072 = vmatprep.subr.bf16.mxu0 %v5435
    %6073 = vmatpush1.bf16.msra.mxu0 %v5434
    %6074 = vmatprep.subr.bf16.mxu0 %v5437
    %6075 = vmatpush1.bf16.msra.mxu0 %v5436
    %6076 = vmatprep.subr.bf16.mxu0 %v5439
    %6077 = vmatpush1.bf16.msra.mxu0 %v5438
    %6078 = vmatprep.subr.bf16.mxu0 %v5441
    %6079 = vmatpush1.bf16.msra.mxu0 %v5440
    %6080 = vmatprep.subr.bf16.mxu0 %v5443
    %6081 = vmatpush1.bf16.msra.mxu0 %v5442
    %6082 = vmatprep.subr.bf16.mxu0 %v5445
    %6083 = vmatpush1.bf16.msra.mxu0 %v5444
    %6084 = vmatprep.subr.bf16.mxu0 %v5447
    %6085 = vmatpush1.bf16.msra.mxu0 %v5446
    %6086 = vmatprep.subr.bf16.mxu0 %v5449
    %6087 = vmatpush1.bf16.msra.mxu0 %v5448
    %6088 = vmatprep.mubr.bf16.mxu0 %v5972
    %6089 = vmatmul.mubr.bf16.gmra.mrb[0].mxu0 %v5971
    %v6090 = vpop.f32.mrb[0].mxu0
    %v6091 = vadd.f32 %v6050, %v6090
    %v6092 = vpop.f32.mrb[0].mxu0
    %v6093 = vadd.f32 %v6052, %v6092
    %v6094 = vpop.f32.mrb[0].mxu0
    %v6095 = vpop.f32.mrb[0].mxu0
    %6096 = vdwg.mxu0
    %6097 = vmatprep.subr.bf16.mxu0 %v5451
    %6098 = vmatpush1.bf16.msra.mxu0 %v5450
    %6099 = vmatprep.subr.bf16.mxu0 %v5453
    %6100 = vmatpush1.bf16.msra.mxu0 %v5452
    %6101 = vmatprep.subr.bf16.mxu0 %v5455
    %6102 = vmatpush1.bf16.msra.mxu0 %v5454
    %6103 = vmatprep.subr.bf16.mxu0 %v5457
    %6104 = vmatpush1.bf16.msra.mxu0 %v5456
    %6105 = vmatprep.subr.bf16.mxu0 %v5459
    %6106 = vmatpush1.bf16.msra.mxu0 %v5458
    %6107 = vmatprep.subr.bf16.mxu0 %v5461
    %6108 = vmatpush1.bf16.msra.mxu0 %v5460
    %6109 = vmatprep.subr.bf16.mxu0 %v5463
    %6110 = vmatpush1.bf16.msra.mxu0 %v5462
    %6111 = vmatprep.subr.bf16.mxu0 %v5465
    %6112 = vmatpush1.bf16.msra.mxu0 %v5464
    %6113 = vmatprep.subr.bf16.mxu0 0
    %6114 = vmatpush1.bf16.msra.mxu0 0
    %6115 = vmatprep.subr.bf16.mxu0 0
    %6116 = vmatpush1.bf16.msra.mxu0 0
    %6117 = vmatprep.subr.bf16.mxu0 0
    %6118 = vmatpush1.bf16.msra.mxu0 0
    %6119 = vmatprep.subr.bf16.mxu0 0
    %6120 = vmatpush1.bf16.msra.mxu0 0
    %6121 = vmatprep.subr.bf16.mxu0 0
    %6122 = vmatpush1.bf16.msra.mxu0 0
    %6123 = vmatprep.subr.bf16.mxu0 0
    %6124 = vmatpush1.bf16.msra.mxu0 0
    %6125 = vmatprep.subr.bf16.mxu0 0
    %6126 = vmatpush1.bf16.msra.mxu0 0
    %6127 = vmatprep.subr.bf16.mxu0 0
    %6128 = vmatpush1.bf16.msra.mxu0 0
    %6129 = vmatprep.mubr.bf16.mxu0 0
    %6130 = vmatmul.mubr.bf16.gmra.mrb[0].mxu0 %v5973
    %v6131 = vpop.f32.mrb[0].mxu0
    %v6132 = vadd.f32 %v6091, %v6131
    %v6133 = vpop.f32.mrb[0].mxu0
    %v6134 = vadd.f32 %v6093, %v6133
    %v6135 = vpop.f32.mrb[0].mxu0
    %v6136 = vpop.f32.mrb[0].mxu0
    %6137 = vdwg.mxu0
    %v6138 = vld [vmem:[#allocation3 + $0x18] sm:$0xff]
    %v6139 = vld [vmem:[#allocation3 + $0x20] sm:$0xff]
    %v6140 = vld [vmem:[#allocation3 + $0x28] sm:$0xff]
    %v6141 = vld [vmem:[#allocation3 + $0x30] sm:$0xff]
    %v6142 = vld [vmem:[#allocation3 + $0x38] sm:$0xff]
    %v6143 = vld [vmem:[#allocation3 + $0x40] sm:$0xff]
    %v6144 = vld [vmem:[#allocation3 + $0x48] sm:$0xff]
    %v6145 = vpack.c.bf16 %v6138, %v6138
    %v6146 = vpack.c.bf16 %v6139, %v6139
    %v6147 = vpack.c.bf16 %v6140, %v6140
    %v6148 = vpack.c.bf16 %v6141, %v6141
    %v6149 = vpack.c.bf16 %v6142, %v6142
    %v6150 = vpack.c.bf16 %v6143, %v6143
    %v6151 = vpack.c.bf16 %v6144, %v6144
    %6152 = vmatprep.subr.bf16.mxu0 %v5355
    %6153 = vmatpush1.bf16.msra.mxu0 %v5354
    %6154 = vmatprep.subr.bf16.mxu0 %v5357
    %6155 = vmatpush1.bf16.msra.mxu0 %v5356
    %6156 = vmatprep.subr.bf16.mxu0 %v5359
    %6157 = vmatpush1.bf16.msra.mxu0 %v5358
    %6158 = vmatprep.subr.bf16.mxu0 %v5361
    %6159 = vmatpush1.bf16.msra.mxu0 %v5360
    %6160 = vmatprep.subr.bf16.mxu0 %v5363
    %6161 = vmatpush1.bf16.msra.mxu0 %v5362
    %6162 = vmatprep.subr.bf16.mxu0 %v5365
    %6163 = vmatpush1.bf16.msra.mxu0 %v5364
    %6164 = vmatprep.subr.bf16.mxu0 %v5367
    %6165 = vmatpush1.bf16.msra.mxu0 %v5366
    %6166 = vmatprep.subr.bf16.mxu0 %v5369
    %6167 = vmatpush1.bf16.msra.mxu0 %v5368
    %6168 = vmatprep.subr.bf16.mxu0 %v5371
    %6169 = vmatpush1.bf16.msra.mxu0 %v5370
    %6170 = vmatprep.subr.bf16.mxu0 %v5373
    %6171 = vmatpush1.bf16.msra.mxu0 %v5372
    %6172 = vmatprep.subr.bf16.mxu0 %v5375
    %6173 = vmatpush1.bf16.msra.mxu0 %v5374
    %6174 = vmatprep.subr.bf16.mxu0 %v5377
    %6175 = vmatpush1.bf16.msra.mxu0 %v5376
    %6176 = vmatprep.subr.bf16.mxu0 %v5379
    %6177 = vmatpush1.bf16.msra.mxu0 %v5378
    %6178 = vmatprep.subr.bf16.mxu0 %v5381
    %6179 = vmatpush1.bf16.msra.mxu0 %v5380
    %6180 = vmatprep.subr.bf16.mxu0 %v5383
    %6181 = vmatpush1.bf16.msra.mxu0 %v5382
    %6182 = vmatprep.subr.bf16.mxu0 %v5385
    %6183 = vmatpush1.bf16.msra.mxu0 %v5384
    %6184 = vmatprep.mubr.bf16.mxu0 %v6146
    %6185 = vmatmul.mubr.bf16.gmra.mrb[0].mxu0 %v6145
    %v6186 = vpop.f32.mrb[0].mxu0
    %v6187 = vadd.f32 0.0, %v6186
    %v6188 = vpop.f32.mrb[0].mxu0
    %v6189 = vadd.f32 0.0, %v6188
    %v6190 = vpop.f32.mrb[0].mxu0
    %v6191 = vpop.f32.mrb[0].mxu0
    %6192 = vdwg.mxu0
    %6193 = vmatprep.subr.bf16.mxu0 %v5387
    %6194 = vmatpush1.bf16.msra.mxu0 %v5386
    %6195 = vmatprep.subr.bf16.mxu0 %v5389
    %6196 = vmatpush1.bf16.msra.mxu0 %v5388
    %6197 = vmatprep.subr.bf16.mxu0 %v5391
    %6198 = vmatpush1.bf16.msra.mxu0 %v5390
    %6199 = vmatprep.subr.bf16.mxu0 %v5393
    %6200 = vmatpush1.bf16.msra.mxu0 %v5392
    %6201 = vmatprep.subr.bf16.mxu0 %v5395
    %6202 = vmatpush1.bf16.msra.mxu0 %v5394
    %6203 = vmatprep.subr.bf16.mxu0 %v5397
    %6204 = vmatpush1.bf16.msra.mxu0 %v5396
    %6205 = vmatprep.subr.bf16.mxu0 %v5399
    %6206 = vmatpush1.bf16.msra.mxu0 %v5398
    %6207 = vmatprep.subr.bf16.mxu0 %v5401
    %6208 = vmatpush1.bf16.msra.mxu0 %v5400
    %6209 = vmatprep.subr.bf16.mxu0 %v5403
    %6210 = vmatpush1.bf16.msra.mxu0 %v5402
    %6211 = vmatprep.subr.bf16.mxu0 %v5405
    %6212 = vmatpush1.bf16.msra.mxu0 %v5404
    %6213 = vmatprep.subr.bf16.mxu0 %v5407
    %6214 = vmatpush1.bf16.msra.mxu0 %v5406
    %6215 = vmatprep.subr.bf16.mxu0 %v5409
    %6216 = vmatpush1.bf16.msra.mxu0 %v5408
    %6217 = vmatprep.subr.bf16.mxu0 %v5411
    %6218 = vmatpush1.bf16.msra.mxu0 %v5410
    %6219 = vmatprep.subr.bf16.mxu0 %v5413
    %6220 = vmatpush1.bf16.msra.mxu0 %v5412
    %6221 = vmatprep.subr.bf16.mxu0 %v5415
    %6222 = vmatpush1.bf16.msra.mxu0 %v5414
    %6223 = vmatprep.subr.bf16.mxu0 %v5417
    %6224 = vmatpush1.bf16.msra.mxu0 %v5416
    %6225 = vmatprep.mubr.bf16.mxu0 %v6148
    %6226 = vmatmul.mubr.bf16.gmra.mrb[0].mxu0 %v6147
    %v6227 = vpop.f32.mrb[0].mxu0
    %v6228 = vadd.f32 %v6187, %v6227
    %v6229 = vpop.f32.mrb[0].mxu0
    %v6230 = vadd.f32 %v6189, %v6229
    %v6231 = vpop.f32.mrb[0].mxu0
    %v6232 = vpop.f32.mrb[0].mxu0
    %6233 = vdwg.mxu0
    %6234 = vmatprep.subr.bf16.mxu0 %v5419
    %6235 = vmatpush1.bf16.msra.mxu0 %v5418
    %6236 = vmatprep.subr.bf16.mxu0 %v5421
    %6237 = vmatpush1.bf16.msra.mxu0 %v5420
    %6238 = vmatprep.subr.bf16.mxu0 %v5423
    %6239 = vmatpush1.bf16.msra.mxu0 %v5422
    %6240 = vmatprep.subr.bf16.mxu0 %v5425
    %6241 = vmatpush1.bf16.msra.mxu0 %v5424
    %6242 = vmatprep.subr.bf16.mxu0 %v5427
    %6243 = vmatpush1.bf16.msra.mxu0 %v5426
    %6244 = vmatprep.subr.bf16.mxu0 %v5429
    %6245 = vmatpush1.bf16.msra.mxu0 %v5428
    %6246 = vmatprep.subr.bf16.mxu0 %v5431
    %6247 = vmatpush1.bf16.msra.mxu0 %v5430
    %6248 = vmatprep.subr.bf16.mxu0 %v5433
    %6249 = vmatpush1.bf16.msra.mxu0 %v5432
    %6250 = vmatprep.subr.bf16.mxu0 %v5435
    %6251 = vmatpush1.bf16.msra.mxu0 %v5434
    %6252 = vmatprep.subr.bf16.mxu0 %v5437
    %6253 = vmatpush1.bf16.msra.mxu0 %v5436
    %6254 = vmatprep.subr.bf16.mxu0 %v5439
    %6255 = vmatpush1.bf16.msra.mxu0 %v5438
    %6256 = vmatprep.subr.bf16.mxu0 %v5441
    %6257 = vmatpush1.bf16.msra.mxu0 %v5440
    %6258 = vmatprep.subr.bf16.mxu0 %v5443
    %6259 = vmatpush1.bf16.msra.mxu0 %v5442
    %6260 = vmatprep.subr.bf16.mxu0 %v5445
    %6261 = vmatpush1.bf16.msra.mxu0 %v5444
    %6262 = vmatprep.subr.bf16.mxu0 %v5447
    %6263 = vmatpush1.bf16.msra.mxu0 %v5446
    %6264 = vmatprep.subr.bf16.mxu0 %v5449
    %6265 = vmatpush1.bf16.msra.mxu0 %v5448
    %6266 = vmatprep.mubr.bf16.mxu0 %v6150
    %6267 = vmatmul.mubr.bf16.gmra.mrb[0].mxu0 %v6149
    %v6268 = vpop.f32.mrb[0].mxu0
    %v6269 = vadd.f32 %v6228, %v6268
    %v6270 = vpop.f32.mrb[0].mxu0
    %v6271 = vadd.f32 %v6230, %v6270
    %v6272 = vpop.f32.mrb[0].mxu0
    %v6273 = vpop.f32.mrb[0].mxu0
    %6274 = vdwg.mxu0
    %6275 = vmatprep.subr.bf16.mxu0 %v5451
    %6276 = vmatpush1.bf16.msra.mxu0 %v5450
    %6277 = vmatprep.subr.bf16.mxu0 %v5453
    %6278 = vmatpush1.bf16.msra.mxu0 %v5452
    %6279 = vmatprep.subr.bf16.mxu0 %v5455
    %6280 = vmatpush1.bf16.msra.mxu0 %v5454
    %6281 = vmatprep.subr.bf16.mxu0 %v5457
    %6282 = vmatpush1.bf16.msra.mxu0 %v5456
    %6283 = vmatprep.subr.bf16.mxu0 %v5459
    %6284 = vmatpush1.bf16.msra.mxu0 %v5458
    %6285 = vmatprep.subr.bf16.mxu0 %v5461
    %6286 = vmatpush1.bf16.msra.mxu0 %v5460
    %6287 = vmatprep.subr.bf16.mxu0 %v5463
    %6288 = vmatpush1.bf16.msra.mxu0 %v5462
    %6289 = vmatprep.subr.bf16.mxu0 %v5465
    %6290 = vmatpush1.bf16.msra.mxu0 %v5464
    %6291 = vmatprep.subr.bf16.mxu0 0
    %6292 = vmatpush1.bf16.msra.mxu0 0
    %6293 = vmatprep.subr.bf16.mxu0 0
    %6294 = vmatpush1.bf16.msra.mxu0 0
    %6295 = vmatprep.subr.bf16.mxu0 0
    %6296 = vmatpush1.bf16.msra.mxu0 0
    %6297 = vmatprep.subr.bf16.mxu0 0
    %6298 = vmatpush1.bf16.msra.mxu0 0
    %6299 = vmatprep.subr.bf16.mxu0 0
    %6300 = vmatpush1.bf16.msra.mxu0 0
    %6301 = vmatprep.subr.bf16.mxu0 0
    %6302 = vmatpush1.bf16.msra.mxu0 0
    %6303 = vmatprep.subr.bf16.mxu0 0
    %6304 = vmatpush1.bf16.msra.mxu0 0
    %6305 = vmatprep.subr.bf16.mxu0 0
    %6306 = vmatpush1.bf16.msra.mxu0 0
    %6307 = vmatprep.mubr.bf16.mxu0 0
    %6308 = vmatmul.mubr.bf16.gmra.mrb[0].mxu0 %v6151
    %v6309 = vpop.f32.mrb[0].mxu0
    %v6310 = vadd.f32 %v6269, %v6309
    %v6311 = vpop.f32.mrb[0].mxu0
    %v6312 = vadd.f32 %v6271, %v6311
    %v6313 = vpop.f32.mrb[0].mxu0
    %v6314 = vpop.f32.mrb[0].mxu0
    %6315 = vdwg.mxu0
    %v6316 = vmax.f32 %v6132, 0.0
    %v6317 = vmax.f32 %v6134, 0.0
    %v6318 = vmax.f32 %v6310, 0.0
    %v6319 = vmax.f32 %v6312, 0.0
    %v6320 = vmax.f32 %v6316, %v6318
    %v6321 = vmax.f32 %v6317, %v6319
    %v6322 = vpack.c.bf16 %v6320, %v6320
    %v6323 = vpack.c.bf16 %v6321, %v6321
    %s6324 = scalar_lea.vmem [#allocation8], 256
    %v6325 = vld [vmem:[%s6324] sm:$0xff]
    %v6326 = vld [vmem:[%s6324 + $0x8] sm:$0xff]
    %v6327 = vld [vmem:[%s6324 + $0x10] sm:$0xff]
    %v6328 = vld [vmem:[%s6324 + $0x18] sm:$0xff]
    %v6329 = vld [vmem:[%s6324 + $0x20] sm:$0xff]
    %v6330 = vld [vmem:[%s6324 + $0x28] sm:$0xff]
    %v6331 = vld [vmem:[%s6324 + $0x30] sm:$0xff]
    %v6332 = vld [vmem:[%s6324 + $0x38] sm:$0xff]
    %v6333 = vld [vmem:[%s6324 + $0x40] sm:$0xff]
    %v6334 = vld [vmem:[%s6324 + $0x48] sm:$0xff]
    %v6335 = vld [vmem:[%s6324 + $0x50] sm:$0xff]
    %v6336 = vld [vmem:[%s6324 + $0x58] sm:$0xff]
    %v6337 = vld [vmem:[%s6324 + $0x60] sm:$0xff]
    %v6338 = vld [vmem:[%s6324 + $0x68] sm:$0xff]
    %v6339 = vld [vmem:[%s6324 + $0x70] sm:$0xff]
    %v6340 = vld [vmem:[%s6324 + $0x78] sm:$0xff]
    %v6341 = vld [vmem:[%s6324 + $0x80] sm:$0xff]
    %v6342 = vld [vmem:[%s6324 + $0x88] sm:$0xff]
    %v6343 = vld [vmem:[%s6324 + $0x90] sm:$0xff]
    %v6344 = vld [vmem:[%s6324 + $0x98] sm:$0xff]
    %v6345 = vld [vmem:[%s6324 + $0xa0] sm:$0xff]
    %v6346 = vld [vmem:[%s6324 + $0xa8] sm:$0xff]
    %v6347 = vld [vmem:[%s6324 + $0xb0] sm:$0xff]
    %v6348 = vld [vmem:[%s6324 + $0xb8] sm:$0xff]
    %v6349 = vld [vmem:[%s6324 + $0xc0] sm:$0xff]
    %v6350 = vld [vmem:[%s6324 + $0xc8] sm:$0xff]
    %v6351 = vld [vmem:[%s6324 + $0xd0] sm:$0xff]
    %v6352 = vld [vmem:[%s6324 + $0xd8] sm:$0xff]
    %v6353 = vld [vmem:[%s6324 + $0xe0] sm:$0xff]
    %v6354 = vld [vmem:[%s6324 + $0xe8] sm:$0xff]
    %v6355 = vld [vmem:[%s6324 + $0xf0] sm:$0xff]
    %v6356 = vld [vmem:[%s6324 + $0xf8] sm:$0xff]
    %v6389 = vunpack.c.l.b16 %v6325
    %v6390 = vunpack.c.h.b16 %v6325
    %v6391 = vunpack.c.l.b16 %v6326
    %v6392 = vunpack.c.h.b16 %v6326
    %v6393 = vunpack.c.l.b16 %v6327
    %v6394 = vunpack.c.h.b16 %v6327
    %v6395 = vunpack.c.l.b16 %v6328
    %v6396 = vunpack.c.h.b16 %v6328
    %v6397 = vunpack.c.l.b16 %v6329
    %v6398 = vunpack.c.h.b16 %v6329
    %v6399 = vunpack.c.l.b16 %v6330
    %v6400 = vunpack.c.h.b16 %v6330
    %v6401 = vunpack.c.l.b16 %v6331
    %v6402 = vunpack.c.h.b16 %v6331
    %v6403 = vunpack.c.l.b16 %v6332
    %v6404 = vunpack.c.h.b16 %v6332
    %v6405 = vunpack.c.l.b16 %v6333
    %v6406 = vunpack.c.h.b16 %v6333
    %v6407 = vunpack.c.l.b16 %v6334
    %v6408 = vunpack.c.h.b16 %v6334
    %v6409 = vunpack.c.l.b16 %v6335
    %v6410 = vunpack.c.h.b16 %v6335
    %v6411 = vunpack.c.l.b16 %v6336
    %v6412 = vunpack.c.h.b16 %v6336
    %v6413 = vunpack.c.l.b16 %v6337
    %v6414 = vunpack.c.h.b16 %v6337
    %v6415 = vunpack.c.l.b16 %v6338
    %v6416 = vunpack.c.h.b16 %v6338
    %v6417 = vunpack.c.l.b16 %v6339
    %v6418 = vunpack.c.h.b16 %v6339
    %v6419 = vunpack.c.l.b16 %v6340
    %v6420 = vunpack.c.h.b16 %v6340
    %v6421 = vunpack.c.l.b16 %v6341
    %v6422 = vunpack.c.h.b16 %v6341
    %v6423 = vunpack.c.l.b16 %v6342
    %v6424 = vunpack.c.h.b16 %v6342
    %v6425 = vunpack.c.l.b16 %v6343
    %v6426 = vunpack.c.h.b16 %v6343
    %v6427 = vunpack.c.l.b16 %v6344
    %v6428 = vunpack.c.h.b16 %v6344
    %v6429 = vunpack.c.l.b16 %v6345
    %v6430 = vunpack.c.h.b16 %v6345
    %v6431 = vunpack.c.l.b16 %v6346
    %v6432 = vunpack.c.h.b16 %v6346
    %v6433 = vunpack.c.l.b16 %v6347
    %v6434 = vunpack.c.h.b16 %v6347
    %v6435 = vunpack.c.l.b16 %v6348
    %v6436 = vunpack.c.h.b16 %v6348
    %v6437 = vunpack.c.l.b16 %v6349
    %v6438 = vunpack.c.h.b16 %v6349
    %v6439 = vunpack.c.l.b16 %v6350
    %v6440 = vunpack.c.h.b16 %v6350
    %v6441 = vunpack.c.l.b16 %v6351
    %v6442 = vunpack.c.h.b16 %v6351
    %v6443 = vunpack.c.l.b16 %v6352
    %v6444 = vunpack.c.h.b16 %v6352
    %v6445 = vunpack.c.l.b16 %v6353
    %v6446 = vunpack.c.h.b16 %v6353
    %v6447 = vunpack.c.l.b16 %v6354
    %v6448 = vunpack.c.h.b16 %v6354
    %v6449 = vunpack.c.l.b16 %v6355
    %v6450 = vunpack.c.h.b16 %v6355
    %v6451 = vunpack.c.l.b16 %v6356
    %v6452 = vunpack.c.h.b16 %v6356
    %v6453 = vpack.c.b16 %v6391, %v6389
    %v6454 = vpack.c.b16 %v6392, %v6390
    %v6455 = vpack.c.b16 %v6395, %v6393
    %v6456 = vpack.c.b16 %v6396, %v6394
    %v6457 = vpack.c.b16 %v6399, %v6397
    %v6458 = vpack.c.b16 %v6400, %v6398
    %v6459 = vpack.c.b16 %v6403, %v6401
    %v6460 = vpack.c.b16 %v6404, %v6402
    %v6461 = vpack.c.b16 %v6407, %v6405
    %v6462 = vpack.c.b16 %v6408, %v6406
    %v6463 = vpack.c.b16 %v6411, %v6409
    %v6464 = vpack.c.b16 %v6412, %v6410
    %v6465 = vpack.c.b16 %v6415, %v6413
    %v6466 = vpack.c.b16 %v6416, %v6414
    %v6467 = vpack.c.b16 %v6419, %v6417
    %v6468 = vpack.c.b16 %v6420, %v6418
    %v6469 = vpack.c.b16 %v6423, %v6421
    %v6470 = vpack.c.b16 %v6424, %v6422
    %v6471 = vpack.c.b16 %v6427, %v6425
    %v6472 = vpack.c.b16 %v6428, %v6426
    %v6473 = vpack.c.b16 %v6431, %v6429
    %v6474 = vpack.c.b16 %v6432, %v6430
    %v6475 = vpack.c.b16 %v6435, %v6433
    %v6476 = vpack.c.b16 %v6436, %v6434
    %v6477 = vpack.c.b16 %v6439, %v6437
    %v6478 = vpack.c.b16 %v6440, %v6438
    %v6479 = vpack.c.b16 %v6443, %v6441
    %v6480 = vpack.c.b16 %v6444, %v6442
    %v6481 = vpack.c.b16 %v6447, %v6445
    %v6482 = vpack.c.b16 %v6448, %v6446
    %v6483 = vpack.c.b16 %v6451, %v6449
    %v6484 = vpack.c.b16 %v6452, %v6450
    %6517 = vmatprep.subr.bf16.mxu0 %v6454
    %6518 = vmatpush1.bf16.msra.mxu0 %v6453
    %6519 = vmatprep.subr.bf16.mxu0 %v6456
    %6520 = vmatpush1.bf16.msra.mxu0 %v6455
    %6521 = vmatprep.subr.bf16.mxu0 %v6458
    %6522 = vmatpush1.bf16.msra.mxu0 %v6457
    %6523 = vmatprep.subr.bf16.mxu0 %v6460
    %6524 = vmatpush1.bf16.msra.mxu0 %v6459
    %6525 = vmatprep.subr.bf16.mxu0 %v6462
    %6526 = vmatpush1.bf16.msra.mxu0 %v6461
    %6527 = vmatprep.subr.bf16.mxu0 %v6464
    %6528 = vmatpush1.bf16.msra.mxu0 %v6463
    %6529 = vmatprep.subr.bf16.mxu0 %v6466
    %6530 = vmatpush1.bf16.msra.mxu0 %v6465
    %6531 = vmatprep.subr.bf16.mxu0 %v6468
    %6532 = vmatpush1.bf16.msra.mxu0 %v6467
    %6533 = vmatprep.subr.bf16.mxu0 %v6470
    %6534 = vmatpush1.bf16.msra.mxu0 %v6469
    %6535 = vmatprep.subr.bf16.mxu0 %v6472
    %6536 = vmatpush1.bf16.msra.mxu0 %v6471
    %6537 = vmatprep.subr.bf16.mxu0 %v6474
    %6538 = vmatpush1.bf16.msra.mxu0 %v6473
    %6539 = vmatprep.subr.bf16.mxu0 %v6476
    %6540 = vmatpush1.bf16.msra.mxu0 %v6475
    %6541 = vmatprep.subr.bf16.mxu0 %v6478
    %6542 = vmatpush1.bf16.msra.mxu0 %v6477
    %6543 = vmatprep.subr.bf16.mxu0 %v6480
    %6544 = vmatpush1.bf16.msra.mxu0 %v6479
    %6545 = vmatprep.subr.bf16.mxu0 %v6482
    %6546 = vmatpush1.bf16.msra.mxu0 %v6481
    %6547 = vmatprep.subr.bf16.mxu0 %v6484
    %6548 = vmatpush1.bf16.msra.mxu0 %v6483
    %6549 = vmatprep.mubr.bf16.mxu0 %v6323
    %6550 = vmatmul.mubr.bf16.gmra.mrb[0].mxu0 %v6322
    %v6551 = vpop.f32.mrb[0].mxu0
    %v6552 = vadd.f32 0.0, %v6551
    %v6553 = vpop.f32.mrb[0].mxu0
    %v6554 = vadd.f32 0.0, %v6553
    %v6555 = vpop.f32.mrb[0].mxu0
    %v6556 = vpop.f32.mrb[0].mxu0
    %6557 = vdwg.mxu0
    %v6590 = vunpack.c.l.b16 %v5928
    %v6591 = vunpack.c.h.b16 %v5928
    %v6592 = vunpack.c.l.b16 %v5929
    %v6593 = vunpack.c.h.b16 %v5929
    %v6594 = vunpack.c.l.b16 %v5930
    %v6595 = vunpack.c.h.b16 %v5930
    %v6596 = vunpack.c.l.b16 %v5931
    %v6597 = vunpack.c.h.b16 %v5931
    %v6598 = vunpack.c.l.b16 %v5932
    %v6599 = vunpack.c.h.b16 %v5932
    %v6600 = vunpack.c.l.b16 %v5933
    %v6601 = vunpack.c.h.b16 %v5933
    %v6602 = vunpack.c.l.b16 %v5934
    %v6603 = vunpack.c.h.b16 %v5934
    %v6604 = vunpack.c.l.b16 %v5935
    %v6605 = vunpack.c.h.b16 %v5935
    %v6606 = vunpack.c.l.b16 %v5936
    %v6607 = vunpack.c.h.b16 %v5936
    %v6608 = vunpack.c.l.b16 %v5937
    %v6609 = vunpack.c.h.b16 %v5937
    %v6610 = vunpack.c.l.b16 %v5938
    %v6611 = vunpack.c.h.b16 %v5938
    %v6612 = vunpack.c.l.b16 %v5939
    %v6613 = vunpack.c.h.b16 %v5939
    %v6614 = vunpack.c.l.b16 %v5940
    %v6615 = vunpack.c.h.b16 %v5940
    %v6616 = vunpack.c.l.b16 %v5941
    %v6617 = vunpack.c.h.b16 %v5941
    %v6618 = vunpack.c.l.b16 %v5942
    %v6619 = vunpack.c.h.b16 %v5942
    %v6620 = vunpack.c.l.b16 %v5943
    %v6621 = vunpack.c.h.b16 %v5943
    %v6622 = vunpack.c.l.b16 %v5944
    %v6623 = vunpack.c.h.b16 %v5944
    %v6624 = vunpack.c.l.b16 %v5945
    %v6625 = vunpack.c.h.b16 %v5945
    %v6626 = vunpack.c.l.b16 %v5946
    %v6627 = vunpack.c.h.b16 %v5946
    %v6628 = vunpack.c.l.b16 %v5947
    %v6629 = vunpack.c.h.b16 %v5947
    %v6630 = vunpack.c.l.b16 %v5948
    %v6631 = vunpack.c.h.b16 %v5948
    %v6632 = vunpack.c.l.b16 %v5949
    %v6633 = vunpack.c.h.b16 %v5949
    %v6634 = vunpack.c.l.b16 %v5950
    %v6635 = vunpack.c.h.b16 %v5950
    %v6636 = vunpack.c.l.b16 %v5951
    %v6637 = vunpack.c.h.b16 %v5951
    %v6638 = vunpack.c.l.b16 %v5952
    %v6639 = vunpack.c.h.b16 %v5952
    %v6640 = vunpack.c.l.b16 %v5953
    %v6641 = vunpack.c.h.b16 %v5953
    %v6642 = vunpack.c.l.b16 %v5954
    %v6643 = vunpack.c.h.b16 %v5954
    %v6644 = vunpack.c.l.b16 %v5955
    %v6645 = vunpack.c.h.b16 %v5955
    %v6646 = vunpack.c.l.b16 %v5956
    %v6647 = vunpack.c.h.b16 %v5956
    %v6648 = vunpack.c.l.b16 %v5957
    %v6649 = vunpack.c.h.b16 %v5957
    %v6650 = vunpack.c.l.b16 %v5958
    %v6651 = vunpack.c.h.b16 %v5958
    %v6652 = vunpack.c.l.b16 %v5959
    %v6653 = vunpack.c.h.b16 %v5959
    %v6654 = vpack.c.b16 %v6592, %v6590
    %v6655 = vpack.c.b16 %v6593, %v6591
    %v6656 = vpack.c.b16 %v6596, %v6594
    %v6657 = vpack.c.b16 %v6597, %v6595
    %v6658 = vpack.c.b16 %v6600, %v6598
    %v6659 = vpack.c.b16 %v6601, %v6599
    %v6660 = vpack.c.b16 %v6604, %v6602
    %v6661 = vpack.c.b16 %v6605, %v6603
    %v6662 = vpack.c.b16 %v6608, %v6606
    %v6663 = vpack.c.b16 %v6609, %v6607
    %v6664 = vpack.c.b16 %v6612, %v6610
    %v6665 = vpack.c.b16 %v6613, %v6611
    %v6666 = vpack.c.b16 %v6616, %v6614
    %v6667 = vpack.c.b16 %v6617, %v6615
    %v6668 = vpack.c.b16 %v6620, %v6618
    %v6669 = vpack.c.b16 %v6621, %v6619
    %v6670 = vpack.c.b16 %v6624, %v6622
    %v6671 = vpack.c.b16 %v6625, %v6623
    %v6672 = vpack.c.b16 %v6628, %v6626
    %v6673 = vpack.c.b16 %v6629, %v6627
    %v6674 = vpack.c.b16 %v6632, %v6630
    %v6675 = vpack.c.b16 %v6633, %v6631
    %v6676 = vpack.c.b16 %v6636, %v6634
    %v6677 = vpack.c.b16 %v6637, %v6635
    %v6678 = vpack.c.b16 %v6640, %v6638
    %v6679 = vpack.c.b16 %v6641, %v6639
    %v6680 = vpack.c.b16 %v6644, %v6642
    %v6681 = vpack.c.b16 %v6645, %v6643
    %v6682 = vpack.c.b16 %v6648, %v6646
    %v6683 = vpack.c.b16 %v6649, %v6647
    %v6684 = vpack.c.b16 %v6652, %v6650
    %v6685 = vpack.c.b16 %v6653, %v6651
    %6718 = vmatprep.subr.bf16.mxu0 %v6655
    %6719 = vmatpush1.bf16.msra.mxu0 %v6654
    %6720 = vmatprep.subr.bf16.mxu0 %v6657
    %6721 = vmatpush1.bf16.msra.mxu0 %v6656
    %6722 = vmatprep.subr.bf16.mxu0 %v6659
    %6723 = vmatpush1.bf16.msra.mxu0 %v6658
    %6724 = vmatprep.subr.bf16.mxu0 %v6661
    %6725 = vmatpush1.bf16.msra.mxu0 %v6660
    %6726 = vmatprep.subr.bf16.mxu0 %v6663
    %6727 = vmatpush1.bf16.msra.mxu0 %v6662
    %6728 = vmatprep.subr.bf16.mxu0 %v6665
    %6729 = vmatpush1.bf16.msra.mxu0 %v6664
    %6730 = vmatprep.subr.bf16.mxu0 %v6667
    %6731 = vmatpush1.bf16.msra.mxu0 %v6666
    %6732 = vmatprep.subr.bf16.mxu0 %v6669
    %6733 = vmatpush1.bf16.msra.mxu0 %v6668
    %6734 = vmatprep.subr.bf16.mxu0 %v6671
    %6735 = vmatpush1.bf16.msra.mxu0 %v6670
    %6736 = vmatprep.subr.bf16.mxu0 %v6673
    %6737 = vmatpush1.bf16.msra.mxu0 %v6672
    %6738 = vmatprep.subr.bf16.mxu0 %v6675
    %6739 = vmatpush1.bf16.msra.mxu0 %v6674
    %6740 = vmatprep.subr.bf16.mxu0 %v6677
    %6741 = vmatpush1.bf16.msra.mxu0 %v6676
    %6742 = vmatprep.subr.bf16.mxu0 %v6679
    %6743 = vmatpush1.bf16.msra.mxu0 %v6678
    %6744 = vmatprep.subr.bf16.mxu0 %v6681
    %6745 = vmatpush1.bf16.msra.mxu0 %v6680
    %6746 = vmatprep.subr.bf16.mxu0 %v6683
    %6747 = vmatpush1.bf16.msra.mxu0 %v6682
    %6748 = vmatprep.subr.bf16.mxu0 %v6685
    %6749 = vmatpush1.bf16.msra.mxu0 %v6684
    %6750 = vmatprep.mubr.bf16.mxu0 %v5927
    %6751 = vmatmul.mubr.bf16.gmra.mrb[0].mxu0 %v5926
    %v6752 = vpop.f32.mrb[0].mxu0
    %v6753 = vadd.f32 %v6552, %v6752
    %v6754 = vpop.f32.mrb[0].mxu0
    %v6755 = vadd.f32 %v6554, %v6754
    %v6756 = vpop.f32.mrb[0].mxu0
    %v6757 = vpop.f32.mrb[0].mxu0
    %6758 = vdwg.mxu0
    %v6759 = vld [vmem:[#allocation3 + $0x20] sm:$0xff]
    %v6760 = vld [vmem:[#allocation3 + $0x28] sm:$0xff]
    %v6761 = vld [vmem:[#allocation3 + $0x30] sm:$0xff]
    %v6762 = vld [vmem:[#allocation3 + $0x38] sm:$0xff]
    %v6763 = vld [vmem:[#allocation3 + $0x40] sm:$0xff]
    %v6764 = vld [vmem:[#allocation3 + $0x48] sm:$0xff]
    %v6765 = vld [vmem:[#allocation3 + $0x50] sm:$0xff]
    %v6766 = vpack.c.bf16 %v6759, %v6759
    %v6767 = vpack.c.bf16 %v6760, %v6760
    %v6768 = vpack.c.bf16 %v6761, %v6761
    %v6769 = vpack.c.bf16 %v6762, %v6762
    %v6770 = vpack.c.bf16 %v6763, %v6763
    %v6771 = vpack.c.bf16 %v6764, %v6764
    %v6772 = vpack.c.bf16 %v6765, %v6765
    %6773 = vmatprep.subr.bf16.mxu0 %v5355
    %6774 = vmatpush1.bf16.msra.mxu0 %v5354
    %6775 = vmatprep.subr.bf16.mxu0 %v5357
    %6776 = vmatpush1.bf16.msra.mxu0 %v5356
    %6777 = vmatprep.subr.bf16.mxu0 %v5359
    %6778 = vmatpush1.bf16.msra.mxu0 %v5358
    %6779 = vmatprep.subr.bf16.mxu0 %v5361
    %6780 = vmatpush1.bf16.msra.mxu0 %v5360
    %6781 = vmatprep.subr.bf16.mxu0 %v5363
    %6782 = vmatpush1.bf16.msra.mxu0 %v5362
    %6783 = vmatprep.subr.bf16.mxu0 %v5365
    %6784 = vmatpush1.bf16.msra.mxu0 %v5364
    %6785 = vmatprep.subr.bf16.mxu0 %v5367
    %6786 = vmatpush1.bf16.msra.mxu0 %v5366
    %6787 = vmatprep.subr.bf16.mxu0 %v5369
    %6788 = vmatpush1.bf16.msra.mxu0 %v5368
    %6789 = vmatprep.subr.bf16.mxu0 %v5371
    %6790 = vmatpush1.bf16.msra.mxu0 %v5370
    %6791 = vmatprep.subr.bf16.mxu0 %v5373
    %6792 = vmatpush1.bf16.msra.mxu0 %v5372
    %6793 = vmatprep.subr.bf16.mxu0 %v5375
    %6794 = vmatpush1.bf16.msra.mxu0 %v5374
    %6795 = vmatprep.subr.bf16.mxu0 %v5377
    %6796 = vmatpush1.bf16.msra.mxu0 %v5376
    %6797 = vmatprep.subr.bf16.mxu0 %v5379
    %6798 = vmatpush1.bf16.msra.mxu0 %v5378
    %6799 = vmatprep.subr.bf16.mxu0 %v5381
    %6800 = vmatpush1.bf16.msra.mxu0 %v5380
    %6801 = vmatprep.subr.bf16.mxu0 %v5383
    %6802 = vmatpush1.bf16.msra.mxu0 %v5382
    %6803 = vmatprep.subr.bf16.mxu0 %v5385
    %6804 = vmatpush1.bf16.msra.mxu0 %v5384
    %6805 = vmatprep.mubr.bf16.mxu0 %v6767
    %6806 = vmatmul.mubr.bf16.gmra.mrb[0].mxu0 %v6766
    %v6807 = vpop.f32.mrb[0].mxu0
    %v6808 = vadd.f32 0.0, %v6807
    %v6809 = vpop.f32.mrb[0].mxu0
    %v6810 = vadd.f32 0.0, %v6809
    %v6811 = vpop.f32.mrb[0].mxu0
    %v6812 = vpop.f32.mrb[0].mxu0
    %6813 = vdwg.mxu0
    %6814 = vmatprep.subr.bf16.mxu0 %v5387
    %6815 = vmatpush1.bf16.msra.mxu0 %v5386
    %6816 = vmatprep.subr.bf16.mxu0 %v5389
    %6817 = vmatpush1.bf16.msra.mxu0 %v5388
    %6818 = vmatprep.subr.bf16.mxu0 %v5391
    %6819 = vmatpush1.bf16.msra.mxu0 %v5390
    %6820 = vmatprep.subr.bf16.mxu0 %v5393
    %6821 = vmatpush1.bf16.msra.mxu0 %v5392
    %6822 = vmatprep.subr.bf16.mxu0 %v5395
    %6823 = vmatpush1.bf16.msra.mxu0 %v5394
    %6824 = vmatprep.subr.bf16.mxu0 %v5397
    %6825 = vmatpush1.bf16.msra.mxu0 %v5396
    %6826 = vmatprep.subr.bf16.mxu0 %v5399
    %6827 = vmatpush1.bf16.msra.mxu0 %v5398
    %6828 = vmatprep.subr.bf16.mxu0 %v5401
    %6829 = vmatpush1.bf16.msra.mxu0 %v5400
    %6830 = vmatprep.subr.bf16.mxu0 %v5403
    %6831 = vmatpush1.bf16.msra.mxu0 %v5402
    %6832 = vmatprep.subr.bf16.mxu0 %v5405
    %6833 = vmatpush1.bf16.msra.mxu0 %v5404
    %6834 = vmatprep.subr.bf16.mxu0 %v5407
    %6835 = vmatpush1.bf16.msra.mxu0 %v5406
    %6836 = vmatprep.subr.bf16.mxu0 %v5409
    %6837 = vmatpush1.bf16.msra.mxu0 %v5408
    %6838 = vmatprep.subr.bf16.mxu0 %v5411
    %6839 = vmatpush1.bf16.msra.mxu0 %v5410
    %6840 = vmatprep.subr.bf16.mxu0 %v5413
    %6841 = vmatpush1.bf16.msra.mxu0 %v5412
    %6842 = vmatprep.subr.bf16.mxu0 %v5415
    %6843 = vmatpush1.bf16.msra.mxu0 %v5414
    %6844 = vmatprep.subr.bf16.mxu0 %v5417
    %6845 = vmatpush1.bf16.msra.mxu0 %v5416
    %6846 = vmatprep.mubr.bf16.mxu0 %v6769
    %6847 = vmatmul.mubr.bf16.gmra.mrb[0].mxu0 %v6768
    %v6848 = vpop.f32.mrb[0].mxu0
    %v6849 = vadd.f32 %v6808, %v6848
    %v6850 = vpop.f32.mrb[0].mxu0
    %v6851 = vadd.f32 %v6810, %v6850
    %v6852 = vpop.f32.mrb[0].mxu0
    %v6853 = vpop.f32.mrb[0].mxu0
    %6854 = vdwg.mxu0
    %6855 = vmatprep.subr.bf16.mxu0 %v5419
    %6856 = vmatpush1.bf16.msra.mxu0 %v5418
    %6857 = vmatprep.subr.bf16.mxu0 %v5421
    %6858 = vmatpush1.bf16.msra.mxu0 %v5420
    %6859 = vmatprep.subr.bf16.mxu0 %v5423
    %6860 = vmatpush1.bf16.msra.mxu0 %v5422
    %6861 = vmatprep.subr.bf16.mxu0 %v5425
    %6862 = vmatpush1.bf16.msra.mxu0 %v5424
    %6863 = vmatprep.subr.bf16.mxu0 %v5427
    %6864 = vmatpush1.bf16.msra.mxu0 %v5426
    %6865 = vmatprep.subr.bf16.mxu0 %v5429
    %6866 = vmatpush1.bf16.msra.mxu0 %v5428
    %6867 = vmatprep.subr.bf16.mxu0 %v5431
    %6868 = vmatpush1.bf16.msra.mxu0 %v5430
    %6869 = vmatprep.subr.bf16.mxu0 %v5433
    %6870 = vmatpush1.bf16.msra.mxu0 %v5432
    %6871 = vmatprep.subr.bf16.mxu0 %v5435
    %6872 = vmatpush1.bf16.msra.mxu0 %v5434
    %6873 = vmatprep.subr.bf16.mxu0 %v5437
    %6874 = vmatpush1.bf16.msra.mxu0 %v5436
    %6875 = vmatprep.subr.bf16.mxu0 %v5439
    %6876 = vmatpush1.bf16.msra.mxu0 %v5438
    %6877 = vmatprep.subr.bf16.mxu0 %v5441
    %6878 = vmatpush1.bf16.msra.mxu0 %v5440
    %6879 = vmatprep.subr.bf16.mxu0 %v5443
    %6880 = vmatpush1.bf16.msra.mxu0 %v5442
    %6881 = vmatprep.subr.bf16.mxu0 %v5445
    %6882 = vmatpush1.bf16.msra.mxu0 %v5444
    %6883 = vmatprep.subr.bf16.mxu0 %v5447
    %6884 = vmatpush1.bf16.msra.mxu0 %v5446
    %6885 = vmatprep.subr.bf16.mxu0 %v5449
    %6886 = vmatpush1.bf16.msra.mxu0 %v5448
    %6887 = vmatprep.mubr.bf16.mxu0 %v6771
    %6888 = vmatmul.mubr.bf16.gmra.mrb[0].mxu0 %v6770
    %v6889 = vpop.f32.mrb[0].mxu0
    %v6890 = vadd.f32 %v6849, %v6889
    %v6891 = vpop.f32.mrb[0].mxu0
    %v6892 = vadd.f32 %v6851, %v6891
    %v6893 = vpop.f32.mrb[0].mxu0
    %v6894 = vpop.f32.mrb[0].mxu0
    %6895 = vdwg.mxu0
    %6896 = vmatprep.subr.bf16.mxu0 %v5451
    %6897 = vmatpush1.bf16.msra.mxu0 %v5450
    %6898 = vmatprep.subr.bf16.mxu0 %v5453
    %6899 = vmatpush1.bf16.msra.mxu0 %v5452
    %6900 = vmatprep.subr.bf16.mxu0 %v5455
    %6901 = vmatpush1.bf16.msra.mxu0 %v5454
    %6902 = vmatprep.subr.bf16.mxu0 %v5457
    %6903 = vmatpush1.bf16.msra.mxu0 %v5456
    %6904 = vmatprep.subr.bf16.mxu0 %v5459
    %6905 = vmatpush1.bf16.msra.mxu0 %v5458
    %6906 = vmatprep.subr.bf16.mxu0 %v5461
    %6907 = vmatpush1.bf16.msra.mxu0 %v5460
    %6908 = vmatprep.subr.bf16.mxu0 %v5463
    %6909 = vmatpush1.bf16.msra.mxu0 %v5462
    %6910 = vmatprep.subr.bf16.mxu0 %v5465
    %6911 = vmatpush1.bf16.msra.mxu0 %v5464
    %6912 = vmatprep.subr.bf16.mxu0 0
    %6913 = vmatpush1.bf16.msra.mxu0 0
    %6914 = vmatprep.subr.bf16.mxu0 0
    %6915 = vmatpush1.bf16.msra.mxu0 0
    %6916 = vmatprep.subr.bf16.mxu0 0
    %6917 = vmatpush1.bf16.msra.mxu0 0
    %6918 = vmatprep.subr.bf16.mxu0 0
    %6919 = vmatpush1.bf16.msra.mxu0 0
    %6920 = vmatprep.subr.bf16.mxu0 0
    %6921 = vmatpush1.bf16.msra.mxu0 0
    %6922 = vmatprep.subr.bf16.mxu0 0
    %6923 = vmatpush1.bf16.msra.mxu0 0
    %6924 = vmatprep.subr.bf16.mxu0 0
    %6925 = vmatpush1.bf16.msra.mxu0 0
    %6926 = vmatprep.subr.bf16.mxu0 0
    %6927 = vmatpush1.bf16.msra.mxu0 0
    %6928 = vmatprep.mubr.bf16.mxu0 0
    %6929 = vmatmul.mubr.bf16.gmra.mrb[0].mxu0 %v6772
    %v6930 = vpop.f32.mrb[0].mxu0
    %v6931 = vadd.f32 %v6890, %v6930
    %v6932 = vpop.f32.mrb[0].mxu0
    %v6933 = vadd.f32 %v6892, %v6932
    %v6934 = vpop.f32.mrb[0].mxu0
    %v6935 = vpop.f32.mrb[0].mxu0
    %6936 = vdwg.mxu0
    %v6937 = vld [vmem:[#allocation3 + $0x28] sm:$0xff]
    %v6938 = vld [vmem:[#allocation3 + $0x30] sm:$0xff]
    %v6939 = vld [vmem:[#allocation3 + $0x38] sm:$0xff]
    %v6940 = vld [vmem:[#allocation3 + $0x40] sm:$0xff]
    %v6941 = vld [vmem:[#allocation3 + $0x48] sm:$0xff]
    %v6942 = vld [vmem:[#allocation3 + $0x50] sm:$0xff]
    %v6943 = vld [vmem:[#allocation3 + $0x58] sm:$0xff]
    %v6944 = vpack.c.bf16 %v6937, %v6937
    %v6945 = vpack.c.bf16 %v6938, %v6938
    %v6946 = vpack.c.bf16 %v6939, %v6939
    %v6947 = vpack.c.bf16 %v6940, %v6940
    %v6948 = vpack.c.bf16 %v6941, %v6941
    %v6949 = vpack.c.bf16 %v6942, %v6942
    %v6950 = vpack.c.bf16 %v6943, %v6943
    %6951 = vmatprep.subr.bf16.mxu0 %v5355
    %6952 = vmatpush1.bf16.msra.mxu0 %v5354
    %6953 = vmatprep.subr.bf16.mxu0 %v5357
    %6954 = vmatpush1.bf16.msra.mxu0 %v5356
    %6955 = vmatprep.subr.bf16.mxu0 %v5359
    %6956 = vmatpush1.bf16.msra.mxu0 %v5358
    %6957 = vmatprep.subr.bf16.mxu0 %v5361
    %6958 = vmatpush1.bf16.msra.mxu0 %v5360
    %6959 = vmatprep.subr.bf16.mxu0 %v5363
    %6960 = vmatpush1.bf16.msra.mxu0 %v5362
    %6961 = vmatprep.subr.bf16.mxu0 %v5365
    %6962 = vmatpush1.bf16.msra.mxu0 %v5364
    %6963 = vmatprep.subr.bf16.mxu0 %v5367
    %6964 = vmatpush1.bf16.msra.mxu0 %v5366
    %6965 = vmatprep.subr.bf16.mxu0 %v5369
    %6966 = vmatpush1.bf16.msra.mxu0 %v5368
    %6967 = vmatprep.subr.bf16.mxu0 %v5371
    %6968 = vmatpush1.bf16.msra.mxu0 %v5370
    %6969 = vmatprep.subr.bf16.mxu0 %v5373
    %6970 = vmatpush1.bf16.msra.mxu0 %v5372
    %6971 = vmatprep.subr.bf16.mxu0 %v5375
    %6972 = vmatpush1.bf16.msra.mxu0 %v5374
    %6973 = vmatprep.subr.bf16.mxu0 %v5377
    %6974 = vmatpush1.bf16.msra.mxu0 %v5376
    %6975 = vmatprep.subr.bf16.mxu0 %v5379
    %6976 = vmatpush1.bf16.msra.mxu0 %v5378
    %6977 = vmatprep.subr.bf16.mxu0 %v5381
    %6978 = vmatpush1.bf16.msra.mxu0 %v5380
    %6979 = vmatprep.subr.bf16.mxu0 %v5383
    %6980 = vmatpush1.bf16.msra.mxu0 %v5382
    %6981 = vmatprep.subr.bf16.mxu0 %v5385
    %6982 = vmatpush1.bf16.msra.mxu0 %v5384
    %6983 = vmatprep.mubr.bf16.mxu0 %v6945
    %6984 = vmatmul.mubr.bf16.gmra.mrb[0].mxu0 %v6944
    %v6985 = vpop.f32.mrb[0].mxu0
    %v6986 = vadd.f32 0.0, %v6985
    %v6987 = vpop.f32.mrb[0].mxu0
    %v6988 = vadd.f32 0.0, %v6987
    %v6989 = vpop.f32.mrb[0].mxu0
    %v6990 = vpop.f32.mrb[0].mxu0
    %6991 = vdwg.mxu0
    %6992 = vmatprep.subr.bf16.mxu0 %v5387
    %6993 = vmatpush1.bf16.msra.mxu0 %v5386
    %6994 = vmatprep.subr.bf16.mxu0 %v5389
    %6995 = vmatpush1.bf16.msra.mxu0 %v5388
    %6996 = vmatprep.subr.bf16.mxu0 %v5391
    %6997 = vmatpush1.bf16.msra.mxu0 %v5390
    %6998 = vmatprep.subr.bf16.mxu0 %v5393
    %6999 = vmatpush1.bf16.msra.mxu0 %v5392
    %7000 = vmatprep.subr.bf16.mxu0 %v5395
    %7001 = vmatpush1.bf16.msra.mxu0 %v5394
    %7002 = vmatprep.subr.bf16.mxu0 %v5397
    %7003 = vmatpush1.bf16.msra.mxu0 %v5396
    %7004 = vmatprep.subr.bf16.mxu0 %v5399
    %7005 = vmatpush1.bf16.msra.mxu0 %v5398
    %7006 = vmatprep.subr.bf16.mxu0 %v5401
    %7007 = vmatpush1.bf16.msra.mxu0 %v5400
    %7008 = vmatprep.subr.bf16.mxu0 %v5403
    %7009 = vmatpush1.bf16.msra.mxu0 %v5402
    %7010 = vmatprep.subr.bf16.mxu0 %v5405
    %7011 = vmatpush1.bf16.msra.mxu0 %v5404
    %7012 = vmatprep.subr.bf16.mxu0 %v5407
    %7013 = vmatpush1.bf16.msra.mxu0 %v5406
    %7014 = vmatprep.subr.bf16.mxu0 %v5409
    %7015 = vmatpush1.bf16.msra.mxu0 %v5408
    %7016 = vmatprep.subr.bf16.mxu0 %v5411
    %7017 = vmatpush1.bf16.msra.mxu0 %v5410
    %7018 = vmatprep.subr.bf16.mxu0 %v5413
    %7019 = vmatpush1.bf16.msra.mxu0 %v5412
    %7020 = vmatprep.subr.bf16.mxu0 %v5415
    %7021 = vmatpush1.bf16.msra.mxu0 %v5414
    %7022 = vmatprep.subr.bf16.mxu0 %v5417
    %7023 = vmatpush1.bf16.msra.mxu0 %v5416
    %7024 = vmatprep.mubr.bf16.mxu0 %v6947
    %7025 = vmatmul.mubr.bf16.gmra.mrb[0].mxu0 %v6946
    %v7026 = vpop.f32.mrb[0].mxu0
    %v7027 = vadd.f32 %v6986, %v7026
    %v7028 = vpop.f32.mrb[0].mxu0
    %v7029 = vadd.f32 %v6988, %v7028
    %v7030 = vpop.f32.mrb[0].mxu0
    %v7031 = vpop.f32.mrb[0].mxu0
    %7032 = vdwg.mxu0
    %7033 = vmatprep.subr.bf16.mxu0 %v5419
    %7034 = vmatpush1.bf16.msra.mxu0 %v5418
    %7035 = vmatprep.subr.bf16.mxu0 %v5421
    %7036 = vmatpush1.bf16.msra.mxu0 %v5420
    %7037 = vmatprep.subr.bf16.mxu0 %v5423
    %7038 = vmatpush1.bf16.msra.mxu0 %v5422
    %7039 = vmatprep.subr.bf16.mxu0 %v5425
    %7040 = vmatpush1.bf16.msra.mxu0 %v5424
    %7041 = vmatprep.subr.bf16.mxu0 %v5427
    %7042 = vmatpush1.bf16.msra.mxu0 %v5426
    %7043 = vmatprep.subr.bf16.mxu0 %v5429
    %7044 = vmatpush1.bf16.msra.mxu0 %v5428
    %7045 = vmatprep.subr.bf16.mxu0 %v5431
    %7046 = vmatpush1.bf16.msra.mxu0 %v5430
    %7047 = vmatprep.subr.bf16.mxu0 %v5433
    %7048 = vmatpush1.bf16.msra.mxu0 %v5432
    %7049 = vmatprep.subr.bf16.mxu0 %v5435
    %7050 = vmatpush1.bf16.msra.mxu0 %v5434
    %7051 = vmatprep.subr.bf16.mxu0 %v5437
    %7052 = vmatpush1.bf16.msra.mxu0 %v5436
    %7053 = vmatprep.subr.bf16.mxu0 %v5439
    %7054 = vmatpush1.bf16.msra.mxu0 %v5438
    %7055 = vmatprep.subr.bf16.mxu0 %v5441
    %7056 = vmatpush1.bf16.msra.mxu0 %v5440
    %7057 = vmatprep.subr.bf16.mxu0 %v5443
    %7058 = vmatpush1.bf16.msra.mxu0 %v5442
    %7059 = vmatprep.subr.bf16.mxu0 %v5445
    %7060 = vmatpush1.bf16.msra.mxu0 %v5444
    %7061 = vmatprep.subr.bf16.mxu0 %v5447
    %7062 = vmatpush1.bf16.msra.mxu0 %v5446
    %7063 = vmatprep.subr.bf16.mxu0 %v5449
    %7064 = vmatpush1.bf16.msra.mxu0 %v5448
    %7065 = vmatprep.mubr.bf16.mxu0 %v6949
    %7066 = vmatmul.mubr.bf16.gmra.mrb[0].mxu0 %v6948
    %v7067 = vpop.f32.mrb[0].mxu0
    %v7068 = vadd.f32 %v7027, %v7067
    %v7069 = vpop.f32.mrb[0].mxu0
    %v7070 = vadd.f32 %v7029, %v7069
    %v7071 = vpop.f32.mrb[0].mxu0
    %v7072 = vpop.f32.mrb[0].mxu0
    %7073 = vdwg.mxu0
    %7074 = vmatprep.subr.bf16.mxu0 %v5451
    %7075 = vmatpush1.bf16.msra.mxu0 %v5450
    %7076 = vmatprep.subr.bf16.mxu0 %v5453
    %7077 = vmatpush1.bf16.msra.mxu0 %v5452
    %7078 = vmatprep.subr.bf16.mxu0 %v5455
    %7079 = vmatpush1.bf16.msra.mxu0 %v5454
    %7080 = vmatprep.subr.bf16.mxu0 %v5457
    %7081 = vmatpush1.bf16.msra.mxu0 %v5456
    %7082 = vmatprep.subr.bf16.mxu0 %v5459
    %7083 = vmatpush1.bf16.msra.mxu0 %v5458
    %7084 = vmatprep.subr.bf16.mxu0 %v5461
    %7085 = vmatpush1.bf16.msra.mxu0 %v5460
    %7086 = vmatprep.subr.bf16.mxu0 %v5463
    %7087 = vmatpush1.bf16.msra.mxu0 %v5462
    %7088 = vmatprep.subr.bf16.mxu0 %v5465
    %7089 = vmatpush1.bf16.msra.mxu0 %v5464
    %7090 = vmatprep.subr.bf16.mxu0 0
    %7091 = vmatpush1.bf16.msra.mxu0 0
    %7092 = vmatprep.subr.bf16.mxu0 0
    %7093 = vmatpush1.bf16.msra.mxu0 0
    %7094 = vmatprep.subr.bf16.mxu0 0
    %7095 = vmatpush1.bf16.msra.mxu0 0
    %7096 = vmatprep.subr.bf16.mxu0 0
    %7097 = vmatpush1.bf16.msra.mxu0 0
    %7098 = vmatprep.subr.bf16.mxu0 0
    %7099 = vmatpush1.bf16.msra.mxu0 0
    %7100 = vmatprep.subr.bf16.mxu0 0
    %7101 = vmatpush1.bf16.msra.mxu0 0
    %7102 = vmatprep.subr.bf16.mxu0 0
    %7103 = vmatpush1.bf16.msra.mxu0 0
    %7104 = vmatprep.subr.bf16.mxu0 0
    %7105 = vmatpush1.bf16.msra.mxu0 0
    %7106 = vmatprep.mubr.bf16.mxu0 0
    %7107 = vmatmul.mubr.bf16.gmra.mrb[0].mxu0 %v6950
    %v7108 = vpop.f32.mrb[0].mxu0
    %v7109 = vadd.f32 %v7068, %v7108
    %v7110 = vpop.f32.mrb[0].mxu0
    %v7111 = vadd.f32 %v7070, %v7110
    %v7112 = vpop.f32.mrb[0].mxu0
    %v7113 = vpop.f32.mrb[0].mxu0
    %7114 = vdwg.mxu0
    %v7115 = vmax.f32 %v6931, 0.0
    %v7116 = vmax.f32 %v6933, 0.0
    %v7117 = vmax.f32 %v7109, 0.0
    %v7118 = vmax.f32 %v7111, 0.0
    %v7119 = vmax.f32 %v7115, %v7117
    %v7120 = vmax.f32 %v7116, %v7118
    %v7121 = vpack.c.bf16 %v7119, %v7119
    %v7122 = vpack.c.bf16 %v7120, %v7120
    %s7123 = scalar_lea.vmem [#allocation8], 512
    %v7124 = vld [vmem:[%s7123] sm:$0xff]
    %v7125 = vld [vmem:[%s7123 + $0x8] sm:$0xff]
    %v7126 = vld [vmem:[%s7123 + $0x10] sm:$0xff]
    %v7127 = vld [vmem:[%s7123 + $0x18] sm:$0xff]
    %v7128 = vld [vmem:[%s7123 + $0x20] sm:$0xff]
    %v7129 = vld [vmem:[%s7123 + $0x28] sm:$0xff]
    %v7130 = vld [vmem:[%s7123 + $0x30] sm:$0xff]
    %v7131 = vld [vmem:[%s7123 + $0x38] sm:$0xff]
    %v7132 = vld [vmem:[%s7123 + $0x40] sm:$0xff]
    %v7133 = vld [vmem:[%s7123 + $0x48] sm:$0xff]
    %v7134 = vld [vmem:[%s7123 + $0x50] sm:$0xff]
    %v7135 = vld [vmem:[%s7123 + $0x58] sm:$0xff]
    %v7136 = vld [vmem:[%s7123 + $0x60] sm:$0xff]
    %v7137 = vld [vmem:[%s7123 + $0x68] sm:$0xff]
    %v7138 = vld [vmem:[%s7123 + $0x70] sm:$0xff]
    %v7139 = vld [vmem:[%s7123 + $0x78] sm:$0xff]
    %v7140 = vld [vmem:[%s7123 + $0x80] sm:$0xff]
    %v7141 = vld [vmem:[%s7123 + $0x88] sm:$0xff]
    %v7142 = vld [vmem:[%s7123 + $0x90] sm:$0xff]
    %v7143 = vld [vmem:[%s7123 + $0x98] sm:$0xff]
    %v7144 = vld [vmem:[%s7123 + $0xa0] sm:$0xff]
    %v7145 = vld [vmem:[%s7123 + $0xa8] sm:$0xff]
    %v7146 = vld [vmem:[%s7123 + $0xb0] sm:$0xff]
    %v7147 = vld [vmem:[%s7123 + $0xb8] sm:$0xff]
    %v7148 = vld [vmem:[%s7123 + $0xc0] sm:$0xff]
    %v7149 = vld [vmem:[%s7123 + $0xc8] sm:$0xff]
    %v7150 = vld [vmem:[%s7123 + $0xd0] sm:$0xff]
    %v7151 = vld [vmem:[%s7123 + $0xd8] sm:$0xff]
    %v7152 = vld [vmem:[%s7123 + $0xe0] sm:$0xff]
    %v7153 = vld [vmem:[%s7123 + $0xe8] sm:$0xff]
    %v7154 = vld [vmem:[%s7123 + $0xf0] sm:$0xff]
    %v7155 = vld [vmem:[%s7123 + $0xf8] sm:$0xff]
    %v7188 = vunpack.c.l.b16 %v7124
    %v7189 = vunpack.c.h.b16 %v7124
    %v7190 = vunpack.c.l.b16 %v7125
    %v7191 = vunpack.c.h.b16 %v7125
    %v7192 = vunpack.c.l.b16 %v7126
    %v7193 = vunpack.c.h.b16 %v7126
    %v7194 = vunpack.c.l.b16 %v7127
    %v7195 = vunpack.c.h.b16 %v7127
    %v7196 = vunpack.c.l.b16 %v7128
    %v7197 = vunpack.c.h.b16 %v7128
    %v7198 = vunpack.c.l.b16 %v7129
    %v7199 = vunpack.c.h.b16 %v7129
    %v7200 = vunpack.c.l.b16 %v7130
    %v7201 = vunpack.c.h.b16 %v7130
    %v7202 = vunpack.c.l.b16 %v7131
    %v7203 = vunpack.c.h.b16 %v7131
    %v7204 = vunpack.c.l.b16 %v7132
    %v7205 = vunpack.c.h.b16 %v7132
    %v7206 = vunpack.c.l.b16 %v7133
    %v7207 = vunpack.c.h.b16 %v7133
    %v7208 = vunpack.c.l.b16 %v7134
    %v7209 = vunpack.c.h.b16 %v7134
    %v7210 = vunpack.c.l.b16 %v7135
    %v7211 = vunpack.c.h.b16 %v7135
    %v7212 = vunpack.c.l.b16 %v7136
    %v7213 = vunpack.c.h.b16 %v7136
    %v7214 = vunpack.c.l.b16 %v7137
    %v7215 = vunpack.c.h.b16 %v7137
    %v7216 = vunpack.c.l.b16 %v7138
    %v7217 = vunpack.c.h.b16 %v7138
    %v7218 = vunpack.c.l.b16 %v7139
    %v7219 = vunpack.c.h.b16 %v7139
    %v7220 = vunpack.c.l.b16 %v7140
    %v7221 = vunpack.c.h.b16 %v7140
    %v7222 = vunpack.c.l.b16 %v7141
    %v7223 = vunpack.c.h.b16 %v7141
    %v7224 = vunpack.c.l.b16 %v7142
    %v7225 = vunpack.c.h.b16 %v7142
    %v7226 = vunpack.c.l.b16 %v7143
    %v7227 = vunpack.c.h.b16 %v7143
    %v7228 = vunpack.c.l.b16 %v7144
    %v7229 = vunpack.c.h.b16 %v7144
    %v7230 = vunpack.c.l.b16 %v7145
    %v7231 = vunpack.c.h.b16 %v7145
    %v7232 = vunpack.c.l.b16 %v7146
    %v7233 = vunpack.c.h.b16 %v7146
    %v7234 = vunpack.c.l.b16 %v7147
    %v7235 = vunpack.c.h.b16 %v7147
    %v7236 = vunpack.c.l.b16 %v7148
    %v7237 = vunpack.c.h.b16 %v7148
    %v7238 = vunpack.c.l.b16 %v7149
    %v7239 = vunpack.c.h.b16 %v7149
    %v7240 = vunpack.c.l.b16 %v7150
    %v7241 = vunpack.c.h.b16 %v7150
    %v7242 = vunpack.c.l.b16 %v7151
    %v7243 = vunpack.c.h.b16 %v7151
    %v7244 = vunpack.c.l.b16 %v7152
    %v7245 = vunpack.c.h.b16 %v7152
    %v7246 = vunpack.c.l.b16 %v7153
    %v7247 = vunpack.c.h.b16 %v7153
    %v7248 = vunpack.c.l.b16 %v7154
    %v7249 = vunpack.c.h.b16 %v7154
    %v7250 = vunpack.c.l.b16 %v7155
    %v7251 = vunpack.c.h.b16 %v7155
    %v7252 = vpack.c.b16 %v7190, %v7188
    %v7253 = vpack.c.b16 %v7191, %v7189
    %v7254 = vpack.c.b16 %v7194, %v7192
    %v7255 = vpack.c.b16 %v7195, %v7193
    %v7256 = vpack.c.b16 %v7198, %v7196
    %v7257 = vpack.c.b16 %v7199, %v7197
    %v7258 = vpack.c.b16 %v7202, %v7200
    %v7259 = vpack.c.b16 %v7203, %v7201
    %v7260 = vpack.c.b16 %v7206, %v7204
    %v7261 = vpack.c.b16 %v7207, %v7205
    %v7262 = vpack.c.b16 %v7210, %v7208
    %v7263 = vpack.c.b16 %v7211, %v7209
    %v7264 = vpack.c.b16 %v7214, %v7212
    %v7265 = vpack.c.b16 %v7215, %v7213
    %v7266 = vpack.c.b16 %v7218, %v7216
    %v7267 = vpack.c.b16 %v7219, %v7217
    %v7268 = vpack.c.b16 %v7222, %v7220
    %v7269 = vpack.c.b16 %v7223, %v7221
    %v7270 = vpack.c.b16 %v7226, %v7224
    %v7271 = vpack.c.b16 %v7227, %v7225
    %v7272 = vpack.c.b16 %v7230, %v7228
    %v7273 = vpack.c.b16 %v7231, %v7229
    %v7274 = vpack.c.b16 %v7234, %v7232
    %v7275 = vpack.c.b16 %v7235, %v7233
    %v7276 = vpack.c.b16 %v7238, %v7236
    %v7277 = vpack.c.b16 %v7239, %v7237
    %v7278 = vpack.c.b16 %v7242, %v7240
    %v7279 = vpack.c.b16 %v7243, %v7241
    %v7280 = vpack.c.b16 %v7246, %v7244
    %v7281 = vpack.c.b16 %v7247, %v7245
    %v7282 = vpack.c.b16 %v7250, %v7248
    %v7283 = vpack.c.b16 %v7251, %v7249
    %7316 = vmatprep.subr.bf16.mxu0 %v7253
    %7317 = vmatpush1.bf16.msra.mxu0 %v7252
    %7318 = vmatprep.subr.bf16.mxu0 %v7255
    %7319 = vmatpush1.bf16.msra.mxu0 %v7254
    %7320 = vmatprep.subr.bf16.mxu0 %v7257
    %7321 = vmatpush1.bf16.msra.mxu0 %v7256
    %7322 = vmatprep.subr.bf16.mxu0 %v7259
    %7323 = vmatpush1.bf16.msra.mxu0 %v7258
    %7324 = vmatprep.subr.bf16.mxu0 %v7261
    %7325 = vmatpush1.bf16.msra.mxu0 %v7260
    %7326 = vmatprep.subr.bf16.mxu0 %v7263
    %7327 = vmatpush1.bf16.msra.mxu0 %v7262
    %7328 = vmatprep.subr.bf16.mxu0 %v7265
    %7329 = vmatpush1.bf16.msra.mxu0 %v7264
    %7330 = vmatprep.subr.bf16.mxu0 %v7267
    %7331 = vmatpush1.bf16.msra.mxu0 %v7266
    %7332 = vmatprep.subr.bf16.mxu0 %v7269
    %7333 = vmatpush1.bf16.msra.mxu0 %v7268
    %7334 = vmatprep.subr.bf16.mxu0 %v7271
    %7335 = vmatpush1.bf16.msra.mxu0 %v7270
    %7336 = vmatprep.subr.bf16.mxu0 %v7273
    %7337 = vmatpush1.bf16.msra.mxu0 %v7272
    %7338 = vmatprep.subr.bf16.mxu0 %v7275
    %7339 = vmatpush1.bf16.msra.mxu0 %v7274
    %7340 = vmatprep.subr.bf16.mxu0 %v7277
    %7341 = vmatpush1.bf16.msra.mxu0 %v7276
    %7342 = vmatprep.subr.bf16.mxu0 %v7279
    %7343 = vmatpush1.bf16.msra.mxu0 %v7278
    %7344 = vmatprep.subr.bf16.mxu0 %v7281
    %7345 = vmatpush1.bf16.msra.mxu0 %v7280
    %7346 = vmatprep.subr.bf16.mxu0 %v7283
    %7347 = vmatpush1.bf16.msra.mxu0 %v7282
    %7348 = vmatprep.mubr.bf16.mxu0 %v7122
    %7349 = vmatmul.mubr.bf16.gmra.mrb[0].mxu0 %v7121
    %v7350 = vpop.f32.mrb[0].mxu0
    %v7351 = vadd.f32 0.0, %v7350
    %v7352 = vpop.f32.mrb[0].mxu0
    %v7353 = vadd.f32 0.0, %v7352
    %v7354 = vpop.f32.mrb[0].mxu0
    %v7355 = vpop.f32.mrb[0].mxu0
    %7356 = vdwg.mxu0
    %v7357 = vadd.f32 %v6753, %v7351
    %v7358 = vadd.f32 %v6755, %v7353
    %v7359 = vld [vmem:[#allocation3 + $0x30] sm:$0xff]
    %v7360 = vld [vmem:[#allocation3 + $0x38] sm:$0xff]
    %v7361 = vld [vmem:[#allocation3 + $0x40] sm:$0xff]
    %v7362 = vld [vmem:[#allocation3 + $0x48] sm:$0xff]
    %v7363 = vld [vmem:[#allocation3 + $0x50] sm:$0xff]
    %v7364 = vld [vmem:[#allocation3 + $0x58] sm:$0xff]
    %v7365 = vld [vmem:[#allocation3 + $0x60] sm:$0xff]
    %v7366 = vpack.c.bf16 %v7359, %v7359
    %v7367 = vpack.c.bf16 %v7360, %v7360
    %v7368 = vpack.c.bf16 %v7361, %v7361
    %v7369 = vpack.c.bf16 %v7362, %v7362
    %v7370 = vpack.c.bf16 %v7363, %v7363
    %v7371 = vpack.c.bf16 %v7364, %v7364
    %v7372 = vpack.c.bf16 %v7365, %v7365
    %7373 = vmatprep.subr.bf16.mxu0 %v5355
    %7374 = vmatpush1.bf16.msra.mxu0 %v5354
    %7375 = vmatprep.subr.bf16.mxu0 %v5357
    %7376 = vmatpush1.bf16.msra.mxu0 %v5356
    %7377 = vmatprep.subr.bf16.mxu0 %v5359
    %7378 = vmatpush1.bf16.msra.mxu0 %v5358
    %7379 = vmatprep.subr.bf16.mxu0 %v5361
    %7380 = vmatpush1.bf16.msra.mxu0 %v5360
    %7381 = vmatprep.subr.bf16.mxu0 %v5363
    %7382 = vmatpush1.bf16.msra.mxu0 %v5362
    %7383 = vmatprep.subr.bf16.mxu0 %v5365
    %7384 = vmatpush1.bf16.msra.mxu0 %v5364
    %7385 = vmatprep.subr.bf16.mxu0 %v5367
    %7386 = vmatpush1.bf16.msra.mxu0 %v5366
    %7387 = vmatprep.subr.bf16.mxu0 %v5369
    %7388 = vmatpush1.bf16.msra.mxu0 %v5368
    %7389 = vmatprep.subr.bf16.mxu0 %v5371
    %7390 = vmatpush1.bf16.msra.mxu0 %v5370
    %7391 = vmatprep.subr.bf16.mxu0 %v5373
    %7392 = vmatpush1.bf16.msra.mxu0 %v5372
    %7393 = vmatprep.subr.bf16.mxu0 %v5375
    %7394 = vmatpush1.bf16.msra.mxu0 %v5374
    %7395 = vmatprep.subr.bf16.mxu0 %v5377
    %7396 = vmatpush1.bf16.msra.mxu0 %v5376
    %7397 = vmatprep.subr.bf16.mxu0 %v5379
    %7398 = vmatpush1.bf16.msra.mxu0 %v5378
    %7399 = vmatprep.subr.bf16.mxu0 %v5381
    %7400 = vmatpush1.bf16.msra.mxu0 %v5380
    %7401 = vmatprep.subr.bf16.mxu0 %v5383
    %7402 = vmatpush1.bf16.msra.mxu0 %v5382
    %7403 = vmatprep.subr.bf16.mxu0 %v5385
    %7404 = vmatpush1.bf16.msra.mxu0 %v5384
    %7405 = vmatprep.mubr.bf16.mxu0 %v7367
    %7406 = vmatmul.mubr.bf16.gmra.mrb[0].mxu0 %v7366
    %v7407 = vpop.f32.mrb[0].mxu0
    %v7408 = vadd.f32 0.0, %v7407
    %v7409 = vpop.f32.mrb[0].mxu0
    %v7410 = vadd.f32 0.0, %v7409
    %v7411 = vpop.f32.mrb[0].mxu0
    %v7412 = vpop.f32.mrb[0].mxu0
    %7413 = vdwg.mxu0
    %7414 = vmatprep.subr.bf16.mxu0 %v5387
    %7415 = vmatpush1.bf16.msra.mxu0 %v5386
    %7416 = vmatprep.subr.bf16.mxu0 %v5389
    %7417 = vmatpush1.bf16.msra.mxu0 %v5388
    %7418 = vmatprep.subr.bf16.mxu0 %v5391
    %7419 = vmatpush1.bf16.msra.mxu0 %v5390
    %7420 = vmatprep.subr.bf16.mxu0 %v5393
    %7421 = vmatpush1.bf16.msra.mxu0 %v5392
    %7422 = vmatprep.subr.bf16.mxu0 %v5395
    %7423 = vmatpush1.bf16.msra.mxu0 %v5394
    %7424 = vmatprep.subr.bf16.mxu0 %v5397
    %7425 = vmatpush1.bf16.msra.mxu0 %v5396
    %7426 = vmatprep.subr.bf16.mxu0 %v5399
    %7427 = vmatpush1.bf16.msra.mxu0 %v5398
    %7428 = vmatprep.subr.bf16.mxu0 %v5401
    %7429 = vmatpush1.bf16.msra.mxu0 %v5400
    %7430 = vmatprep.subr.bf16.mxu0 %v5403
    %7431 = vmatpush1.bf16.msra.mxu0 %v5402
    %7432 = vmatprep.subr.bf16.mxu0 %v5405
    %7433 = vmatpush1.bf16.msra.mxu0 %v5404
    %7434 = vmatprep.subr.bf16.mxu0 %v5407
    %7435 = vmatpush1.bf16.msra.mxu0 %v5406
    %7436 = vmatprep.subr.bf16.mxu0 %v5409
    %7437 = vmatpush1.bf16.msra.mxu0 %v5408
    %7438 = vmatprep.subr.bf16.mxu0 %v5411
    %7439 = vmatpush1.bf16.msra.mxu0 %v5410
    %7440 = vmatprep.subr.bf16.mxu0 %v5413
    %7441 = vmatpush1.bf16.msra.mxu0 %v5412
    %7442 = vmatprep.subr.bf16.mxu0 %v5415
    %7443 = vmatpush1.bf16.msra.mxu0 %v5414
    %7444 = vmatprep.subr.bf16.mxu0 %v5417
    %7445 = vmatpush1.bf16.msra.mxu0 %v5416
    %7446 = vmatprep.mubr.bf16.mxu0 %v7369
    %7447 = vmatmul.mubr.bf16.gmra.mrb[0].mxu0 %v7368
    %v7448 = vpop.f32.mrb[0].mxu0
    %v7449 = vadd.f32 %v7408, %v7448
    %v7450 = vpop.f32.mrb[0].mxu0
    %v7451 = vadd.f32 %v7410, %v7450
    %v7452 = vpop.f32.mrb[0].mxu0
    %v7453 = vpop.f32.mrb[0].mxu0
    %7454 = vdwg.mxu0
    %7455 = vmatprep.subr.bf16.mxu0 %v5419
    %7456 = vmatpush1.bf16.msra.mxu0 %v5418
    %7457 = vmatprep.subr.bf16.mxu0 %v5421
    %7458 = vmatpush1.bf16.msra.mxu0 %v5420
    %7459 = vmatprep.subr.bf16.mxu0 %v5423
    %7460 = vmatpush1.bf16.msra.mxu0 %v5422
    %7461 = vmatprep.subr.bf16.mxu0 %v5425
    %7462 = vmatpush1.bf16.msra.mxu0 %v5424
    %7463 = vmatprep.subr.bf16.mxu0 %v5427
    %7464 = vmatpush1.bf16.msra.mxu0 %v5426
    %7465 = vmatprep.subr.bf16.mxu0 %v5429
    %7466 = vmatpush1.bf16.msra.mxu0 %v5428
    %7467 = vmatprep.subr.bf16.mxu0 %v5431
    %7468 = vmatpush1.bf16.msra.mxu0 %v5430
    %7469 = vmatprep.subr.bf16.mxu0 %v5433
    %7470 = vmatpush1.bf16.msra.mxu0 %v5432
    %7471 = vmatprep.subr.bf16.mxu0 %v5435
    %7472 = vmatpush1.bf16.msra.mxu0 %v5434
    %7473 = vmatprep.subr.bf16.mxu0 %v5437
    %7474 = vmatpush1.bf16.msra.mxu0 %v5436
    %7475 = vmatprep.subr.bf16.mxu0 %v5439
    %7476 = vmatpush1.bf16.msra.mxu0 %v5438
    %7477 = vmatprep.subr.bf16.mxu0 %v5441
    %7478 = vmatpush1.bf16.msra.mxu0 %v5440
    %7479 = vmatprep.subr.bf16.mxu0 %v5443
    %7480 = vmatpush1.bf16.msra.mxu0 %v5442
    %7481 = vmatprep.subr.bf16.mxu0 %v5445
    %7482 = vmatpush1.bf16.msra.mxu0 %v5444
    %7483 = vmatprep.subr.bf16.mxu0 %v5447
    %7484 = vmatpush1.bf16.msra.mxu0 %v5446
    %7485 = vmatprep.subr.bf16.mxu0 %v5449
    %7486 = vmatpush1.bf16.msra.mxu0 %v5448
    %7487 = vmatprep.mubr.bf16.mxu0 %v7371
    %7488 = vmatmul.mubr.bf16.gmra.mrb[0].mxu0 %v7370
    %v7489 = vpop.f32.mrb[0].mxu0
    %v7490 = vadd.f32 %v7449, %v7489
    %v7491 = vpop.f32.mrb[0].mxu0
    %v7492 = vadd.f32 %v7451, %v7491
    %v7493 = vpop.f32.mrb[0].mxu0
    %v7494 = vpop.f32.mrb[0].mxu0
    %7495 = vdwg.mxu0
    %7496 = vmatprep.subr.bf16.mxu0 %v5451
    %7497 = vmatpush1.bf16.msra.mxu0 %v5450
    %7498 = vmatprep.subr.bf16.mxu0 %v5453
    %7499 = vmatpush1.bf16.msra.mxu0 %v5452
    %7500 = vmatprep.subr.bf16.mxu0 %v5455
    %7501 = vmatpush1.bf16.msra.mxu0 %v5454
    %7502 = vmatprep.subr.bf16.mxu0 %v5457
    %7503 = vmatpush1.bf16.msra.mxu0 %v5456
    %7504 = vmatprep.subr.bf16.mxu0 %v5459
    %7505 = vmatpush1.bf16.msra.mxu0 %v5458
    %7506 = vmatprep.subr.bf16.mxu0 %v5461
    %7507 = vmatpush1.bf16.msra.mxu0 %v5460
    %7508 = vmatprep.subr.bf16.mxu0 %v5463
    %7509 = vmatpush1.bf16.msra.mxu0 %v5462
    %7510 = vmatprep.subr.bf16.mxu0 %v5465
    %7511 = vmatpush1.bf16.msra.mxu0 %v5464
    %7512 = vmatprep.subr.bf16.mxu0 0
    %7513 = vmatpush1.bf16.msra.mxu0 0
    %7514 = vmatprep.subr.bf16.mxu0 0
    %7515 = vmatpush1.bf16.msra.mxu0 0
    %7516 = vmatprep.subr.bf16.mxu0 0
    %7517 = vmatpush1.bf16.msra.mxu0 0
    %7518 = vmatprep.subr.bf16.mxu0 0
    %7519 = vmatpush1.bf16.msra.mxu0 0
    %7520 = vmatprep.subr.bf16.mxu0 0
    %7521 = vmatpush1.bf16.msra.mxu0 0
    %7522 = vmatprep.subr.bf16.mxu0 0
    %7523 = vmatpush1.bf16.msra.mxu0 0
    %7524 = vmatprep.subr.bf16.mxu0 0
    %7525 = vmatpush1.bf16.msra.mxu0 0
    %7526 = vmatprep.subr.bf16.mxu0 0
    %7527 = vmatpush1.bf16.msra.mxu0 0
    %7528 = vmatprep.mubr.bf16.mxu0 0
    %7529 = vmatmul.mubr.bf16.gmra.mrb[0].mxu0 %v7372
    %v7530 = vpop.f32.mrb[0].mxu0
    %v7531 = vadd.f32 %v7490, %v7530
    %v7532 = vpop.f32.mrb[0].mxu0
    %v7533 = vadd.f32 %v7492, %v7532
    %v7534 = vpop.f32.mrb[0].mxu0
    %v7535 = vpop.f32.mrb[0].mxu0
    %7536 = vdwg.mxu0
    %v7537 = vld [vmem:[#allocation3 + $0x38] sm:$0xff]
    %v7538 = vld [vmem:[#allocation3 + $0x40] sm:$0xff]
    %v7539 = vld [vmem:[#allocation3 + $0x48] sm:$0xff]
    %v7540 = vld [vmem:[#allocation3 + $0x50] sm:$0xff]
    %v7541 = vld [vmem:[#allocation3 + $0x58] sm:$0xff]
    %v7542 = vld [vmem:[#allocation3 + $0x60] sm:$0xff]
    %v7543 = vld [vmem:[#allocation3 + $0x68] sm:$0xff]
    %v7544 = vpack.c.bf16 %v7537, %v7537
    %v7545 = vpack.c.bf16 %v7538, %v7538
    %v7546 = vpack.c.bf16 %v7539, %v7539
    %v7547 = vpack.c.bf16 %v7540, %v7540
    %v7548 = vpack.c.bf16 %v7541, %v7541
    %v7549 = vpack.c.bf16 %v7542, %v7542
    %v7550 = vpack.c.bf16 %v7543, %v7543
    %7551 = vmatprep.subr.bf16.mxu0 %v5355
    %7552 = vmatpush1.bf16.msra.mxu0 %v5354
    %7553 = vmatprep.subr.bf16.mxu0 %v5357
    %7554 = vmatpush1.bf16.msra.mxu0 %v5356
    %7555 = vmatprep.subr.bf16.mxu0 %v5359
    %7556 = vmatpush1.bf16.msra.mxu0 %v5358
    %7557 = vmatprep.subr.bf16.mxu0 %v5361
    %7558 = vmatpush1.bf16.msra.mxu0 %v5360
    %7559 = vmatprep.subr.bf16.mxu0 %v5363
    %7560 = vmatpush1.bf16.msra.mxu0 %v5362
    %7561 = vmatprep.subr.bf16.mxu0 %v5365
    %7562 = vmatpush1.bf16.msra.mxu0 %v5364
    %7563 = vmatprep.subr.bf16.mxu0 %v5367
    %7564 = vmatpush1.bf16.msra.mxu0 %v5366
    %7565 = vmatprep.subr.bf16.mxu0 %v5369
    %7566 = vmatpush1.bf16.msra.mxu0 %v5368
    %7567 = vmatprep.subr.bf16.mxu0 %v5371
    %7568 = vmatpush1.bf16.msra.mxu0 %v5370
    %7569 = vmatprep.subr.bf16.mxu0 %v5373
    %7570 = vmatpush1.bf16.msra.mxu0 %v5372
    %7571 = vmatprep.subr.bf16.mxu0 %v5375
    %7572 = vmatpush1.bf16.msra.mxu0 %v5374
    %7573 = vmatprep.subr.bf16.mxu0 %v5377
    %7574 = vmatpush1.bf16.msra.mxu0 %v5376
    %7575 = vmatprep.subr.bf16.mxu0 %v5379
    %7576 = vmatpush1.bf16.msra.mxu0 %v5378
    %7577 = vmatprep.subr.bf16.mxu0 %v5381
    %7578 = vmatpush1.bf16.msra.mxu0 %v5380
    %7579 = vmatprep.subr.bf16.mxu0 %v5383
    %7580 = vmatpush1.bf16.msra.mxu0 %v5382
    %7581 = vmatprep.subr.bf16.mxu0 %v5385
    %7582 = vmatpush1.bf16.msra.mxu0 %v5384
    %7583 = vmatprep.mubr.bf16.mxu0 %v7545
    %7584 = vmatmul.mubr.bf16.gmra.mrb[0].mxu0 %v7544
    %v7585 = vpop.f32.mrb[0].mxu0
    %v7586 = vadd.f32 0.0, %v7585
    %v7587 = vpop.f32.mrb[0].mxu0
    %v7588 = vadd.f32 0.0, %v7587
    %v7589 = vpop.f32.mrb[0].mxu0
    %v7590 = vpop.f32.mrb[0].mxu0
    %7591 = vdwg.mxu0
    %7592 = vmatprep.subr.bf16.mxu0 %v5387
    %7593 = vmatpush1.bf16.msra.mxu0 %v5386
    %7594 = vmatprep.subr.bf16.mxu0 %v5389
    %7595 = vmatpush1.bf16.msra.mxu0 %v5388
    %7596 = vmatprep.subr.bf16.mxu0 %v5391
    %7597 = vmatpush1.bf16.msra.mxu0 %v5390
    %7598 = vmatprep.subr.bf16.mxu0 %v5393
    %7599 = vmatpush1.bf16.msra.mxu0 %v5392
    %7600 = vmatprep.subr.bf16.mxu0 %v5395
    %7601 = vmatpush1.bf16.msra.mxu0 %v5394
    %7602 = vmatprep.subr.bf16.mxu0 %v5397
    %7603 = vmatpush1.bf16.msra.mxu0 %v5396
    %7604 = vmatprep.subr.bf16.mxu0 %v5399
    %7605 = vmatpush1.bf16.msra.mxu0 %v5398
    %7606 = vmatprep.subr.bf16.mxu0 %v5401
    %7607 = vmatpush1.bf16.msra.mxu0 %v5400
    %7608 = vmatprep.subr.bf16.mxu0 %v5403
    %7609 = vmatpush1.bf16.msra.mxu0 %v5402
    %7610 = vmatprep.subr.bf16.mxu0 %v5405
    %7611 = vmatpush1.bf16.msra.mxu0 %v5404
    %7612 = vmatprep.subr.bf16.mxu0 %v5407
    %7613 = vmatpush1.bf16.msra.mxu0 %v5406
    %7614 = vmatprep.subr.bf16.mxu0 %v5409
    %7615 = vmatpush1.bf16.msra.mxu0 %v5408
    %7616 = vmatprep.subr.bf16.mxu0 %v5411
    %7617 = vmatpush1.bf16.msra.mxu0 %v5410
    %7618 = vmatprep.subr.bf16.mxu0 %v5413
    %7619 = vmatpush1.bf16.msra.mxu0 %v5412
    %7620 = vmatprep.subr.bf16.mxu0 %v5415
    %7621 = vmatpush1.bf16.msra.mxu0 %v5414
    %7622 = vmatprep.subr.bf16.mxu0 %v5417
    %7623 = vmatpush1.bf16.msra.mxu0 %v5416
    %7624 = vmatprep.mubr.bf16.mxu0 %v7547
    %7625 = vmatmul.mubr.bf16.gmra.mrb[0].mxu0 %v7546
    %v7626 = vpop.f32.mrb[0].mxu0
    %v7627 = vadd.f32 %v7586, %v7626
    %v7628 = vpop.f32.mrb[0].mxu0
    %v7629 = vadd.f32 %v7588, %v7628
    %v7630 = vpop.f32.mrb[0].mxu0
    %v7631 = vpop.f32.mrb[0].mxu0
    %7632 = vdwg.mxu0
    %7633 = vmatprep.subr.bf16.mxu0 %v5419
    %7634 = vmatpush1.bf16.msra.mxu0 %v5418
    %7635 = vmatprep.subr.bf16.mxu0 %v5421
    %7636 = vmatpush1.bf16.msra.mxu0 %v5420
    %7637 = vmatprep.subr.bf16.mxu0 %v5423
    %7638 = vmatpush1.bf16.msra.mxu0 %v5422
    %7639 = vmatprep.subr.bf16.mxu0 %v5425
    %7640 = vmatpush1.bf16.msra.mxu0 %v5424
    %7641 = vmatprep.subr.bf16.mxu0 %v5427
    %7642 = vmatpush1.bf16.msra.mxu0 %v5426
    %7643 = vmatprep.subr.bf16.mxu0 %v5429
    %7644 = vmatpush1.bf16.msra.mxu0 %v5428
    %7645 = vmatprep.subr.bf16.mxu0 %v5431
    %7646 = vmatpush1.bf16.msra.mxu0 %v5430
    %7647 = vmatprep.subr.bf16.mxu0 %v5433
    %7648 = vmatpush1.bf16.msra.mxu0 %v5432
    %7649 = vmatprep.subr.bf16.mxu0 %v5435
    %7650 = vmatpush1.bf16.msra.mxu0 %v5434
    %7651 = vmatprep.subr.bf16.mxu0 %v5437
    %7652 = vmatpush1.bf16.msra.mxu0 %v5436
    %7653 = vmatprep.subr.bf16.mxu0 %v5439
    %7654 = vmatpush1.bf16.msra.mxu0 %v5438
    %7655 = vmatprep.subr.bf16.mxu0 %v5441
    %7656 = vmatpush1.bf16.msra.mxu0 %v5440
    %7657 = vmatprep.subr.bf16.mxu0 %v5443
    %7658 = vmatpush1.bf16.msra.mxu0 %v5442
    %7659 = vmatprep.subr.bf16.mxu0 %v5445
    %7660 = vmatpush1.bf16.msra.mxu0 %v5444
    %7661 = vmatprep.subr.bf16.mxu0 %v5447
    %7662 = vmatpush1.bf16.msra.mxu0 %v5446
    %7663 = vmatprep.subr.bf16.mxu0 %v5449
    %7664 = vmatpush1.bf16.msra.mxu0 %v5448
    %7665 = vmatprep.mubr.bf16.mxu0 %v7549
    %7666 = vmatmul.mubr.bf16.gmra.mrb[0].mxu0 %v7548
    %v7667 = vpop.f32.mrb[0].mxu0
    %v7668 = vadd.f32 %v7627, %v7667
    %v7669 = vpop.f32.mrb[0].mxu0
    %v7670 = vadd.f32 %v7629, %v7669
    %v7671 = vpop.f32.mrb[0].mxu0
    %v7672 = vpop.f32.mrb[0].mxu0
    %7673 = vdwg.mxu0
    %7674 = vmatprep.subr.bf16.mxu0 %v5451
    %7675 = vmatpush1.bf16.msra.mxu0 %v5450
    %7676 = vmatprep.subr.bf16.mxu0 %v5453
    %7677 = vmatpush1.bf16.msra.mxu0 %v5452
    %7678 = vmatprep.subr.bf16.mxu0 %v5455
    %7679 = vmatpush1.bf16.msra.mxu0 %v5454
    %7680 = vmatprep.subr.bf16.mxu0 %v5457
    %7681 = vmatpush1.bf16.msra.mxu0 %v5456
    %7682 = vmatprep.subr.bf16.mxu0 %v5459
    %7683 = vmatpush1.bf16.msra.mxu0 %v5458
    %7684 = vmatprep.subr.bf16.mxu0 %v5461
    %7685 = vmatpush1.bf16.msra.mxu0 %v5460
    %7686 = vmatprep.subr.bf16.mxu0 %v5463
    %7687 = vmatpush1.bf16.msra.mxu0 %v5462
    %7688 = vmatprep.subr.bf16.mxu0 %v5465
    %7689 = vmatpush1.bf16.msra.mxu0 %v5464
    %7690 = vmatprep.subr.bf16.mxu0 0
    %7691 = vmatpush1.bf16.msra.mxu0 0
    %7692 = vmatprep.subr.bf16.mxu0 0
    %7693 = vmatpush1.bf16.msra.mxu0 0
    %7694 = vmatprep.subr.bf16.mxu0 0
    %7695 = vmatpush1.bf16.msra.mxu0 0
    %7696 = vmatprep.subr.bf16.mxu0 0
    %7697 = vmatpush1.bf16.msra.mxu0 0
    %7698 = vmatprep.subr.bf16.mxu0 0
    %7699 = vmatpush1.bf16.msra.mxu0 0
    %7700 = vmatprep.subr.bf16.mxu0 0
    %7701 = vmatpush1.bf16.msra.mxu0 0
    %7702 = vmatprep.subr.bf16.mxu0 0
    %7703 = vmatpush1.bf16.msra.mxu0 0
    %7704 = vmatprep.subr.bf16.mxu0 0
    %7705 = vmatpush1.bf16.msra.mxu0 0
    %7706 = vmatprep.mubr.bf16.mxu0 0
    %7707 = vmatmul.mubr.bf16.gmra.mrb[0].mxu0 %v7550
    %v7708 = vpop.f32.mrb[0].mxu0
    %v7709 = vadd.f32 %v7668, %v7708
    %v7710 = vpop.f32.mrb[0].mxu0
    %v7711 = vadd.f32 %v7670, %v7710
    %v7712 = vpop.f32.mrb[0].mxu0
    %v7713 = vpop.f32.mrb[0].mxu0
    %7714 = vdwg.mxu0
    %v7715 = vmax.f32 %v7531, 0.0
    %v7716 = vmax.f32 %v7533, 0.0
    %v7717 = vmax.f32 %v7709, 0.0
    %v7718 = vmax.f32 %v7711, 0.0
    %v7719 = vmax.f32 %v7715, %v7717
    %v7720 = vmax.f32 %v7716, %v7718
    %v7721 = vpack.c.bf16 %v7719, %v7719
    %v7722 = vpack.c.bf16 %v7720, %v7720
    %s7723 = scalar_lea.vmem [#allocation8], 768
    %v7724 = vld [vmem:[%s7723] sm:$0xff]
    %v7725 = vld [vmem:[%s7723 + $0x8] sm:$0xff]
    %v7726 = vld [vmem:[%s7723 + $0x10] sm:$0xff]
    %v7727 = vld [vmem:[%s7723 + $0x18] sm:$0xff]
    %v7728 = vld [vmem:[%s7723 + $0x20] sm:$0xff]
    %v7729 = vld [vmem:[%s7723 + $0x28] sm:$0xff]
    %v7730 = vld [vmem:[%s7723 + $0x30] sm:$0xff]
    %v7731 = vld [vmem:[%s7723 + $0x38] sm:$0xff]
    %v7732 = vld [vmem:[%s7723 + $0x40] sm:$0xff]
    %v7733 = vld [vmem:[%s7723 + $0x48] sm:$0xff]
    %v7734 = vld [vmem:[%s7723 + $0x50] sm:$0xff]
    %v7735 = vld [vmem:[%s7723 + $0x58] sm:$0xff]
    %v7736 = vld [vmem:[%s7723 + $0x60] sm:$0xff]
    %v7737 = vld [vmem:[%s7723 + $0x68] sm:$0xff]
    %v7738 = vld [vmem:[%s7723 + $0x70] sm:$0xff]
    %v7739 = vld [vmem:[%s7723 + $0x78] sm:$0xff]
    %v7740 = vld [vmem:[%s7723 + $0x80] sm:$0xff]
    %v7741 = vld [vmem:[%s7723 + $0x88] sm:$0xff]
    %v7742 = vld [vmem:[%s7723 + $0x90] sm:$0xff]
    %v7743 = vld [vmem:[%s7723 + $0x98] sm:$0xff]
    %v7744 = vld [vmem:[%s7723 + $0xa0] sm:$0xff]
    %v7745 = vld [vmem:[%s7723 + $0xa8] sm:$0xff]
    %v7746 = vld [vmem:[%s7723 + $0xb0] sm:$0xff]
    %v7747 = vld [vmem:[%s7723 + $0xb8] sm:$0xff]
    %v7748 = vld [vmem:[%s7723 + $0xc0] sm:$0xff]
    %v7749 = vld [vmem:[%s7723 + $0xc8] sm:$0xff]
    %v7750 = vld [vmem:[%s7723 + $0xd0] sm:$0xff]
    %v7751 = vld [vmem:[%s7723 + $0xd8] sm:$0xff]
    %v7752 = vld [vmem:[%s7723 + $0xe0] sm:$0xff]
    %v7753 = vld [vmem:[%s7723 + $0xe8] sm:$0xff]
    %v7754 = vld [vmem:[%s7723 + $0xf0] sm:$0xff]
    %v7755 = vld [vmem:[%s7723 + $0xf8] sm:$0xff]
    %v7788 = vunpack.c.l.b16 %v7724
    %v7789 = vunpack.c.h.b16 %v7724
    %v7790 = vunpack.c.l.b16 %v7725
    %v7791 = vunpack.c.h.b16 %v7725
    %v7792 = vunpack.c.l.b16 %v7726
    %v7793 = vunpack.c.h.b16 %v7726
    %v7794 = vunpack.c.l.b16 %v7727
    %v7795 = vunpack.c.h.b16 %v7727
    %v7796 = vunpack.c.l.b16 %v7728
    %v7797 = vunpack.c.h.b16 %v7728
    %v7798 = vunpack.c.l.b16 %v7729
    %v7799 = vunpack.c.h.b16 %v7729
    %v7800 = vunpack.c.l.b16 %v7730
    %v7801 = vunpack.c.h.b16 %v7730
    %v7802 = vunpack.c.l.b16 %v7731
    %v7803 = vunpack.c.h.b16 %v7731
    %v7804 = vunpack.c.l.b16 %v7732
    %v7805 = vunpack.c.h.b16 %v7732
    %v7806 = vunpack.c.l.b16 %v7733
    %v7807 = vunpack.c.h.b16 %v7733
    %v7808 = vunpack.c.l.b16 %v7734
    %v7809 = vunpack.c.h.b16 %v7734
    %v7810 = vunpack.c.l.b16 %v7735
    %v7811 = vunpack.c.h.b16 %v7735
    %v7812 = vunpack.c.l.b16 %v7736
    %v7813 = vunpack.c.h.b16 %v7736
    %v7814 = vunpack.c.l.b16 %v7737
    %v7815 = vunpack.c.h.b16 %v7737
    %v7816 = vunpack.c.l.b16 %v7738
    %v7817 = vunpack.c.h.b16 %v7738
    %v7818 = vunpack.c.l.b16 %v7739
    %v7819 = vunpack.c.h.b16 %v7739
    %v7820 = vunpack.c.l.b16 %v7740
    %v7821 = vunpack.c.h.b16 %v7740
    %v7822 = vunpack.c.l.b16 %v7741
    %v7823 = vunpack.c.h.b16 %v7741
    %v7824 = vunpack.c.l.b16 %v7742
    %v7825 = vunpack.c.h.b16 %v7742
    %v7826 = vunpack.c.l.b16 %v7743
    %v7827 = vunpack.c.h.b16 %v7743
    %v7828 = vunpack.c.l.b16 %v7744
    %v7829 = vunpack.c.h.b16 %v7744
    %v7830 = vunpack.c.l.b16 %v7745
    %v7831 = vunpack.c.h.b16 %v7745
    %v7832 = vunpack.c.l.b16 %v7746
    %v7833 = vunpack.c.h.b16 %v7746
    %v7834 = vunpack.c.l.b16 %v7747
    %v7835 = vunpack.c.h.b16 %v7747
    %v7836 = vunpack.c.l.b16 %v7748
    %v7837 = vunpack.c.h.b16 %v7748
    %v7838 = vunpack.c.l.b16 %v7749
    %v7839 = vunpack.c.h.b16 %v7749
    %v7840 = vunpack.c.l.b16 %v7750
    %v7841 = vunpack.c.h.b16 %v7750
    %v7842 = vunpack.c.l.b16 %v7751
    %v7843 = vunpack.c.h.b16 %v7751
    %v7844 = vunpack.c.l.b16 %v7752
    %v7845 = vunpack.c.h.b16 %v7752
    %v7846 = vunpack.c.l.b16 %v7753
    %v7847 = vunpack.c.h.b16 %v7753
    %v7848 = vunpack.c.l.b16 %v7754
    %v7849 = vunpack.c.h.b16 %v7754
    %v7850 = vunpack.c.l.b16 %v7755
    %v7851 = vunpack.c.h.b16 %v7755
    %v7852 = vpack.c.b16 %v7790, %v7788
    %v7853 = vpack.c.b16 %v7791, %v7789
    %v7854 = vpack.c.b16 %v7794, %v7792
    %v7855 = vpack.c.b16 %v7795, %v7793
    %v7856 = vpack.c.b16 %v7798, %v7796
    %v7857 = vpack.c.b16 %v7799, %v7797
    %v7858 = vpack.c.b16 %v7802, %v7800
    %v7859 = vpack.c.b16 %v7803, %v7801
    %v7860 = vpack.c.b16 %v7806, %v7804
    %v7861 = vpack.c.b16 %v7807, %v7805
    %v7862 = vpack.c.b16 %v7810, %v7808
    %v7863 = vpack.c.b16 %v7811, %v7809
    %v7864 = vpack.c.b16 %v7814, %v7812
    %v7865 = vpack.c.b16 %v7815, %v7813
    %v7866 = vpack.c.b16 %v7818, %v7816
    %v7867 = vpack.c.b16 %v7819, %v7817
    %v7868 = vpack.c.b16 %v7822, %v7820
    %v7869 = vpack.c.b16 %v7823, %v7821
    %v7870 = vpack.c.b16 %v7826, %v7824
    %v7871 = vpack.c.b16 %v7827, %v7825
    %v7872 = vpack.c.b16 %v7830, %v7828
    %v7873 = vpack.c.b16 %v7831, %v7829
    %v7874 = vpack.c.b16 %v7834, %v7832
    %v7875 = vpack.c.b16 %v7835, %v7833
    %v7876 = vpack.c.b16 %v7838, %v7836
    %v7877 = vpack.c.b16 %v7839, %v7837
    %v7878 = vpack.c.b16 %v7842, %v7840
    %v7879 = vpack.c.b16 %v7843, %v7841
    %v7880 = vpack.c.b16 %v7846, %v7844
    %v7881 = vpack.c.b16 %v7847, %v7845
    %v7882 = vpack.c.b16 %v7850, %v7848
    %v7883 = vpack.c.b16 %v7851, %v7849
    %7916 = vmatprep.subr.bf16.mxu0 %v7853
    %7917 = vmatpush1.bf16.msra.mxu0 %v7852
    %7918 = vmatprep.subr.bf16.mxu0 %v7855
    %7919 = vmatpush1.bf16.msra.mxu0 %v7854
    %7920 = vmatprep.subr.bf16.mxu0 %v7857
    %7921 = vmatpush1.bf16.msra.mxu0 %v7856
    %7922 = vmatprep.subr.bf16.mxu0 %v7859
    %7923 = vmatpush1.bf16.msra.mxu0 %v7858
    %7924 = vmatprep.subr.bf16.mxu0 %v7861
    %7925 = vmatpush1.bf16.msra.mxu0 %v7860
    %7926 = vmatprep.subr.bf16.mxu0 %v7863
    %7927 = vmatpush1.bf16.msra.mxu0 %v7862
    %7928 = vmatprep.subr.bf16.mxu0 %v7865
    %7929 = vmatpush1.bf16.msra.mxu0 %v7864
    %7930 = vmatprep.subr.bf16.mxu0 %v7867
    %7931 = vmatpush1.bf16.msra.mxu0 %v7866
    %7932 = vmatprep.subr.bf16.mxu0 %v7869
    %7933 = vmatpush1.bf16.msra.mxu0 %v7868
    %7934 = vmatprep.subr.bf16.mxu0 %v7871
    %7935 = vmatpush1.bf16.msra.mxu0 %v7870
    %7936 = vmatprep.subr.bf16.mxu0 %v7873
    %7937 = vmatpush1.bf16.msra.mxu0 %v7872
    %7938 = vmatprep.subr.bf16.mxu0 %v7875
    %7939 = vmatpush1.bf16.msra.mxu0 %v7874
    %7940 = vmatprep.subr.bf16.mxu0 %v7877
    %7941 = vmatpush1.bf16.msra.mxu0 %v7876
    %7942 = vmatprep.subr.bf16.mxu0 %v7879
    %7943 = vmatpush1.bf16.msra.mxu0 %v7878
    %7944 = vmatprep.subr.bf16.mxu0 %v7881
    %7945 = vmatpush1.bf16.msra.mxu0 %v7880
    %7946 = vmatprep.subr.bf16.mxu0 %v7883
    %7947 = vmatpush1.bf16.msra.mxu0 %v7882
    %7948 = vmatprep.mubr.bf16.mxu0 %v7722
    %7949 = vmatmul.mubr.bf16.gmra.mrb[0].mxu0 %v7721
    %v7950 = vpop.f32.mrb[0].mxu0
    %v7951 = vadd.f32 0.0, %v7950
    %v7952 = vpop.f32.mrb[0].mxu0
    %v7953 = vadd.f32 0.0, %v7952
    %v7954 = vpop.f32.mrb[0].mxu0
    %v7955 = vpop.f32.mrb[0].mxu0
    %7956 = vdwg.mxu0
    %v7957 = vadd.f32 %v7357, %v7951
    %v7958 = vadd.f32 %v7358, %v7953
    %v7959 = vmax.f32 %v7957, 0.0
    %v7960 = vmax.f32 %v7958, 0.0
    %v7961 = vpack.c.bf16 %v7959, %v7959
    %v7962 = vpack.c.bf16 %v7960, %v7960
    %v7963 = vld [vmem:[%s5] sm:$0xf]
    %v7964 = vld [vmem:[%s5 + $0x4] sm:$0xf]
    %v7965 = vld [vmem:[%s5 + $0x8] sm:$0xf]
    %v7966 = vld [vmem:[%s5 + $0xc] sm:$0xf]
    %v7967 = vld [vmem:[%s5 + $0x10] sm:$0xf]
    %v7968 = vld [vmem:[%s5 + $0x14] sm:$0xf]
    %v7969 = vld [vmem:[%s5 + $0x18] sm:$0xf]
    %v7970 = vld [vmem:[%s5 + $0x1c] sm:$0xf]
    %v7971 = vld [vmem:[%s5 + $0x20] sm:$0xf]
    %v7972 = vld [vmem:[%s5 + $0x24] sm:$0xf]
    %v7973 = vld [vmem:[%s5 + $0x28] sm:$0xf]
    %v7974 = vld [vmem:[%s5 + $0x2c] sm:$0xf]
    %v7975 = vld [vmem:[%s5 + $0x30] sm:$0xf]
    %v7976 = vld [vmem:[%s5 + $0x34] sm:$0xf]
    %v7977 = vld [vmem:[%s5 + $0x38] sm:$0xf]
    %v7978 = vld [vmem:[%s5 + $0x3c] sm:$0xf]
    %v7979 = vld [vmem:[%s5 + $0x40] sm:$0xf]
    %v7980 = vld [vmem:[%s5 + $0x44] sm:$0xf]
    %v7981 = vld [vmem:[%s5 + $0x48] sm:$0xf]
    %v7982 = vld [vmem:[%s5 + $0x4c] sm:$0xf]
    %v7983 = vld [vmem:[%s5 + $0x50] sm:$0xf]
    %v7984 = vld [vmem:[%s5 + $0x54] sm:$0xf]
    %v7985 = vld [vmem:[%s5 + $0x58] sm:$0xf]
    %v7986 = vld [vmem:[%s5 + $0x5c] sm:$0xf]
    %v7987 = vld [vmem:[%s5 + $0x60] sm:$0xf]
    %v7988 = vld [vmem:[%s5 + $0x64] sm:$0xf]
    %v7989 = vld [vmem:[%s5 + $0x68] sm:$0xf]
    %v7990 = vld [vmem:[%s5 + $0x6c] sm:$0xf]
    %v7991 = vld [vmem:[%s5 + $0x70] sm:$0xf]
    %v7992 = vld [vmem:[%s5 + $0x74] sm:$0xf]
    %v7993 = vld [vmem:[%s5 + $0x78] sm:$0xf]
    %v7994 = vld [vmem:[%s5 + $0x7c] sm:$0xf]
    %v8027 = vunpack.c.l.b16 %v7963
    %v8028 = vunpack.c.l.b16 %v7964
    %v8029 = vunpack.c.l.b16 %v7965
    %v8030 = vunpack.c.l.b16 %v7966
    %v8031 = vunpack.c.l.b16 %v7967
    %v8032 = vunpack.c.l.b16 %v7968
    %v8033 = vunpack.c.l.b16 %v7969
    %v8034 = vunpack.c.l.b16 %v7970
    %v8035 = vunpack.c.l.b16 %v7971
    %v8036 = vunpack.c.l.b16 %v7972
    %v8037 = vunpack.c.l.b16 %v7973
    %v8038 = vunpack.c.l.b16 %v7974
    %v8039 = vunpack.c.l.b16 %v7975
    %v8040 = vunpack.c.l.b16 %v7976
    %v8041 = vunpack.c.l.b16 %v7977
    %v8042 = vunpack.c.l.b16 %v7978
    %v8043 = vunpack.c.l.b16 %v7979
    %v8044 = vunpack.c.l.b16 %v7980
    %v8045 = vunpack.c.l.b16 %v7981
    %v8046 = vunpack.c.l.b16 %v7982
    %v8047 = vunpack.c.l.b16 %v7983
    %v8048 = vunpack.c.l.b16 %v7984
    %v8049 = vunpack.c.l.b16 %v7985
    %v8050 = vunpack.c.l.b16 %v7986
    %v8051 = vunpack.c.l.b16 %v7987
    %v8052 = vunpack.c.l.b16 %v7988
    %v8053 = vunpack.c.l.b16 %v7989
    %v8054 = vunpack.c.l.b16 %v7990
    %v8055 = vunpack.c.l.b16 %v7991
    %v8056 = vunpack.c.l.b16 %v7992
    %v8057 = vunpack.c.l.b16 %v7993
    %v8058 = vunpack.c.l.b16 %v7994
    %v8059 = vpack.c.b16 %v8028, %v8027
    %v8060 = vpack.c.b16 %v8030, %v8029
    %v8061 = vpack.c.b16 %v8032, %v8031
    %v8062 = vpack.c.b16 %v8034, %v8033
    %v8063 = vpack.c.b16 %v8036, %v8035
    %v8064 = vpack.c.b16 %v8038, %v8037
    %v8065 = vpack.c.b16 %v8040, %v8039
    %v8066 = vpack.c.b16 %v8042, %v8041
    %v8067 = vpack.c.b16 %v8044, %v8043
    %v8068 = vpack.c.b16 %v8046, %v8045
    %v8069 = vpack.c.b16 %v8048, %v8047
    %v8070 = vpack.c.b16 %v8050, %v8049
    %v8071 = vpack.c.b16 %v8052, %v8051
    %v8072 = vpack.c.b16 %v8054, %v8053
    %v8073 = vpack.c.b16 %v8056, %v8055
    %v8074 = vpack.c.b16 %v8058, %v8057
    %8091 = vmatprep.subr.bf16.mxu0 0
    %8092 = vmatpush1.bf16.msra.mxu0 %v8059
    %8093 = vmatprep.subr.bf16.mxu0 0
    %8094 = vmatpush1.bf16.msra.mxu0 %v8060
    %8095 = vmatprep.subr.bf16.mxu0 0
    %8096 = vmatpush1.bf16.msra.mxu0 %v8061
    %8097 = vmatprep.subr.bf16.mxu0 0
    %8098 = vmatpush1.bf16.msra.mxu0 %v8062
    %8099 = vmatprep.subr.bf16.mxu0 0
    %8100 = vmatpush1.bf16.msra.mxu0 %v8063
    %8101 = vmatprep.subr.bf16.mxu0 0
    %8102 = vmatpush1.bf16.msra.mxu0 %v8064
    %8103 = vmatprep.subr.bf16.mxu0 0
    %8104 = vmatpush1.bf16.msra.mxu0 %v8065
    %8105 = vmatprep.subr.bf16.mxu0 0
    %8106 = vmatpush1.bf16.msra.mxu0 %v8066
    %8107 = vmatprep.subr.bf16.mxu0 0
    %8108 = vmatpush1.bf16.msra.mxu0 %v8067
    %8109 = vmatprep.subr.bf16.mxu0 0
    %8110 = vmatpush1.bf16.msra.mxu0 %v8068
    %8111 = vmatprep.subr.bf16.mxu0 0
    %8112 = vmatpush1.bf16.msra.mxu0 %v8069
    %8113 = vmatprep.subr.bf16.mxu0 0
    %8114 = vmatpush1.bf16.msra.mxu0 %v8070
    %8115 = vmatprep.subr.bf16.mxu0 0
    %8116 = vmatpush1.bf16.msra.mxu0 %v8071
    %8117 = vmatprep.subr.bf16.mxu0 0
    %8118 = vmatpush1.bf16.msra.mxu0 %v8072
    %8119 = vmatprep.subr.bf16.mxu0 0
    %8120 = vmatpush1.bf16.msra.mxu0 %v8073
    %8121 = vmatprep.subr.bf16.mxu0 0
    %8122 = vmatpush1.bf16.msra.mxu0 %v8074
    %8123 = vmatprep.mubr.bf16.mxu0 %v7962
    %8124 = vmatmul.mubr.bf16.gmra.mrb[0].mxu0 %v7961
    %v8125 = vpop.f32.mrb[0].mxu0
    %v8126 = vadd.f32 0.0, %v8125
    %v8127 = vpop.f32.mrb[0].mxu0
    %v8128 = vpop.f32.mrb[0].mxu0
    %v8129 = vpop.f32.mrb[0].mxu0
    %8130 = vdwg.mxu0
    %v8131 = vmax.f32 %v8126, 0.0
    %v8132 = vld [vmem:[%s6] sm:$0x1]
    %v8134 = vlaneseq
    %v8135 = vshrl.u32 %v8134, 7
    %v8136 = vsub.s32 0, %v8135
    %v8137 = vrot.slane %v8132, %v8136
    %v8139 = vmul.f32 %v8131, %v8137
    %8140 = vadd.xlane.f32.xlu0 %v8139
    %v8141 = vpop.xlane.xlu0 %8140
    %vm8142 = vcmask 7168
    %8143 = vst.msk [vmem:[%s7] sm:$0xff] %vm8142, %v8141
    // Predicated region
    $region42: #{cnn_forward.1} parent=1 // pred_check
      _
    $region43: #{cnn_forward.1} parent=1 // pred_check_branch
      %8145 = sbr.rel (0) target = $region45
    $region44: #{cnn_forward.1} parent=1 // pred_region
      _
    $region45: #{cnn_forward.1} parent=1 // pred_fallthru
      _
    // Predicated region
    $region46: #{cnn_forward.1} parent=1 // pred_check
      _
    $region47: #{cnn_forward.1} parent=1 // pred_check_branch
      %8147 = sbr.rel (0) target = $region49
    $region48: #{cnn_forward.1} parent=1 // pred_region
      _
    $region49: #{cnn_forward.1} parent=1 // pred_fallthru
      _
    %8148 = vsyncpa [#allocation5], 1
    %8149 = vsyncpa [#allocation7], 1

</llo_original>
